<compile_context>
chip_gen: v7x
topology: tpu7x:2x2x1
jax: 0.10.0
libtpu: 0.0.40
codegen_flags: <defaults>
</compile_context>

<pallas_src>
import functools

import jax
import jax.numpy as jnp
from jax.experimental import pallas as pl
from jax.experimental.pallas import tpu as pltpu

# Conservative explicit VMEM budget: fits v5e/v6e (128 MiB physical) and v7x (64 MiB).
_VMEM_LIMIT = 48 * 1024 * 1024


def _round_up(x, m):
    return (x + m - 1) // m * m


def _pick_divisor(n, candidates):
    for c in candidates:
        if n % c == 0:
            return c
    return n


# ------------------------------------------------------------------ GEMM (+ fused BN stats)
def _gemm_kernel(a_ref, b_ref, o_ref, *rest, act, with_stats):
    if with_stats:
        sum_ref, sq_ref, acc_ref = rest
    else:
        (acc_ref,) = rest

    k = pl.program_id(2)

    @pl.when(k == 0)
    def _():
        acc_ref[...] = jnp.zeros_like(acc_ref)

    # bf16 x bf16 -> f32 accumulation on the MXU.
    acc_ref[...] += jnp.dot(a_ref[...], b_ref[...], preferred_element_type=jnp.float32)

    @pl.when(k == pl.num_programs(2) - 1)
    def _():
        z = acc_ref[...]
        if act == "leaky":
            z_out = jnp.where(z >= 0, z, 0.2 * z)
        else:
            z_out = z
        o_ref[...] = z_out.astype(o_ref.dtype)
        if with_stats:
            # Per-(i,j)-block partial sums of the pre-activation output (for training-mode BN).
            sum_ref[...] = jnp.sum(z, axis=0, keepdims=True)[None]
            sq_ref[...] = jnp.sum(z * z, axis=0, keepdims=True)[None]


def gemm_fused(a, b, act="none", with_stats=False):
    """y = act(a @ b) with bf16 MXU operands and f32 accumulation.

    a:[M,K], b:[K,N]. Returns y:[M,N] bf16.  If with_stats, also returns per-column
    (sum[N], sumsq[N]) of the pre-activation product in f32, fused into the GEMM epilogue.
    """
    M, K = a.shape
    K2, N = b.shape
    assert K == K2

    # ---- tile selection + zero padding (zero rows/cols contribute nothing) ----
    Mp = max(_round_up(M, 16), 16)
    tm = _pick_divisor(Mp, (512, 256, 128, 64, 32, 16))

    if K > 2048:
        Kp = _round_up(K, 256)
        tk = _pick_divisor(Kp, (2048, 1024, 512, 256))
    else:
        Kp, tk = K, K

    if N >= 256 and N % 256 == 0:
        Np, tn = N, 256            # full 256-wide MXU on v6e/v7x
    elif N % 128 == 0:
        Np, tn = N, 128
    elif N < 128:
        Np, tn = N, N              # full-dim lane block for small C_out
    else:
        Np, tn = _round_up(N, 128), 128

    if (Mp, Kp) != (M, K):
        a = jnp.pad(a, ((0, Mp - M), (0, Kp - K)))
    if (Kp, Np) != (K, N):
        b = jnp.pad(b, ((0, Kp - K), (0, Np - N)))
    a = a.astype(jnp.bfloat16)
    b = b.astype(jnp.bfloat16)

    gi, gj, gk = Mp // tm, Np // tn, Kp // tk

    out_shape = [jax.ShapeDtypeStruct((Mp, Np), jnp.bfloat16)]
    out_specs = [pl.BlockSpec((tm, tn), lambda i, j, k: (i, j))]
    if with_stats:
        out_shape += [jax.ShapeDtypeStruct((gi, 1, Np), jnp.float32),
                      jax.ShapeDtypeStruct((gi, 1, Np), jnp.float32)]
        out_specs += [pl.BlockSpec((1, 1, tn), lambda i, j, k: (i, 0, j)),
                      pl.BlockSpec((1, 1, tn), lambda i, j, k: (i, 0, j))]

    res = pl.pallas_call(
        functools.partial(_gemm_kernel, act=act, with_stats=with_stats),
        out_shape=out_shape,
        grid_spec=pltpu.PrefetchScalarGridSpec(
            num_scalar_prefetch=0,
            grid=(gi, gj, gk),
            in_specs=[pl.BlockSpec((tm, tk), lambda i, j, k: (i, k)),
                      pl.BlockSpec((tk, tn), lambda i, j, k: (k, j))],
            out_specs=out_specs,
            scratch_shapes=[pltpu.VMEM((tm, tn), jnp.float32)],
        ),
        compiler_params=pltpu.CompilerParams(
            dimension_semantics=("parallel", "parallel", "arbitrary"),
            vmem_limit_bytes=_VMEM_LIMIT),
    )(a, b)

    y = res[0]
    if (Mp, Np) != (M, N):
        y = y[:M, :N]
    if not with_stats:
        return y
    s = res[1].reshape(gi, Np).sum(axis=0)[:N]
    s2 = res[2].reshape(gi, Np).sum(axis=0)[:N]
    return y, s, s2


# --------------------------------------------------------- fused BN-affine + LeakyReLU(0.2)
def _affine_leaky_kernel(x_ref, scale_ref, shift_ref, o_ref):
    z = x_ref[...].astype(jnp.float32) * scale_ref[...] + shift_ref[...]   # f32 math
    o_ref[...] = jnp.where(z >= 0, z, 0.2 * z).astype(o_ref.dtype)         # bf16 store


def affine_leaky(x, scale, shift):
    """leaky_relu_0.2(x * scale + shift); x:[M,C] bf16, scale/shift:[1,C] f32 -> bf16."""
    M, C = x.shape
    Mp = max(_round_up(M, 16), 16)
    if Mp != M:
        x = jnp.pad(x, ((0, Mp - M), (0, 0)))
    tm = _pick_divisor(Mp, (1024, 512, 256, 128, 64, 32, 16))
    out = pl.pallas_call(
        _affine_leaky_kernel,
        out_shape=jax.ShapeDtypeStruct((Mp, C), jnp.bfloat16),
        grid_spec=pltpu.PrefetchScalarGridSpec(
            num_scalar_prefetch=0,
            grid=(Mp // tm,),
            in_specs=[pl.BlockSpec((tm, C), lambda i: (i, 0)),
                      pl.BlockSpec((1, C), lambda i: (0, 0)),
                      pl.BlockSpec((1, C), lambda i: (0, 0))],
            out_specs=pl.BlockSpec((tm, C), lambda i: (i, 0)),
        ),
        compiler_params=pltpu.CompilerParams(
            dimension_semantics=("parallel",), vmem_limit_bytes=_VMEM_LIMIT),
    )(x, scale, shift)
    return out[:M] if Mp != M else out


# ---------------------------------------------- final conv (C_out = 1): lane-dense matvec
def _matvec_sigmoid_kernel(x_ref, w_ref, o_ref):
    x = x_ref[...].astype(jnp.float32)
    w = w_ref[...]                                    # (1, K) f32
    o_ref[...] = jax.nn.sigmoid(jnp.sum(x * w, axis=1, keepdims=True))


def matvec_sigmoid(a, w):
    """sigmoid(a @ w) for a single output channel; K stays on the 128-lane axis (VPU mult +
    XLU reduce) instead of a 1-lane-wide MXU matmul with masked 1-lane output stores."""
    M, K = a.shape
    Mp = max(_round_up(M, 8), 8)
    if Mp != M:
        a = jnp.pad(a, ((0, Mp - M), (0, 0)))
    a = a.astype(jnp.bfloat16)
    w2 = w.reshape(1, K).astype(jnp.float32)
    max_tm = max(8, (2 * 1024 * 1024) // max(K, 1))   # keep x tile <= ~4 MiB bf16
    cands = tuple(c for c in (512, 256, 128, 64, 32, 16, 8) if c <= max_tm)
    tm = _pick_divisor(Mp, cands)
    out = pl.pallas_call(
        _matvec_sigmoid_kernel,
        out_shape=jax.ShapeDtypeStruct((Mp, 1), jnp.float32),
        grid_spec=pltpu.PrefetchScalarGridSpec(
            num_scalar_prefetch=0,
            grid=(Mp // tm,),
            in_specs=[pl.BlockSpec((tm, K), lambda i: (i, 0)),
                      pl.BlockSpec((1, K), lambda i: (0, 0))],
            out_specs=pl.BlockSpec((tm, 1), lambda i: (i, 0)),
        ),
        compiler_params=pltpu.CompilerParams(
            dimension_semantics=("parallel",), vmem_limit_bytes=_VMEM_LIMIT),
    )(a, w2)
    return out[:M] if Mp != M else out


# ----------------------------------------------------------------------------- im2col glue
def im2col(x, kh, kw, stride, pad):
    """x: NHWC -> patches [N*Ho*Wo, C*kh*kw] with K index = c*(kh*kw) + di*kw + dj."""
    n, h, w, c = x.shape
    xp = jnp.pad(x, ((0, 0), (pad, pad), (pad, pad), (0, 0)))
    ho = (h + 2 * pad - kh) // stride + 1
    wo = (w + 2 * pad - kw) // stride + 1
    cols = []
    for di in range(kh):
        for dj in range(kw):
            cols.append(xp[:, di:di + stride * ho:stride, dj:dj + stride * wo:stride, :])
    patches = jnp.stack(cols, axis=-1)                 # (n, ho, wo, c, kh*kw)
    patches = patches.reshape(n * ho * wo, c * kh * kw)
    return patches, ho, wo


# -------------------------------------------------------------------------- full forward
def discriminator_forward(x_nchw, params, in_size=3, ndf=16, eps=1e-5):
    x = jnp.transpose(x_nchw, (0, 2, 3, 1)).astype(jnp.bfloat16)   # NCHW -> NHWC, bf16
    n = x.shape[0]

    def conv(y, w, stride, pad, act, with_stats):
        cout, cin, kh, kw = w.shape
        # TODO(synk): lower im2col into the GEMM kernel (per-tap shifted-window DMAs) to
        # avoid materializing the ~4x-duplicated bf16 patches array in HBM.
        patches, ho, wo = im2col(y, kh, kw, stride, pad)
        wmat = w.reshape(cout, cin * kh * kw).T        # [K, C_out]
        return gemm_fused(patches, wmat, act=act, with_stats=with_stats), ho, wo

    # layer 1: Conv(in_size->ndf, 4,2,1, bias=False) + LeakyReLU(0.2), fused in GEMM epilogue
    y, ho, wo = conv(x, params["w1"], 2, 1, "leaky", False)
    x = y.reshape(n, ho, wo, ndf)

    # layers 2-4: Conv + BatchNorm (training-mode batch stats, fused into GEMM) + LeakyReLU
    for idx, c_out in zip((2, 3, 4), (2 * ndf, 4 * ndf, 8 * ndf)):
        (y, s, s2), ho, wo = conv(x, params[f"w{idx}"], 2, 1, "none", True)
        m = jnp.float32(y.shape[0])                    # true row count (padded rows sum to 0)
        mean = s / m
        var = jnp.maximum(s2 / m - mean * mean, 0.0)   # biased variance (PyTorch training BN)
        gamma = params[f"bn{idx}_gamma"]
        beta = params[f"bn{idx}_beta"]
        scale = gamma / jnp.sqrt(var + eps)
        shift = beta - mean * scale
        y = affine_leaky(y, scale.reshape(1, -1).astype(jnp.float32),
                         shift.reshape(1, -1).astype(jnp.float32))
        x = y.reshape(n, ho, wo, c_out)

    # layer 5: Conv(8*ndf -> 1, 4,1,0, bias=False) + Sigmoid  (lane-dense matvec kernel)
    patches, ho, wo = im2col(x, 4, 4, 1, 0)
    out = matvec_sigmoid(patches, params["w5"].reshape(-1))
    out = out.reshape(n, ho, wo, 1)
    return jnp.transpose(out, (0, 3, 1, 2)).astype(jnp.float32)    # back to NCHW


# --------------------------------------------------------------------------- param init
def init_params(key, in_size=3, ndf=16):
    ks = jax.random.split(key, 5)
    w = lambda k, co, ci: 0.02 * jax.random.normal(k, (co, ci, 4, 4), jnp.float32)
    p = {
        "w1": w(ks[0], ndf, in_size),
        "w2": w(ks[1], 2 * ndf, ndf),
        "w3": w(ks[2], 4 * ndf, 2 * ndf),
        "w4": w(ks[3], 8 * ndf, 4 * ndf),
        "w5": w(ks[4], 1, 8 * ndf),
    }
    for idx, c in zip((2, 3, 4), (2 * ndf, 4 * ndf, 8 * ndf)):
        p[f"bn{idx}_gamma"] = jnp.ones((c,), jnp.float32)   # PyTorch BN default init
        p[f"bn{idx}_beta"] = jnp.zeros((c,), jnp.float32)
    return p


# ------------------------------------------------------------------ pure-JAX f32 reference
def ref_forward(x, p, eps=1e-5):
    conv = lambda x, w, s, pd: jax.lax.conv_general_dilated(
        x, w, (s, s), [(pd, pd), (pd, pd)], dimension_numbers=("NCHW", "OIHW", "NCHW"))

    def bn(x):
        mean = jnp.mean(x, axis=(0, 2, 3), keepdims=True)
        var = jnp.mean((x - mean) ** 2, axis=(0, 2, 3), keepdims=True)
        return (x - mean) / jnp.sqrt(var + eps)

    lrelu = lambda x: jnp.where(x >= 0, x, 0.2 * x)
    y = lrelu(conv(x, p["w1"], 2, 1))
    y = lrelu(bn(conv(y, p["w2"], 2, 1)))
    y = lrelu(bn(conv(y, p["w3"], 2, 1)))
    y = lrelu(bn(conv(y, p["w4"], 2, 1)))
    return jax.nn.sigmoid(conv(y, p["w5"], 1, 0))


if __name__ == "__main__":
    IN_SIZE, NDF = 3, 16          # small ndf for the demo; module default is 128
    key = jax.random.PRNGKey(0)
    kx, kp = jax.random.split(key)
    x = jax.random.normal(kx, (2, IN_SIZE, 64, 64), jnp.float32)   # NCHW, 64x64 (DCGAN size)
    params = init_params(kp, IN_SIZE, NDF)

    fwd = jax.jit(functools.partial(discriminator_forward, in_size=IN_SIZE, ndf=NDF))
    out = jax.block_until_ready(fwd(x, params))
    assert out.shape == (2, 1, 1, 1), out.shape

    ref = jax.block_until_ready(ref_forward(x, params))
    err = float(jnp.max(jnp.abs(out - ref)))
    # bf16 MXU operands / bf16 activations -> looser tolerance than pure-f32 path.
    assert err < 3e-2, f"mismatch vs f32 reference: {err}"

    print("KERNEL_OK")
</pallas_src>

<mosaic_0001>
module attributes {stable_mosaic.version = 11 : i64} {
  func.func @_gemm_kernel(%arg0: i32, %arg1: i32, %arg2: i32, %arg3: memref<512x48xbf16, #tpu.memory_space<vmem>>, %arg4: memref<48x16xbf16, #tpu.memory_space<vmem>>, %arg5: memref<512x16xbf16, #tpu.memory_space<vmem>>, %arg6: memref<512x16xf32, #tpu.memory_space<vmem>>) attributes {dimension_semantics = [#tpu.dimension_semantics<parallel>, #tpu.dimension_semantics<parallel>, #tpu.dimension_semantics<arbitrary>], iteration_bounds = array<i64: 4, 1, 1>, scalar_prefetch = 0 : i64, scratch_operands = 1 : i64, tpu.core_type = #tpu.core_type<tc>, window_params = [{transform_indices = @transform_0, window_bounds = array<i64: 512, 48>}, {transform_indices = @transform_1, window_bounds = array<i64: 48, 16>}, {transform_indices = @transform_2, window_bounds = array<i64: 512, 16>}]} {
    %c0_i32 = arith.constant 0 : i32
    %0 = arith.cmpi eq, %arg2, %c0_i32 : i32
    %1 = arith.extui %0 : i1 to i32
    %c0_i32_0 = arith.constant 0 : i32
    %2 = arith.cmpi ne, %1, %c0_i32_0 : i32
    scf.if %2 {
      %cst_10 = arith.constant 0.000000e+00 : f32
      %12 = vector.broadcast %cst_10 : f32 to vector<512x16xf32>
      %c0_11 = arith.constant 0 : index
      %c0_12 = arith.constant 0 : index
      %13 = vector.load %arg6[%c0_11, %c0_12] : memref<512x16xf32, #tpu.memory_space<vmem>>, vector<512x16xf32>
      tpu.vector_store %arg6[%c0_11, %c0_12], %12 {strides = array<i32>} : memref<512x16xf32, #tpu.memory_space<vmem>>, vector<512x16xf32>,
    } else {
    }
    %c0 = arith.constant 0 : index
    %c0_1 = arith.constant 0 : index
    %3 = vector.load %arg6[%c0, %c0_1] : memref<512x16xf32, #tpu.memory_space<vmem>>, vector<512x16xf32>
    %c0_2 = arith.constant 0 : index
    %c0_3 = arith.constant 0 : index
    %4 = vector.load %arg3[%c0_2, %c0_3] : memref<512x48xbf16, #tpu.memory_space<vmem>>, vector<512x48xbf16>
    %c0_4 = arith.constant 0 : index
    %c0_5 = arith.constant 0 : index
    %5 = vector.load %arg4[%c0_4, %c0_5] : memref<48x16xbf16, #tpu.memory_space<vmem>>, vector<48x16xbf16>
    %cst = arith.constant dense<0.000000e+00> : vector<512x16xf32>
    %6 = tpu.matmul %4, %5, %cst {dimension_numbers = #tpu.dot_dimension_numbers<[1], [0], [0], [1], [0, 0, 1, 1], [], []>} : vector<512x48xbf16>, vector<48x16xbf16>, vector<512x16xf32> -> vector<512x16xf32>
    %7 = arith.addf %3, %6 : vector<512x16xf32>
    %c0_6 = arith.constant 0 : index
    %c0_7 = arith.constant 0 : index
    %8 = vector.load %arg6[%c0_6, %c0_7] : memref<512x16xf32, #tpu.memory_space<vmem>>, vector<512x16xf32>
    tpu.vector_store %arg6[%c0_6, %c0_7], %7 {strides = array<i32>} : memref<512x16xf32, #tpu.memory_space<vmem>>, vector<512x16xf32>,
    %c0_i32_8 = arith.constant 0 : i32
    %9 = arith.cmpi eq, %arg2, %c0_i32_8 : i32
    %10 = arith.extui %9 : i1 to i32
    %c0_i32_9 = arith.constant 0 : i32
    %11 = arith.cmpi ne, %10, %c0_i32_9 : i32
    scf.if %11 {
      %c0_10 = arith.constant 0 : index
      %c0_11 = arith.constant 0 : index
      %12 = vector.load %arg6[%c0_10, %c0_11] : memref<512x16xf32, #tpu.memory_space<vmem>>, vector<512x16xf32>
      %cst_12 = arith.constant 0.000000e+00 : f32
      %13 = vector.broadcast %cst_12 : f32 to vector<512x16xf32>
      %14 = arith.cmpf oge, %12, %13 : vector<512x16xf32>
      %cst_13 = arith.constant 2.000000e-01 : f32
      %15 = vector.broadcast %cst_13 : f32 to vector<512x16xf32>
      %16 = arith.mulf %15, %12 : vector<512x16xf32>
      %17 = arith.select %14, %12, %16 : vector<512x16xi1>, vector<512x16xf32>
      %18 = arith.truncf %17 : vector<512x16xf32> to vector<512x16xbf16>
      %c0_14 = arith.constant 0 : index
      %c0_15 = arith.constant 0 : index
      %19 = vector.load %arg5[%c0_14, %c0_15] : memref<512x16xbf16, #tpu.memory_space<vmem>>, vector<512x16xbf16>
      tpu.vector_store %arg5[%c0_14, %c0_15], %18 {strides = array<i32>} : memref<512x16xbf16, #tpu.memory_space<vmem>>, vector<512x16xbf16>,
    } else {
    }
    return
  }
  func.func @transform_0(%arg0: i32, %arg1: i32, %arg2: i32) -> (i32, i32) {
    %c0_i32 = arith.constant 0 : i32
    return %arg0, %arg2 : i32, i32
  }
  func.func @transform_1(%arg0: i32, %arg1: i32, %arg2: i32) -> (i32, i32) {
    %c0_i32 = arith.constant 0 : i32
    return %arg2, %arg1 : i32, i32
  }
  func.func @transform_2(%arg0: i32, %arg1: i32, %arg2: i32) -> (i32, i32) {
    %c0_i32 = arith.constant 0 : i32
    return %arg0, %arg1 : i32, i32
  }
}

module attributes {stable_mosaic.version = 11 : i64} {
  func.func @_gemm_kernel(%arg0: i32, %arg1: i32, %arg2: i32, %arg3: memref<512x256xbf16, #tpu.memory_space<vmem>>, %arg4: memref<256x32xbf16, #tpu.memory_space<vmem>>, %arg5: memref<512x32xbf16, #tpu.memory_space<vmem>>, %arg6: memref<1x1x32xf32, #tpu.memory_space<vmem>>, %arg7: memref<1x1x32xf32, #tpu.memory_space<vmem>>, %arg8: memref<512x32xf32, #tpu.memory_space<vmem>>) attributes {dimension_semantics = [#tpu.dimension_semantics<parallel>, #tpu.dimension_semantics<parallel>, #tpu.dimension_semantics<arbitrary>], iteration_bounds = array<i64: 1, 1, 1>, scalar_prefetch = 0 : i64, scratch_operands = 1 : i64, tpu.core_type = #tpu.core_type<tc>, window_params = [{transform_indices = @transform_0, window_bounds = array<i64: 512, 256>}, {transform_indices = @transform_1, window_bounds = array<i64: 256, 32>}, {transform_indices = @transform_2, window_bounds = array<i64: 512, 32>}, {transform_indices = @transform_3, window_bounds = array<i64: 1, 1, 32>}, {transform_indices = @transform_4, window_bounds = array<i64: 1, 1, 32>}]} {
    %c0_i32 = arith.constant 0 : i32
    %0 = arith.cmpi eq, %arg2, %c0_i32 : i32
    %1 = arith.extui %0 : i1 to i32
    %c0_i32_0 = arith.constant 0 : i32
    %2 = arith.cmpi ne, %1, %c0_i32_0 : i32
    scf.if %2 {
      %cst_10 = arith.constant 0.000000e+00 : f32
      %12 = vector.broadcast %cst_10 : f32 to vector<512x32xf32>
      %c0_11 = arith.constant 0 : index
      %c0_12 = arith.constant 0 : index
      %13 = vector.load %arg8[%c0_11, %c0_12] : memref<512x32xf32, #tpu.memory_space<vmem>>, vector<512x32xf32>
      tpu.vector_store %arg8[%c0_11, %c0_12], %12 {strides = array<i32>} : memref<512x32xf32, #tpu.memory_space<vmem>>, vector<512x32xf32>,
    } else {
    }
    %c0 = arith.constant 0 : index
    %c0_1 = arith.constant 0 : index
    %3 = vector.load %arg8[%c0, %c0_1] : memref<512x32xf32, #tpu.memory_space<vmem>>, vector<512x32xf32>
    %c0_2 = arith.constant 0 : index
    %c0_3 = arith.constant 0 : index
    %4 = vector.load %arg3[%c0_2, %c0_3] : memref<512x256xbf16, #tpu.memory_space<vmem>>, vector<512x256xbf16>
    %c0_4 = arith.constant 0 : index
    %c0_5 = arith.constant 0 : index
    %5 = vector.load %arg4[%c0_4, %c0_5] : memref<256x32xbf16, #tpu.memory_space<vmem>>, vector<256x32xbf16>
    %cst = arith.constant dense<0.000000e+00> : vector<512x32xf32>
    %6 = tpu.matmul %4, %5, %cst {dimension_numbers = #tpu.dot_dimension_numbers<[1], [0], [0], [1], [0, 0, 1, 1], [], []>} : vector<512x256xbf16>, vector<256x32xbf16>, vector<512x32xf32> -> vector<512x32xf32>
    %7 = arith.addf %3, %6 : vector<512x32xf32>
    %c0_6 = arith.constant 0 : index
    %c0_7 = arith.constant 0 : index
    %8 = vector.load %arg8[%c0_6, %c0_7] : memref<512x32xf32, #tpu.memory_space<vmem>>, vector<512x32xf32>
    tpu.vector_store %arg8[%c0_6, %c0_7], %7 {strides = array<i32>} : memref<512x32xf32, #tpu.memory_space<vmem>>, vector<512x32xf32>,
    %c0_i32_8 = arith.constant 0 : i32
    %9 = arith.cmpi eq, %arg2, %c0_i32_8 : i32
    %10 = arith.extui %9 : i1 to i32
    %c0_i32_9 = arith.constant 0 : i32
    %11 = arith.cmpi ne, %10, %c0_i32_9 : i32
    scf.if %11 {
      %c0_10 = arith.constant 0 : index
      %c0_11 = arith.constant 0 : index
      %12 = vector.load %arg8[%c0_10, %c0_11] : memref<512x32xf32, #tpu.memory_space<vmem>>, vector<512x32xf32>
      %13 = arith.truncf %12 : vector<512x32xf32> to vector<512x32xbf16>
      %c0_12 = arith.constant 0 : index
      %c0_13 = arith.constant 0 : index
      %14 = vector.load %arg5[%c0_12, %c0_13] : memref<512x32xbf16, #tpu.memory_space<vmem>>, vector<512x32xbf16>
      tpu.vector_store %arg5[%c0_12, %c0_13], %13 {strides = array<i32>} : memref<512x32xbf16, #tpu.memory_space<vmem>>, vector<512x32xbf16>,
      %cst_14 = arith.constant dense<0.000000e+00> : vector<32xf32>
      %15 = vector.multi_reduction <add>, %12, %cst_14 [0] : vector<512x32xf32> to vector<32xf32>
      %16 = vector.shape_cast %15 : vector<32xf32> to vector<1x32xf32>
      %17 = vector.shape_cast %16 : vector<1x32xf32> to vector<1x1x32xf32>
      %c0_15 = arith.constant 0 : index
      %c0_16 = arith.constant 0 : index
      %c0_17 = arith.constant 0 : index
      %18 = vector.load %arg6[%c0_15, %c0_16, %c0_17] : memref<1x1x32xf32, #tpu.memory_space<vmem>>, vector<1x1x32xf32>
      tpu.vector_store %arg6[%c0_15, %c0_16, %c0_17], %17 {strides = array<i32>} : memref<1x1x32xf32, #tpu.memory_space<vmem>>, vector<1x1x32xf32>,
      %19 = arith.mulf %12, %12 : vector<512x32xf32>
      %cst_18 = arith.constant dense<0.000000e+00> : vector<32xf32>
      %20 = vector.multi_reduction <add>, %19, %cst_18 [0] : vector<512x32xf32> to vector<32xf32>
      %21 = vector.shape_cast %20 : vector<32xf32> to vector<1x32xf32>
      %22 = vector.shape_cast %21 : vector<1x32xf32> to vector<1x1x32xf32>
      %c0_19 = arith.constant 0 : index
      %c0_20 = arith.constant 0 : index
      %c0_21 = arith.constant 0 : index
      %23 = vector.load %arg7[%c0_19, %c0_20, %c0_21] : memref<1x1x32xf32, #tpu.memory_space<vmem>>, vector<1x1x32xf32>
      tpu.vector_store %arg7[%c0_19, %c0_20, %c0_21], %22 {strides = array<i32>} : memref<1x1x32xf32, #tpu.memory_space<vmem>>, vector<1x1x32xf32>,
    } else {
    }
    return
  }
  func.func @transform_0(%arg0: i32, %arg1: i32, %arg2: i32) -> (i32, i32) {
    %c0_i32 = arith.constant 0 : i32
    return %arg0, %arg2 : i32, i32
  }
  func.func @transform_1(%arg0: i32, %arg1: i32, %arg2: i32) -> (i32, i32) {
    %c0_i32 = arith.constant 0 : i32
    return %arg2, %arg1 : i32, i32
  }
  func.func @transform_2(%arg0: i32, %arg1: i32, %arg2: i32) -> (i32, i32) {
    %c0_i32 = arith.constant 0 : i32
    return %arg0, %arg1 : i32, i32
  }
  func.func @transform_3(%arg0: i32, %arg1: i32, %arg2: i32) -> (i32, i32, i32) {
    %c0_i32 = arith.constant 0 : i32
    %c0_i32_0 = arith.constant 0 : i32
    return %arg0, %c0_i32, %arg1 : i32, i32, i32
  }
  func.func @transform_4(%arg0: i32, %arg1: i32, %arg2: i32) -> (i32, i32, i32) {
    %c0_i32 = arith.constant 0 : i32
    %c0_i32_0 = arith.constant 0 : i32
    return %arg0, %c0_i32, %arg1 : i32, i32, i32
  }
}

module attributes {stable_mosaic.version = 11 : i64} {
  func.func @_affine_leaky_kernel(%arg0: i32, %arg1: memref<512x32xbf16, #tpu.memory_space<vmem>>, %arg2: memref<1x32xf32, #tpu.memory_space<vmem>>, %arg3: memref<1x32xf32, #tpu.memory_space<vmem>>, %arg4: memref<512x32xbf16, #tpu.memory_space<vmem>>) attributes {dimension_semantics = [#tpu.dimension_semantics<parallel>], iteration_bounds = array<i64: 1>, scalar_prefetch = 0 : i64, scratch_operands = 0 : i64, tpu.core_type = #tpu.core_type<tc>, window_params = [{transform_indices = @transform_0, window_bounds = array<i64: 512, 32>}, {pipeline_mode = #tpu.pipeline_mode<synchronous>, transform_indices = @transform_1, window_bounds = array<i64: 1, 32>}, {pipeline_mode = #tpu.pipeline_mode<synchronous>, transform_indices = @transform_2, window_bounds = array<i64: 1, 32>}, {transform_indices = @transform_3, window_bounds = array<i64: 512, 32>}]} {
    %c0 = arith.constant 0 : index
    %c0_0 = arith.constant 0 : index
    %0 = vector.load %arg1[%c0, %c0_0] : memref<512x32xbf16, #tpu.memory_space<vmem>>, vector<512x32xbf16>
    %1 = arith.extf %0 : vector<512x32xbf16> to vector<512x32xf32>
    %c0_1 = arith.constant 0 : index
    %c0_2 = arith.constant 0 : index
    %2 = vector.load %arg2[%c0_1, %c0_2] : memref<1x32xf32, #tpu.memory_space<vmem>>, vector<1x32xf32>
    %3 = vector.broadcast %2 : vector<1x32xf32> to vector<512x32xf32>
    %4 = arith.mulf %1, %3 : vector<512x32xf32>
    %c0_3 = arith.constant 0 : index
    %c0_4 = arith.constant 0 : index
    %5 = vector.load %arg3[%c0_3, %c0_4] : memref<1x32xf32, #tpu.memory_space<vmem>>, vector<1x32xf32>
    %6 = vector.broadcast %5 : vector<1x32xf32> to vector<512x32xf32>
    %7 = arith.addf %4, %6 : vector<512x32xf32>
    %cst = arith.constant 0.000000e+00 : f32
    %8 = vector.broadcast %cst : f32 to vector<512x32xf32>
    %9 = arith.cmpf oge, %7, %8 : vector<512x32xf32>
    %cst_5 = arith.constant 2.000000e-01 : f32
    %10 = vector.broadcast %cst_5 : f32 to vector<512x32xf32>
    %11 = arith.mulf %10, %7 : vector<512x32xf32>
    %12 = arith.select %9, %7, %11 : vector<512x32xi1>, vector<512x32xf32>
    %13 = arith.truncf %12 : vector<512x32xf32> to vector<512x32xbf16>
    %c0_6 = arith.constant 0 : index
    %c0_7 = arith.constant 0 : index
    %14 = vector.load %arg4[%c0_6, %c0_7] : memref<512x32xbf16, #tpu.memory_space<vmem>>, vector<512x32xbf16>
    tpu.vector_store %arg4[%c0_6, %c0_7], %13 {strides = array<i32>} : memref<512x32xbf16, #tpu.memory_space<vmem>>, vector<512x32xbf16>,
    return
  }
  func.func @transform_0(%arg0: i32) -> (i32, i32) {
    %c0_i32 = arith.constant 0 : i32
    %c0_i32_0 = arith.constant 0 : i32
    return %arg0, %c0_i32 : i32, i32
  }
  func.func @transform_1(%arg0: i32) -> (i32, i32) {
    %c0_i32 = arith.constant 0 : i32
    %c0_i32_0 = arith.constant 0 : i32
    %c0_i32_1 = arith.constant 0 : i32
    return %c0_i32, %c0_i32_0 : i32, i32
  }
  func.func @transform_2(%arg0: i32) -> (i32, i32) {
    %c0_i32 = arith.constant 0 : i32
    %c0_i32_0 = arith.constant 0 : i32
    %c0_i32_1 = arith.constant 0 : i32
    return %c0_i32, %c0_i32_0 : i32, i32
  }
  func.func @transform_3(%arg0: i32) -> (i32, i32) {
    %c0_i32 = arith.constant 0 : i32
    %c0_i32_0 = arith.constant 0 : i32
    return %arg0, %c0_i32 : i32, i32
  }
}

module attributes {stable_mosaic.version = 11 : i64} {
  func.func @_gemm_kernel(%arg0: i32, %arg1: i32, %arg2: i32, %arg3: memref<128x512xbf16, #tpu.memory_space<vmem>>, %arg4: memref<512x64xbf16, #tpu.memory_space<vmem>>, %arg5: memref<128x64xbf16, #tpu.memory_space<vmem>>, %arg6: memref<1x1x64xf32, #tpu.memory_space<vmem>>, %arg7: memref<1x1x64xf32, #tpu.memory_space<vmem>>, %arg8: memref<128x64xf32, #tpu.memory_space<vmem>>) attributes {dimension_semantics = [#tpu.dimension_semantics<parallel>, #tpu.dimension_semantics<parallel>, #tpu.dimension_semantics<arbitrary>], iteration_bounds = array<i64: 1, 1, 1>, scalar_prefetch = 0 : i64, scratch_operands = 1 : i64, tpu.core_type = #tpu.core_type<tc>, window_params = [{transform_indices = @transform_0, window_bounds = array<i64: 128, 512>}, {transform_indices = @transform_1, window_bounds = array<i64: 512, 64>}, {transform_indices = @transform_2, window_bounds = array<i64: 128, 64>}, {transform_indices = @transform_3, window_bounds = array<i64: 1, 1, 64>}, {transform_indices = @transform_4, window_bounds = array<i64: 1, 1, 64>}]} {
    %c0_i32 = arith.constant 0 : i32
    %0 = arith.cmpi eq, %arg2, %c0_i32 : i32
    %1 = arith.extui %0 : i1 to i32
    %c0_i32_0 = arith.constant 0 : i32
    %2 = arith.cmpi ne, %1, %c0_i32_0 : i32
    scf.if %2 {
      %cst_10 = arith.constant 0.000000e+00 : f32
      %12 = vector.broadcast %cst_10 : f32 to vector<128x64xf32>
      %c0_11 = arith.constant 0 : index
      %c0_12 = arith.constant 0 : index
      %13 = vector.load %arg8[%c0_11, %c0_12] : memref<128x64xf32, #tpu.memory_space<vmem>>, vector<128x64xf32>
      tpu.vector_store %arg8[%c0_11, %c0_12], %12 {strides = array<i32>} : memref<128x64xf32, #tpu.memory_space<vmem>>, vector<128x64xf32>,
    } else {
    }
    %c0 = arith.constant 0 : index
    %c0_1 = arith.constant 0 : index
    %3 = vector.load %arg8[%c0, %c0_1] : memref<128x64xf32, #tpu.memory_space<vmem>>, vector<128x64xf32>
    %c0_2 = arith.constant 0 : index
    %c0_3 = arith.constant 0 : index
    %4 = vector.load %arg3[%c0_2, %c0_3] : memref<128x512xbf16, #tpu.memory_space<vmem>>, vector<128x512xbf16>
    %c0_4 = arith.constant 0 : index
    %c0_5 = arith.constant 0 : index
    %5 = vector.load %arg4[%c0_4, %c0_5] : memref<512x64xbf16, #tpu.memory_space<vmem>>, vector<512x64xbf16>
    %cst = arith.constant dense<0.000000e+00> : vector<128x64xf32>
    %6 = tpu.matmul %4, %5, %cst {dimension_numbers = #tpu.dot_dimension_numbers<[1], [0], [0], [1], [0, 0, 1, 1], [], []>} : vector<128x512xbf16>, vector<512x64xbf16>, vector<128x64xf32> -> vector<128x64xf32>
    %7 = arith.addf %3, %6 : vector<128x64xf32>
    %c0_6 = arith.constant 0 : index
    %c0_7 = arith.constant 0 : index
    %8 = vector.load %arg8[%c0_6, %c0_7] : memref<128x64xf32, #tpu.memory_space<vmem>>, vector<128x64xf32>
    tpu.vector_store %arg8[%c0_6, %c0_7], %7 {strides = array<i32>} : memref<128x64xf32, #tpu.memory_space<vmem>>, vector<128x64xf32>,
    %c0_i32_8 = arith.constant 0 : i32
    %9 = arith.cmpi eq, %arg2, %c0_i32_8 : i32
    %10 = arith.extui %9 : i1 to i32
    %c0_i32_9 = arith.constant 0 : i32
    %11 = arith.cmpi ne, %10, %c0_i32_9 : i32
    scf.if %11 {
      %c0_10 = arith.constant 0 : index
      %c0_11 = arith.constant 0 : index
      %12 = vector.load %arg8[%c0_10, %c0_11] : memref<128x64xf32, #tpu.memory_space<vmem>>, vector<128x64xf32>
      %13 = arith.truncf %12 : vector<128x64xf32> to vector<128x64xbf16>
      %c0_12 = arith.constant 0 : index
      %c0_13 = arith.constant 0 : index
      %14 = vector.load %arg5[%c0_12, %c0_13] : memref<128x64xbf16, #tpu.memory_space<vmem>>, vector<128x64xbf16>
      tpu.vector_store %arg5[%c0_12, %c0_13], %13 {strides = array<i32>} : memref<128x64xbf16, #tpu.memory_space<vmem>>, vector<128x64xbf16>,
      %cst_14 = arith.constant dense<0.000000e+00> : vector<64xf32>
      %15 = vector.multi_reduction <add>, %12, %cst_14 [0] : vector<128x64xf32> to vector<64xf32>
      %16 = vector.shape_cast %15 : vector<64xf32> to vector<1x64xf32>
      %17 = vector.shape_cast %16 : vector<1x64xf32> to vector<1x1x64xf32>
      %c0_15 = arith.constant 0 : index
      %c0_16 = arith.constant 0 : index
      %c0_17 = arith.constant 0 : index
      %18 = vector.load %arg6[%c0_15, %c0_16, %c0_17] : memref<1x1x64xf32, #tpu.memory_space<vmem>>, vector<1x1x64xf32>
      tpu.vector_store %arg6[%c0_15, %c0_16, %c0_17], %17 {strides = array<i32>} : memref<1x1x64xf32, #tpu.memory_space<vmem>>, vector<1x1x64xf32>,
      %19 = arith.mulf %12, %12 : vector<128x64xf32>
      %cst_18 = arith.constant dense<0.000000e+00> : vector<64xf32>
      %20 = vector.multi_reduction <add>, %19, %cst_18 [0] : vector<128x64xf32> to vector<64xf32>
      %21 = vector.shape_cast %20 : vector<64xf32> to vector<1x64xf32>
      %22 = vector.shape_cast %21 : vector<1x64xf32> to vector<1x1x64xf32>
      %c0_19 = arith.constant 0 : index
      %c0_20 = arith.constant 0 : index
      %c0_21 = arith.constant 0 : index
      %23 = vector.load %arg7[%c0_19, %c0_20, %c0_21] : memref<1x1x64xf32, #tpu.memory_space<vmem>>, vector<1x1x64xf32>
      tpu.vector_store %arg7[%c0_19, %c0_20, %c0_21], %22 {strides = array<i32>} : memref<1x1x64xf32, #tpu.memory_space<vmem>>, vector<1x1x64xf32>,
    } else {
    }
    return
  }
  func.func @transform_0(%arg0: i32, %arg1: i32, %arg2: i32) -> (i32, i32) {
    %c0_i32 = arith.constant 0 : i32
    return %arg0, %arg2 : i32, i32
  }
  func.func @transform_1(%arg0: i32, %arg1: i32, %arg2: i32) -> (i32, i32) {
    %c0_i32 = arith.constant 0 : i32
    return %arg2, %arg1 : i32, i32
  }
  func.func @transform_2(%arg0: i32, %arg1: i32, %arg2: i32) -> (i32, i32) {
    %c0_i32 = arith.constant 0 : i32
    return %arg0, %arg1 : i32, i32
  }
  func.func @transform_3(%arg0: i32, %arg1: i32, %arg2: i32) -> (i32, i32, i32) {
    %c0_i32 = arith.constant 0 : i32
    %c0_i32_0 = arith.constant 0 : i32
    return %arg0, %c0_i32, %arg1 : i32, i32, i32
  }
  func.func @transform_4(%arg0: i32, %arg1: i32, %arg2: i32) -> (i32, i32, i32) {
    %c0_i32 = arith.constant 0 : i32
    %c0_i32_0 = arith.constant 0 : i32
    return %arg0, %c0_i32, %arg1 : i32, i32, i32
  }
}

module attributes {stable_mosaic.version = 11 : i64} {
  func.func @_affine_leaky_kernel(%arg0: i32, %arg1: memref<128x64xbf16, #tpu.memory_space<vmem>>, %arg2: memref<1x64xf32, #tpu.memory_space<vmem>>, %arg3: memref<1x64xf32, #tpu.memory_space<vmem>>, %arg4: memref<128x64xbf16, #tpu.memory_space<vmem>>) attributes {dimension_semantics = [#tpu.dimension_semantics<parallel>], iteration_bounds = array<i64: 1>, scalar_prefetch = 0 : i64, scratch_operands = 0 : i64, tpu.core_type = #tpu.core_type<tc>, window_params = [{transform_indices = @transform_0, window_bounds = array<i64: 128, 64>}, {pipeline_mode = #tpu.pipeline_mode<synchronous>, transform_indices = @transform_1, window_bounds = array<i64: 1, 64>}, {pipeline_mode = #tpu.pipeline_mode<synchronous>, transform_indices = @transform_2, window_bounds = array<i64: 1, 64>}, {transform_indices = @transform_3, window_bounds = array<i64: 128, 64>}]} {
    %c0 = arith.constant 0 : index
    %c0_0 = arith.constant 0 : index
    %0 = vector.load %arg1[%c0, %c0_0] : memref<128x64xbf16, #tpu.memory_space<vmem>>, vector<128x64xbf16>
    %1 = arith.extf %0 : vector<128x64xbf16> to vector<128x64xf32>
    %c0_1 = arith.constant 0 : index
    %c0_2 = arith.constant 0 : index
    %2 = vector.load %arg2[%c0_1, %c0_2] : memref<1x64xf32, #tpu.memory_space<vmem>>, vector<1x64xf32>
    %3 = vector.broadcast %2 : vector<1x64xf32> to vector<128x64xf32>
    %4 = arith.mulf %1, %3 : vector<128x64xf32>
    %c0_3 = arith.constant 0 : index
    %c0_4 = arith.constant 0 : index
    %5 = vector.load %arg3[%c0_3, %c0_4] : memref<1x64xf32, #tpu.memory_space<vmem>>, vector<1x64xf32>
    %6 = vector.broadcast %5 : vector<1x64xf32> to vector<128x64xf32>
    %7 = arith.addf %4, %6 : vector<128x64xf32>
    %cst = arith.constant 0.000000e+00 : f32
    %8 = vector.broadcast %cst : f32 to vector<128x64xf32>
    %9 = arith.cmpf oge, %7, %8 : vector<128x64xf32>
    %cst_5 = arith.constant 2.000000e-01 : f32
    %10 = vector.broadcast %cst_5 : f32 to vector<128x64xf32>
    %11 = arith.mulf %10, %7 : vector<128x64xf32>
    %12 = arith.select %9, %7, %11 : vector<128x64xi1>, vector<128x64xf32>
    %13 = arith.truncf %12 : vector<128x64xf32> to vector<128x64xbf16>
    %c0_6 = arith.constant 0 : index
    %c0_7 = arith.constant 0 : index
    %14 = vector.load %arg4[%c0_6, %c0_7] : memref<128x64xbf16, #tpu.memory_space<vmem>>, vector<128x64xbf16>
    tpu.vector_store %arg4[%c0_6, %c0_7], %13 {strides = array<i32>} : memref<128x64xbf16, #tpu.memory_space<vmem>>, vector<128x64xbf16>,
    return
  }
  func.func @transform_0(%arg0: i32) -> (i32, i32) {
    %c0_i32 = arith.constant 0 : i32
    %c0_i32_0 = arith.constant 0 : i32
    return %arg0, %c0_i32 : i32, i32
  }
  func.func @transform_1(%arg0: i32) -> (i32, i32) {
    %c0_i32 = arith.constant 0 : i32
    %c0_i32_0 = arith.constant 0 : i32
    %c0_i32_1 = arith.constant 0 : i32
    return %c0_i32, %c0_i32_0 : i32, i32
  }
  func.func @transform_2(%arg0: i32) -> (i32, i32) {
    %c0_i32 = arith.constant 0 : i32
    %c0_i32_0 = arith.constant 0 : i32
    %c0_i32_1 = arith.constant 0 : i32
    return %c0_i32, %c0_i32_0 : i32, i32
  }
  func.func @transform_3(%arg0: i32) -> (i32, i32) {
    %c0_i32 = arith.constant 0 : i32
    %c0_i32_0 = arith.constant 0 : i32
    return %arg0, %c0_i32 : i32, i32
  }
}

module attributes {stable_mosaic.version = 11 : i64} {
  func.func @_gemm_kernel(%arg0: i32, %arg1: i32, %arg2: i32, %arg3: memref<32x1024xbf16, #tpu.memory_space<vmem>>, %arg4: memref<1024x128xbf16, #tpu.memory_space<vmem>>, %arg5: memref<32x128xbf16, #tpu.memory_space<vmem>>, %arg6: memref<1x1x128xf32, #tpu.memory_space<vmem>>, %arg7: memref<1x1x128xf32, #tpu.memory_space<vmem>>, %arg8: memref<32x128xf32, #tpu.memory_space<vmem>>) attributes {dimension_semantics = [#tpu.dimension_semantics<parallel>, #tpu.dimension_semantics<parallel>, #tpu.dimension_semantics<arbitrary>], iteration_bounds = array<i64: 1, 1, 1>, scalar_prefetch = 0 : i64, scratch_operands = 1 : i64, tpu.core_type = #tpu.core_type<tc>, window_params = [{transform_indices = @transform_0, window_bounds = array<i64: 32, 1024>}, {transform_indices = @transform_1, window_bounds = array<i64: 1024, 128>}, {transform_indices = @transform_2, window_bounds = array<i64: 32, 128>}, {transform_indices = @transform_3, window_bounds = array<i64: 1, 1, 128>}, {transform_indices = @transform_4, window_bounds = array<i64: 1, 1, 128>}]} {
    %c0_i32 = arith.constant 0 : i32
    %0 = arith.cmpi eq, %arg2, %c0_i32 : i32
    %1 = arith.extui %0 : i1 to i32
    %c0_i32_0 = arith.constant 0 : i32
    %2 = arith.cmpi ne, %1, %c0_i32_0 : i32
    scf.if %2 {
      %cst_10 = arith.constant 0.000000e+00 : f32
      %12 = vector.broadcast %cst_10 : f32 to vector<32x128xf32>
      %c0_11 = arith.constant 0 : index
      %c0_12 = arith.constant 0 : index
      %13 = vector.load %arg8[%c0_11, %c0_12] : memref<32x128xf32, #tpu.memory_space<vmem>>, vector<32x128xf32>
      tpu.vector_store %arg8[%c0_11, %c0_12], %12 {strides = array<i32>} : memref<32x128xf32, #tpu.memory_space<vmem>>, vector<32x128xf32>,
    } else {
    }
    %c0 = arith.constant 0 : index
    %c0_1 = arith.constant 0 : index
    %3 = vector.load %arg8[%c0, %c0_1] : memref<32x128xf32, #tpu.memory_space<vmem>>, vector<32x128xf32>
    %c0_2 = arith.constant 0 : index
    %c0_3 = arith.constant 0 : index
    %4 = vector.load %arg3[%c0_2, %c0_3] : memref<32x1024xbf16, #tpu.memory_space<vmem>>, vector<32x1024xbf16>
    %c0_4 = arith.constant 0 : index
    %c0_5 = arith.constant 0 : index
    %5 = vector.load %arg4[%c0_4, %c0_5] : memref<1024x128xbf16, #tpu.memory_space<vmem>>, vector<1024x128xbf16>
    %cst = arith.constant dense<0.000000e+00> : vector<32x128xf32>
    %6 = tpu.matmul %4, %5, %cst {dimension_numbers = #tpu.dot_dimension_numbers<[1], [0], [0], [1], [0, 0, 1, 1], [], []>} : vector<32x1024xbf16>, vector<1024x128xbf16>, vector<32x128xf32> -> vector<32x128xf32>
    %7 = arith.addf %3, %6 : vector<32x128xf32>
    %c0_6 = arith.constant 0 : index
    %c0_7 = arith.constant 0 : index
    %8 = vector.load %arg8[%c0_6, %c0_7] : memref<32x128xf32, #tpu.memory_space<vmem>>, vector<32x128xf32>
    tpu.vector_store %arg8[%c0_6, %c0_7], %7 {strides = array<i32>} : memref<32x128xf32, #tpu.memory_space<vmem>>, vector<32x128xf32>,
    %c0_i32_8 = arith.constant 0 : i32
    %9 = arith.cmpi eq, %arg2, %c0_i32_8 : i32
    %10 = arith.extui %9 : i1 to i32
    %c0_i32_9 = arith.constant 0 : i32
    %11 = arith.cmpi ne, %10, %c0_i32_9 : i32
    scf.if %11 {
      %c0_10 = arith.constant 0 : index
      %c0_11 = arith.constant 0 : index
      %12 = vector.load %arg8[%c0_10, %c0_11] : memref<32x128xf32, #tpu.memory_space<vmem>>, vector<32x128xf32>
      %13 = arith.truncf %12 : vector<32x128xf32> to vector<32x128xbf16>
      %c0_12 = arith.constant 0 : index
      %c0_13 = arith.constant 0 : index
      %14 = vector.load %arg5[%c0_12, %c0_13] : memref<32x128xbf16, #tpu.memory_space<vmem>>, vector<32x128xbf16>
      tpu.vector_store %arg5[%c0_12, %c0_13], %13 {strides = array<i32>} : memref<32x128xbf16, #tpu.memory_space<vmem>>, vector<32x128xbf16>,
      %cst_14 = arith.constant dense<0.000000e+00> : vector<128xf32>
      %15 = vector.multi_reduction <add>, %12, %cst_14 [0] : vector<32x128xf32> to vector<128xf32>
      %16 = vector.shape_cast %15 : vector<128xf32> to vector<1x128xf32>
      %17 = vector.shape_cast %16 : vector<1x128xf32> to vector<1x1x128xf32>
      %c0_15 = arith.constant 0 : index
      %c0_16 = arith.constant 0 : index
      %c0_17 = arith.constant 0 : index
      %18 = vector.load %arg6[%c0_15, %c0_16, %c0_17] : memref<1x1x128xf32, #tpu.memory_space<vmem>>, vector<1x1x128xf32>
      tpu.vector_store %arg6[%c0_15, %c0_16, %c0_17], %17 {strides = array<i32>} : memref<1x1x128xf32, #tpu.memory_space<vmem>>, vector<1x1x128xf32>,
      %19 = arith.mulf %12, %12 : vector<32x128xf32>
      %cst_18 = arith.constant dense<0.000000e+00> : vector<128xf32>
      %20 = vector.multi_reduction <add>, %19, %cst_18 [0] : vector<32x128xf32> to vector<128xf32>
      %21 = vector.shape_cast %20 : vector<128xf32> to vector<1x128xf32>
      %22 = vector.shape_cast %21 : vector<1x128xf32> to vector<1x1x128xf32>
      %c0_19 = arith.constant 0 : index
      %c0_20 = arith.constant 0 : index
      %c0_21 = arith.constant 0 : index
      %23 = vector.load %arg7[%c0_19, %c0_20, %c0_21] : memref<1x1x128xf32, #tpu.memory_space<vmem>>, vector<1x1x128xf32>
      tpu.vector_store %arg7[%c0_19, %c0_20, %c0_21], %22 {strides = array<i32>} : memref<1x1x128xf32, #tpu.memory_space<vmem>>, vector<1x1x128xf32>,
    } else {
    }
    return
  }
  func.func @transform_0(%arg0: i32, %arg1: i32, %arg2: i32) -> (i32, i32) {
    %c0_i32 = arith.constant 0 : i32
    return %arg0, %arg2 : i32, i32
  }
  func.func @transform_1(%arg0: i32, %arg1: i32, %arg2: i32) -> (i32, i32) {
    %c0_i32 = arith.constant 0 : i32
    return %arg2, %arg1 : i32, i32
  }
  func.func @transform_2(%arg0: i32, %arg1: i32, %arg2: i32) -> (i32, i32) {
    %c0_i32 = arith.constant 0 : i32
    return %arg0, %arg1 : i32, i32
  }
  func.func @transform_3(%arg0: i32, %arg1: i32, %arg2: i32) -> (i32, i32, i32) {
    %c0_i32 = arith.constant 0 : i32
    %c0_i32_0 = arith.constant 0 : i32
    return %arg0, %c0_i32, %arg1 : i32, i32, i32
  }
  func.func @transform_4(%arg0: i32, %arg1: i32, %arg2: i32) -> (i32, i32, i32) {
    %c0_i32 = arith.constant 0 : i32
    %c0_i32_0 = arith.constant 0 : i32
    return %arg0, %c0_i32, %arg1 : i32, i32, i32
  }
}

module attributes {stable_mosaic.version = 11 : i64} {
  func.func @_affine_leaky_kernel(%arg0: i32, %arg1: memref<32x128xbf16, #tpu.memory_space<vmem>>, %arg2: memref<1x128xf32, #tpu.memory_space<vmem>>, %arg3: memref<1x128xf32, #tpu.memory_space<vmem>>, %arg4: memref<32x128xbf16, #tpu.memory_space<vmem>>) attributes {dimension_semantics = [#tpu.dimension_semantics<parallel>], iteration_bounds = array<i64: 1>, scalar_prefetch = 0 : i64, scratch_operands = 0 : i64, tpu.core_type = #tpu.core_type<tc>, window_params = [{transform_indices = @transform_0, window_bounds = array<i64: 32, 128>}, {pipeline_mode = #tpu.pipeline_mode<synchronous>, transform_indices = @transform_1, window_bounds = array<i64: 1, 128>}, {pipeline_mode = #tpu.pipeline_mode<synchronous>, transform_indices = @transform_2, window_bounds = array<i64: 1, 128>}, {transform_indices = @transform_3, window_bounds = array<i64: 32, 128>}]} {
    %c0 = arith.constant 0 : index
    %c0_0 = arith.constant 0 : index
    %0 = vector.load %arg1[%c0, %c0_0] : memref<32x128xbf16, #tpu.memory_space<vmem>>, vector<32x128xbf16>
    %1 = arith.extf %0 : vector<32x128xbf16> to vector<32x128xf32>
    %c0_1 = arith.constant 0 : index
    %c0_2 = arith.constant 0 : index
    %2 = vector.load %arg2[%c0_1, %c0_2] : memref<1x128xf32, #tpu.memory_space<vmem>>, vector<1x128xf32>
    %3 = vector.broadcast %2 : vector<1x128xf32> to vector<32x128xf32>
    %4 = arith.mulf %1, %3 : vector<32x128xf32>
    %c0_3 = arith.constant 0 : index
    %c0_4 = arith.constant 0 : index
    %5 = vector.load %arg3[%c0_3, %c0_4] : memref<1x128xf32, #tpu.memory_space<vmem>>, vector<1x128xf32>
    %6 = vector.broadcast %5 : vector<1x128xf32> to vector<32x128xf32>
    %7 = arith.addf %4, %6 : vector<32x128xf32>
    %cst = arith.constant 0.000000e+00 : f32
    %8 = vector.broadcast %cst : f32 to vector<32x128xf32>
    %9 = arith.cmpf oge, %7, %8 : vector<32x128xf32>
    %cst_5 = arith.constant 2.000000e-01 : f32
    %10 = vector.broadcast %cst_5 : f32 to vector<32x128xf32>
    %11 = arith.mulf %10, %7 : vector<32x128xf32>
    %12 = arith.select %9, %7, %11 : vector<32x128xi1>, vector<32x128xf32>
    %13 = arith.truncf %12 : vector<32x128xf32> to vector<32x128xbf16>
    %c0_6 = arith.constant 0 : index
    %c0_7 = arith.constant 0 : index
    %14 = vector.load %arg4[%c0_6, %c0_7] : memref<32x128xbf16, #tpu.memory_space<vmem>>, vector<32x128xbf16>
    tpu.vector_store %arg4[%c0_6, %c0_7], %13 {strides = array<i32>} : memref<32x128xbf16, #tpu.memory_space<vmem>>, vector<32x128xbf16>,
    return
  }
  func.func @transform_0(%arg0: i32) -> (i32, i32) {
    %c0_i32 = arith.constant 0 : i32
    %c0_i32_0 = arith.constant 0 : i32
    return %arg0, %c0_i32 : i32, i32
  }
  func.func @transform_1(%arg0: i32) -> (i32, i32) {
    %c0_i32 = arith.constant 0 : i32
    %c0_i32_0 = arith.constant 0 : i32
    %c0_i32_1 = arith.constant 0 : i32
    return %c0_i32, %c0_i32_0 : i32, i32
  }
  func.func @transform_2(%arg0: i32) -> (i32, i32) {
    %c0_i32 = arith.constant 0 : i32
    %c0_i32_0 = arith.constant 0 : i32
    %c0_i32_1 = arith.constant 0 : i32
    return %c0_i32, %c0_i32_0 : i32, i32
  }
  func.func @transform_3(%arg0: i32) -> (i32, i32) {
    %c0_i32 = arith.constant 0 : i32
    %c0_i32_0 = arith.constant 0 : i32
    return %arg0, %c0_i32 : i32, i32
  }
}

module attributes {stable_mosaic.version = 11 : i64} {
  func.func @_matvec_sigmoid_kernel(%arg0: i32, %arg1: memref<8x2048xbf16, #tpu.memory_space<vmem>>, %arg2: memref<1x2048xf32, #tpu.memory_space<vmem>>, %arg3: memref<8x1xf32, #tpu.memory_space<vmem>>) attributes {dimension_semantics = [#tpu.dimension_semantics<parallel>], iteration_bounds = array<i64: 1>, scalar_prefetch = 0 : i64, scratch_operands = 0 : i64, tpu.core_type = #tpu.core_type<tc>, window_params = [{transform_indices = @transform_0, window_bounds = array<i64: 8, 2048>}, {pipeline_mode = #tpu.pipeline_mode<synchronous>, transform_indices = @transform_1, window_bounds = array<i64: 1, 2048>}, {transform_indices = @transform_2, window_bounds = array<i64: 8, 1>}]} {
    %c0 = arith.constant 0 : index
    %c0_0 = arith.constant 0 : index
    %0 = vector.load %arg1[%c0, %c0_0] : memref<8x2048xbf16, #tpu.memory_space<vmem>>, vector<8x2048xbf16>
    %1 = arith.extf %0 : vector<8x2048xbf16> to vector<8x2048xf32>
    %c0_1 = arith.constant 0 : index
    %c0_2 = arith.constant 0 : index
    %2 = vector.load %arg2[%c0_1, %c0_2] : memref<1x2048xf32, #tpu.memory_space<vmem>>, vector<1x2048xf32>
    %3 = vector.broadcast %2 : vector<1x2048xf32> to vector<8x2048xf32>
    %4 = arith.mulf %1, %3 : vector<8x2048xf32>
    %cst = arith.constant dense<0.000000e+00> : vector<8xf32>
    %5 = vector.multi_reduction <add>, %4, %cst [1] : vector<8x2048xf32> to vector<8xf32>
    %6 = vector.shape_cast %5 : vector<8xf32> to vector<8x1xf32>
    %7 = arith.negf %6 : vector<8x1xf32>
    %8 = math.exp %7 : vector<8x1xf32>
    %cst_3 = arith.constant 1.000000e+00 : f32
    %9 = vector.broadcast %cst_3 : f32 to vector<8x1xf32>
    %10 = arith.addf %9, %8 : vector<8x1xf32>
    %11 = arith.divf %9, %10 : vector<8x1xf32>
    %c0_4 = arith.constant 0 : index
    %c0_5 = arith.constant 0 : index
    %12 = vector.load %arg3[%c0_4, %c0_5] : memref<8x1xf32, #tpu.memory_space<vmem>>, vector<8x1xf32>
    tpu.vector_store %arg3[%c0_4, %c0_5], %11 {strides = array<i32>} : memref<8x1xf32, #tpu.memory_space<vmem>>, vector<8x1xf32>,
    return
  }
  func.func @transform_0(%arg0: i32) -> (i32, i32) {
    %c0_i32 = arith.constant 0 : i32
    %c0_i32_0 = arith.constant 0 : i32
    return %arg0, %c0_i32 : i32, i32
  }
  func.func @transform_1(%arg0: i32) -> (i32, i32) {
    %c0_i32 = arith.constant 0 : i32
    %c0_i32_0 = arith.constant 0 : i32
    %c0_i32_1 = arith.constant 0 : i32
    return %c0_i32, %c0_i32_0 : i32, i32
  }
  func.func @transform_2(%arg0: i32) -> (i32, i32) {
    %c0_i32 = arith.constant 0 : i32
    %c0_i32_0 = arith.constant 0 : i32
    return %arg0, %c0_i32 : i32, i32
  }
}

</mosaic_0001>

<llo_original>
// kernel: discriminator_forward.8
$region0: #{discriminator_forward.8}
  #allocation0 [shape = 'u32[]', space=smem, size = 0x4, offset = 0x4, fixed_abs, tag = 'smem constant byte address 0x4 - core index']
  #allocation1 [shape = 'u32[144,128]{1,0:T(1,128)}', space=vmem, size = 0x12000, scoped, tag = 'internal scratch']
  #allocation2 [shape = 'f32[512,16]{1,0:T(8,128)}', space=vmem, size = 0x40000, scoped, tag = 'scratch operand']
  %s0 = inlined_call_operand.vmem [shape: bf16[2048,48], index: 0, kind: input, shape index: {}]
  %s1 = inlined_call_operand.vmem [shape: bf16[48,16], index: 1, kind: input, shape index: {}]
  %s2 = inlined_call_operand.vmem [shape: bf16[2048,16], index: 2, kind: output, shape index: {}]
  %s3 = sld [smem:[#allocation0]]
  $region49: #{discriminator_forward.8} parent=0
    _
  %s5 = ssub.s32 1, %s3
  %s6 = scalar_select 0, %s5, %s3
  loop: start=0, step=1, limit=6
  $region2: #{discriminator_forward.8} parent=0 // loop_pre_header
    _
  $region3: #{discriminator_forward.8} parent=0 // loop_header
    %s8 = sphi 0, %s12
    %p9 = scmp.ge.s32.totalorder %s8, 6
    %s15 = sphi 0, %s34
    %s16 = sphi 0, %s30
    %s17 = sphi 0, %s26
    %s18 = sphi 0, %s15
    %s19 = sphi 0, %s16
    %s20 = sphi 0, %s17
    %s21 = sphi 0, %s18
    %s22 = sphi 0, %s19
    %s23 = sphi 0, %s20
    %s39 = sphi 0, %s41
    %s42 = sphi 0, %s39
    %s43 = sphi 0, %s42
    %s59 = sphi 0, %s43
    %s67 = sphi 0, %s69
    %s70 = sphi 0, %s67
    %s71 = sphi 0, %s70
    %s87 = sphi 0, %s71
    %s95 = sphi 0, %s97
    %s98 = sphi 0, %s95
    %s99 = sphi 0, %s98
    %s115 = sphi 0, %s99
  $region4: #{discriminator_forward.8} parent=0 // loop_header_branch
    %11 = sbr.rel (%p9) target = $region8
  $region5: #{discriminator_forward.8} parent=0 // loop_body
    %s13 = ssub.s32 %s8, 1
    %s14 = ssub.s32 %s8, 2
    %s24 = sadd.s32 1, %s17
    %p25 = scmp.ge.s32.totalorder %s24, 1
    %s26 = scalar_select %p25, 0, %s24
    %s27 = sadd.s32 1, %s16
    %s28 = scalar_select %p25, %s27, %s16
    %p29 = scmp.ge.s32.totalorder %s28, 1
    %s30 = scalar_select %p29, 0, %s28
    %s31 = sadd.s32 1, %s15
    %s32 = scalar_select %p29, %s31, %s15
    %p33 = scmp.ge.s32.totalorder %s32, 4
    %s34 = scalar_select %p33, 0, %s32
    %s35 = ssub.s32 %s15, %s34
    %s36 = ssub.s32 %s17, %s26
    %s37 = sor.u32 %s35, %s36
    %p38 = scmp.eq.s32.totalorder %s37, 0
    %s40 = sadd.s32 %s39, 1
    %s41 = scalar_select %p38, %s39, %s40
    %p44 = pneg %p38
    %p45 = scmp.eq.s32.totalorder %s8, 3
    %p46 = por %p44, %p45
    %p47 = scmp.ne.s32.totalorder %s39, %s42
    %p48 = scmp.eq.s32.totalorder %s8, 0
    %p49 = por %p47, %p48
    %p50 = scmp.ne.s32.totalorder %s39, %s42
    %p51 = scmp.eq.s32.totalorder %s13, 3
    %p52 = por %p50, %p51
    %p53 = scmp.ne.s32.totalorder %s42, %s43
    %p54 = scmp.eq.s32.totalorder %s13, 0
    %p55 = por %p53, %p54
    %p56 = scmp.ne.s32.totalorder %s42, %s43
    %p57 = scmp.eq.s32.totalorder %s14, 3
    %p58 = por %p56, %p57
    %p60 = scmp.ne.s32.totalorder %s43, %s59
    %p61 = scmp.eq.s32.totalorder %s14, 0
    %p62 = por %p60, %p61
    %s63 = ssub.s32 %s17, %s26
    %s64 = ssub.s32 %s16, %s30
    %s65 = sor.u32 %s63, %s64
    %p66 = scmp.eq.s32.totalorder %s65, 0
    %s68 = sadd.s32 %s67, 1
    %s69 = scalar_select %p66, %s67, %s68
    %p72 = pneg %p66
    %p73 = scmp.eq.s32.totalorder %s8, 3
    %p74 = por %p72, %p73
    %p75 = scmp.ne.s32.totalorder %s67, %s70
    %p76 = scmp.eq.s32.totalorder %s8, 0
    %p77 = por %p75, %p76
    %p78 = scmp.ne.s32.totalorder %s67, %s70
    %p79 = scmp.eq.s32.totalorder %s13, 3
    %p80 = por %p78, %p79
    %p81 = scmp.ne.s32.totalorder %s70, %s71
    %p82 = scmp.eq.s32.totalorder %s13, 0
    %p83 = por %p81, %p82
    %p84 = scmp.ne.s32.totalorder %s70, %s71
    %p85 = scmp.eq.s32.totalorder %s14, 3
    %p86 = por %p84, %p85
    %p88 = scmp.ne.s32.totalorder %s71, %s87
    %p89 = scmp.eq.s32.totalorder %s14, 0
    %p90 = por %p88, %p89
    %s91 = ssub.s32 %s15, %s34
    %s92 = ssub.s32 %s16, %s30
    %s93 = sor.u32 %s91, %s92
    %p94 = scmp.eq.s32.totalorder %s93, 0
    %s96 = sadd.s32 %s95, 1
    %s97 = scalar_select %p94, %s95, %s96
    %p100 = pneg %p94
    %p101 = scmp.eq.s32.totalorder %s8, 3
    %p102 = por %p100, %p101
    %p103 = scmp.ne.s32.totalorder %s95, %s98
    %p104 = scmp.eq.s32.totalorder %s8, 0
    %p105 = por %p103, %p104
    %p106 = scmp.ne.s32.totalorder %s95, %s98
    %p107 = scmp.eq.s32.totalorder %s13, 3
    %p108 = por %p106, %p107
    %p109 = scmp.ne.s32.totalorder %s98, %s99
    %p110 = scmp.eq.s32.totalorder %s13, 0
    %p111 = por %p109, %p110
    %p112 = scmp.ne.s32.totalorder %s98, %s99
    %p113 = scmp.eq.s32.totalorder %s14, 3
    %p114 = por %p112, %p113
    %p116 = scmp.ne.s32.totalorder %s99, %s115
    %p117 = scmp.eq.s32.totalorder %s14, 0
    %p118 = por %p116, %p117
    %p119 = scmp.le.s32.totalorder 1, %s8
    %p120 = scmp.lt.s32.totalorder %s8, 5
    %p121 = pnand %p119, %p120
    %p122 = pneg %p121
    // Predicated region
    $region9: #{discriminator_forward.8} parent=5 // pred_check
      _
    $region10: #{discriminator_forward.8} parent=5 // pred_check_branch
      %124 = sbr.rel (%p121) target = $region12
    $region11: #{discriminator_forward.8} parent=5 // pred_region
      %s125 = ssub.s32 %s8, 1
      // Predicated region
      $region13: #{discriminator_forward.8} parent=11 // pred_check
        %p126 = pneg %p83
      $region14: #{discriminator_forward.8} parent=11 // pred_check_branch
        %128 = sbr.rel (%p126) target = $region16
      $region15: #{discriminator_forward.8} parent=11 // pred_region
        %s129 = smul.u32 6, %s20
        %p130 = scmp.lt.s32.totalorder %s129, 5
        %s131 = scalar_select %p130, %s129, 5
        %p132 = scmp.lt.s32.totalorder %s19, 0
        %s133 = scalar_select %p132, %s19, 0
        %s134 = sadd.s32 %s133, %s131
        %s135 = smul.addr %s134, 4
        %s136 = scalar_lea.vmem %s1, %s135
        %s137 = smul.u32 6, %s20
      $region16: #{discriminator_forward.8} parent=11 // pred_fallthru
        _
    $region12: #{discriminator_forward.8} parent=5 // pred_fallthru
      _
    %p138 = scmp.lt.s32.totalorder %s8, 4
    // Predicated region
    $region17: #{discriminator_forward.8} parent=5 // pred_check
      %p139 = pneg %p138
    $region18: #{discriminator_forward.8} parent=5 // pred_check_branch
      %141 = sbr.rel (%p139) target = $region20
    $region19: #{discriminator_forward.8} parent=5 // pred_region
      // Predicated region
      $region21: #{discriminator_forward.8} parent=19 // pred_check
        %p142 = pneg %p49
      $region22: #{discriminator_forward.8} parent=19 // pred_check_branch
        %144 = sbr.rel (%p142) target = $region24
      $region23: #{discriminator_forward.8} parent=19 // pred_region
        %s145 = smul.u32 64, %s15
        %p146 = scmp.lt.s32.totalorder %s145, 255
        %s147 = scalar_select %p146, %s145, 255
        %p148 = scmp.lt.s32.totalorder %s17, 0
        %s149 = scalar_select %p148, %s17, 0
        %s150 = sadd.s32 %s149, %s147
        %s151 = smul.addr %s150, 4
        %s152 = scalar_lea.vmem %s0, %s151
        %s153 = smul.u32 64, %s15
      $region24: #{discriminator_forward.8} parent=19 // pred_fallthru
        _
    $region20: #{discriminator_forward.8} parent=5 // pred_fallthru
      _
    %p154 = scmp.le.s32.totalorder 1, %s8
    %p155 = scmp.lt.s32.totalorder %s8, 5
    %p156 = pnand %p154, %p155
    %p157 = pneg %p156
    // Predicated region
    $region25: #{discriminator_forward.8} parent=5 // pred_check
      _
    $region26: #{discriminator_forward.8} parent=5 // pred_check_branch
      %159 = sbr.rel (%p156) target = $region28
    $region27: #{discriminator_forward.8} parent=5 // pred_region
      %s160 = ssub.s32 %s8, 1
      %s161 = smul.u32 64, %s18
      %p162 = scmp.lt.s32.totalorder %s161, 255
      %s163 = scalar_select %p162, %s161, 255
      %p164 = scmp.lt.s32.totalorder %s20, 0
      %s165 = scalar_select %p164, %s20, 0
      %s166 = sadd.s32 %s165, %s163
      %s167 = smul.addr %s166, 4
      %s168 = scalar_lea.vmem %s0, %s167
      %p169 = pneg %p55
      %p170 = pneg %p52
      %s171 = smul.u32 6, %s20
      %p172 = scmp.lt.s32.totalorder %s171, 5
      %s173 = scalar_select %p172, %s171, 5
      %p174 = scmp.lt.s32.totalorder %s19, 0
      %s175 = scalar_select %p174, %s19, 0
      %s176 = sadd.s32 %s175, %s173
      %s177 = smul.addr %s176, 4
      %s178 = scalar_lea.vmem %s1, %s177
      %p179 = pneg %p83
      %p180 = pneg %p80
      %p181 = pneg %p111
      %p182 = pneg %p108
      %s183 = smul.u32 64, %s18
      %p184 = scmp.lt.s32.totalorder %s183, 255
      %s185 = scalar_select %p184, %s183, 255
      %p186 = scmp.lt.s32.totalorder %s19, 0
      %s187 = scalar_select %p186, %s19, 0
      %s188 = sadd.s32 %s187, %s185
      %s189 = smul.addr %s188, 4
      %s190 = scalar_lea.vmem %s2, %s189
      %s191 = smul.u32 64, %s18
      %p192 = scmp.lt.s32.totalorder %s191, 255
      %s193 = scalar_select %p192, %s191, 255
      %p194 = scmp.lt.s32.totalorder %s20, 0
      %s195 = scalar_select %p194, %s20, 0
      %s196 = sadd.s32 %s195, %s193
      %s197 = smul.addr %s196, 4
      %s198 = scalar_lea.vmem %s0, %s197
      %s199 = smul.u32 64, %s18
      %s200 = smul.u32 6, %s20
      %p201 = scmp.lt.s32.totalorder %s200, 5
      %s202 = scalar_select %p201, %s200, 5
      %p203 = scmp.lt.s32.totalorder %s19, 0
      %s204 = scalar_select %p203, %s19, 0
      %s205 = sadd.s32 %s204, %s202
      %s206 = smul.addr %s205, 4
      %s207 = scalar_lea.vmem %s1, %s206
      %s208 = smul.u32 6, %s20
      %s209 = smul.u32 64, %s18
      %p210 = scmp.lt.s32.totalorder %s209, 255
      %s211 = scalar_select %p210, %s209, 255
      %p212 = scmp.lt.s32.totalorder %s19, 0
      %s213 = scalar_select %p212, %s19, 0
      %s214 = sadd.s32 %s213, %s211
      %s215 = smul.addr %s214, 4
      %s216 = scalar_lea.vmem %s2, %s215
      %s217 = smul.u32 64, %s18
      %p219 = scmp.eq.s32.totalorder %s20, 0
      // Predicated region
      $region29: #{discriminator_forward.8} parent=27 // pred_check
        %p220 = pneg %p219
      $region30: #{discriminator_forward.8} parent=27 // pred_check_branch
        %222 = sbr.rel (%p220) target = $region32
      $region31: #{discriminator_forward.8} parent=27 // pred_region
        %vm223 = vcmask 130048
        %224 = vst.msk [vmem:[#allocation2] sm:$0xff] %vm223, 0.0
        %225 = vst.msk [vmem:[#allocation2 + $0x8] sm:$0xff] %vm223, 0.0
        %226 = vst.msk [vmem:[#allocation2 + $0x10] sm:$0xff] %vm223, 0.0
        %227 = vst.msk [vmem:[#allocation2 + $0x18] sm:$0xff] %vm223, 0.0
        %228 = vst.msk [vmem:[#allocation2 + $0x20] sm:$0xff] %vm223, 0.0
        %229 = vst.msk [vmem:[#allocation2 + $0x28] sm:$0xff] %vm223, 0.0
        %230 = vst.msk [vmem:[#allocation2 + $0x30] sm:$0xff] %vm223, 0.0
        %231 = vst.msk [vmem:[#allocation2 + $0x38] sm:$0xff] %vm223, 0.0
        %232 = vst.msk [vmem:[#allocation2 + $0x40] sm:$0xff] %vm223, 0.0
        %233 = vst.msk [vmem:[#allocation2 + $0x48] sm:$0xff] %vm223, 0.0
        %234 = vst.msk [vmem:[#allocation2 + $0x50] sm:$0xff] %vm223, 0.0
        %235 = vst.msk [vmem:[#allocation2 + $0x58] sm:$0xff] %vm223, 0.0
        %236 = vst.msk [vmem:[#allocation2 + $0x60] sm:$0xff] %vm223, 0.0
        %237 = vst.msk [vmem:[#allocation2 + $0x68] sm:$0xff] %vm223, 0.0
        %238 = vst.msk [vmem:[#allocation2 + $0x70] sm:$0xff] %vm223, 0.0
        %239 = vst.msk [vmem:[#allocation2 + $0x78] sm:$0xff] %vm223, 0.0
        %240 = vst.msk [vmem:[#allocation2 + $0x80] sm:$0xff] %vm223, 0.0
        %241 = vst.msk [vmem:[#allocation2 + $0x88] sm:$0xff] %vm223, 0.0
        %242 = vst.msk [vmem:[#allocation2 + $0x90] sm:$0xff] %vm223, 0.0
        %243 = vst.msk [vmem:[#allocation2 + $0x98] sm:$0xff] %vm223, 0.0
        %244 = vst.msk [vmem:[#allocation2 + $0xa0] sm:$0xff] %vm223, 0.0
        %245 = vst.msk [vmem:[#allocation2 + $0xa8] sm:$0xff] %vm223, 0.0
        %246 = vst.msk [vmem:[#allocation2 + $0xb0] sm:$0xff] %vm223, 0.0
        %247 = vst.msk [vmem:[#allocation2 + $0xb8] sm:$0xff] %vm223, 0.0
        %248 = vst.msk [vmem:[#allocation2 + $0xc0] sm:$0xff] %vm223, 0.0
        %249 = vst.msk [vmem:[#allocation2 + $0xc8] sm:$0xff] %vm223, 0.0
        %250 = vst.msk [vmem:[#allocation2 + $0xd0] sm:$0xff] %vm223, 0.0
        %251 = vst.msk [vmem:[#allocation2 + $0xd8] sm:$0xff] %vm223, 0.0
        %252 = vst.msk [vmem:[#allocation2 + $0xe0] sm:$0xff] %vm223, 0.0
        %253 = vst.msk [vmem:[#allocation2 + $0xe8] sm:$0xff] %vm223, 0.0
        %254 = vst.msk [vmem:[#allocation2 + $0xf0] sm:$0xff] %vm223, 0.0
        %255 = vst.msk [vmem:[#allocation2 + $0xf8] sm:$0xff] %vm223, 0.0
        %256 = vst.msk [vmem:[#allocation2 + $0x100] sm:$0xff] %vm223, 0.0
        %257 = vst.msk [vmem:[#allocation2 + $0x108] sm:$0xff] %vm223, 0.0
        %258 = vst.msk [vmem:[#allocation2 + $0x110] sm:$0xff] %vm223, 0.0
        %259 = vst.msk [vmem:[#allocation2 + $0x118] sm:$0xff] %vm223, 0.0
        %260 = vst.msk [vmem:[#allocation2 + $0x120] sm:$0xff] %vm223, 0.0
        %261 = vst.msk [vmem:[#allocation2 + $0x128] sm:$0xff] %vm223, 0.0
        %262 = vst.msk [vmem:[#allocation2 + $0x130] sm:$0xff] %vm223, 0.0
        %263 = vst.msk [vmem:[#allocation2 + $0x138] sm:$0xff] %vm223, 0.0
        %264 = vst.msk [vmem:[#allocation2 + $0x140] sm:$0xff] %vm223, 0.0
        %265 = vst.msk [vmem:[#allocation2 + $0x148] sm:$0xff] %vm223, 0.0
        %266 = vst.msk [vmem:[#allocation2 + $0x150] sm:$0xff] %vm223, 0.0
        %267 = vst.msk [vmem:[#allocation2 + $0x158] sm:$0xff] %vm223, 0.0
        %268 = vst.msk [vmem:[#allocation2 + $0x160] sm:$0xff] %vm223, 0.0
        %269 = vst.msk [vmem:[#allocation2 + $0x168] sm:$0xff] %vm223, 0.0
        %270 = vst.msk [vmem:[#allocation2 + $0x170] sm:$0xff] %vm223, 0.0
        %271 = vst.msk [vmem:[#allocation2 + $0x178] sm:$0xff] %vm223, 0.0
        %272 = vst.msk [vmem:[#allocation2 + $0x180] sm:$0xff] %vm223, 0.0
        %273 = vst.msk [vmem:[#allocation2 + $0x188] sm:$0xff] %vm223, 0.0
        %274 = vst.msk [vmem:[#allocation2 + $0x190] sm:$0xff] %vm223, 0.0
        %275 = vst.msk [vmem:[#allocation2 + $0x198] sm:$0xff] %vm223, 0.0
        %276 = vst.msk [vmem:[#allocation2 + $0x1a0] sm:$0xff] %vm223, 0.0
        %277 = vst.msk [vmem:[#allocation2 + $0x1a8] sm:$0xff] %vm223, 0.0
        %278 = vst.msk [vmem:[#allocation2 + $0x1b0] sm:$0xff] %vm223, 0.0
        %279 = vst.msk [vmem:[#allocation2 + $0x1b8] sm:$0xff] %vm223, 0.0
        %280 = vst.msk [vmem:[#allocation2 + $0x1c0] sm:$0xff] %vm223, 0.0
        %281 = vst.msk [vmem:[#allocation2 + $0x1c8] sm:$0xff] %vm223, 0.0
        %282 = vst.msk [vmem:[#allocation2 + $0x1d0] sm:$0xff] %vm223, 0.0
        %283 = vst.msk [vmem:[#allocation2 + $0x1d8] sm:$0xff] %vm223, 0.0
        %284 = vst.msk [vmem:[#allocation2 + $0x1e0] sm:$0xff] %vm223, 0.0
        %285 = vst.msk [vmem:[#allocation2 + $0x1e8] sm:$0xff] %vm223, 0.0
        %286 = vst.msk [vmem:[#allocation2 + $0x1f0] sm:$0xff] %vm223, 0.0
        %287 = vst.msk [vmem:[#allocation2 + $0x1f8] sm:$0xff] %vm223, 0.0
      $region32: #{discriminator_forward.8} parent=27 // pred_fallthru
        _
      %v288 = vld [vmem:[#allocation2] sm:$0xff]
      %v289 = vld [vmem:[#allocation2 + $0x8] sm:$0xff]
      %v290 = vld [vmem:[#allocation2 + $0x10] sm:$0xff]
      %v291 = vld [vmem:[#allocation2 + $0x18] sm:$0xff]
      %v292 = vld [vmem:[#allocation2 + $0x20] sm:$0xff]
      %v293 = vld [vmem:[#allocation2 + $0x28] sm:$0xff]
      %v294 = vld [vmem:[#allocation2 + $0x30] sm:$0xff]
      %v295 = vld [vmem:[#allocation2 + $0x38] sm:$0xff]
      %v296 = vld [vmem:[#allocation2 + $0x40] sm:$0xff]
      %v297 = vld [vmem:[#allocation2 + $0x48] sm:$0xff]
      %v298 = vld [vmem:[#allocation2 + $0x50] sm:$0xff]
      %v299 = vld [vmem:[#allocation2 + $0x58] sm:$0xff]
      %v300 = vld [vmem:[#allocation2 + $0x60] sm:$0xff]
      %v301 = vld [vmem:[#allocation2 + $0x68] sm:$0xff]
      %v302 = vld [vmem:[#allocation2 + $0x70] sm:$0xff]
      %v303 = vld [vmem:[#allocation2 + $0x78] sm:$0xff]
      %v304 = vld [vmem:[#allocation2 + $0x80] sm:$0xff]
      %v305 = vld [vmem:[#allocation2 + $0x88] sm:$0xff]
      %v306 = vld [vmem:[#allocation2 + $0x90] sm:$0xff]
      %v307 = vld [vmem:[#allocation2 + $0x98] sm:$0xff]
      %v308 = vld [vmem:[#allocation2 + $0xa0] sm:$0xff]
      %v309 = vld [vmem:[#allocation2 + $0xa8] sm:$0xff]
      %v310 = vld [vmem:[#allocation2 + $0xb0] sm:$0xff]
      %v311 = vld [vmem:[#allocation2 + $0xb8] sm:$0xff]
      %v312 = vld [vmem:[#allocation2 + $0xc0] sm:$0xff]
      %v313 = vld [vmem:[#allocation2 + $0xc8] sm:$0xff]
      %v314 = vld [vmem:[#allocation2 + $0xd0] sm:$0xff]
      %v315 = vld [vmem:[#allocation2 + $0xd8] sm:$0xff]
      %v316 = vld [vmem:[#allocation2 + $0xe0] sm:$0xff]
      %v317 = vld [vmem:[#allocation2 + $0xe8] sm:$0xff]
      %v318 = vld [vmem:[#allocation2 + $0xf0] sm:$0xff]
      %v319 = vld [vmem:[#allocation2 + $0xf8] sm:$0xff]
      %v320 = vld [vmem:[#allocation2 + $0x100] sm:$0xff]
      %v321 = vld [vmem:[#allocation2 + $0x108] sm:$0xff]
      %v322 = vld [vmem:[#allocation2 + $0x110] sm:$0xff]
      %v323 = vld [vmem:[#allocation2 + $0x118] sm:$0xff]
      %v324 = vld [vmem:[#allocation2 + $0x120] sm:$0xff]
      %v325 = vld [vmem:[#allocation2 + $0x128] sm:$0xff]
      %v326 = vld [vmem:[#allocation2 + $0x130] sm:$0xff]
      %v327 = vld [vmem:[#allocation2 + $0x138] sm:$0xff]
      %v328 = vld [vmem:[#allocation2 + $0x140] sm:$0xff]
      %v329 = vld [vmem:[#allocation2 + $0x148] sm:$0xff]
      %v330 = vld [vmem:[#allocation2 + $0x150] sm:$0xff]
      %v331 = vld [vmem:[#allocation2 + $0x158] sm:$0xff]
      %v332 = vld [vmem:[#allocation2 + $0x160] sm:$0xff]
      %v333 = vld [vmem:[#allocation2 + $0x168] sm:$0xff]
      %v334 = vld [vmem:[#allocation2 + $0x170] sm:$0xff]
      %v335 = vld [vmem:[#allocation2 + $0x178] sm:$0xff]
      %v336 = vld [vmem:[#allocation2 + $0x180] sm:$0xff]
      %v337 = vld [vmem:[#allocation2 + $0x188] sm:$0xff]
      %v338 = vld [vmem:[#allocation2 + $0x190] sm:$0xff]
      %v339 = vld [vmem:[#allocation2 + $0x198] sm:$0xff]
      %v340 = vld [vmem:[#allocation2 + $0x1a0] sm:$0xff]
      %v341 = vld [vmem:[#allocation2 + $0x1a8] sm:$0xff]
      %v342 = vld [vmem:[#allocation2 + $0x1b0] sm:$0xff]
      %v343 = vld [vmem:[#allocation2 + $0x1b8] sm:$0xff]
      %v344 = vld [vmem:[#allocation2 + $0x1c0] sm:$0xff]
      %v345 = vld [vmem:[#allocation2 + $0x1c8] sm:$0xff]
      %v346 = vld [vmem:[#allocation2 + $0x1d0] sm:$0xff]
      %v347 = vld [vmem:[#allocation2 + $0x1d8] sm:$0xff]
      %v348 = vld [vmem:[#allocation2 + $0x1e0] sm:$0xff]
      %v349 = vld [vmem:[#allocation2 + $0x1e8] sm:$0xff]
      %v350 = vld [vmem:[#allocation2 + $0x1f0] sm:$0xff]
      %v351 = vld [vmem:[#allocation2 + $0x1f8] sm:$0xff]
      %v352 = vld [vmem:[%s198] sm:$0xf]
      %v353 = vld [vmem:[%s198 + $0x4] sm:$0xf]
      %v354 = vld [vmem:[%s198 + $0x8] sm:$0xf]
      %v355 = vld [vmem:[%s198 + $0xc] sm:$0xf]
      %v356 = vld [vmem:[%s198 + $0x10] sm:$0xf]
      %v357 = vld [vmem:[%s198 + $0x14] sm:$0xf]
      %v358 = vld [vmem:[%s198 + $0x18] sm:$0xf]
      %v359 = vld [vmem:[%s198 + $0x1c] sm:$0xf]
      %v360 = vld [vmem:[%s198 + $0x20] sm:$0xf]
      %v361 = vld [vmem:[%s198 + $0x24] sm:$0xf]
      %v362 = vld [vmem:[%s198 + $0x28] sm:$0xf]
      %v363 = vld [vmem:[%s198 + $0x2c] sm:$0xf]
      %v364 = vld [vmem:[%s198 + $0x30] sm:$0xf]
      %v365 = vld [vmem:[%s198 + $0x34] sm:$0xf]
      %v366 = vld [vmem:[%s198 + $0x38] sm:$0xf]
      %v367 = vld [vmem:[%s198 + $0x3c] sm:$0xf]
      %v368 = vld [vmem:[%s198 + $0x40] sm:$0xf]
      %v369 = vld [vmem:[%s198 + $0x44] sm:$0xf]
      %v370 = vld [vmem:[%s198 + $0x48] sm:$0xf]
      %v371 = vld [vmem:[%s198 + $0x4c] sm:$0xf]
      %v372 = vld [vmem:[%s198 + $0x50] sm:$0xf]
      %v373 = vld [vmem:[%s198 + $0x54] sm:$0xf]
      %v374 = vld [vmem:[%s198 + $0x58] sm:$0xf]
      %v375 = vld [vmem:[%s198 + $0x5c] sm:$0xf]
      %v376 = vld [vmem:[%s198 + $0x60] sm:$0xf]
      %v377 = vld [vmem:[%s198 + $0x64] sm:$0xf]
      %v378 = vld [vmem:[%s198 + $0x68] sm:$0xf]
      %v379 = vld [vmem:[%s198 + $0x6c] sm:$0xf]
      %v380 = vld [vmem:[%s198 + $0x70] sm:$0xf]
      %v381 = vld [vmem:[%s198 + $0x74] sm:$0xf]
      %v382 = vld [vmem:[%s198 + $0x78] sm:$0xf]
      %v383 = vld [vmem:[%s198 + $0x7c] sm:$0xf]
      %v384 = vld [vmem:[%s198 + $0x80] sm:$0xf]
      %v385 = vld [vmem:[%s198 + $0x84] sm:$0xf]
      %v386 = vld [vmem:[%s198 + $0x88] sm:$0xf]
      %v387 = vld [vmem:[%s198 + $0x8c] sm:$0xf]
      %v388 = vld [vmem:[%s198 + $0x90] sm:$0xf]
      %v389 = vld [vmem:[%s198 + $0x94] sm:$0xf]
      %v390 = vld [vmem:[%s198 + $0x98] sm:$0xf]
      %v391 = vld [vmem:[%s198 + $0x9c] sm:$0xf]
      %v392 = vld [vmem:[%s198 + $0xa0] sm:$0xf]
      %v393 = vld [vmem:[%s198 + $0xa4] sm:$0xf]
      %v394 = vld [vmem:[%s198 + $0xa8] sm:$0xf]
      %v395 = vld [vmem:[%s198 + $0xac] sm:$0xf]
      %v396 = vld [vmem:[%s198 + $0xb0] sm:$0xf]
      %v397 = vld [vmem:[%s198 + $0xb4] sm:$0xf]
      %v398 = vld [vmem:[%s198 + $0xb8] sm:$0xf]
      %v399 = vld [vmem:[%s198 + $0xbc] sm:$0xf]
      %v400 = vld [vmem:[%s198 + $0xc0] sm:$0xf]
      %v401 = vld [vmem:[%s198 + $0xc4] sm:$0xf]
      %v402 = vld [vmem:[%s198 + $0xc8] sm:$0xf]
      %v403 = vld [vmem:[%s198 + $0xcc] sm:$0xf]
      %v404 = vld [vmem:[%s198 + $0xd0] sm:$0xf]
      %v405 = vld [vmem:[%s198 + $0xd4] sm:$0xf]
      %v406 = vld [vmem:[%s198 + $0xd8] sm:$0xf]
      %v407 = vld [vmem:[%s198 + $0xdc] sm:$0xf]
      %v408 = vld [vmem:[%s198 + $0xe0] sm:$0xf]
      %v409 = vld [vmem:[%s198 + $0xe4] sm:$0xf]
      %v410 = vld [vmem:[%s198 + $0xe8] sm:$0xf]
      %v411 = vld [vmem:[%s198 + $0xec] sm:$0xf]
      %v412 = vld [vmem:[%s198 + $0xf0] sm:$0xf]
      %v413 = vld [vmem:[%s198 + $0xf4] sm:$0xf]
      %v414 = vld [vmem:[%s198 + $0xf8] sm:$0xf]
      %v415 = vld [vmem:[%s198 + $0xfc] sm:$0xf]
      %v416 = vld [vmem:[%s207] sm:$0xf]
      %v417 = vld [vmem:[%s207 + $0x4] sm:$0xf]
      %v418 = vld [vmem:[%s207 + $0x8] sm:$0xf]
      %v419 = vld [vmem:[%s207 + $0xc] sm:$0xf]
      %v420 = vld [vmem:[%s207 + $0x10] sm:$0xf]
      %v421 = vld [vmem:[%s207 + $0x14] sm:$0xf]
      %v486 = vunpack.c.l.b16 %v352
      %v487 = vunpack.c.l.b16 %v353
      %v488 = vunpack.c.l.b16 %v354
      %v489 = vunpack.c.l.b16 %v355
      %v490 = vunpack.c.l.b16 %v356
      %v491 = vunpack.c.l.b16 %v357
      %v492 = vunpack.c.l.b16 %v358
      %v493 = vunpack.c.l.b16 %v359
      %v494 = vunpack.c.l.b16 %v360
      %v495 = vunpack.c.l.b16 %v361
      %v496 = vunpack.c.l.b16 %v362
      %v497 = vunpack.c.l.b16 %v363
      %v498 = vunpack.c.l.b16 %v364
      %v499 = vunpack.c.l.b16 %v365
      %v500 = vunpack.c.l.b16 %v366
      %v501 = vunpack.c.l.b16 %v367
      %v502 = vunpack.c.l.b16 %v368
      %v503 = vunpack.c.l.b16 %v369
      %v504 = vunpack.c.l.b16 %v370
      %v505 = vunpack.c.l.b16 %v371
      %v506 = vunpack.c.l.b16 %v372
      %v507 = vunpack.c.l.b16 %v373
      %v508 = vunpack.c.l.b16 %v374
      %v509 = vunpack.c.l.b16 %v375
      %v510 = vunpack.c.l.b16 %v376
      %v511 = vunpack.c.l.b16 %v377
      %v512 = vunpack.c.l.b16 %v378
      %v513 = vunpack.c.l.b16 %v379
      %v514 = vunpack.c.l.b16 %v380
      %v515 = vunpack.c.l.b16 %v381
      %v516 = vunpack.c.l.b16 %v382
      %v517 = vunpack.c.l.b16 %v383
      %v518 = vunpack.c.l.b16 %v384
      %v519 = vunpack.c.l.b16 %v385
      %v520 = vunpack.c.l.b16 %v386
      %v521 = vunpack.c.l.b16 %v387
      %v522 = vunpack.c.l.b16 %v388
      %v523 = vunpack.c.l.b16 %v389
      %v524 = vunpack.c.l.b16 %v390
      %v525 = vunpack.c.l.b16 %v391
      %v526 = vunpack.c.l.b16 %v392
      %v527 = vunpack.c.l.b16 %v393
      %v528 = vunpack.c.l.b16 %v394
      %v529 = vunpack.c.l.b16 %v395
      %v530 = vunpack.c.l.b16 %v396
      %v531 = vunpack.c.l.b16 %v397
      %v532 = vunpack.c.l.b16 %v398
      %v533 = vunpack.c.l.b16 %v399
      %v534 = vunpack.c.l.b16 %v400
      %v535 = vunpack.c.l.b16 %v401
      %v536 = vunpack.c.l.b16 %v402
      %v537 = vunpack.c.l.b16 %v403
      %v538 = vunpack.c.l.b16 %v404
      %v539 = vunpack.c.l.b16 %v405
      %v540 = vunpack.c.l.b16 %v406
      %v541 = vunpack.c.l.b16 %v407
      %v542 = vunpack.c.l.b16 %v408
      %v543 = vunpack.c.l.b16 %v409
      %v544 = vunpack.c.l.b16 %v410
      %v545 = vunpack.c.l.b16 %v411
      %v546 = vunpack.c.l.b16 %v412
      %v547 = vunpack.c.l.b16 %v413
      %v548 = vunpack.c.l.b16 %v414
      %v549 = vunpack.c.l.b16 %v415
      %v550 = vpack.c.b16 %v487, %v486
      %v551 = vpack.c.b16 %v489, %v488
      %v552 = vpack.c.b16 %v491, %v490
      %v553 = vpack.c.b16 %v493, %v492
      %v554 = vpack.c.b16 %v495, %v494
      %v555 = vpack.c.b16 %v497, %v496
      %v556 = vpack.c.b16 %v499, %v498
      %v557 = vpack.c.b16 %v501, %v500
      %v558 = vpack.c.b16 %v503, %v502
      %v559 = vpack.c.b16 %v505, %v504
      %v560 = vpack.c.b16 %v507, %v506
      %v561 = vpack.c.b16 %v509, %v508
      %v562 = vpack.c.b16 %v511, %v510
      %v563 = vpack.c.b16 %v513, %v512
      %v564 = vpack.c.b16 %v515, %v514
      %v565 = vpack.c.b16 %v517, %v516
      %v566 = vpack.c.b16 %v519, %v518
      %v567 = vpack.c.b16 %v521, %v520
      %v568 = vpack.c.b16 %v523, %v522
      %v569 = vpack.c.b16 %v525, %v524
      %v570 = vpack.c.b16 %v527, %v526
      %v571 = vpack.c.b16 %v529, %v528
      %v572 = vpack.c.b16 %v531, %v530
      %v573 = vpack.c.b16 %v533, %v532
      %v574 = vpack.c.b16 %v535, %v534
      %v575 = vpack.c.b16 %v537, %v536
      %v576 = vpack.c.b16 %v539, %v538
      %v577 = vpack.c.b16 %v541, %v540
      %v578 = vpack.c.b16 %v543, %v542
      %v579 = vpack.c.b16 %v545, %v544
      %v580 = vpack.c.b16 %v547, %v546
      %v581 = vpack.c.b16 %v549, %v548
      %v588 = vunpack.c.l.b16 %v416
      %v589 = vunpack.c.l.b16 %v417
      %v590 = vunpack.c.l.b16 %v418
      %v591 = vunpack.c.l.b16 %v419
      %v592 = vunpack.c.l.b16 %v420
      %v593 = vunpack.c.l.b16 %v421
      %v594 = vpack.c.b16 %v589, %v588
      %v595 = vpack.c.b16 %v591, %v590
      %v596 = vpack.c.b16 %v593, %v592
      %vm600 = vcmask 392192
      %v602 = vsel %vm600, %v550, 0
      %v605 = vsel %vm600, %v551, 0
      %v608 = vsel %vm600, %v552, 0
      %v611 = vsel %vm600, %v553, 0
      %v614 = vsel %vm600, %v554, 0
      %v617 = vsel %vm600, %v555, 0
      %v620 = vsel %vm600, %v556, 0
      %v623 = vsel %vm600, %v557, 0
      %v626 = vsel %vm600, %v558, 0
      %v629 = vsel %vm600, %v559, 0
      %v632 = vsel %vm600, %v560, 0
      %v635 = vsel %vm600, %v561, 0
      %v638 = vsel %vm600, %v562, 0
      %v641 = vsel %vm600, %v563, 0
      %v644 = vsel %vm600, %v564, 0
      %v647 = vsel %vm600, %v565, 0
      %v650 = vsel %vm600, %v566, 0
      %v653 = vsel %vm600, %v567, 0
      %v656 = vsel %vm600, %v568, 0
      %v659 = vsel %vm600, %v569, 0
      %v662 = vsel %vm600, %v570, 0
      %v665 = vsel %vm600, %v571, 0
      %v668 = vsel %vm600, %v572, 0
      %v671 = vsel %vm600, %v573, 0
      %v674 = vsel %vm600, %v574, 0
      %v677 = vsel %vm600, %v575, 0
      %v680 = vsel %vm600, %v576, 0
      %v683 = vsel %vm600, %v577, 0
      %v686 = vsel %vm600, %v578, 0
      %v689 = vsel %vm600, %v579, 0
      %v692 = vsel %vm600, %v580, 0
      %v695 = vsel %vm600, %v581, 0
      %697 = vmatprep.subr.bf16.mxu0 0
      %698 = vmatpush1.bf16.msra.mxu0 %v594
      %699 = vmatprep.subr.bf16.mxu0 0
      %700 = vmatpush1.bf16.msra.mxu0 %v595
      %701 = vmatprep.subr.bf16.mxu0 0
      %702 = vmatpush1.bf16.msra.mxu0 %v596
      %703 = vmatprep.subr.bf16.mxu0 0
      %704 = vmatpush1.bf16.msra.mxu0 0
      %705 = vmatprep.subr.bf16.mxu0 0
      %706 = vmatpush1.bf16.msra.mxu0 0
      %707 = vmatprep.subr.bf16.mxu0 0
      %708 = vmatpush1.bf16.msra.mxu0 0
      %709 = vmatprep.subr.bf16.mxu0 0
      %710 = vmatpush1.bf16.msra.mxu0 0
      %711 = vmatprep.subr.bf16.mxu0 0
      %712 = vmatpush1.bf16.msra.mxu0 0
      %713 = vmatprep.subr.bf16.mxu0 0
      %714 = vmatpush1.bf16.msra.mxu0 0
      %715 = vmatprep.subr.bf16.mxu0 0
      %716 = vmatpush1.bf16.msra.mxu0 0
      %717 = vmatprep.subr.bf16.mxu0 0
      %718 = vmatpush1.bf16.msra.mxu0 0
      %719 = vmatprep.subr.bf16.mxu0 0
      %720 = vmatpush1.bf16.msra.mxu0 0
      %721 = vmatprep.subr.bf16.mxu0 0
      %722 = vmatpush1.bf16.msra.mxu0 0
      %723 = vmatprep.subr.bf16.mxu0 0
      %724 = vmatpush1.bf16.msra.mxu0 0
      %725 = vmatprep.subr.bf16.mxu0 0
      %726 = vmatpush1.bf16.msra.mxu0 0
      %727 = vmatprep.subr.bf16.mxu0 0
      %728 = vmatpush1.bf16.msra.mxu0 0
      %729 = vmatprep.mubr.bf16.mxu0 0
      %730 = vmatmul.mubr.bf16.gmra.mrb[0].mxu0 %v602
      %v731 = vpop.f32.mrb[0].mxu0
      %v732 = vadd.f32 0.0, %v731
      %v733 = vpop.f32.mrb[0].mxu0
      %v734 = vpop.f32.mrb[0].mxu0
      %v735 = vadd.f32 0.0, %v734
      %v736 = vpop.f32.mrb[0].mxu0
      %737 = vmatprep.mubr.bf16.mxu0 0
      %738 = vmatmul.mubr.bf16.gmra.mrb[0].mxu0 %v605
      %v739 = vpop.f32.mrb[0].mxu0
      %v740 = vadd.f32 0.0, %v739
      %v741 = vpop.f32.mrb[0].mxu0
      %v742 = vpop.f32.mrb[0].mxu0
      %v743 = vadd.f32 0.0, %v742
      %v744 = vpop.f32.mrb[0].mxu0
      %745 = vmatprep.mubr.bf16.mxu0 0
      %746 = vmatmul.mubr.bf16.gmra.mrb[0].mxu0 %v608
      %v747 = vpop.f32.mrb[0].mxu0
      %v748 = vadd.f32 0.0, %v747
      %v749 = vpop.f32.mrb[0].mxu0
      %v750 = vpop.f32.mrb[0].mxu0
      %v751 = vadd.f32 0.0, %v750
      %v752 = vpop.f32.mrb[0].mxu0
      %753 = vmatprep.mubr.bf16.mxu0 0
      %754 = vmatmul.mubr.bf16.gmra.mrb[0].mxu0 %v611
      %v755 = vpop.f32.mrb[0].mxu0
      %v756 = vadd.f32 0.0, %v755
      %v757 = vpop.f32.mrb[0].mxu0
      %v758 = vpop.f32.mrb[0].mxu0
      %v759 = vadd.f32 0.0, %v758
      %v760 = vpop.f32.mrb[0].mxu0
      %761 = vmatprep.mubr.bf16.mxu0 0
      %762 = vmatmul.mubr.bf16.gmra.mrb[0].mxu0 %v614
      %v763 = vpop.f32.mrb[0].mxu0
      %v764 = vadd.f32 0.0, %v763
      %v765 = vpop.f32.mrb[0].mxu0
      %v766 = vpop.f32.mrb[0].mxu0
      %v767 = vadd.f32 0.0, %v766
      %v768 = vpop.f32.mrb[0].mxu0
      %769 = vmatprep.mubr.bf16.mxu0 0
      %770 = vmatmul.mubr.bf16.gmra.mrb[0].mxu0 %v617
      %v771 = vpop.f32.mrb[0].mxu0
      %v772 = vadd.f32 0.0, %v771
      %v773 = vpop.f32.mrb[0].mxu0
      %v774 = vpop.f32.mrb[0].mxu0
      %v775 = vadd.f32 0.0, %v774
      %v776 = vpop.f32.mrb[0].mxu0
      %777 = vmatprep.mubr.bf16.mxu0 0
      %778 = vmatmul.mubr.bf16.gmra.mrb[0].mxu0 %v620
      %v779 = vpop.f32.mrb[0].mxu0
      %v780 = vadd.f32 0.0, %v779
      %v781 = vpop.f32.mrb[0].mxu0
      %v782 = vpop.f32.mrb[0].mxu0
      %v783 = vadd.f32 0.0, %v782
      %v784 = vpop.f32.mrb[0].mxu0
      %785 = vmatprep.mubr.bf16.mxu0 0
      %786 = vmatmul.mubr.bf16.gmra.mrb[0].mxu0 %v623
      %v787 = vpop.f32.mrb[0].mxu0
      %v788 = vadd.f32 0.0, %v787
      %v789 = vpop.f32.mrb[0].mxu0
      %v790 = vpop.f32.mrb[0].mxu0
      %v791 = vadd.f32 0.0, %v790
      %v792 = vpop.f32.mrb[0].mxu0
      %793 = vmatprep.mubr.bf16.mxu0 0
      %794 = vmatmul.mubr.bf16.gmra.mrb[0].mxu0 %v626
      %v795 = vpop.f32.mrb[0].mxu0
      %v796 = vadd.f32 0.0, %v795
      %v797 = vpop.f32.mrb[0].mxu0
      %v798 = vpop.f32.mrb[0].mxu0
      %v799 = vadd.f32 0.0, %v798
      %v800 = vpop.f32.mrb[0].mxu0
      %801 = vmatprep.mubr.bf16.mxu0 0
      %802 = vmatmul.mubr.bf16.gmra.mrb[0].mxu0 %v629
      %v803 = vpop.f32.mrb[0].mxu0
      %v804 = vadd.f32 0.0, %v803
      %v805 = vpop.f32.mrb[0].mxu0
      %v806 = vpop.f32.mrb[0].mxu0
      %v807 = vadd.f32 0.0, %v806
      %v808 = vpop.f32.mrb[0].mxu0
      %809 = vmatprep.mubr.bf16.mxu0 0
      %810 = vmatmul.mubr.bf16.gmra.mrb[0].mxu0 %v632
      %v811 = vpop.f32.mrb[0].mxu0
      %v812 = vadd.f32 0.0, %v811
      %v813 = vpop.f32.mrb[0].mxu0
      %v814 = vpop.f32.mrb[0].mxu0
      %v815 = vadd.f32 0.0, %v814
      %v816 = vpop.f32.mrb[0].mxu0
      %817 = vmatprep.mubr.bf16.mxu0 0
      %818 = vmatmul.mubr.bf16.gmra.mrb[0].mxu0 %v635
      %v819 = vpop.f32.mrb[0].mxu0
      %v820 = vadd.f32 0.0, %v819
      %v821 = vpop.f32.mrb[0].mxu0
      %v822 = vpop.f32.mrb[0].mxu0
      %v823 = vadd.f32 0.0, %v822
      %v824 = vpop.f32.mrb[0].mxu0
      %825 = vmatprep.mubr.bf16.mxu0 0
      %826 = vmatmul.mubr.bf16.gmra.mrb[0].mxu0 %v638
      %v827 = vpop.f32.mrb[0].mxu0
      %v828 = vadd.f32 0.0, %v827
      %v829 = vpop.f32.mrb[0].mxu0
      %v830 = vpop.f32.mrb[0].mxu0
      %v831 = vadd.f32 0.0, %v830
      %v832 = vpop.f32.mrb[0].mxu0
      %833 = vmatprep.mubr.bf16.mxu0 0
      %834 = vmatmul.mubr.bf16.gmra.mrb[0].mxu0 %v641
      %v835 = vpop.f32.mrb[0].mxu0
      %v836 = vadd.f32 0.0, %v835
      %v837 = vpop.f32.mrb[0].mxu0
      %v838 = vpop.f32.mrb[0].mxu0
      %v839 = vadd.f32 0.0, %v838
      %v840 = vpop.f32.mrb[0].mxu0
      %841 = vmatprep.mubr.bf16.mxu0 0
      %842 = vmatmul.mubr.bf16.gmra.mrb[0].mxu0 %v644
      %v843 = vpop.f32.mrb[0].mxu0
      %v844 = vadd.f32 0.0, %v843
      %v845 = vpop.f32.mrb[0].mxu0
      %v846 = vpop.f32.mrb[0].mxu0
      %v847 = vadd.f32 0.0, %v846
      %v848 = vpop.f32.mrb[0].mxu0
      %849 = vmatprep.mubr.bf16.mxu0 0
      %850 = vmatmul.mubr.bf16.gmra.mrb[0].mxu0 %v647
      %v851 = vpop.f32.mrb[0].mxu0
      %v852 = vadd.f32 0.0, %v851
      %v853 = vpop.f32.mrb[0].mxu0
      %v854 = vpop.f32.mrb[0].mxu0
      %v855 = vadd.f32 0.0, %v854
      %v856 = vpop.f32.mrb[0].mxu0
      %857 = vmatprep.mubr.bf16.mxu0 0
      %858 = vmatmul.mubr.bf16.gmra.mrb[0].mxu0 %v650
      %v859 = vpop.f32.mrb[0].mxu0
      %v860 = vadd.f32 0.0, %v859
      %v861 = vpop.f32.mrb[0].mxu0
      %v862 = vpop.f32.mrb[0].mxu0
      %v863 = vadd.f32 0.0, %v862
      %v864 = vpop.f32.mrb[0].mxu0
      %865 = vmatprep.mubr.bf16.mxu0 0
      %866 = vmatmul.mubr.bf16.gmra.mrb[0].mxu0 %v653
      %v867 = vpop.f32.mrb[0].mxu0
      %v868 = vadd.f32 0.0, %v867
      %v869 = vpop.f32.mrb[0].mxu0
      %v870 = vpop.f32.mrb[0].mxu0
      %v871 = vadd.f32 0.0, %v870
      %v872 = vpop.f32.mrb[0].mxu0
      %873 = vmatprep.mubr.bf16.mxu0 0
      %874 = vmatmul.mubr.bf16.gmra.mrb[0].mxu0 %v656
      %v875 = vpop.f32.mrb[0].mxu0
      %v876 = vadd.f32 0.0, %v875
      %v877 = vpop.f32.mrb[0].mxu0
      %v878 = vpop.f32.mrb[0].mxu0
      %v879 = vadd.f32 0.0, %v878
      %v880 = vpop.f32.mrb[0].mxu0
      %881 = vmatprep.mubr.bf16.mxu0 0
      %882 = vmatmul.mubr.bf16.gmra.mrb[0].mxu0 %v659
      %v883 = vpop.f32.mrb[0].mxu0
      %v884 = vadd.f32 0.0, %v883
      %v885 = vpop.f32.mrb[0].mxu0
      %v886 = vpop.f32.mrb[0].mxu0
      %v887 = vadd.f32 0.0, %v886
      %v888 = vpop.f32.mrb[0].mxu0
      %889 = vmatprep.mubr.bf16.mxu0 0
      %890 = vmatmul.mubr.bf16.gmra.mrb[0].mxu0 %v662
      %v891 = vpop.f32.mrb[0].mxu0
      %v892 = vadd.f32 0.0, %v891
      %v893 = vpop.f32.mrb[0].mxu0
      %v894 = vpop.f32.mrb[0].mxu0
      %v895 = vadd.f32 0.0, %v894
      %v896 = vpop.f32.mrb[0].mxu0
      %897 = vmatprep.mubr.bf16.mxu0 0
      %898 = vmatmul.mubr.bf16.gmra.mrb[0].mxu0 %v665
      %v899 = vpop.f32.mrb[0].mxu0
      %v900 = vadd.f32 0.0, %v899
      %v901 = vpop.f32.mrb[0].mxu0
      %v902 = vpop.f32.mrb[0].mxu0
      %v903 = vadd.f32 0.0, %v902
      %v904 = vpop.f32.mrb[0].mxu0
      %905 = vmatprep.mubr.bf16.mxu0 0
      %906 = vmatmul.mubr.bf16.gmra.mrb[0].mxu0 %v668
      %v907 = vpop.f32.mrb[0].mxu0
      %v908 = vadd.f32 0.0, %v907
      %v909 = vpop.f32.mrb[0].mxu0
      %v910 = vpop.f32.mrb[0].mxu0
      %v911 = vadd.f32 0.0, %v910
      %v912 = vpop.f32.mrb[0].mxu0
      %913 = vmatprep.mubr.bf16.mxu0 0
      %914 = vmatmul.mubr.bf16.gmra.mrb[0].mxu0 %v671
      %v915 = vpop.f32.mrb[0].mxu0
      %v916 = vadd.f32 0.0, %v915
      %v917 = vpop.f32.mrb[0].mxu0
      %v918 = vpop.f32.mrb[0].mxu0
      %v919 = vadd.f32 0.0, %v918
      %v920 = vpop.f32.mrb[0].mxu0
      %921 = vmatprep.mubr.bf16.mxu0 0
      %922 = vmatmul.mubr.bf16.gmra.mrb[0].mxu0 %v674
      %v923 = vpop.f32.mrb[0].mxu0
      %v924 = vadd.f32 0.0, %v923
      %v925 = vpop.f32.mrb[0].mxu0
      %v926 = vpop.f32.mrb[0].mxu0
      %v927 = vadd.f32 0.0, %v926
      %v928 = vpop.f32.mrb[0].mxu0
      %929 = vmatprep.mubr.bf16.mxu0 0
      %930 = vmatmul.mubr.bf16.gmra.mrb[0].mxu0 %v677
      %v931 = vpop.f32.mrb[0].mxu0
      %v932 = vadd.f32 0.0, %v931
      %v933 = vpop.f32.mrb[0].mxu0
      %v934 = vpop.f32.mrb[0].mxu0
      %v935 = vadd.f32 0.0, %v934
      %v936 = vpop.f32.mrb[0].mxu0
      %937 = vmatprep.mubr.bf16.mxu0 0
      %938 = vmatmul.mubr.bf16.gmra.mrb[0].mxu0 %v680
      %v939 = vpop.f32.mrb[0].mxu0
      %v940 = vadd.f32 0.0, %v939
      %v941 = vpop.f32.mrb[0].mxu0
      %v942 = vpop.f32.mrb[0].mxu0
      %v943 = vadd.f32 0.0, %v942
      %v944 = vpop.f32.mrb[0].mxu0
      %945 = vmatprep.mubr.bf16.mxu0 0
      %946 = vmatmul.mubr.bf16.gmra.mrb[0].mxu0 %v683
      %v947 = vpop.f32.mrb[0].mxu0
      %v948 = vadd.f32 0.0, %v947
      %v949 = vpop.f32.mrb[0].mxu0
      %v950 = vpop.f32.mrb[0].mxu0
      %v951 = vadd.f32 0.0, %v950
      %v952 = vpop.f32.mrb[0].mxu0
      %953 = vmatprep.mubr.bf16.mxu0 0
      %954 = vmatmul.mubr.bf16.gmra.mrb[0].mxu0 %v686
      %v955 = vpop.f32.mrb[0].mxu0
      %v956 = vadd.f32 0.0, %v955
      %v957 = vpop.f32.mrb[0].mxu0
      %v958 = vpop.f32.mrb[0].mxu0
      %v959 = vadd.f32 0.0, %v958
      %v960 = vpop.f32.mrb[0].mxu0
      %961 = vmatprep.mubr.bf16.mxu0 0
      %962 = vmatmul.mubr.bf16.gmra.mrb[0].mxu0 %v689
      %v963 = vpop.f32.mrb[0].mxu0
      %v964 = vadd.f32 0.0, %v963
      %v965 = vpop.f32.mrb[0].mxu0
      %v966 = vpop.f32.mrb[0].mxu0
      %v967 = vadd.f32 0.0, %v966
      %v968 = vpop.f32.mrb[0].mxu0
      %969 = vmatprep.mubr.bf16.mxu0 0
      %970 = vmatmul.mubr.bf16.gmra.mrb[0].mxu0 %v692
      %v971 = vpop.f32.mrb[0].mxu0
      %v972 = vadd.f32 0.0, %v971
      %v973 = vpop.f32.mrb[0].mxu0
      %v974 = vpop.f32.mrb[0].mxu0
      %v975 = vadd.f32 0.0, %v974
      %v976 = vpop.f32.mrb[0].mxu0
      %977 = vmatprep.mubr.bf16.mxu0 0
      %978 = vmatmul.mubr.bf16.gmra.mrb[0].mxu0 %v695
      %v979 = vpop.f32.mrb[0].mxu0
      %v980 = vadd.f32 0.0, %v979
      %v981 = vpop.f32.mrb[0].mxu0
      %v982 = vpop.f32.mrb[0].mxu0
      %v983 = vadd.f32 0.0, %v982
      %v984 = vpop.f32.mrb[0].mxu0
      %985 = vdwg.mxu0
      %v986 = vadd.f32 %v288, %v732
      %v987 = vadd.f32 %v289, %v735
      %v988 = vadd.f32 %v290, %v740
      %v989 = vadd.f32 %v291, %v743
      %v990 = vadd.f32 %v292, %v748
      %v991 = vadd.f32 %v293, %v751
      %v992 = vadd.f32 %v294, %v756
      %v993 = vadd.f32 %v295, %v759
      %v994 = vadd.f32 %v296, %v764
      %v995 = vadd.f32 %v297, %v767
      %v996 = vadd.f32 %v298, %v772
      %v997 = vadd.f32 %v299, %v775
      %v998 = vadd.f32 %v300, %v780
      %v999 = vadd.f32 %v301, %v783
      %v1000 = vadd.f32 %v302, %v788
      %v1001 = vadd.f32 %v303, %v791
      %v1002 = vadd.f32 %v304, %v796
      %v1003 = vadd.f32 %v305, %v799
      %v1004 = vadd.f32 %v306, %v804
      %v1005 = vadd.f32 %v307, %v807
      %v1006 = vadd.f32 %v308, %v812
      %v1007 = vadd.f32 %v309, %v815
      %v1008 = vadd.f32 %v310, %v820
      %v1009 = vadd.f32 %v311, %v823
      %v1010 = vadd.f32 %v312, %v828
      %v1011 = vadd.f32 %v313, %v831
      %v1012 = vadd.f32 %v314, %v836
      %v1013 = vadd.f32 %v315, %v839
      %v1014 = vadd.f32 %v316, %v844
      %v1015 = vadd.f32 %v317, %v847
      %v1016 = vadd.f32 %v318, %v852
      %v1017 = vadd.f32 %v319, %v855
      %v1018 = vadd.f32 %v320, %v860
      %v1019 = vadd.f32 %v321, %v863
      %v1020 = vadd.f32 %v322, %v868
      %v1021 = vadd.f32 %v323, %v871
      %v1022 = vadd.f32 %v324, %v876
      %v1023 = vadd.f32 %v325, %v879
      %v1024 = vadd.f32 %v326, %v884
      %v1025 = vadd.f32 %v327, %v887
      %v1026 = vadd.f32 %v328, %v892
      %v1027 = vadd.f32 %v329, %v895
      %v1028 = vadd.f32 %v330, %v900
      %v1029 = vadd.f32 %v331, %v903
      %v1030 = vadd.f32 %v332, %v908
      %v1031 = vadd.f32 %v333, %v911
      %v1032 = vadd.f32 %v334, %v916
      %v1033 = vadd.f32 %v335, %v919
      %v1034 = vadd.f32 %v336, %v924
      %v1035 = vadd.f32 %v337, %v927
      %v1036 = vadd.f32 %v338, %v932
      %v1037 = vadd.f32 %v339, %v935
      %v1038 = vadd.f32 %v340, %v940
      %v1039 = vadd.f32 %v341, %v943
      %v1040 = vadd.f32 %v342, %v948
      %v1041 = vadd.f32 %v343, %v951
      %v1042 = vadd.f32 %v344, %v956
      %v1043 = vadd.f32 %v345, %v959
      %v1044 = vadd.f32 %v346, %v964
      %v1045 = vadd.f32 %v347, %v967
      %v1046 = vadd.f32 %v348, %v972
      %v1047 = vadd.f32 %v349, %v975
      %v1048 = vadd.f32 %v350, %v980
      %v1049 = vadd.f32 %v351, %v983
      %vm1050 = vcmask 130048
      %1051 = vst.msk [vmem:[#allocation2] sm:$0xff] %vm1050, %v986
      %1052 = vst.msk [vmem:[#allocation2 + $0x8] sm:$0xff] %vm1050, %v987
      %1053 = vst.msk [vmem:[#allocation2 + $0x10] sm:$0xff] %vm1050, %v988
      %1054 = vst.msk [vmem:[#allocation2 + $0x18] sm:$0xff] %vm1050, %v989
      %1055 = vst.msk [vmem:[#allocation2 + $0x20] sm:$0xff] %vm1050, %v990
      %1056 = vst.msk [vmem:[#allocation2 + $0x28] sm:$0xff] %vm1050, %v991
      %1057 = vst.msk [vmem:[#allocation2 + $0x30] sm:$0xff] %vm1050, %v992
      %1058 = vst.msk [vmem:[#allocation2 + $0x38] sm:$0xff] %vm1050, %v993
      %1059 = vst.msk [vmem:[#allocation2 + $0x40] sm:$0xff] %vm1050, %v994
      %1060 = vst.msk [vmem:[#allocation2 + $0x48] sm:$0xff] %vm1050, %v995
      %1061 = vst.msk [vmem:[#allocation2 + $0x50] sm:$0xff] %vm1050, %v996
      %1062 = vst.msk [vmem:[#allocation2 + $0x58] sm:$0xff] %vm1050, %v997
      %1063 = vst.msk [vmem:[#allocation2 + $0x60] sm:$0xff] %vm1050, %v998
      %1064 = vst.msk [vmem:[#allocation2 + $0x68] sm:$0xff] %vm1050, %v999
      %1065 = vst.msk [vmem:[#allocation2 + $0x70] sm:$0xff] %vm1050, %v1000
      %1066 = vst.msk [vmem:[#allocation2 + $0x78] sm:$0xff] %vm1050, %v1001
      %1067 = vst.msk [vmem:[#allocation2 + $0x80] sm:$0xff] %vm1050, %v1002
      %1068 = vst.msk [vmem:[#allocation2 + $0x88] sm:$0xff] %vm1050, %v1003
      %1069 = vst.msk [vmem:[#allocation2 + $0x90] sm:$0xff] %vm1050, %v1004
      %1070 = vst.msk [vmem:[#allocation2 + $0x98] sm:$0xff] %vm1050, %v1005
      %1071 = vst.msk [vmem:[#allocation2 + $0xa0] sm:$0xff] %vm1050, %v1006
      %1072 = vst.msk [vmem:[#allocation2 + $0xa8] sm:$0xff] %vm1050, %v1007
      %1073 = vst.msk [vmem:[#allocation2 + $0xb0] sm:$0xff] %vm1050, %v1008
      %1074 = vst.msk [vmem:[#allocation2 + $0xb8] sm:$0xff] %vm1050, %v1009
      %1075 = vst.msk [vmem:[#allocation2 + $0xc0] sm:$0xff] %vm1050, %v1010
      %1076 = vst.msk [vmem:[#allocation2 + $0xc8] sm:$0xff] %vm1050, %v1011
      %1077 = vst.msk [vmem:[#allocation2 + $0xd0] sm:$0xff] %vm1050, %v1012
      %1078 = vst.msk [vmem:[#allocation2 + $0xd8] sm:$0xff] %vm1050, %v1013
      %1079 = vst.msk [vmem:[#allocation2 + $0xe0] sm:$0xff] %vm1050, %v1014
      %1080 = vst.msk [vmem:[#allocation2 + $0xe8] sm:$0xff] %vm1050, %v1015
      %1081 = vst.msk [vmem:[#allocation2 + $0xf0] sm:$0xff] %vm1050, %v1016
      %1082 = vst.msk [vmem:[#allocation2 + $0xf8] sm:$0xff] %vm1050, %v1017
      %1083 = vst.msk [vmem:[#allocation2 + $0x100] sm:$0xff] %vm1050, %v1018
      %1084 = vst.msk [vmem:[#allocation2 + $0x108] sm:$0xff] %vm1050, %v1019
      %1085 = vst.msk [vmem:[#allocation2 + $0x110] sm:$0xff] %vm1050, %v1020
      %1086 = vst.msk [vmem:[#allocation2 + $0x118] sm:$0xff] %vm1050, %v1021
      %1087 = vst.msk [vmem:[#allocation2 + $0x120] sm:$0xff] %vm1050, %v1022
      %1088 = vst.msk [vmem:[#allocation2 + $0x128] sm:$0xff] %vm1050, %v1023
      %1089 = vst.msk [vmem:[#allocation2 + $0x130] sm:$0xff] %vm1050, %v1024
      %1090 = vst.msk [vmem:[#allocation2 + $0x138] sm:$0xff] %vm1050, %v1025
      %1091 = vst.msk [vmem:[#allocation2 + $0x140] sm:$0xff] %vm1050, %v1026
      %1092 = vst.msk [vmem:[#allocation2 + $0x148] sm:$0xff] %vm1050, %v1027
      %1093 = vst.msk [vmem:[#allocation2 + $0x150] sm:$0xff] %vm1050, %v1028
      %1094 = vst.msk [vmem:[#allocation2 + $0x158] sm:$0xff] %vm1050, %v1029
      %1095 = vst.msk [vmem:[#allocation2 + $0x160] sm:$0xff] %vm1050, %v1030
      %1096 = vst.msk [vmem:[#allocation2 + $0x168] sm:$0xff] %vm1050, %v1031
      %1097 = vst.msk [vmem:[#allocation2 + $0x170] sm:$0xff] %vm1050, %v1032
      %1098 = vst.msk [vmem:[#allocation2 + $0x178] sm:$0xff] %vm1050, %v1033
      %1099 = vst.msk [vmem:[#allocation2 + $0x180] sm:$0xff] %vm1050, %v1034
      %1100 = vst.msk [vmem:[#allocation2 + $0x188] sm:$0xff] %vm1050, %v1035
      %1101 = vst.msk [vmem:[#allocation2 + $0x190] sm:$0xff] %vm1050, %v1036
      %1102 = vst.msk [vmem:[#allocation2 + $0x198] sm:$0xff] %vm1050, %v1037
      %1103 = vst.msk [vmem:[#allocation2 + $0x1a0] sm:$0xff] %vm1050, %v1038
      %1104 = vst.msk [vmem:[#allocation2 + $0x1a8] sm:$0xff] %vm1050, %v1039
      %1105 = vst.msk [vmem:[#allocation2 + $0x1b0] sm:$0xff] %vm1050, %v1040
      %1106 = vst.msk [vmem:[#allocation2 + $0x1b8] sm:$0xff] %vm1050, %v1041
      %1107 = vst.msk [vmem:[#allocation2 + $0x1c0] sm:$0xff] %vm1050, %v1042
      %1108 = vst.msk [vmem:[#allocation2 + $0x1c8] sm:$0xff] %vm1050, %v1043
      %1109 = vst.msk [vmem:[#allocation2 + $0x1d0] sm:$0xff] %vm1050, %v1044
      %1110 = vst.msk [vmem:[#allocation2 + $0x1d8] sm:$0xff] %vm1050, %v1045
      %1111 = vst.msk [vmem:[#allocation2 + $0x1e0] sm:$0xff] %vm1050, %v1046
      %1112 = vst.msk [vmem:[#allocation2 + $0x1e8] sm:$0xff] %vm1050, %v1047
      %1113 = vst.msk [vmem:[#allocation2 + $0x1f0] sm:$0xff] %vm1050, %v1048
      %1114 = vst.msk [vmem:[#allocation2 + $0x1f8] sm:$0xff] %vm1050, %v1049
      // Predicated region
      $region33: #{discriminator_forward.8} parent=27 // pred_check
        %p1115 = pneg %p219
      $region34: #{discriminator_forward.8} parent=27 // pred_check_branch
        %1117 = sbr.rel (%p1115) target = $region36
      $region35: #{discriminator_forward.8} parent=27 // pred_region
        %v1118 = vld [vmem:[#allocation2] sm:$0xff]
        %v1119 = vld [vmem:[#allocation2 + $0x8] sm:$0xff]
        %v1120 = vld [vmem:[#allocation2 + $0x10] sm:$0xff]
        %v1121 = vld [vmem:[#allocation2 + $0x18] sm:$0xff]
        %v1122 = vld [vmem:[#allocation2 + $0x20] sm:$0xff]
        %v1123 = vld [vmem:[#allocation2 + $0x28] sm:$0xff]
        %v1124 = vld [vmem:[#allocation2 + $0x30] sm:$0xff]
        %v1125 = vld [vmem:[#allocation2 + $0x38] sm:$0xff]
        %v1126 = vld [vmem:[#allocation2 + $0x40] sm:$0xff]
        %v1127 = vld [vmem:[#allocation2 + $0x48] sm:$0xff]
        %v1128 = vld [vmem:[#allocation2 + $0x50] sm:$0xff]
        %v1129 = vld [vmem:[#allocation2 + $0x58] sm:$0xff]
        %v1130 = vld [vmem:[#allocation2 + $0x60] sm:$0xff]
        %v1131 = vld [vmem:[#allocation2 + $0x68] sm:$0xff]
        %v1132 = vld [vmem:[#allocation2 + $0x70] sm:$0xff]
        %v1133 = vld [vmem:[#allocation2 + $0x78] sm:$0xff]
        %v1134 = vld [vmem:[#allocation2 + $0x80] sm:$0xff]
        %v1135 = vld [vmem:[#allocation2 + $0x88] sm:$0xff]
        %v1136 = vld [vmem:[#allocation2 + $0x90] sm:$0xff]
        %v1137 = vld [vmem:[#allocation2 + $0x98] sm:$0xff]
        %v1138 = vld [vmem:[#allocation2 + $0xa0] sm:$0xff]
        %v1139 = vld [vmem:[#allocation2 + $0xa8] sm:$0xff]
        %v1140 = vld [vmem:[#allocation2 + $0xb0] sm:$0xff]
        %v1141 = vld [vmem:[#allocation2 + $0xb8] sm:$0xff]
        %v1142 = vld [vmem:[#allocation2 + $0xc0] sm:$0xff]
        %v1143 = vld [vmem:[#allocation2 + $0xc8] sm:$0xff]
        %v1144 = vld [vmem:[#allocation2 + $0xd0] sm:$0xff]
        %v1145 = vld [vmem:[#allocation2 + $0xd8] sm:$0xff]
        %v1146 = vld [vmem:[#allocation2 + $0xe0] sm:$0xff]
        %v1147 = vld [vmem:[#allocation2 + $0xe8] sm:$0xff]
        %v1148 = vld [vmem:[#allocation2 + $0xf0] sm:$0xff]
        %v1149 = vld [vmem:[#allocation2 + $0xf8] sm:$0xff]
        %v1150 = vld [vmem:[#allocation2 + $0x100] sm:$0xff]
        %v1151 = vld [vmem:[#allocation2 + $0x108] sm:$0xff]
        %v1152 = vld [vmem:[#allocation2 + $0x110] sm:$0xff]
        %v1153 = vld [vmem:[#allocation2 + $0x118] sm:$0xff]
        %v1154 = vld [vmem:[#allocation2 + $0x120] sm:$0xff]
        %v1155 = vld [vmem:[#allocation2 + $0x128] sm:$0xff]
        %v1156 = vld [vmem:[#allocation2 + $0x130] sm:$0xff]
        %v1157 = vld [vmem:[#allocation2 + $0x138] sm:$0xff]
        %v1158 = vld [vmem:[#allocation2 + $0x140] sm:$0xff]
        %v1159 = vld [vmem:[#allocation2 + $0x148] sm:$0xff]
        %v1160 = vld [vmem:[#allocation2 + $0x150] sm:$0xff]
        %v1161 = vld [vmem:[#allocation2 + $0x158] sm:$0xff]
        %v1162 = vld [vmem:[#allocation2 + $0x160] sm:$0xff]
        %v1163 = vld [vmem:[#allocation2 + $0x168] sm:$0xff]
        %v1164 = vld [vmem:[#allocation2 + $0x170] sm:$0xff]
        %v1165 = vld [vmem:[#allocation2 + $0x178] sm:$0xff]
        %v1166 = vld [vmem:[#allocation2 + $0x180] sm:$0xff]
        %v1167 = vld [vmem:[#allocation2 + $0x188] sm:$0xff]
        %v1168 = vld [vmem:[#allocation2 + $0x190] sm:$0xff]
        %v1169 = vld [vmem:[#allocation2 + $0x198] sm:$0xff]
        %v1170 = vld [vmem:[#allocation2 + $0x1a0] sm:$0xff]
        %v1171 = vld [vmem:[#allocation2 + $0x1a8] sm:$0xff]
        %v1172 = vld [vmem:[#allocation2 + $0x1b0] sm:$0xff]
        %v1173 = vld [vmem:[#allocation2 + $0x1b8] sm:$0xff]
        %v1174 = vld [vmem:[#allocation2 + $0x1c0] sm:$0xff]
        %v1175 = vld [vmem:[#allocation2 + $0x1c8] sm:$0xff]
        %v1176 = vld [vmem:[#allocation2 + $0x1d0] sm:$0xff]
        %v1177 = vld [vmem:[#allocation2 + $0x1d8] sm:$0xff]
        %v1178 = vld [vmem:[#allocation2 + $0x1e0] sm:$0xff]
        %v1179 = vld [vmem:[#allocation2 + $0x1e8] sm:$0xff]
        %v1180 = vld [vmem:[#allocation2 + $0x1f0] sm:$0xff]
        %v1181 = vld [vmem:[#allocation2 + $0x1f8] sm:$0xff]
        %vm1182 = vcmp.ge.f32.partialorder %v1118, 0.0
        %vm1183 = vcmp.ge.f32.partialorder %v1119, 0.0
        %vm1184 = vcmp.ge.f32.partialorder %v1120, 0.0
        %vm1185 = vcmp.ge.f32.partialorder %v1121, 0.0
        %vm1186 = vcmp.ge.f32.partialorder %v1122, 0.0
        %vm1187 = vcmp.ge.f32.partialorder %v1123, 0.0
        %vm1188 = vcmp.ge.f32.partialorder %v1124, 0.0
        %vm1189 = vcmp.ge.f32.partialorder %v1125, 0.0
        %vm1190 = vcmp.ge.f32.partialorder %v1126, 0.0
        %vm1191 = vcmp.ge.f32.partialorder %v1127, 0.0
        %vm1192 = vcmp.ge.f32.partialorder %v1128, 0.0
        %vm1193 = vcmp.ge.f32.partialorder %v1129, 0.0
        %vm1194 = vcmp.ge.f32.partialorder %v1130, 0.0
        %vm1195 = vcmp.ge.f32.partialorder %v1131, 0.0
        %vm1196 = vcmp.ge.f32.partialorder %v1132, 0.0
        %vm1197 = vcmp.ge.f32.partialorder %v1133, 0.0
        %vm1198 = vcmp.ge.f32.partialorder %v1134, 0.0
        %vm1199 = vcmp.ge.f32.partialorder %v1135, 0.0
        %vm1200 = vcmp.ge.f32.partialorder %v1136, 0.0
        %vm1201 = vcmp.ge.f32.partialorder %v1137, 0.0
        %vm1202 = vcmp.ge.f32.partialorder %v1138, 0.0
        %vm1203 = vcmp.ge.f32.partialorder %v1139, 0.0
        %vm1204 = vcmp.ge.f32.partialorder %v1140, 0.0
        %vm1205 = vcmp.ge.f32.partialorder %v1141, 0.0
        %vm1206 = vcmp.ge.f32.partialorder %v1142, 0.0
        %vm1207 = vcmp.ge.f32.partialorder %v1143, 0.0
        %vm1208 = vcmp.ge.f32.partialorder %v1144, 0.0
        %vm1209 = vcmp.ge.f32.partialorder %v1145, 0.0
        %vm1210 = vcmp.ge.f32.partialorder %v1146, 0.0
        %vm1211 = vcmp.ge.f32.partialorder %v1147, 0.0
        %vm1212 = vcmp.ge.f32.partialorder %v1148, 0.0
        %vm1213 = vcmp.ge.f32.partialorder %v1149, 0.0
        %vm1214 = vcmp.ge.f32.partialorder %v1150, 0.0
        %vm1215 = vcmp.ge.f32.partialorder %v1151, 0.0
        %vm1216 = vcmp.ge.f32.partialorder %v1152, 0.0
        %vm1217 = vcmp.ge.f32.partialorder %v1153, 0.0
        %vm1218 = vcmp.ge.f32.partialorder %v1154, 0.0
        %vm1219 = vcmp.ge.f32.partialorder %v1155, 0.0
        %vm1220 = vcmp.ge.f32.partialorder %v1156, 0.0
        %vm1221 = vcmp.ge.f32.partialorder %v1157, 0.0
        %vm1222 = vcmp.ge.f32.partialorder %v1158, 0.0
        %vm1223 = vcmp.ge.f32.partialorder %v1159, 0.0
        %vm1224 = vcmp.ge.f32.partialorder %v1160, 0.0
        %vm1225 = vcmp.ge.f32.partialorder %v1161, 0.0
        %vm1226 = vcmp.ge.f32.partialorder %v1162, 0.0
        %vm1227 = vcmp.ge.f32.partialorder %v1163, 0.0
        %vm1228 = vcmp.ge.f32.partialorder %v1164, 0.0
        %vm1229 = vcmp.ge.f32.partialorder %v1165, 0.0
        %vm1230 = vcmp.ge.f32.partialorder %v1166, 0.0
        %vm1231 = vcmp.ge.f32.partialorder %v1167, 0.0
        %vm1232 = vcmp.ge.f32.partialorder %v1168, 0.0
        %vm1233 = vcmp.ge.f32.partialorder %v1169, 0.0
        %vm1234 = vcmp.ge.f32.partialorder %v1170, 0.0
        %vm1235 = vcmp.ge.f32.partialorder %v1171, 0.0
        %vm1236 = vcmp.ge.f32.partialorder %v1172, 0.0
        %vm1237 = vcmp.ge.f32.partialorder %v1173, 0.0
        %vm1238 = vcmp.ge.f32.partialorder %v1174, 0.0
        %vm1239 = vcmp.ge.f32.partialorder %v1175, 0.0
        %vm1240 = vcmp.ge.f32.partialorder %v1176, 0.0
        %vm1241 = vcmp.ge.f32.partialorder %v1177, 0.0
        %vm1242 = vcmp.ge.f32.partialorder %v1178, 0.0
        %vm1243 = vcmp.ge.f32.partialorder %v1179, 0.0
        %vm1244 = vcmp.ge.f32.partialorder %v1180, 0.0
        %vm1245 = vcmp.ge.f32.partialorder %v1181, 0.0
        %v1246 = vmul.f32 %v1118, 0.2
        %v1247 = vmul.f32 %v1119, 0.2
        %v1248 = vmul.f32 %v1120, 0.2
        %v1249 = vmul.f32 %v1121, 0.2
        %v1250 = vmul.f32 %v1122, 0.2
        %v1251 = vmul.f32 %v1123, 0.2
        %v1252 = vmul.f32 %v1124, 0.2
        %v1253 = vmul.f32 %v1125, 0.2
        %v1254 = vmul.f32 %v1126, 0.2
        %v1255 = vmul.f32 %v1127, 0.2
        %v1256 = vmul.f32 %v1128, 0.2
        %v1257 = vmul.f32 %v1129, 0.2
        %v1258 = vmul.f32 %v1130, 0.2
        %v1259 = vmul.f32 %v1131, 0.2
        %v1260 = vmul.f32 %v1132, 0.2
        %v1261 = vmul.f32 %v1133, 0.2
        %v1262 = vmul.f32 %v1134, 0.2
        %v1263 = vmul.f32 %v1135, 0.2
        %v1264 = vmul.f32 %v1136, 0.2
        %v1265 = vmul.f32 %v1137, 0.2
        %v1266 = vmul.f32 %v1138, 0.2
        %v1267 = vmul.f32 %v1139, 0.2
        %v1268 = vmul.f32 %v1140, 0.2
        %v1269 = vmul.f32 %v1141, 0.2
        %v1270 = vmul.f32 %v1142, 0.2
        %v1271 = vmul.f32 %v1143, 0.2
        %v1272 = vmul.f32 %v1144, 0.2
        %v1273 = vmul.f32 %v1145, 0.2
        %v1274 = vmul.f32 %v1146, 0.2
        %v1275 = vmul.f32 %v1147, 0.2
        %v1276 = vmul.f32 %v1148, 0.2
        %v1277 = vmul.f32 %v1149, 0.2
        %v1278 = vmul.f32 %v1150, 0.2
        %v1279 = vmul.f32 %v1151, 0.2
        %v1280 = vmul.f32 %v1152, 0.2
        %v1281 = vmul.f32 %v1153, 0.2
        %v1282 = vmul.f32 %v1154, 0.2
        %v1283 = vmul.f32 %v1155, 0.2
        %v1284 = vmul.f32 %v1156, 0.2
        %v1285 = vmul.f32 %v1157, 0.2
        %v1286 = vmul.f32 %v1158, 0.2
        %v1287 = vmul.f32 %v1159, 0.2
        %v1288 = vmul.f32 %v1160, 0.2
        %v1289 = vmul.f32 %v1161, 0.2
        %v1290 = vmul.f32 %v1162, 0.2
        %v1291 = vmul.f32 %v1163, 0.2
        %v1292 = vmul.f32 %v1164, 0.2
        %v1293 = vmul.f32 %v1165, 0.2
        %v1294 = vmul.f32 %v1166, 0.2
        %v1295 = vmul.f32 %v1167, 0.2
        %v1296 = vmul.f32 %v1168, 0.2
        %v1297 = vmul.f32 %v1169, 0.2
        %v1298 = vmul.f32 %v1170, 0.2
        %v1299 = vmul.f32 %v1171, 0.2
        %v1300 = vmul.f32 %v1172, 0.2
        %v1301 = vmul.f32 %v1173, 0.2
        %v1302 = vmul.f32 %v1174, 0.2
        %v1303 = vmul.f32 %v1175, 0.2
        %v1304 = vmul.f32 %v1176, 0.2
        %v1305 = vmul.f32 %v1177, 0.2
        %v1306 = vmul.f32 %v1178, 0.2
        %v1307 = vmul.f32 %v1179, 0.2
        %v1308 = vmul.f32 %v1180, 0.2
        %v1309 = vmul.f32 %v1181, 0.2
        %v1310 = vsel %vm1182, %v1118, %v1246
        %v1311 = vsel %vm1183, %v1119, %v1247
        %v1312 = vsel %vm1184, %v1120, %v1248
        %v1313 = vsel %vm1185, %v1121, %v1249
        %v1314 = vsel %vm1186, %v1122, %v1250
        %v1315 = vsel %vm1187, %v1123, %v1251
        %v1316 = vsel %vm1188, %v1124, %v1252
        %v1317 = vsel %vm1189, %v1125, %v1253
        %v1318 = vsel %vm1190, %v1126, %v1254
        %v1319 = vsel %vm1191, %v1127, %v1255
        %v1320 = vsel %vm1192, %v1128, %v1256
        %v1321 = vsel %vm1193, %v1129, %v1257
        %v1322 = vsel %vm1194, %v1130, %v1258
        %v1323 = vsel %vm1195, %v1131, %v1259
        %v1324 = vsel %vm1196, %v1132, %v1260
        %v1325 = vsel %vm1197, %v1133, %v1261
        %v1326 = vsel %vm1198, %v1134, %v1262
        %v1327 = vsel %vm1199, %v1135, %v1263
        %v1328 = vsel %vm1200, %v1136, %v1264
        %v1329 = vsel %vm1201, %v1137, %v1265
        %v1330 = vsel %vm1202, %v1138, %v1266
        %v1331 = vsel %vm1203, %v1139, %v1267
        %v1332 = vsel %vm1204, %v1140, %v1268
        %v1333 = vsel %vm1205, %v1141, %v1269
        %v1334 = vsel %vm1206, %v1142, %v1270
        %v1335 = vsel %vm1207, %v1143, %v1271
        %v1336 = vsel %vm1208, %v1144, %v1272
        %v1337 = vsel %vm1209, %v1145, %v1273
        %v1338 = vsel %vm1210, %v1146, %v1274
        %v1339 = vsel %vm1211, %v1147, %v1275
        %v1340 = vsel %vm1212, %v1148, %v1276
        %v1341 = vsel %vm1213, %v1149, %v1277
        %v1342 = vsel %vm1214, %v1150, %v1278
        %v1343 = vsel %vm1215, %v1151, %v1279
        %v1344 = vsel %vm1216, %v1152, %v1280
        %v1345 = vsel %vm1217, %v1153, %v1281
        %v1346 = vsel %vm1218, %v1154, %v1282
        %v1347 = vsel %vm1219, %v1155, %v1283
        %v1348 = vsel %vm1220, %v1156, %v1284
        %v1349 = vsel %vm1221, %v1157, %v1285
        %v1350 = vsel %vm1222, %v1158, %v1286
        %v1351 = vsel %vm1223, %v1159, %v1287
        %v1352 = vsel %vm1224, %v1160, %v1288
        %v1353 = vsel %vm1225, %v1161, %v1289
        %v1354 = vsel %vm1226, %v1162, %v1290
        %v1355 = vsel %vm1227, %v1163, %v1291
        %v1356 = vsel %vm1228, %v1164, %v1292
        %v1357 = vsel %vm1229, %v1165, %v1293
        %v1358 = vsel %vm1230, %v1166, %v1294
        %v1359 = vsel %vm1231, %v1167, %v1295
        %v1360 = vsel %vm1232, %v1168, %v1296
        %v1361 = vsel %vm1233, %v1169, %v1297
        %v1362 = vsel %vm1234, %v1170, %v1298
        %v1363 = vsel %vm1235, %v1171, %v1299
        %v1364 = vsel %vm1236, %v1172, %v1300
        %v1365 = vsel %vm1237, %v1173, %v1301
        %v1366 = vsel %vm1238, %v1174, %v1302
        %v1367 = vsel %vm1239, %v1175, %v1303
        %v1368 = vsel %vm1240, %v1176, %v1304
        %v1369 = vsel %vm1241, %v1177, %v1305
        %v1370 = vsel %vm1242, %v1178, %v1306
        %v1371 = vsel %vm1243, %v1179, %v1307
        %v1372 = vsel %vm1244, %v1180, %v1308
        %v1373 = vsel %vm1245, %v1181, %v1309
        %v1374 = vpack.c.bf16 %v1311, %v1310
        %v1375 = vpack.c.bf16 %v1313, %v1312
        %v1376 = vpack.c.bf16 %v1315, %v1314
        %v1377 = vpack.c.bf16 %v1317, %v1316
        %v1378 = vpack.c.bf16 %v1319, %v1318
        %v1379 = vpack.c.bf16 %v1321, %v1320
        %v1380 = vpack.c.bf16 %v1323, %v1322
        %v1381 = vpack.c.bf16 %v1325, %v1324
        %v1382 = vpack.c.bf16 %v1327, %v1326
        %v1383 = vpack.c.bf16 %v1329, %v1328
        %v1384 = vpack.c.bf16 %v1331, %v1330
        %v1385 = vpack.c.bf16 %v1333, %v1332
        %v1386 = vpack.c.bf16 %v1335, %v1334
        %v1387 = vpack.c.bf16 %v1337, %v1336
        %v1388 = vpack.c.bf16 %v1339, %v1338
        %v1389 = vpack.c.bf16 %v1341, %v1340
        %v1390 = vpack.c.bf16 %v1343, %v1342
        %v1391 = vpack.c.bf16 %v1345, %v1344
        %v1392 = vpack.c.bf16 %v1347, %v1346
        %v1393 = vpack.c.bf16 %v1349, %v1348
        %v1394 = vpack.c.bf16 %v1351, %v1350
        %v1395 = vpack.c.bf16 %v1353, %v1352
        %v1396 = vpack.c.bf16 %v1355, %v1354
        %v1397 = vpack.c.bf16 %v1357, %v1356
        %v1398 = vpack.c.bf16 %v1359, %v1358
        %v1399 = vpack.c.bf16 %v1361, %v1360
        %v1400 = vpack.c.bf16 %v1363, %v1362
        %v1401 = vpack.c.bf16 %v1365, %v1364
        %v1402 = vpack.c.bf16 %v1367, %v1366
        %v1403 = vpack.c.bf16 %v1369, %v1368
        %v1404 = vpack.c.bf16 %v1371, %v1370
        %v1405 = vpack.c.bf16 %v1373, %v1372
        %v1438 = vunpack.c.l.b16 %v1374
        %v1439 = vunpack.c.h.b16 %v1374
        %v1440 = vunpack.c.l.b16 %v1375
        %v1441 = vunpack.c.h.b16 %v1375
        %v1442 = vunpack.c.l.b16 %v1376
        %v1443 = vunpack.c.h.b16 %v1376
        %v1444 = vunpack.c.l.b16 %v1377
        %v1445 = vunpack.c.h.b16 %v1377
        %v1446 = vunpack.c.l.b16 %v1378
        %v1447 = vunpack.c.h.b16 %v1378
        %v1448 = vunpack.c.l.b16 %v1379
        %v1449 = vunpack.c.h.b16 %v1379
        %v1450 = vunpack.c.l.b16 %v1380
        %v1451 = vunpack.c.h.b16 %v1380
        %v1452 = vunpack.c.l.b16 %v1381
        %v1453 = vunpack.c.h.b16 %v1381
        %v1454 = vunpack.c.l.b16 %v1382
        %v1455 = vunpack.c.h.b16 %v1382
        %v1456 = vunpack.c.l.b16 %v1383
        %v1457 = vunpack.c.h.b16 %v1383
        %v1458 = vunpack.c.l.b16 %v1384
        %v1459 = vunpack.c.h.b16 %v1384
        %v1460 = vunpack.c.l.b16 %v1385
        %v1461 = vunpack.c.h.b16 %v1385
        %v1462 = vunpack.c.l.b16 %v1386
        %v1463 = vunpack.c.h.b16 %v1386
        %v1464 = vunpack.c.l.b16 %v1387
        %v1465 = vunpack.c.h.b16 %v1387
        %v1466 = vunpack.c.l.b16 %v1388
        %v1467 = vunpack.c.h.b16 %v1388
        %v1468 = vunpack.c.l.b16 %v1389
        %v1469 = vunpack.c.h.b16 %v1389
        %v1470 = vunpack.c.l.b16 %v1390
        %v1471 = vunpack.c.h.b16 %v1390
        %v1472 = vunpack.c.l.b16 %v1391
        %v1473 = vunpack.c.h.b16 %v1391
        %v1474 = vunpack.c.l.b16 %v1392
        %v1475 = vunpack.c.h.b16 %v1392
        %v1476 = vunpack.c.l.b16 %v1393
        %v1477 = vunpack.c.h.b16 %v1393
        %v1478 = vunpack.c.l.b16 %v1394
        %v1479 = vunpack.c.h.b16 %v1394
        %v1480 = vunpack.c.l.b16 %v1395
        %v1481 = vunpack.c.h.b16 %v1395
        %v1482 = vunpack.c.l.b16 %v1396
        %v1483 = vunpack.c.h.b16 %v1396
        %v1484 = vunpack.c.l.b16 %v1397
        %v1485 = vunpack.c.h.b16 %v1397
        %v1486 = vunpack.c.l.b16 %v1398
        %v1487 = vunpack.c.h.b16 %v1398
        %v1488 = vunpack.c.l.b16 %v1399
        %v1489 = vunpack.c.h.b16 %v1399
        %v1490 = vunpack.c.l.b16 %v1400
        %v1491 = vunpack.c.h.b16 %v1400
        %v1492 = vunpack.c.l.b16 %v1401
        %v1493 = vunpack.c.h.b16 %v1401
        %v1494 = vunpack.c.l.b16 %v1402
        %v1495 = vunpack.c.h.b16 %v1402
        %v1496 = vunpack.c.l.b16 %v1403
        %v1497 = vunpack.c.h.b16 %v1403
        %v1498 = vunpack.c.l.b16 %v1404
        %v1499 = vunpack.c.h.b16 %v1404
        %v1500 = vunpack.c.l.b16 %v1405
        %v1501 = vunpack.c.h.b16 %v1405
        %v1502 = vpack.c.b16 %v1438, %v1438
        %v1503 = vpack.c.b16 %v1439, %v1439
        %v1504 = vpack.c.b16 %v1440, %v1440
        %v1505 = vpack.c.b16 %v1441, %v1441
        %v1506 = vpack.c.b16 %v1442, %v1442
        %v1507 = vpack.c.b16 %v1443, %v1443
        %v1508 = vpack.c.b16 %v1444, %v1444
        %v1509 = vpack.c.b16 %v1445, %v1445
        %v1510 = vpack.c.b16 %v1446, %v1446
        %v1511 = vpack.c.b16 %v1447, %v1447
        %v1512 = vpack.c.b16 %v1448, %v1448
        %v1513 = vpack.c.b16 %v1449, %v1449
        %v1514 = vpack.c.b16 %v1450, %v1450
        %v1515 = vpack.c.b16 %v1451, %v1451
        %v1516 = vpack.c.b16 %v1452, %v1452
        %v1517 = vpack.c.b16 %v1453, %v1453
        %v1518 = vpack.c.b16 %v1454, %v1454
        %v1519 = vpack.c.b16 %v1455, %v1455
        %v1520 = vpack.c.b16 %v1456, %v1456
        %v1521 = vpack.c.b16 %v1457, %v1457
        %v1522 = vpack.c.b16 %v1458, %v1458
        %v1523 = vpack.c.b16 %v1459, %v1459
        %v1524 = vpack.c.b16 %v1460, %v1460
        %v1525 = vpack.c.b16 %v1461, %v1461
        %v1526 = vpack.c.b16 %v1462, %v1462
        %v1527 = vpack.c.b16 %v1463, %v1463
        %v1528 = vpack.c.b16 %v1464, %v1464
        %v1529 = vpack.c.b16 %v1465, %v1465
        %v1530 = vpack.c.b16 %v1466, %v1466
        %v1531 = vpack.c.b16 %v1467, %v1467
        %v1532 = vpack.c.b16 %v1468, %v1468
        %v1533 = vpack.c.b16 %v1469, %v1469
        %v1534 = vpack.c.b16 %v1470, %v1470
        %v1535 = vpack.c.b16 %v1471, %v1471
        %v1536 = vpack.c.b16 %v1472, %v1472
        %v1537 = vpack.c.b16 %v1473, %v1473
        %v1538 = vpack.c.b16 %v1474, %v1474
        %v1539 = vpack.c.b16 %v1475, %v1475
        %v1540 = vpack.c.b16 %v1476, %v1476
        %v1541 = vpack.c.b16 %v1477, %v1477
        %v1542 = vpack.c.b16 %v1478, %v1478
        %v1543 = vpack.c.b16 %v1479, %v1479
        %v1544 = vpack.c.b16 %v1480, %v1480
        %v1545 = vpack.c.b16 %v1481, %v1481
        %v1546 = vpack.c.b16 %v1482, %v1482
        %v1547 = vpack.c.b16 %v1483, %v1483
        %v1548 = vpack.c.b16 %v1484, %v1484
        %v1549 = vpack.c.b16 %v1485, %v1485
        %v1550 = vpack.c.b16 %v1486, %v1486
        %v1551 = vpack.c.b16 %v1487, %v1487
        %v1552 = vpack.c.b16 %v1488, %v1488
        %v1553 = vpack.c.b16 %v1489, %v1489
        %v1554 = vpack.c.b16 %v1490, %v1490
        %v1555 = vpack.c.b16 %v1491, %v1491
        %v1556 = vpack.c.b16 %v1492, %v1492
        %v1557 = vpack.c.b16 %v1493, %v1493
        %v1558 = vpack.c.b16 %v1494, %v1494
        %v1559 = vpack.c.b16 %v1495, %v1495
        %v1560 = vpack.c.b16 %v1496, %v1496
        %v1561 = vpack.c.b16 %v1497, %v1497
        %v1562 = vpack.c.b16 %v1498, %v1498
        %v1563 = vpack.c.b16 %v1499, %v1499
        %v1564 = vpack.c.b16 %v1500, %v1500
        %v1565 = vpack.c.b16 %v1501, %v1501
        %vm1630 = vcmask 125952
        %1631 = vst.msk [vmem:[%s216] sm:$0xf] %vm1630, %v1502
        %1632 = vst.msk [vmem:[%s216 + $0x4] sm:$0xf] %vm1630, %v1503
        %1633 = vst.msk [vmem:[%s216 + $0x8] sm:$0xf] %vm1630, %v1504
        %1634 = vst.msk [vmem:[%s216 + $0xc] sm:$0xf] %vm1630, %v1505
        %1635 = vst.msk [vmem:[%s216 + $0x10] sm:$0xf] %vm1630, %v1506
        %1636 = vst.msk [vmem:[%s216 + $0x14] sm:$0xf] %vm1630, %v1507
        %1637 = vst.msk [vmem:[%s216 + $0x18] sm:$0xf] %vm1630, %v1508
        %1638 = vst.msk [vmem:[%s216 + $0x1c] sm:$0xf] %vm1630, %v1509
        %1639 = vst.msk [vmem:[%s216 + $0x20] sm:$0xf] %vm1630, %v1510
        %1640 = vst.msk [vmem:[%s216 + $0x24] sm:$0xf] %vm1630, %v1511
        %1641 = vst.msk [vmem:[%s216 + $0x28] sm:$0xf] %vm1630, %v1512
        %1642 = vst.msk [vmem:[%s216 + $0x2c] sm:$0xf] %vm1630, %v1513
        %1643 = vst.msk [vmem:[%s216 + $0x30] sm:$0xf] %vm1630, %v1514
        %1644 = vst.msk [vmem:[%s216 + $0x34] sm:$0xf] %vm1630, %v1515
        %1645 = vst.msk [vmem:[%s216 + $0x38] sm:$0xf] %vm1630, %v1516
        %1646 = vst.msk [vmem:[%s216 + $0x3c] sm:$0xf] %vm1630, %v1517
        %1647 = vst.msk [vmem:[%s216 + $0x40] sm:$0xf] %vm1630, %v1518
        %1648 = vst.msk [vmem:[%s216 + $0x44] sm:$0xf] %vm1630, %v1519
        %1649 = vst.msk [vmem:[%s216 + $0x48] sm:$0xf] %vm1630, %v1520
        %1650 = vst.msk [vmem:[%s216 + $0x4c] sm:$0xf] %vm1630, %v1521
        %1651 = vst.msk [vmem:[%s216 + $0x50] sm:$0xf] %vm1630, %v1522
        %1652 = vst.msk [vmem:[%s216 + $0x54] sm:$0xf] %vm1630, %v1523
        %1653 = vst.msk [vmem:[%s216 + $0x58] sm:$0xf] %vm1630, %v1524
        %1654 = vst.msk [vmem:[%s216 + $0x5c] sm:$0xf] %vm1630, %v1525
        %1655 = vst.msk [vmem:[%s216 + $0x60] sm:$0xf] %vm1630, %v1526
        %1656 = vst.msk [vmem:[%s216 + $0x64] sm:$0xf] %vm1630, %v1527
        %1657 = vst.msk [vmem:[%s216 + $0x68] sm:$0xf] %vm1630, %v1528
        %1658 = vst.msk [vmem:[%s216 + $0x6c] sm:$0xf] %vm1630, %v1529
        %1659 = vst.msk [vmem:[%s216 + $0x70] sm:$0xf] %vm1630, %v1530
        %1660 = vst.msk [vmem:[%s216 + $0x74] sm:$0xf] %vm1630, %v1531
        %1661 = vst.msk [vmem:[%s216 + $0x78] sm:$0xf] %vm1630, %v1532
        %1662 = vst.msk [vmem:[%s216 + $0x7c] sm:$0xf] %vm1630, %v1533
        %1663 = vst.msk [vmem:[%s216 + $0x80] sm:$0xf] %vm1630, %v1534
        %1664 = vst.msk [vmem:[%s216 + $0x84] sm:$0xf] %vm1630, %v1535
        %1665 = vst.msk [vmem:[%s216 + $0x88] sm:$0xf] %vm1630, %v1536
        %1666 = vst.msk [vmem:[%s216 + $0x8c] sm:$0xf] %vm1630, %v1537
        %1667 = vst.msk [vmem:[%s216 + $0x90] sm:$0xf] %vm1630, %v1538
        %1668 = vst.msk [vmem:[%s216 + $0x94] sm:$0xf] %vm1630, %v1539
        %1669 = vst.msk [vmem:[%s216 + $0x98] sm:$0xf] %vm1630, %v1540
        %1670 = vst.msk [vmem:[%s216 + $0x9c] sm:$0xf] %vm1630, %v1541
        %1671 = vst.msk [vmem:[%s216 + $0xa0] sm:$0xf] %vm1630, %v1542
        %1672 = vst.msk [vmem:[%s216 + $0xa4] sm:$0xf] %vm1630, %v1543
        %1673 = vst.msk [vmem:[%s216 + $0xa8] sm:$0xf] %vm1630, %v1544
        %1674 = vst.msk [vmem:[%s216 + $0xac] sm:$0xf] %vm1630, %v1545
        %1675 = vst.msk [vmem:[%s216 + $0xb0] sm:$0xf] %vm1630, %v1546
        %1676 = vst.msk [vmem:[%s216 + $0xb4] sm:$0xf] %vm1630, %v1547
        %1677 = vst.msk [vmem:[%s216 + $0xb8] sm:$0xf] %vm1630, %v1548
        %1678 = vst.msk [vmem:[%s216 + $0xbc] sm:$0xf] %vm1630, %v1549
        %1679 = vst.msk [vmem:[%s216 + $0xc0] sm:$0xf] %vm1630, %v1550
        %1680 = vst.msk [vmem:[%s216 + $0xc4] sm:$0xf] %vm1630, %v1551
        %1681 = vst.msk [vmem:[%s216 + $0xc8] sm:$0xf] %vm1630, %v1552
        %1682 = vst.msk [vmem:[%s216 + $0xcc] sm:$0xf] %vm1630, %v1553
        %1683 = vst.msk [vmem:[%s216 + $0xd0] sm:$0xf] %vm1630, %v1554
        %1684 = vst.msk [vmem:[%s216 + $0xd4] sm:$0xf] %vm1630, %v1555
        %1685 = vst.msk [vmem:[%s216 + $0xd8] sm:$0xf] %vm1630, %v1556
        %1686 = vst.msk [vmem:[%s216 + $0xdc] sm:$0xf] %vm1630, %v1557
        %1687 = vst.msk [vmem:[%s216 + $0xe0] sm:$0xf] %vm1630, %v1558
        %1688 = vst.msk [vmem:[%s216 + $0xe4] sm:$0xf] %vm1630, %v1559
        %1689 = vst.msk [vmem:[%s216 + $0xe8] sm:$0xf] %vm1630, %v1560
        %1690 = vst.msk [vmem:[%s216 + $0xec] sm:$0xf] %vm1630, %v1561
        %1691 = vst.msk [vmem:[%s216 + $0xf0] sm:$0xf] %vm1630, %v1562
        %1692 = vst.msk [vmem:[%s216 + $0xf4] sm:$0xf] %vm1630, %v1563
        %1693 = vst.msk [vmem:[%s216 + $0xf8] sm:$0xf] %vm1630, %v1564
        %1694 = vst.msk [vmem:[%s216 + $0xfc] sm:$0xf] %vm1630, %v1565
      $region36: #{discriminator_forward.8} parent=27 // pred_fallthru
        _
      %s1695 = smul.u32 64, %s18
      %p1696 = scmp.lt.s32.totalorder %s1695, 255
      %s1697 = scalar_select %p1696, %s1695, 255
      %p1698 = scmp.lt.s32.totalorder %s19, 0
      %s1699 = scalar_select %p1698, %s19, 0
      %s1700 = sadd.s32 %s1699, %s1697
      %s1701 = smul.addr %s1700, 4
      %s1702 = scalar_lea.vmem %s2, %s1701
      // Predicated region
      $region37: #{discriminator_forward.8} parent=27 // pred_check
        %p1703 = pneg %p108
      $region38: #{discriminator_forward.8} parent=27 // pred_check_branch
        %1705 = sbr.rel (%p1703) target = $region40
      $region39: #{discriminator_forward.8} parent=27 // pred_region
        %s1706 = smul.u32 64, %s18
      $region40: #{discriminator_forward.8} parent=27 // pred_fallthru
        _
    $region28: #{discriminator_forward.8} parent=5 // pred_fallthru
      _
    %p1707 = scmp.le.s32.totalorder 2, %s8
    // Predicated region
    $region41: #{discriminator_forward.8} parent=5 // pred_check
      %p1708 = pneg %p1707
    $region42: #{discriminator_forward.8} parent=5 // pred_check_branch
      %1710 = sbr.rel (%p1708) target = $region44
    $region43: #{discriminator_forward.8} parent=5 // pred_region
      %s1711 = ssub.s32 %s8, 2
      // Predicated region
      $region45: #{discriminator_forward.8} parent=43 // pred_check
        %p1712 = pneg %p114
      $region46: #{discriminator_forward.8} parent=43 // pred_check_branch
        %1714 = sbr.rel (%p1712) target = $region48
      $region47: #{discriminator_forward.8} parent=43 // pred_region
        %s1715 = smul.u32 64, %s21
        %p1716 = scmp.lt.s32.totalorder %s1715, 255
        %s1717 = scalar_select %p1716, %s1715, 255
        %p1718 = scmp.lt.s32.totalorder %s22, 0
        %s1719 = scalar_select %p1718, %s22, 0
        %s1720 = sadd.s32 %s1719, %s1717
        %s1721 = smul.addr %s1720, 4
        %s1722 = scalar_lea.vmem %s2, %s1721
      $region48: #{discriminator_forward.8} parent=43 // pred_fallthru
        _
    $region44: #{discriminator_forward.8} parent=5 // pred_fallthru
      _
  $region6: #{discriminator_forward.8} parent=0 // loop_footer
    %s12 = sadd.s32 1, %s8
  $region7: #{discriminator_forward.8} parent=0 // loop_footer_branch
    %7 = sbr.rel target = $region3
  $region8: #{discriminator_forward.8} parent=0 // loop_exit
    _

// kernel: discriminator_forward.9
$region0: #{discriminator_forward.9}
  #allocation0 [shape = 'u32[]', space=smem, size = 0x4, offset = 0x4, fixed_abs, tag = 'smem constant byte address 0x4 - core index']
  #allocation1 [shape = 'u32[144,128]{1,0:T(1,128)}', space=vmem, size = 0x12000, scoped, tag = 'internal scratch']
  #allocation2 [shape = 'f32[512,32]{1,0:T(8,128)}', space=vmem, size = 0x40000, scoped, tag = 'scratch operand']
  %s0 = inlined_call_operand.vmem [shape: bf16[512,256], index: 0, kind: input, shape index: {}]
  %s1 = inlined_call_operand.vmem [shape: bf16[256,32], index: 1, kind: input, shape index: {}]
  %s2 = inlined_call_operand.vmem [shape: bf16[512,32], index: 2, kind: output, shape index: {0}]
  %s3 = inlined_call_operand.vmem [shape: f32[1,1,32], index: 3, kind: output, shape index: {1}]
  %s4 = inlined_call_operand.vmem [shape: f32[1,1,32], index: 4, kind: output, shape index: {2}]
  %5 = xla_tuple %s2, %s3, %s4
  %s6 = sld [smem:[#allocation0]]
  $region42: #{discriminator_forward.9} parent=0
    _
  %s8 = ssub.s32 1, %s6
  %s9 = scalar_select 0, %s8, %s6
  // Predicated region
  $region2: #{discriminator_forward.9} parent=0 // pred_check
    _
  $region3: #{discriminator_forward.9} parent=0 // pred_check_branch
    %11 = sbr.rel (0) target = $region5
  $region4: #{discriminator_forward.9} parent=0 // pred_region
    _
  $region5: #{discriminator_forward.9} parent=0 // pred_fallthru
    _
  // Predicated region
  $region6: #{discriminator_forward.9} parent=0 // pred_check
    _
  $region7: #{discriminator_forward.9} parent=0 // pred_check_branch
    %13 = sbr.rel (0) target = $region9
  $region8: #{discriminator_forward.9} parent=0 // pred_region
    _
  $region9: #{discriminator_forward.9} parent=0 // pred_fallthru
    _
  %p15 = scmp.eq.s32.totalorder 0, 0
  // Predicated region
  $region10: #{discriminator_forward.9} parent=0 // pred_check
    %p16 = pneg %p15
  $region11: #{discriminator_forward.9} parent=0 // pred_check_branch
    %18 = sbr.rel (%p16) target = $region13
  $region12: #{discriminator_forward.9} parent=0 // pred_region
    %vm19 = vcmask 261120
    %20 = vst.msk [vmem:[#allocation2] sm:$0xff] %vm19, 0.0
    %21 = vst.msk [vmem:[#allocation2 + $0x8] sm:$0xff] %vm19, 0.0
    %22 = vst.msk [vmem:[#allocation2 + $0x10] sm:$0xff] %vm19, 0.0
    %23 = vst.msk [vmem:[#allocation2 + $0x18] sm:$0xff] %vm19, 0.0
    %24 = vst.msk [vmem:[#allocation2 + $0x20] sm:$0xff] %vm19, 0.0
    %25 = vst.msk [vmem:[#allocation2 + $0x28] sm:$0xff] %vm19, 0.0
    %26 = vst.msk [vmem:[#allocation2 + $0x30] sm:$0xff] %vm19, 0.0
    %27 = vst.msk [vmem:[#allocation2 + $0x38] sm:$0xff] %vm19, 0.0
    %28 = vst.msk [vmem:[#allocation2 + $0x40] sm:$0xff] %vm19, 0.0
    %29 = vst.msk [vmem:[#allocation2 + $0x48] sm:$0xff] %vm19, 0.0
    %30 = vst.msk [vmem:[#allocation2 + $0x50] sm:$0xff] %vm19, 0.0
    %31 = vst.msk [vmem:[#allocation2 + $0x58] sm:$0xff] %vm19, 0.0
    %32 = vst.msk [vmem:[#allocation2 + $0x60] sm:$0xff] %vm19, 0.0
    %33 = vst.msk [vmem:[#allocation2 + $0x68] sm:$0xff] %vm19, 0.0
    %34 = vst.msk [vmem:[#allocation2 + $0x70] sm:$0xff] %vm19, 0.0
    %35 = vst.msk [vmem:[#allocation2 + $0x78] sm:$0xff] %vm19, 0.0
    %36 = vst.msk [vmem:[#allocation2 + $0x80] sm:$0xff] %vm19, 0.0
    %37 = vst.msk [vmem:[#allocation2 + $0x88] sm:$0xff] %vm19, 0.0
    %38 = vst.msk [vmem:[#allocation2 + $0x90] sm:$0xff] %vm19, 0.0
    %39 = vst.msk [vmem:[#allocation2 + $0x98] sm:$0xff] %vm19, 0.0
    %40 = vst.msk [vmem:[#allocation2 + $0xa0] sm:$0xff] %vm19, 0.0
    %41 = vst.msk [vmem:[#allocation2 + $0xa8] sm:$0xff] %vm19, 0.0
    %42 = vst.msk [vmem:[#allocation2 + $0xb0] sm:$0xff] %vm19, 0.0
    %43 = vst.msk [vmem:[#allocation2 + $0xb8] sm:$0xff] %vm19, 0.0
    %44 = vst.msk [vmem:[#allocation2 + $0xc0] sm:$0xff] %vm19, 0.0
    %45 = vst.msk [vmem:[#allocation2 + $0xc8] sm:$0xff] %vm19, 0.0
    %46 = vst.msk [vmem:[#allocation2 + $0xd0] sm:$0xff] %vm19, 0.0
    %47 = vst.msk [vmem:[#allocation2 + $0xd8] sm:$0xff] %vm19, 0.0
    %48 = vst.msk [vmem:[#allocation2 + $0xe0] sm:$0xff] %vm19, 0.0
    %49 = vst.msk [vmem:[#allocation2 + $0xe8] sm:$0xff] %vm19, 0.0
    %50 = vst.msk [vmem:[#allocation2 + $0xf0] sm:$0xff] %vm19, 0.0
    %51 = vst.msk [vmem:[#allocation2 + $0xf8] sm:$0xff] %vm19, 0.0
    %52 = vst.msk [vmem:[#allocation2 + $0x100] sm:$0xff] %vm19, 0.0
    %53 = vst.msk [vmem:[#allocation2 + $0x108] sm:$0xff] %vm19, 0.0
    %54 = vst.msk [vmem:[#allocation2 + $0x110] sm:$0xff] %vm19, 0.0
    %55 = vst.msk [vmem:[#allocation2 + $0x118] sm:$0xff] %vm19, 0.0
    %56 = vst.msk [vmem:[#allocation2 + $0x120] sm:$0xff] %vm19, 0.0
    %57 = vst.msk [vmem:[#allocation2 + $0x128] sm:$0xff] %vm19, 0.0
    %58 = vst.msk [vmem:[#allocation2 + $0x130] sm:$0xff] %vm19, 0.0
    %59 = vst.msk [vmem:[#allocation2 + $0x138] sm:$0xff] %vm19, 0.0
    %60 = vst.msk [vmem:[#allocation2 + $0x140] sm:$0xff] %vm19, 0.0
    %61 = vst.msk [vmem:[#allocation2 + $0x148] sm:$0xff] %vm19, 0.0
    %62 = vst.msk [vmem:[#allocation2 + $0x150] sm:$0xff] %vm19, 0.0
    %63 = vst.msk [vmem:[#allocation2 + $0x158] sm:$0xff] %vm19, 0.0
    %64 = vst.msk [vmem:[#allocation2 + $0x160] sm:$0xff] %vm19, 0.0
    %65 = vst.msk [vmem:[#allocation2 + $0x168] sm:$0xff] %vm19, 0.0
    %66 = vst.msk [vmem:[#allocation2 + $0x170] sm:$0xff] %vm19, 0.0
    %67 = vst.msk [vmem:[#allocation2 + $0x178] sm:$0xff] %vm19, 0.0
    %68 = vst.msk [vmem:[#allocation2 + $0x180] sm:$0xff] %vm19, 0.0
    %69 = vst.msk [vmem:[#allocation2 + $0x188] sm:$0xff] %vm19, 0.0
    %70 = vst.msk [vmem:[#allocation2 + $0x190] sm:$0xff] %vm19, 0.0
    %71 = vst.msk [vmem:[#allocation2 + $0x198] sm:$0xff] %vm19, 0.0
    %72 = vst.msk [vmem:[#allocation2 + $0x1a0] sm:$0xff] %vm19, 0.0
    %73 = vst.msk [vmem:[#allocation2 + $0x1a8] sm:$0xff] %vm19, 0.0
    %74 = vst.msk [vmem:[#allocation2 + $0x1b0] sm:$0xff] %vm19, 0.0
    %75 = vst.msk [vmem:[#allocation2 + $0x1b8] sm:$0xff] %vm19, 0.0
    %76 = vst.msk [vmem:[#allocation2 + $0x1c0] sm:$0xff] %vm19, 0.0
    %77 = vst.msk [vmem:[#allocation2 + $0x1c8] sm:$0xff] %vm19, 0.0
    %78 = vst.msk [vmem:[#allocation2 + $0x1d0] sm:$0xff] %vm19, 0.0
    %79 = vst.msk [vmem:[#allocation2 + $0x1d8] sm:$0xff] %vm19, 0.0
    %80 = vst.msk [vmem:[#allocation2 + $0x1e0] sm:$0xff] %vm19, 0.0
    %81 = vst.msk [vmem:[#allocation2 + $0x1e8] sm:$0xff] %vm19, 0.0
    %82 = vst.msk [vmem:[#allocation2 + $0x1f0] sm:$0xff] %vm19, 0.0
    %83 = vst.msk [vmem:[#allocation2 + $0x1f8] sm:$0xff] %vm19, 0.0
  $region13: #{discriminator_forward.9} parent=0 // pred_fallthru
    _
  %v84 = vld [vmem:[#allocation2] sm:$0xff]
  %v85 = vld [vmem:[#allocation2 + $0x8] sm:$0xff]
  %v86 = vld [vmem:[#allocation2 + $0x10] sm:$0xff]
  %v87 = vld [vmem:[#allocation2 + $0x18] sm:$0xff]
  %v88 = vld [vmem:[#allocation2 + $0x20] sm:$0xff]
  %v89 = vld [vmem:[#allocation2 + $0x28] sm:$0xff]
  %v90 = vld [vmem:[#allocation2 + $0x30] sm:$0xff]
  %v91 = vld [vmem:[#allocation2 + $0x38] sm:$0xff]
  %v92 = vld [vmem:[#allocation2 + $0x40] sm:$0xff]
  %v93 = vld [vmem:[#allocation2 + $0x48] sm:$0xff]
  %v94 = vld [vmem:[#allocation2 + $0x50] sm:$0xff]
  %v95 = vld [vmem:[#allocation2 + $0x58] sm:$0xff]
  %v96 = vld [vmem:[#allocation2 + $0x60] sm:$0xff]
  %v97 = vld [vmem:[#allocation2 + $0x68] sm:$0xff]
  %v98 = vld [vmem:[#allocation2 + $0x70] sm:$0xff]
  %v99 = vld [vmem:[#allocation2 + $0x78] sm:$0xff]
  %v100 = vld [vmem:[#allocation2 + $0x80] sm:$0xff]
  %v101 = vld [vmem:[#allocation2 + $0x88] sm:$0xff]
  %v102 = vld [vmem:[#allocation2 + $0x90] sm:$0xff]
  %v103 = vld [vmem:[#allocation2 + $0x98] sm:$0xff]
  %v104 = vld [vmem:[#allocation2 + $0xa0] sm:$0xff]
  %v105 = vld [vmem:[#allocation2 + $0xa8] sm:$0xff]
  %v106 = vld [vmem:[#allocation2 + $0xb0] sm:$0xff]
  %v107 = vld [vmem:[#allocation2 + $0xb8] sm:$0xff]
  %v108 = vld [vmem:[#allocation2 + $0xc0] sm:$0xff]
  %v109 = vld [vmem:[#allocation2 + $0xc8] sm:$0xff]
  %v110 = vld [vmem:[#allocation2 + $0xd0] sm:$0xff]
  %v111 = vld [vmem:[#allocation2 + $0xd8] sm:$0xff]
  %v112 = vld [vmem:[#allocation2 + $0xe0] sm:$0xff]
  %v113 = vld [vmem:[#allocation2 + $0xe8] sm:$0xff]
  %v114 = vld [vmem:[#allocation2 + $0xf0] sm:$0xff]
  %v115 = vld [vmem:[#allocation2 + $0xf8] sm:$0xff]
  %v116 = vld [vmem:[#allocation2 + $0x100] sm:$0xff]
  %v117 = vld [vmem:[#allocation2 + $0x108] sm:$0xff]
  %v118 = vld [vmem:[#allocation2 + $0x110] sm:$0xff]
  %v119 = vld [vmem:[#allocation2 + $0x118] sm:$0xff]
  %v120 = vld [vmem:[#allocation2 + $0x120] sm:$0xff]
  %v121 = vld [vmem:[#allocation2 + $0x128] sm:$0xff]
  %v122 = vld [vmem:[#allocation2 + $0x130] sm:$0xff]
  %v123 = vld [vmem:[#allocation2 + $0x138] sm:$0xff]
  %v124 = vld [vmem:[#allocation2 + $0x140] sm:$0xff]
  %v125 = vld [vmem:[#allocation2 + $0x148] sm:$0xff]
  %v126 = vld [vmem:[#allocation2 + $0x150] sm:$0xff]
  %v127 = vld [vmem:[#allocation2 + $0x158] sm:$0xff]
  %v128 = vld [vmem:[#allocation2 + $0x160] sm:$0xff]
  %v129 = vld [vmem:[#allocation2 + $0x168] sm:$0xff]
  %v130 = vld [vmem:[#allocation2 + $0x170] sm:$0xff]
  %v131 = vld [vmem:[#allocation2 + $0x178] sm:$0xff]
  %v132 = vld [vmem:[#allocation2 + $0x180] sm:$0xff]
  %v133 = vld [vmem:[#allocation2 + $0x188] sm:$0xff]
  %v134 = vld [vmem:[#allocation2 + $0x190] sm:$0xff]
  %v135 = vld [vmem:[#allocation2 + $0x198] sm:$0xff]
  %v136 = vld [vmem:[#allocation2 + $0x1a0] sm:$0xff]
  %v137 = vld [vmem:[#allocation2 + $0x1a8] sm:$0xff]
  %v138 = vld [vmem:[#allocation2 + $0x1b0] sm:$0xff]
  %v139 = vld [vmem:[#allocation2 + $0x1b8] sm:$0xff]
  %v140 = vld [vmem:[#allocation2 + $0x1c0] sm:$0xff]
  %v141 = vld [vmem:[#allocation2 + $0x1c8] sm:$0xff]
  %v142 = vld [vmem:[#allocation2 + $0x1d0] sm:$0xff]
  %v143 = vld [vmem:[#allocation2 + $0x1d8] sm:$0xff]
  %v144 = vld [vmem:[#allocation2 + $0x1e0] sm:$0xff]
  %v145 = vld [vmem:[#allocation2 + $0x1e8] sm:$0xff]
  %v146 = vld [vmem:[#allocation2 + $0x1f0] sm:$0xff]
  %v147 = vld [vmem:[#allocation2 + $0x1f8] sm:$0xff]
  %v148 = vld [vmem:[%s0] sm:$0xff]
  %v149 = vld [vmem:[%s0 + $0x8] sm:$0xff]
  %v150 = vld [vmem:[%s0 + $0x10] sm:$0xff]
  %v151 = vld [vmem:[%s0 + $0x18] sm:$0xff]
  %v152 = vld [vmem:[%s0 + $0x20] sm:$0xff]
  %v153 = vld [vmem:[%s0 + $0x28] sm:$0xff]
  %v154 = vld [vmem:[%s0 + $0x30] sm:$0xff]
  %v155 = vld [vmem:[%s0 + $0x38] sm:$0xff]
  %v156 = vld [vmem:[%s0 + $0x40] sm:$0xff]
  %v157 = vld [vmem:[%s0 + $0x48] sm:$0xff]
  %v158 = vld [vmem:[%s0 + $0x50] sm:$0xff]
  %v159 = vld [vmem:[%s0 + $0x58] sm:$0xff]
  %v160 = vld [vmem:[%s0 + $0x60] sm:$0xff]
  %v161 = vld [vmem:[%s0 + $0x68] sm:$0xff]
  %v162 = vld [vmem:[%s0 + $0x70] sm:$0xff]
  %v163 = vld [vmem:[%s0 + $0x78] sm:$0xff]
  %v164 = vld [vmem:[%s0 + $0x80] sm:$0xff]
  %v165 = vld [vmem:[%s0 + $0x88] sm:$0xff]
  %v166 = vld [vmem:[%s0 + $0x90] sm:$0xff]
  %v167 = vld [vmem:[%s0 + $0x98] sm:$0xff]
  %v168 = vld [vmem:[%s0 + $0xa0] sm:$0xff]
  %v169 = vld [vmem:[%s0 + $0xa8] sm:$0xff]
  %v170 = vld [vmem:[%s0 + $0xb0] sm:$0xff]
  %v171 = vld [vmem:[%s0 + $0xb8] sm:$0xff]
  %v172 = vld [vmem:[%s0 + $0xc0] sm:$0xff]
  %v173 = vld [vmem:[%s0 + $0xc8] sm:$0xff]
  %v174 = vld [vmem:[%s0 + $0xd0] sm:$0xff]
  %v175 = vld [vmem:[%s0 + $0xd8] sm:$0xff]
  %v176 = vld [vmem:[%s0 + $0xe0] sm:$0xff]
  %v177 = vld [vmem:[%s0 + $0xe8] sm:$0xff]
  %v178 = vld [vmem:[%s0 + $0xf0] sm:$0xff]
  %v179 = vld [vmem:[%s0 + $0xf8] sm:$0xff]
  %v180 = vld [vmem:[%s0 + $0x100] sm:$0xff]
  %v181 = vld [vmem:[%s0 + $0x108] sm:$0xff]
  %v182 = vld [vmem:[%s0 + $0x110] sm:$0xff]
  %v183 = vld [vmem:[%s0 + $0x118] sm:$0xff]
  %v184 = vld [vmem:[%s0 + $0x120] sm:$0xff]
  %v185 = vld [vmem:[%s0 + $0x128] sm:$0xff]
  %v186 = vld [vmem:[%s0 + $0x130] sm:$0xff]
  %v187 = vld [vmem:[%s0 + $0x138] sm:$0xff]
  %v188 = vld [vmem:[%s0 + $0x140] sm:$0xff]
  %v189 = vld [vmem:[%s0 + $0x148] sm:$0xff]
  %v190 = vld [vmem:[%s0 + $0x150] sm:$0xff]
  %v191 = vld [vmem:[%s0 + $0x158] sm:$0xff]
  %v192 = vld [vmem:[%s0 + $0x160] sm:$0xff]
  %v193 = vld [vmem:[%s0 + $0x168] sm:$0xff]
  %v194 = vld [vmem:[%s0 + $0x170] sm:$0xff]
  %v195 = vld [vmem:[%s0 + $0x178] sm:$0xff]
  %v196 = vld [vmem:[%s0 + $0x180] sm:$0xff]
  %v197 = vld [vmem:[%s0 + $0x188] sm:$0xff]
  %v198 = vld [vmem:[%s0 + $0x190] sm:$0xff]
  %v199 = vld [vmem:[%s0 + $0x198] sm:$0xff]
  %v200 = vld [vmem:[%s0 + $0x1a0] sm:$0xff]
  %v201 = vld [vmem:[%s0 + $0x1a8] sm:$0xff]
  %v202 = vld [vmem:[%s0 + $0x1b0] sm:$0xff]
  %v203 = vld [vmem:[%s0 + $0x1b8] sm:$0xff]
  %v204 = vld [vmem:[%s0 + $0x1c0] sm:$0xff]
  %v205 = vld [vmem:[%s0 + $0x1c8] sm:$0xff]
  %v206 = vld [vmem:[%s0 + $0x1d0] sm:$0xff]
  %v207 = vld [vmem:[%s0 + $0x1d8] sm:$0xff]
  %v208 = vld [vmem:[%s0 + $0x1e0] sm:$0xff]
  %v209 = vld [vmem:[%s0 + $0x1e8] sm:$0xff]
  %v210 = vld [vmem:[%s0 + $0x1f0] sm:$0xff]
  %v211 = vld [vmem:[%s0 + $0x1f8] sm:$0xff]
  %v212 = vld [vmem:[%s1] sm:$0xf]
  %v213 = vld [vmem:[%s1 + $0x4] sm:$0xf]
  %v214 = vld [vmem:[%s1 + $0x8] sm:$0xf]
  %v215 = vld [vmem:[%s1 + $0xc] sm:$0xf]
  %v216 = vld [vmem:[%s1 + $0x10] sm:$0xf]
  %v217 = vld [vmem:[%s1 + $0x14] sm:$0xf]
  %v218 = vld [vmem:[%s1 + $0x18] sm:$0xf]
  %v219 = vld [vmem:[%s1 + $0x1c] sm:$0xf]
  %v220 = vld [vmem:[%s1 + $0x20] sm:$0xf]
  %v221 = vld [vmem:[%s1 + $0x24] sm:$0xf]
  %v222 = vld [vmem:[%s1 + $0x28] sm:$0xf]
  %v223 = vld [vmem:[%s1 + $0x2c] sm:$0xf]
  %v224 = vld [vmem:[%s1 + $0x30] sm:$0xf]
  %v225 = vld [vmem:[%s1 + $0x34] sm:$0xf]
  %v226 = vld [vmem:[%s1 + $0x38] sm:$0xf]
  %v227 = vld [vmem:[%s1 + $0x3c] sm:$0xf]
  %v228 = vld [vmem:[%s1 + $0x40] sm:$0xf]
  %v229 = vld [vmem:[%s1 + $0x44] sm:$0xf]
  %v230 = vld [vmem:[%s1 + $0x48] sm:$0xf]
  %v231 = vld [vmem:[%s1 + $0x4c] sm:$0xf]
  %v232 = vld [vmem:[%s1 + $0x50] sm:$0xf]
  %v233 = vld [vmem:[%s1 + $0x54] sm:$0xf]
  %v234 = vld [vmem:[%s1 + $0x58] sm:$0xf]
  %v235 = vld [vmem:[%s1 + $0x5c] sm:$0xf]
  %v236 = vld [vmem:[%s1 + $0x60] sm:$0xf]
  %v237 = vld [vmem:[%s1 + $0x64] sm:$0xf]
  %v238 = vld [vmem:[%s1 + $0x68] sm:$0xf]
  %v239 = vld [vmem:[%s1 + $0x6c] sm:$0xf]
  %v240 = vld [vmem:[%s1 + $0x70] sm:$0xf]
  %v241 = vld [vmem:[%s1 + $0x74] sm:$0xf]
  %v242 = vld [vmem:[%s1 + $0x78] sm:$0xf]
  %v243 = vld [vmem:[%s1 + $0x7c] sm:$0xf]
  %v308 = vunpack.c.l.b16 %v148
  %v309 = vunpack.c.h.b16 %v148
  %v310 = vunpack.c.l.b16 %v149
  %v311 = vunpack.c.h.b16 %v149
  %v312 = vunpack.c.l.b16 %v150
  %v313 = vunpack.c.h.b16 %v150
  %v314 = vunpack.c.l.b16 %v151
  %v315 = vunpack.c.h.b16 %v151
  %v316 = vunpack.c.l.b16 %v152
  %v317 = vunpack.c.h.b16 %v152
  %v318 = vunpack.c.l.b16 %v153
  %v319 = vunpack.c.h.b16 %v153
  %v320 = vunpack.c.l.b16 %v154
  %v321 = vunpack.c.h.b16 %v154
  %v322 = vunpack.c.l.b16 %v155
  %v323 = vunpack.c.h.b16 %v155
  %v324 = vunpack.c.l.b16 %v156
  %v325 = vunpack.c.h.b16 %v156
  %v326 = vunpack.c.l.b16 %v157
  %v327 = vunpack.c.h.b16 %v157
  %v328 = vunpack.c.l.b16 %v158
  %v329 = vunpack.c.h.b16 %v158
  %v330 = vunpack.c.l.b16 %v159
  %v331 = vunpack.c.h.b16 %v159
  %v332 = vunpack.c.l.b16 %v160
  %v333 = vunpack.c.h.b16 %v160
  %v334 = vunpack.c.l.b16 %v161
  %v335 = vunpack.c.h.b16 %v161
  %v336 = vunpack.c.l.b16 %v162
  %v337 = vunpack.c.h.b16 %v162
  %v338 = vunpack.c.l.b16 %v163
  %v339 = vunpack.c.h.b16 %v163
  %v340 = vunpack.c.l.b16 %v164
  %v341 = vunpack.c.h.b16 %v164
  %v342 = vunpack.c.l.b16 %v165
  %v343 = vunpack.c.h.b16 %v165
  %v344 = vunpack.c.l.b16 %v166
  %v345 = vunpack.c.h.b16 %v166
  %v346 = vunpack.c.l.b16 %v167
  %v347 = vunpack.c.h.b16 %v167
  %v348 = vunpack.c.l.b16 %v168
  %v349 = vunpack.c.h.b16 %v168
  %v350 = vunpack.c.l.b16 %v169
  %v351 = vunpack.c.h.b16 %v169
  %v352 = vunpack.c.l.b16 %v170
  %v353 = vunpack.c.h.b16 %v170
  %v354 = vunpack.c.l.b16 %v171
  %v355 = vunpack.c.h.b16 %v171
  %v356 = vunpack.c.l.b16 %v172
  %v357 = vunpack.c.h.b16 %v172
  %v358 = vunpack.c.l.b16 %v173
  %v359 = vunpack.c.h.b16 %v173
  %v360 = vunpack.c.l.b16 %v174
  %v361 = vunpack.c.h.b16 %v174
  %v362 = vunpack.c.l.b16 %v175
  %v363 = vunpack.c.h.b16 %v175
  %v364 = vunpack.c.l.b16 %v176
  %v365 = vunpack.c.h.b16 %v176
  %v366 = vunpack.c.l.b16 %v177
  %v367 = vunpack.c.h.b16 %v177
  %v368 = vunpack.c.l.b16 %v178
  %v369 = vunpack.c.h.b16 %v178
  %v370 = vunpack.c.l.b16 %v179
  %v371 = vunpack.c.h.b16 %v179
  %v372 = vunpack.c.l.b16 %v180
  %v373 = vunpack.c.h.b16 %v180
  %v374 = vunpack.c.l.b16 %v181
  %v375 = vunpack.c.h.b16 %v181
  %v376 = vunpack.c.l.b16 %v182
  %v377 = vunpack.c.h.b16 %v182
  %v378 = vunpack.c.l.b16 %v183
  %v379 = vunpack.c.h.b16 %v183
  %v380 = vunpack.c.l.b16 %v184
  %v381 = vunpack.c.h.b16 %v184
  %v382 = vunpack.c.l.b16 %v185
  %v383 = vunpack.c.h.b16 %v185
  %v384 = vunpack.c.l.b16 %v186
  %v385 = vunpack.c.h.b16 %v186
  %v386 = vunpack.c.l.b16 %v187
  %v387 = vunpack.c.h.b16 %v187
  %v388 = vunpack.c.l.b16 %v188
  %v389 = vunpack.c.h.b16 %v188
  %v390 = vunpack.c.l.b16 %v189
  %v391 = vunpack.c.h.b16 %v189
  %v392 = vunpack.c.l.b16 %v190
  %v393 = vunpack.c.h.b16 %v190
  %v394 = vunpack.c.l.b16 %v191
  %v395 = vunpack.c.h.b16 %v191
  %v396 = vunpack.c.l.b16 %v192
  %v397 = vunpack.c.h.b16 %v192
  %v398 = vunpack.c.l.b16 %v193
  %v399 = vunpack.c.h.b16 %v193
  %v400 = vunpack.c.l.b16 %v194
  %v401 = vunpack.c.h.b16 %v194
  %v402 = vunpack.c.l.b16 %v195
  %v403 = vunpack.c.h.b16 %v195
  %v404 = vunpack.c.l.b16 %v196
  %v405 = vunpack.c.h.b16 %v196
  %v406 = vunpack.c.l.b16 %v197
  %v407 = vunpack.c.h.b16 %v197
  %v408 = vunpack.c.l.b16 %v198
  %v409 = vunpack.c.h.b16 %v198
  %v410 = vunpack.c.l.b16 %v199
  %v411 = vunpack.c.h.b16 %v199
  %v412 = vunpack.c.l.b16 %v200
  %v413 = vunpack.c.h.b16 %v200
  %v414 = vunpack.c.l.b16 %v201
  %v415 = vunpack.c.h.b16 %v201
  %v416 = vunpack.c.l.b16 %v202
  %v417 = vunpack.c.h.b16 %v202
  %v418 = vunpack.c.l.b16 %v203
  %v419 = vunpack.c.h.b16 %v203
  %v420 = vunpack.c.l.b16 %v204
  %v421 = vunpack.c.h.b16 %v204
  %v422 = vunpack.c.l.b16 %v205
  %v423 = vunpack.c.h.b16 %v205
  %v424 = vunpack.c.l.b16 %v206
  %v425 = vunpack.c.h.b16 %v206
  %v426 = vunpack.c.l.b16 %v207
  %v427 = vunpack.c.h.b16 %v207
  %v428 = vunpack.c.l.b16 %v208
  %v429 = vunpack.c.h.b16 %v208
  %v430 = vunpack.c.l.b16 %v209
  %v431 = vunpack.c.h.b16 %v209
  %v432 = vunpack.c.l.b16 %v210
  %v433 = vunpack.c.h.b16 %v210
  %v434 = vunpack.c.l.b16 %v211
  %v435 = vunpack.c.h.b16 %v211
  %v436 = vpack.c.b16 %v310, %v308
  %v437 = vpack.c.b16 %v311, %v309
  %v438 = vpack.c.b16 %v314, %v312
  %v439 = vpack.c.b16 %v315, %v313
  %v440 = vpack.c.b16 %v318, %v316
  %v441 = vpack.c.b16 %v319, %v317
  %v442 = vpack.c.b16 %v322, %v320
  %v443 = vpack.c.b16 %v323, %v321
  %v444 = vpack.c.b16 %v326, %v324
  %v445 = vpack.c.b16 %v327, %v325
  %v446 = vpack.c.b16 %v330, %v328
  %v447 = vpack.c.b16 %v331, %v329
  %v448 = vpack.c.b16 %v334, %v332
  %v449 = vpack.c.b16 %v335, %v333
  %v450 = vpack.c.b16 %v338, %v336
  %v451 = vpack.c.b16 %v339, %v337
  %v452 = vpack.c.b16 %v342, %v340
  %v453 = vpack.c.b16 %v343, %v341
  %v454 = vpack.c.b16 %v346, %v344
  %v455 = vpack.c.b16 %v347, %v345
  %v456 = vpack.c.b16 %v350, %v348
  %v457 = vpack.c.b16 %v351, %v349
  %v458 = vpack.c.b16 %v354, %v352
  %v459 = vpack.c.b16 %v355, %v353
  %v460 = vpack.c.b16 %v358, %v356
  %v461 = vpack.c.b16 %v359, %v357
  %v462 = vpack.c.b16 %v362, %v360
  %v463 = vpack.c.b16 %v363, %v361
  %v464 = vpack.c.b16 %v366, %v364
  %v465 = vpack.c.b16 %v367, %v365
  %v466 = vpack.c.b16 %v370, %v368
  %v467 = vpack.c.b16 %v371, %v369
  %v468 = vpack.c.b16 %v374, %v372
  %v469 = vpack.c.b16 %v375, %v373
  %v470 = vpack.c.b16 %v378, %v376
  %v471 = vpack.c.b16 %v379, %v377
  %v472 = vpack.c.b16 %v382, %v380
  %v473 = vpack.c.b16 %v383, %v381
  %v474 = vpack.c.b16 %v386, %v384
  %v475 = vpack.c.b16 %v387, %v385
  %v476 = vpack.c.b16 %v390, %v388
  %v477 = vpack.c.b16 %v391, %v389
  %v478 = vpack.c.b16 %v394, %v392
  %v479 = vpack.c.b16 %v395, %v393
  %v480 = vpack.c.b16 %v398, %v396
  %v481 = vpack.c.b16 %v399, %v397
  %v482 = vpack.c.b16 %v402, %v400
  %v483 = vpack.c.b16 %v403, %v401
  %v484 = vpack.c.b16 %v406, %v404
  %v485 = vpack.c.b16 %v407, %v405
  %v486 = vpack.c.b16 %v410, %v408
  %v487 = vpack.c.b16 %v411, %v409
  %v488 = vpack.c.b16 %v414, %v412
  %v489 = vpack.c.b16 %v415, %v413
  %v490 = vpack.c.b16 %v418, %v416
  %v491 = vpack.c.b16 %v419, %v417
  %v492 = vpack.c.b16 %v422, %v420
  %v493 = vpack.c.b16 %v423, %v421
  %v494 = vpack.c.b16 %v426, %v424
  %v495 = vpack.c.b16 %v427, %v425
  %v496 = vpack.c.b16 %v430, %v428
  %v497 = vpack.c.b16 %v431, %v429
  %v498 = vpack.c.b16 %v434, %v432
  %v499 = vpack.c.b16 %v435, %v433
  %v596 = vunpack.c.l.b16 %v212
  %v597 = vunpack.c.l.b16 %v213
  %v598 = vunpack.c.l.b16 %v214
  %v599 = vunpack.c.l.b16 %v215
  %v600 = vunpack.c.l.b16 %v216
  %v601 = vunpack.c.l.b16 %v217
  %v602 = vunpack.c.l.b16 %v218
  %v603 = vunpack.c.l.b16 %v219
  %v604 = vunpack.c.l.b16 %v220
  %v605 = vunpack.c.l.b16 %v221
  %v606 = vunpack.c.l.b16 %v222
  %v607 = vunpack.c.l.b16 %v223
  %v608 = vunpack.c.l.b16 %v224
  %v609 = vunpack.c.l.b16 %v225
  %v610 = vunpack.c.l.b16 %v226
  %v611 = vunpack.c.l.b16 %v227
  %v612 = vunpack.c.l.b16 %v228
  %v613 = vunpack.c.l.b16 %v229
  %v614 = vunpack.c.l.b16 %v230
  %v615 = vunpack.c.l.b16 %v231
  %v616 = vunpack.c.l.b16 %v232
  %v617 = vunpack.c.l.b16 %v233
  %v618 = vunpack.c.l.b16 %v234
  %v619 = vunpack.c.l.b16 %v235
  %v620 = vunpack.c.l.b16 %v236
  %v621 = vunpack.c.l.b16 %v237
  %v622 = vunpack.c.l.b16 %v238
  %v623 = vunpack.c.l.b16 %v239
  %v624 = vunpack.c.l.b16 %v240
  %v625 = vunpack.c.l.b16 %v241
  %v626 = vunpack.c.l.b16 %v242
  %v627 = vunpack.c.l.b16 %v243
  %v628 = vpack.c.b16 %v597, %v596
  %v629 = vpack.c.b16 %v599, %v598
  %v630 = vpack.c.b16 %v601, %v600
  %v631 = vpack.c.b16 %v603, %v602
  %v632 = vpack.c.b16 %v605, %v604
  %v633 = vpack.c.b16 %v607, %v606
  %v634 = vpack.c.b16 %v609, %v608
  %v635 = vpack.c.b16 %v611, %v610
  %v636 = vpack.c.b16 %v613, %v612
  %v637 = vpack.c.b16 %v615, %v614
  %v638 = vpack.c.b16 %v617, %v616
  %v639 = vpack.c.b16 %v619, %v618
  %v640 = vpack.c.b16 %v621, %v620
  %v641 = vpack.c.b16 %v623, %v622
  %v642 = vpack.c.b16 %v625, %v624
  %v643 = vpack.c.b16 %v627, %v626
  %660 = vmatprep.subr.bf16.mxu0 0
  %661 = vmatpush1.bf16.msra.mxu0 %v628
  %662 = vmatprep.subr.bf16.mxu0 0
  %663 = vmatpush1.bf16.msra.mxu0 %v629
  %664 = vmatprep.subr.bf16.mxu0 0
  %665 = vmatpush1.bf16.msra.mxu0 %v630
  %666 = vmatprep.subr.bf16.mxu0 0
  %667 = vmatpush1.bf16.msra.mxu0 %v631
  %668 = vmatprep.subr.bf16.mxu0 0
  %669 = vmatpush1.bf16.msra.mxu0 %v632
  %670 = vmatprep.subr.bf16.mxu0 0
  %671 = vmatpush1.bf16.msra.mxu0 %v633
  %672 = vmatprep.subr.bf16.mxu0 0
  %673 = vmatpush1.bf16.msra.mxu0 %v634
  %674 = vmatprep.subr.bf16.mxu0 0
  %675 = vmatpush1.bf16.msra.mxu0 %v635
  %676 = vmatprep.subr.bf16.mxu0 0
  %677 = vmatpush1.bf16.msra.mxu0 %v636
  %678 = vmatprep.subr.bf16.mxu0 0
  %679 = vmatpush1.bf16.msra.mxu0 %v637
  %680 = vmatprep.subr.bf16.mxu0 0
  %681 = vmatpush1.bf16.msra.mxu0 %v638
  %682 = vmatprep.subr.bf16.mxu0 0
  %683 = vmatpush1.bf16.msra.mxu0 %v639
  %684 = vmatprep.subr.bf16.mxu0 0
  %685 = vmatpush1.bf16.msra.mxu0 %v640
  %686 = vmatprep.subr.bf16.mxu0 0
  %687 = vmatpush1.bf16.msra.mxu0 %v641
  %688 = vmatprep.subr.bf16.mxu0 0
  %689 = vmatpush1.bf16.msra.mxu0 %v642
  %690 = vmatprep.subr.bf16.mxu0 0
  %691 = vmatpush1.bf16.msra.mxu0 %v643
  %692 = vmatprep.mubr.bf16.mxu0 %v437
  %693 = vmatmul.mubr.bf16.gmra.mrb[0].mxu0 %v436
  %v694 = vpop.f32.mrb[0].mxu0
  %v695 = vadd.f32 0.0, %v694
  %v696 = vpop.f32.mrb[0].mxu0
  %v697 = vpop.f32.mrb[0].mxu0
  %v698 = vadd.f32 0.0, %v697
  %v699 = vpop.f32.mrb[0].mxu0
  %700 = vmatprep.mubr.bf16.mxu0 %v439
  %701 = vmatmul.mubr.bf16.gmra.mrb[0].mxu0 %v438
  %v702 = vpop.f32.mrb[0].mxu0
  %v703 = vadd.f32 0.0, %v702
  %v704 = vpop.f32.mrb[0].mxu0
  %v705 = vpop.f32.mrb[0].mxu0
  %v706 = vadd.f32 0.0, %v705
  %v707 = vpop.f32.mrb[0].mxu0
  %708 = vmatprep.mubr.bf16.mxu0 %v441
  %709 = vmatmul.mubr.bf16.gmra.mrb[0].mxu0 %v440
  %v710 = vpop.f32.mrb[0].mxu0
  %v711 = vadd.f32 0.0, %v710
  %v712 = vpop.f32.mrb[0].mxu0
  %v713 = vpop.f32.mrb[0].mxu0
  %v714 = vadd.f32 0.0, %v713
  %v715 = vpop.f32.mrb[0].mxu0
  %716 = vmatprep.mubr.bf16.mxu0 %v443
  %717 = vmatmul.mubr.bf16.gmra.mrb[0].mxu0 %v442
  %v718 = vpop.f32.mrb[0].mxu0
  %v719 = vadd.f32 0.0, %v718
  %v720 = vpop.f32.mrb[0].mxu0
  %v721 = vpop.f32.mrb[0].mxu0
  %v722 = vadd.f32 0.0, %v721
  %v723 = vpop.f32.mrb[0].mxu0
  %724 = vmatprep.mubr.bf16.mxu0 %v445
  %725 = vmatmul.mubr.bf16.gmra.mrb[0].mxu0 %v444
  %v726 = vpop.f32.mrb[0].mxu0
  %v727 = vadd.f32 0.0, %v726
  %v728 = vpop.f32.mrb[0].mxu0
  %v729 = vpop.f32.mrb[0].mxu0
  %v730 = vadd.f32 0.0, %v729
  %v731 = vpop.f32.mrb[0].mxu0
  %732 = vmatprep.mubr.bf16.mxu0 %v447
  %733 = vmatmul.mubr.bf16.gmra.mrb[0].mxu0 %v446
  %v734 = vpop.f32.mrb[0].mxu0
  %v735 = vadd.f32 0.0, %v734
  %v736 = vpop.f32.mrb[0].mxu0
  %v737 = vpop.f32.mrb[0].mxu0
  %v738 = vadd.f32 0.0, %v737
  %v739 = vpop.f32.mrb[0].mxu0
  %740 = vmatprep.mubr.bf16.mxu0 %v449
  %741 = vmatmul.mubr.bf16.gmra.mrb[0].mxu0 %v448
  %v742 = vpop.f32.mrb[0].mxu0
  %v743 = vadd.f32 0.0, %v742
  %v744 = vpop.f32.mrb[0].mxu0
  %v745 = vpop.f32.mrb[0].mxu0
  %v746 = vadd.f32 0.0, %v745
  %v747 = vpop.f32.mrb[0].mxu0
  %748 = vmatprep.mubr.bf16.mxu0 %v451
  %749 = vmatmul.mubr.bf16.gmra.mrb[0].mxu0 %v450
  %v750 = vpop.f32.mrb[0].mxu0
  %v751 = vadd.f32 0.0, %v750
  %v752 = vpop.f32.mrb[0].mxu0
  %v753 = vpop.f32.mrb[0].mxu0
  %v754 = vadd.f32 0.0, %v753
  %v755 = vpop.f32.mrb[0].mxu0
  %756 = vmatprep.mubr.bf16.mxu0 %v453
  %757 = vmatmul.mubr.bf16.gmra.mrb[0].mxu0 %v452
  %v758 = vpop.f32.mrb[0].mxu0
  %v759 = vadd.f32 0.0, %v758
  %v760 = vpop.f32.mrb[0].mxu0
  %v761 = vpop.f32.mrb[0].mxu0
  %v762 = vadd.f32 0.0, %v761
  %v763 = vpop.f32.mrb[0].mxu0
  %764 = vmatprep.mubr.bf16.mxu0 %v455
  %765 = vmatmul.mubr.bf16.gmra.mrb[0].mxu0 %v454
  %v766 = vpop.f32.mrb[0].mxu0
  %v767 = vadd.f32 0.0, %v766
  %v768 = vpop.f32.mrb[0].mxu0
  %v769 = vpop.f32.mrb[0].mxu0
  %v770 = vadd.f32 0.0, %v769
  %v771 = vpop.f32.mrb[0].mxu0
  %772 = vmatprep.mubr.bf16.mxu0 %v457
  %773 = vmatmul.mubr.bf16.gmra.mrb[0].mxu0 %v456
  %v774 = vpop.f32.mrb[0].mxu0
  %v775 = vadd.f32 0.0, %v774
  %v776 = vpop.f32.mrb[0].mxu0
  %v777 = vpop.f32.mrb[0].mxu0
  %v778 = vadd.f32 0.0, %v777
  %v779 = vpop.f32.mrb[0].mxu0
  %780 = vmatprep.mubr.bf16.mxu0 %v459
  %781 = vmatmul.mubr.bf16.gmra.mrb[0].mxu0 %v458
  %v782 = vpop.f32.mrb[0].mxu0
  %v783 = vadd.f32 0.0, %v782
  %v784 = vpop.f32.mrb[0].mxu0
  %v785 = vpop.f32.mrb[0].mxu0
  %v786 = vadd.f32 0.0, %v785
  %v787 = vpop.f32.mrb[0].mxu0
  %788 = vmatprep.mubr.bf16.mxu0 %v461
  %789 = vmatmul.mubr.bf16.gmra.mrb[0].mxu0 %v460
  %v790 = vpop.f32.mrb[0].mxu0
  %v791 = vadd.f32 0.0, %v790
  %v792 = vpop.f32.mrb[0].mxu0
  %v793 = vpop.f32.mrb[0].mxu0
  %v794 = vadd.f32 0.0, %v793
  %v795 = vpop.f32.mrb[0].mxu0
  %796 = vmatprep.mubr.bf16.mxu0 %v463
  %797 = vmatmul.mubr.bf16.gmra.mrb[0].mxu0 %v462
  %v798 = vpop.f32.mrb[0].mxu0
  %v799 = vadd.f32 0.0, %v798
  %v800 = vpop.f32.mrb[0].mxu0
  %v801 = vpop.f32.mrb[0].mxu0
  %v802 = vadd.f32 0.0, %v801
  %v803 = vpop.f32.mrb[0].mxu0
  %804 = vmatprep.mubr.bf16.mxu0 %v465
  %805 = vmatmul.mubr.bf16.gmra.mrb[0].mxu0 %v464
  %v806 = vpop.f32.mrb[0].mxu0
  %v807 = vadd.f32 0.0, %v806
  %v808 = vpop.f32.mrb[0].mxu0
  %v809 = vpop.f32.mrb[0].mxu0
  %v810 = vadd.f32 0.0, %v809
  %v811 = vpop.f32.mrb[0].mxu0
  %812 = vmatprep.mubr.bf16.mxu0 %v467
  %813 = vmatmul.mubr.bf16.gmra.mrb[0].mxu0 %v466
  %v814 = vpop.f32.mrb[0].mxu0
  %v815 = vadd.f32 0.0, %v814
  %v816 = vpop.f32.mrb[0].mxu0
  %v817 = vpop.f32.mrb[0].mxu0
  %v818 = vadd.f32 0.0, %v817
  %v819 = vpop.f32.mrb[0].mxu0
  %820 = vmatprep.mubr.bf16.mxu0 %v469
  %821 = vmatmul.mubr.bf16.gmra.mrb[0].mxu0 %v468
  %v822 = vpop.f32.mrb[0].mxu0
  %v823 = vadd.f32 0.0, %v822
  %v824 = vpop.f32.mrb[0].mxu0
  %v825 = vpop.f32.mrb[0].mxu0
  %v826 = vadd.f32 0.0, %v825
  %v827 = vpop.f32.mrb[0].mxu0
  %828 = vmatprep.mubr.bf16.mxu0 %v471
  %829 = vmatmul.mubr.bf16.gmra.mrb[0].mxu0 %v470
  %v830 = vpop.f32.mrb[0].mxu0
  %v831 = vadd.f32 0.0, %v830
  %v832 = vpop.f32.mrb[0].mxu0
  %v833 = vpop.f32.mrb[0].mxu0
  %v834 = vadd.f32 0.0, %v833
  %v835 = vpop.f32.mrb[0].mxu0
  %836 = vmatprep.mubr.bf16.mxu0 %v473
  %837 = vmatmul.mubr.bf16.gmra.mrb[0].mxu0 %v472
  %v838 = vpop.f32.mrb[0].mxu0
  %v839 = vadd.f32 0.0, %v838
  %v840 = vpop.f32.mrb[0].mxu0
  %v841 = vpop.f32.mrb[0].mxu0
  %v842 = vadd.f32 0.0, %v841
  %v843 = vpop.f32.mrb[0].mxu0
  %844 = vmatprep.mubr.bf16.mxu0 %v475
  %845 = vmatmul.mubr.bf16.gmra.mrb[0].mxu0 %v474
  %v846 = vpop.f32.mrb[0].mxu0
  %v847 = vadd.f32 0.0, %v846
  %v848 = vpop.f32.mrb[0].mxu0
  %v849 = vpop.f32.mrb[0].mxu0
  %v850 = vadd.f32 0.0, %v849
  %v851 = vpop.f32.mrb[0].mxu0
  %852 = vmatprep.mubr.bf16.mxu0 %v477
  %853 = vmatmul.mubr.bf16.gmra.mrb[0].mxu0 %v476
  %v854 = vpop.f32.mrb[0].mxu0
  %v855 = vadd.f32 0.0, %v854
  %v856 = vpop.f32.mrb[0].mxu0
  %v857 = vpop.f32.mrb[0].mxu0
  %v858 = vadd.f32 0.0, %v857
  %v859 = vpop.f32.mrb[0].mxu0
  %860 = vmatprep.mubr.bf16.mxu0 %v479
  %861 = vmatmul.mubr.bf16.gmra.mrb[0].mxu0 %v478
  %v862 = vpop.f32.mrb[0].mxu0
  %v863 = vadd.f32 0.0, %v862
  %v864 = vpop.f32.mrb[0].mxu0
  %v865 = vpop.f32.mrb[0].mxu0
  %v866 = vadd.f32 0.0, %v865
  %v867 = vpop.f32.mrb[0].mxu0
  %868 = vmatprep.mubr.bf16.mxu0 %v481
  %869 = vmatmul.mubr.bf16.gmra.mrb[0].mxu0 %v480
  %v870 = vpop.f32.mrb[0].mxu0
  %v871 = vadd.f32 0.0, %v870
  %v872 = vpop.f32.mrb[0].mxu0
  %v873 = vpop.f32.mrb[0].mxu0
  %v874 = vadd.f32 0.0, %v873
  %v875 = vpop.f32.mrb[0].mxu0
  %876 = vmatprep.mubr.bf16.mxu0 %v483
  %877 = vmatmul.mubr.bf16.gmra.mrb[0].mxu0 %v482
  %v878 = vpop.f32.mrb[0].mxu0
  %v879 = vadd.f32 0.0, %v878
  %v880 = vpop.f32.mrb[0].mxu0
  %v881 = vpop.f32.mrb[0].mxu0
  %v882 = vadd.f32 0.0, %v881
  %v883 = vpop.f32.mrb[0].mxu0
  %884 = vmatprep.mubr.bf16.mxu0 %v485
  %885 = vmatmul.mubr.bf16.gmra.mrb[0].mxu0 %v484
  %v886 = vpop.f32.mrb[0].mxu0
  %v887 = vadd.f32 0.0, %v886
  %v888 = vpop.f32.mrb[0].mxu0
  %v889 = vpop.f32.mrb[0].mxu0
  %v890 = vadd.f32 0.0, %v889
  %v891 = vpop.f32.mrb[0].mxu0
  %892 = vmatprep.mubr.bf16.mxu0 %v487
  %893 = vmatmul.mubr.bf16.gmra.mrb[0].mxu0 %v486
  %v894 = vpop.f32.mrb[0].mxu0
  %v895 = vadd.f32 0.0, %v894
  %v896 = vpop.f32.mrb[0].mxu0
  %v897 = vpop.f32.mrb[0].mxu0
  %v898 = vadd.f32 0.0, %v897
  %v899 = vpop.f32.mrb[0].mxu0
  %900 = vmatprep.mubr.bf16.mxu0 %v489
  %901 = vmatmul.mubr.bf16.gmra.mrb[0].mxu0 %v488
  %v902 = vpop.f32.mrb[0].mxu0
  %v903 = vadd.f32 0.0, %v902
  %v904 = vpop.f32.mrb[0].mxu0
  %v905 = vpop.f32.mrb[0].mxu0
  %v906 = vadd.f32 0.0, %v905
  %v907 = vpop.f32.mrb[0].mxu0
  %908 = vmatprep.mubr.bf16.mxu0 %v491
  %909 = vmatmul.mubr.bf16.gmra.mrb[0].mxu0 %v490
  %v910 = vpop.f32.mrb[0].mxu0
  %v911 = vadd.f32 0.0, %v910
  %v912 = vpop.f32.mrb[0].mxu0
  %v913 = vpop.f32.mrb[0].mxu0
  %v914 = vadd.f32 0.0, %v913
  %v915 = vpop.f32.mrb[0].mxu0
  %916 = vmatprep.mubr.bf16.mxu0 %v493
  %917 = vmatmul.mubr.bf16.gmra.mrb[0].mxu0 %v492
  %v918 = vpop.f32.mrb[0].mxu0
  %v919 = vadd.f32 0.0, %v918
  %v920 = vpop.f32.mrb[0].mxu0
  %v921 = vpop.f32.mrb[0].mxu0
  %v922 = vadd.f32 0.0, %v921
  %v923 = vpop.f32.mrb[0].mxu0
  %924 = vmatprep.mubr.bf16.mxu0 %v495
  %925 = vmatmul.mubr.bf16.gmra.mrb[0].mxu0 %v494
  %v926 = vpop.f32.mrb[0].mxu0
  %v927 = vadd.f32 0.0, %v926
  %v928 = vpop.f32.mrb[0].mxu0
  %v929 = vpop.f32.mrb[0].mxu0
  %v930 = vadd.f32 0.0, %v929
  %v931 = vpop.f32.mrb[0].mxu0
  %932 = vmatprep.mubr.bf16.mxu0 %v497
  %933 = vmatmul.mubr.bf16.gmra.mrb[0].mxu0 %v496
  %v934 = vpop.f32.mrb[0].mxu0
  %v935 = vadd.f32 0.0, %v934
  %v936 = vpop.f32.mrb[0].mxu0
  %v937 = vpop.f32.mrb[0].mxu0
  %v938 = vadd.f32 0.0, %v937
  %v939 = vpop.f32.mrb[0].mxu0
  %940 = vmatprep.mubr.bf16.mxu0 %v499
  %941 = vmatmul.mubr.bf16.gmra.mrb[0].mxu0 %v498
  %v942 = vpop.f32.mrb[0].mxu0
  %v943 = vadd.f32 0.0, %v942
  %v944 = vpop.f32.mrb[0].mxu0
  %v945 = vpop.f32.mrb[0].mxu0
  %v946 = vadd.f32 0.0, %v945
  %v947 = vpop.f32.mrb[0].mxu0
  %948 = vdwg.mxu0
  %v949 = vadd.f32 %v84, %v695
  %v950 = vadd.f32 %v85, %v698
  %v951 = vadd.f32 %v86, %v703
  %v952 = vadd.f32 %v87, %v706
  %v953 = vadd.f32 %v88, %v711
  %v954 = vadd.f32 %v89, %v714
  %v955 = vadd.f32 %v90, %v719
  %v956 = vadd.f32 %v91, %v722
  %v957 = vadd.f32 %v92, %v727
  %v958 = vadd.f32 %v93, %v730
  %v959 = vadd.f32 %v94, %v735
  %v960 = vadd.f32 %v95, %v738
  %v961 = vadd.f32 %v96, %v743
  %v962 = vadd.f32 %v97, %v746
  %v963 = vadd.f32 %v98, %v751
  %v964 = vadd.f32 %v99, %v754
  %v965 = vadd.f32 %v100, %v759
  %v966 = vadd.f32 %v101, %v762
  %v967 = vadd.f32 %v102, %v767
  %v968 = vadd.f32 %v103, %v770
  %v969 = vadd.f32 %v104, %v775
  %v970 = vadd.f32 %v105, %v778
  %v971 = vadd.f32 %v106, %v783
  %v972 = vadd.f32 %v107, %v786
  %v973 = vadd.f32 %v108, %v791
  %v974 = vadd.f32 %v109, %v794
  %v975 = vadd.f32 %v110, %v799
  %v976 = vadd.f32 %v111, %v802
  %v977 = vadd.f32 %v112, %v807
  %v978 = vadd.f32 %v113, %v810
  %v979 = vadd.f32 %v114, %v815
  %v980 = vadd.f32 %v115, %v818
  %v981 = vadd.f32 %v116, %v823
  %v982 = vadd.f32 %v117, %v826
  %v983 = vadd.f32 %v118, %v831
  %v984 = vadd.f32 %v119, %v834
  %v985 = vadd.f32 %v120, %v839
  %v986 = vadd.f32 %v121, %v842
  %v987 = vadd.f32 %v122, %v847
  %v988 = vadd.f32 %v123, %v850
  %v989 = vadd.f32 %v124, %v855
  %v990 = vadd.f32 %v125, %v858
  %v991 = vadd.f32 %v126, %v863
  %v992 = vadd.f32 %v127, %v866
  %v993 = vadd.f32 %v128, %v871
  %v994 = vadd.f32 %v129, %v874
  %v995 = vadd.f32 %v130, %v879
  %v996 = vadd.f32 %v131, %v882
  %v997 = vadd.f32 %v132, %v887
  %v998 = vadd.f32 %v133, %v890
  %v999 = vadd.f32 %v134, %v895
  %v1000 = vadd.f32 %v135, %v898
  %v1001 = vadd.f32 %v136, %v903
  %v1002 = vadd.f32 %v137, %v906
  %v1003 = vadd.f32 %v138, %v911
  %v1004 = vadd.f32 %v139, %v914
  %v1005 = vadd.f32 %v140, %v919
  %v1006 = vadd.f32 %v141, %v922
  %v1007 = vadd.f32 %v142, %v927
  %v1008 = vadd.f32 %v143, %v930
  %v1009 = vadd.f32 %v144, %v935
  %v1010 = vadd.f32 %v145, %v938
  %v1011 = vadd.f32 %v146, %v943
  %v1012 = vadd.f32 %v147, %v946
  %vm1013 = vcmask 261120
  %1014 = vst.msk [vmem:[#allocation2] sm:$0xff] %vm1013, %v949
  %1015 = vst.msk [vmem:[#allocation2 + $0x8] sm:$0xff] %vm1013, %v950
  %1016 = vst.msk [vmem:[#allocation2 + $0x10] sm:$0xff] %vm1013, %v951
  %1017 = vst.msk [vmem:[#allocation2 + $0x18] sm:$0xff] %vm1013, %v952
  %1018 = vst.msk [vmem:[#allocation2 + $0x20] sm:$0xff] %vm1013, %v953
  %1019 = vst.msk [vmem:[#allocation2 + $0x28] sm:$0xff] %vm1013, %v954
  %1020 = vst.msk [vmem:[#allocation2 + $0x30] sm:$0xff] %vm1013, %v955
  %1021 = vst.msk [vmem:[#allocation2 + $0x38] sm:$0xff] %vm1013, %v956
  %1022 = vst.msk [vmem:[#allocation2 + $0x40] sm:$0xff] %vm1013, %v957
  %1023 = vst.msk [vmem:[#allocation2 + $0x48] sm:$0xff] %vm1013, %v958
  %1024 = vst.msk [vmem:[#allocation2 + $0x50] sm:$0xff] %vm1013, %v959
  %1025 = vst.msk [vmem:[#allocation2 + $0x58] sm:$0xff] %vm1013, %v960
  %1026 = vst.msk [vmem:[#allocation2 + $0x60] sm:$0xff] %vm1013, %v961
  %1027 = vst.msk [vmem:[#allocation2 + $0x68] sm:$0xff] %vm1013, %v962
  %1028 = vst.msk [vmem:[#allocation2 + $0x70] sm:$0xff] %vm1013, %v963
  %1029 = vst.msk [vmem:[#allocation2 + $0x78] sm:$0xff] %vm1013, %v964
  %1030 = vst.msk [vmem:[#allocation2 + $0x80] sm:$0xff] %vm1013, %v965
  %1031 = vst.msk [vmem:[#allocation2 + $0x88] sm:$0xff] %vm1013, %v966
  %1032 = vst.msk [vmem:[#allocation2 + $0x90] sm:$0xff] %vm1013, %v967
  %1033 = vst.msk [vmem:[#allocation2 + $0x98] sm:$0xff] %vm1013, %v968
  %1034 = vst.msk [vmem:[#allocation2 + $0xa0] sm:$0xff] %vm1013, %v969
  %1035 = vst.msk [vmem:[#allocation2 + $0xa8] sm:$0xff] %vm1013, %v970
  %1036 = vst.msk [vmem:[#allocation2 + $0xb0] sm:$0xff] %vm1013, %v971
  %1037 = vst.msk [vmem:[#allocation2 + $0xb8] sm:$0xff] %vm1013, %v972
  %1038 = vst.msk [vmem:[#allocation2 + $0xc0] sm:$0xff] %vm1013, %v973
  %1039 = vst.msk [vmem:[#allocation2 + $0xc8] sm:$0xff] %vm1013, %v974
  %1040 = vst.msk [vmem:[#allocation2 + $0xd0] sm:$0xff] %vm1013, %v975
  %1041 = vst.msk [vmem:[#allocation2 + $0xd8] sm:$0xff] %vm1013, %v976
  %1042 = vst.msk [vmem:[#allocation2 + $0xe0] sm:$0xff] %vm1013, %v977
  %1043 = vst.msk [vmem:[#allocation2 + $0xe8] sm:$0xff] %vm1013, %v978
  %1044 = vst.msk [vmem:[#allocation2 + $0xf0] sm:$0xff] %vm1013, %v979
  %1045 = vst.msk [vmem:[#allocation2 + $0xf8] sm:$0xff] %vm1013, %v980
  %1046 = vst.msk [vmem:[#allocation2 + $0x100] sm:$0xff] %vm1013, %v981
  %1047 = vst.msk [vmem:[#allocation2 + $0x108] sm:$0xff] %vm1013, %v982
  %1048 = vst.msk [vmem:[#allocation2 + $0x110] sm:$0xff] %vm1013, %v983
  %1049 = vst.msk [vmem:[#allocation2 + $0x118] sm:$0xff] %vm1013, %v984
  %1050 = vst.msk [vmem:[#allocation2 + $0x120] sm:$0xff] %vm1013, %v985
  %1051 = vst.msk [vmem:[#allocation2 + $0x128] sm:$0xff] %vm1013, %v986
  %1052 = vst.msk [vmem:[#allocation2 + $0x130] sm:$0xff] %vm1013, %v987
  %1053 = vst.msk [vmem:[#allocation2 + $0x138] sm:$0xff] %vm1013, %v988
  %1054 = vst.msk [vmem:[#allocation2 + $0x140] sm:$0xff] %vm1013, %v989
  %1055 = vst.msk [vmem:[#allocation2 + $0x148] sm:$0xff] %vm1013, %v990
  %1056 = vst.msk [vmem:[#allocation2 + $0x150] sm:$0xff] %vm1013, %v991
  %1057 = vst.msk [vmem:[#allocation2 + $0x158] sm:$0xff] %vm1013, %v992
  %1058 = vst.msk [vmem:[#allocation2 + $0x160] sm:$0xff] %vm1013, %v993
  %1059 = vst.msk [vmem:[#allocation2 + $0x168] sm:$0xff] %vm1013, %v994
  %1060 = vst.msk [vmem:[#allocation2 + $0x170] sm:$0xff] %vm1013, %v995
  %1061 = vst.msk [vmem:[#allocation2 + $0x178] sm:$0xff] %vm1013, %v996
  %1062 = vst.msk [vmem:[#allocation2 + $0x180] sm:$0xff] %vm1013, %v997
  %1063 = vst.msk [vmem:[#allocation2 + $0x188] sm:$0xff] %vm1013, %v998
  %1064 = vst.msk [vmem:[#allocation2 + $0x190] sm:$0xff] %vm1013, %v999
  %1065 = vst.msk [vmem:[#allocation2 + $0x198] sm:$0xff] %vm1013, %v1000
  %1066 = vst.msk [vmem:[#allocation2 + $0x1a0] sm:$0xff] %vm1013, %v1001
  %1067 = vst.msk [vmem:[#allocation2 + $0x1a8] sm:$0xff] %vm1013, %v1002
  %1068 = vst.msk [vmem:[#allocation2 + $0x1b0] sm:$0xff] %vm1013, %v1003
  %1069 = vst.msk [vmem:[#allocation2 + $0x1b8] sm:$0xff] %vm1013, %v1004
  %1070 = vst.msk [vmem:[#allocation2 + $0x1c0] sm:$0xff] %vm1013, %v1005
  %1071 = vst.msk [vmem:[#allocation2 + $0x1c8] sm:$0xff] %vm1013, %v1006
  %1072 = vst.msk [vmem:[#allocation2 + $0x1d0] sm:$0xff] %vm1013, %v1007
  %1073 = vst.msk [vmem:[#allocation2 + $0x1d8] sm:$0xff] %vm1013, %v1008
  %1074 = vst.msk [vmem:[#allocation2 + $0x1e0] sm:$0xff] %vm1013, %v1009
  %1075 = vst.msk [vmem:[#allocation2 + $0x1e8] sm:$0xff] %vm1013, %v1010
  %1076 = vst.msk [vmem:[#allocation2 + $0x1f0] sm:$0xff] %vm1013, %v1011
  %1077 = vst.msk [vmem:[#allocation2 + $0x1f8] sm:$0xff] %vm1013, %v1012
  // Predicated region
  $region14: #{discriminator_forward.9} parent=0 // pred_check
    %p1078 = pneg %p15
  $region15: #{discriminator_forward.9} parent=0 // pred_check_branch
    %1080 = sbr.rel (%p1078) target = $region17
  $region16: #{discriminator_forward.9} parent=0 // pred_region
    %v1081 = vld [vmem:[#allocation2] sm:$0xff]
    %v1082 = vld [vmem:[#allocation2 + $0x8] sm:$0xff]
    %v1083 = vld [vmem:[#allocation2 + $0x10] sm:$0xff]
    %v1084 = vld [vmem:[#allocation2 + $0x18] sm:$0xff]
    %v1085 = vld [vmem:[#allocation2 + $0x20] sm:$0xff]
    %v1086 = vld [vmem:[#allocation2 + $0x28] sm:$0xff]
    %v1087 = vld [vmem:[#allocation2 + $0x30] sm:$0xff]
    %v1088 = vld [vmem:[#allocation2 + $0x38] sm:$0xff]
    %v1089 = vld [vmem:[#allocation2 + $0x40] sm:$0xff]
    %v1090 = vld [vmem:[#allocation2 + $0x48] sm:$0xff]
    %v1091 = vld [vmem:[#allocation2 + $0x50] sm:$0xff]
    %v1092 = vld [vmem:[#allocation2 + $0x58] sm:$0xff]
    %v1093 = vld [vmem:[#allocation2 + $0x60] sm:$0xff]
    %v1094 = vld [vmem:[#allocation2 + $0x68] sm:$0xff]
    %v1095 = vld [vmem:[#allocation2 + $0x70] sm:$0xff]
    %v1096 = vld [vmem:[#allocation2 + $0x78] sm:$0xff]
    %v1097 = vld [vmem:[#allocation2 + $0x80] sm:$0xff]
    %v1098 = vld [vmem:[#allocation2 + $0x88] sm:$0xff]
    %v1099 = vld [vmem:[#allocation2 + $0x90] sm:$0xff]
    %v1100 = vld [vmem:[#allocation2 + $0x98] sm:$0xff]
    %v1101 = vld [vmem:[#allocation2 + $0xa0] sm:$0xff]
    %v1102 = vld [vmem:[#allocation2 + $0xa8] sm:$0xff]
    %v1103 = vld [vmem:[#allocation2 + $0xb0] sm:$0xff]
    %v1104 = vld [vmem:[#allocation2 + $0xb8] sm:$0xff]
    %v1105 = vld [vmem:[#allocation2 + $0xc0] sm:$0xff]
    %v1106 = vld [vmem:[#allocation2 + $0xc8] sm:$0xff]
    %v1107 = vld [vmem:[#allocation2 + $0xd0] sm:$0xff]
    %v1108 = vld [vmem:[#allocation2 + $0xd8] sm:$0xff]
    %v1109 = vld [vmem:[#allocation2 + $0xe0] sm:$0xff]
    %v1110 = vld [vmem:[#allocation2 + $0xe8] sm:$0xff]
    %v1111 = vld [vmem:[#allocation2 + $0xf0] sm:$0xff]
    %v1112 = vld [vmem:[#allocation2 + $0xf8] sm:$0xff]
    %v1113 = vld [vmem:[#allocation2 + $0x100] sm:$0xff]
    %v1114 = vld [vmem:[#allocation2 + $0x108] sm:$0xff]
    %v1115 = vld [vmem:[#allocation2 + $0x110] sm:$0xff]
    %v1116 = vld [vmem:[#allocation2 + $0x118] sm:$0xff]
    %v1117 = vld [vmem:[#allocation2 + $0x120] sm:$0xff]
    %v1118 = vld [vmem:[#allocation2 + $0x128] sm:$0xff]
    %v1119 = vld [vmem:[#allocation2 + $0x130] sm:$0xff]
    %v1120 = vld [vmem:[#allocation2 + $0x138] sm:$0xff]
    %v1121 = vld [vmem:[#allocation2 + $0x140] sm:$0xff]
    %v1122 = vld [vmem:[#allocation2 + $0x148] sm:$0xff]
    %v1123 = vld [vmem:[#allocation2 + $0x150] sm:$0xff]
    %v1124 = vld [vmem:[#allocation2 + $0x158] sm:$0xff]
    %v1125 = vld [vmem:[#allocation2 + $0x160] sm:$0xff]
    %v1126 = vld [vmem:[#allocation2 + $0x168] sm:$0xff]
    %v1127 = vld [vmem:[#allocation2 + $0x170] sm:$0xff]
    %v1128 = vld [vmem:[#allocation2 + $0x178] sm:$0xff]
    %v1129 = vld [vmem:[#allocation2 + $0x180] sm:$0xff]
    %v1130 = vld [vmem:[#allocation2 + $0x188] sm:$0xff]
    %v1131 = vld [vmem:[#allocation2 + $0x190] sm:$0xff]
    %v1132 = vld [vmem:[#allocation2 + $0x198] sm:$0xff]
    %v1133 = vld [vmem:[#allocation2 + $0x1a0] sm:$0xff]
    %v1134 = vld [vmem:[#allocation2 + $0x1a8] sm:$0xff]
    %v1135 = vld [vmem:[#allocation2 + $0x1b0] sm:$0xff]
    %v1136 = vld [vmem:[#allocation2 + $0x1b8] sm:$0xff]
    %v1137 = vld [vmem:[#allocation2 + $0x1c0] sm:$0xff]
    %v1138 = vld [vmem:[#allocation2 + $0x1c8] sm:$0xff]
    %v1139 = vld [vmem:[#allocation2 + $0x1d0] sm:$0xff]
    %v1140 = vld [vmem:[#allocation2 + $0x1d8] sm:$0xff]
    %v1141 = vld [vmem:[#allocation2 + $0x1e0] sm:$0xff]
    %v1142 = vld [vmem:[#allocation2 + $0x1e8] sm:$0xff]
    %v1143 = vld [vmem:[#allocation2 + $0x1f0] sm:$0xff]
    %v1144 = vld [vmem:[#allocation2 + $0x1f8] sm:$0xff]
    %v1145 = vpack.c.bf16 %v1082, %v1081
    %v1146 = vpack.c.bf16 %v1084, %v1083
    %v1147 = vpack.c.bf16 %v1086, %v1085
    %v1148 = vpack.c.bf16 %v1088, %v1087
    %v1149 = vpack.c.bf16 %v1090, %v1089
    %v1150 = vpack.c.bf16 %v1092, %v1091
    %v1151 = vpack.c.bf16 %v1094, %v1093
    %v1152 = vpack.c.bf16 %v1096, %v1095
    %v1153 = vpack.c.bf16 %v1098, %v1097
    %v1154 = vpack.c.bf16 %v1100, %v1099
    %v1155 = vpack.c.bf16 %v1102, %v1101
    %v1156 = vpack.c.bf16 %v1104, %v1103
    %v1157 = vpack.c.bf16 %v1106, %v1105
    %v1158 = vpack.c.bf16 %v1108, %v1107
    %v1159 = vpack.c.bf16 %v1110, %v1109
    %v1160 = vpack.c.bf16 %v1112, %v1111
    %v1161 = vpack.c.bf16 %v1114, %v1113
    %v1162 = vpack.c.bf16 %v1116, %v1115
    %v1163 = vpack.c.bf16 %v1118, %v1117
    %v1164 = vpack.c.bf16 %v1120, %v1119
    %v1165 = vpack.c.bf16 %v1122, %v1121
    %v1166 = vpack.c.bf16 %v1124, %v1123
    %v1167 = vpack.c.bf16 %v1126, %v1125
    %v1168 = vpack.c.bf16 %v1128, %v1127
    %v1169 = vpack.c.bf16 %v1130, %v1129
    %v1170 = vpack.c.bf16 %v1132, %v1131
    %v1171 = vpack.c.bf16 %v1134, %v1133
    %v1172 = vpack.c.bf16 %v1136, %v1135
    %v1173 = vpack.c.bf16 %v1138, %v1137
    %v1174 = vpack.c.bf16 %v1140, %v1139
    %v1175 = vpack.c.bf16 %v1142, %v1141
    %v1176 = vpack.c.bf16 %v1144, %v1143
    %v1209 = vunpack.c.l.b16 %v1145
    %v1210 = vunpack.c.h.b16 %v1145
    %v1211 = vunpack.c.l.b16 %v1146
    %v1212 = vunpack.c.h.b16 %v1146
    %v1213 = vunpack.c.l.b16 %v1147
    %v1214 = vunpack.c.h.b16 %v1147
    %v1215 = vunpack.c.l.b16 %v1148
    %v1216 = vunpack.c.h.b16 %v1148
    %v1217 = vunpack.c.l.b16 %v1149
    %v1218 = vunpack.c.h.b16 %v1149
    %v1219 = vunpack.c.l.b16 %v1150
    %v1220 = vunpack.c.h.b16 %v1150
    %v1221 = vunpack.c.l.b16 %v1151
    %v1222 = vunpack.c.h.b16 %v1151
    %v1223 = vunpack.c.l.b16 %v1152
    %v1224 = vunpack.c.h.b16 %v1152
    %v1225 = vunpack.c.l.b16 %v1153
    %v1226 = vunpack.c.h.b16 %v1153
    %v1227 = vunpack.c.l.b16 %v1154
    %v1228 = vunpack.c.h.b16 %v1154
    %v1229 = vunpack.c.l.b16 %v1155
    %v1230 = vunpack.c.h.b16 %v1155
    %v1231 = vunpack.c.l.b16 %v1156
    %v1232 = vunpack.c.h.b16 %v1156
    %v1233 = vunpack.c.l.b16 %v1157
    %v1234 = vunpack.c.h.b16 %v1157
    %v1235 = vunpack.c.l.b16 %v1158
    %v1236 = vunpack.c.h.b16 %v1158
    %v1237 = vunpack.c.l.b16 %v1159
    %v1238 = vunpack.c.h.b16 %v1159
    %v1239 = vunpack.c.l.b16 %v1160
    %v1240 = vunpack.c.h.b16 %v1160
    %v1241 = vunpack.c.l.b16 %v1161
    %v1242 = vunpack.c.h.b16 %v1161
    %v1243 = vunpack.c.l.b16 %v1162
    %v1244 = vunpack.c.h.b16 %v1162
    %v1245 = vunpack.c.l.b16 %v1163
    %v1246 = vunpack.c.h.b16 %v1163
    %v1247 = vunpack.c.l.b16 %v1164
    %v1248 = vunpack.c.h.b16 %v1164
    %v1249 = vunpack.c.l.b16 %v1165
    %v1250 = vunpack.c.h.b16 %v1165
    %v1251 = vunpack.c.l.b16 %v1166
    %v1252 = vunpack.c.h.b16 %v1166
    %v1253 = vunpack.c.l.b16 %v1167
    %v1254 = vunpack.c.h.b16 %v1167
    %v1255 = vunpack.c.l.b16 %v1168
    %v1256 = vunpack.c.h.b16 %v1168
    %v1257 = vunpack.c.l.b16 %v1169
    %v1258 = vunpack.c.h.b16 %v1169
    %v1259 = vunpack.c.l.b16 %v1170
    %v1260 = vunpack.c.h.b16 %v1170
    %v1261 = vunpack.c.l.b16 %v1171
    %v1262 = vunpack.c.h.b16 %v1171
    %v1263 = vunpack.c.l.b16 %v1172
    %v1264 = vunpack.c.h.b16 %v1172
    %v1265 = vunpack.c.l.b16 %v1173
    %v1266 = vunpack.c.h.b16 %v1173
    %v1267 = vunpack.c.l.b16 %v1174
    %v1268 = vunpack.c.h.b16 %v1174
    %v1269 = vunpack.c.l.b16 %v1175
    %v1270 = vunpack.c.h.b16 %v1175
    %v1271 = vunpack.c.l.b16 %v1176
    %v1272 = vunpack.c.h.b16 %v1176
    %v1273 = vpack.c.b16 %v1209, %v1209
    %v1274 = vpack.c.b16 %v1210, %v1210
    %v1275 = vpack.c.b16 %v1211, %v1211
    %v1276 = vpack.c.b16 %v1212, %v1212
    %v1277 = vpack.c.b16 %v1213, %v1213
    %v1278 = vpack.c.b16 %v1214, %v1214
    %v1279 = vpack.c.b16 %v1215, %v1215
    %v1280 = vpack.c.b16 %v1216, %v1216
    %v1281 = vpack.c.b16 %v1217, %v1217
    %v1282 = vpack.c.b16 %v1218, %v1218
    %v1283 = vpack.c.b16 %v1219, %v1219
    %v1284 = vpack.c.b16 %v1220, %v1220
    %v1285 = vpack.c.b16 %v1221, %v1221
    %v1286 = vpack.c.b16 %v1222, %v1222
    %v1287 = vpack.c.b16 %v1223, %v1223
    %v1288 = vpack.c.b16 %v1224, %v1224
    %v1289 = vpack.c.b16 %v1225, %v1225
    %v1290 = vpack.c.b16 %v1226, %v1226
    %v1291 = vpack.c.b16 %v1227, %v1227
    %v1292 = vpack.c.b16 %v1228, %v1228
    %v1293 = vpack.c.b16 %v1229, %v1229
    %v1294 = vpack.c.b16 %v1230, %v1230
    %v1295 = vpack.c.b16 %v1231, %v1231
    %v1296 = vpack.c.b16 %v1232, %v1232
    %v1297 = vpack.c.b16 %v1233, %v1233
    %v1298 = vpack.c.b16 %v1234, %v1234
    %v1299 = vpack.c.b16 %v1235, %v1235
    %v1300 = vpack.c.b16 %v1236, %v1236
    %v1301 = vpack.c.b16 %v1237, %v1237
    %v1302 = vpack.c.b16 %v1238, %v1238
    %v1303 = vpack.c.b16 %v1239, %v1239
    %v1304 = vpack.c.b16 %v1240, %v1240
    %v1305 = vpack.c.b16 %v1241, %v1241
    %v1306 = vpack.c.b16 %v1242, %v1242
    %v1307 = vpack.c.b16 %v1243, %v1243
    %v1308 = vpack.c.b16 %v1244, %v1244
    %v1309 = vpack.c.b16 %v1245, %v1245
    %v1310 = vpack.c.b16 %v1246, %v1246
    %v1311 = vpack.c.b16 %v1247, %v1247
    %v1312 = vpack.c.b16 %v1248, %v1248
    %v1313 = vpack.c.b16 %v1249, %v1249
    %v1314 = vpack.c.b16 %v1250, %v1250
    %v1315 = vpack.c.b16 %v1251, %v1251
    %v1316 = vpack.c.b16 %v1252, %v1252
    %v1317 = vpack.c.b16 %v1253, %v1253
    %v1318 = vpack.c.b16 %v1254, %v1254
    %v1319 = vpack.c.b16 %v1255, %v1255
    %v1320 = vpack.c.b16 %v1256, %v1256
    %v1321 = vpack.c.b16 %v1257, %v1257
    %v1322 = vpack.c.b16 %v1258, %v1258
    %v1323 = vpack.c.b16 %v1259, %v1259
    %v1324 = vpack.c.b16 %v1260, %v1260
    %v1325 = vpack.c.b16 %v1261, %v1261
    %v1326 = vpack.c.b16 %v1262, %v1262
    %v1327 = vpack.c.b16 %v1263, %v1263
    %v1328 = vpack.c.b16 %v1264, %v1264
    %v1329 = vpack.c.b16 %v1265, %v1265
    %v1330 = vpack.c.b16 %v1266, %v1266
    %v1331 = vpack.c.b16 %v1267, %v1267
    %v1332 = vpack.c.b16 %v1268, %v1268
    %v1333 = vpack.c.b16 %v1269, %v1269
    %v1334 = vpack.c.b16 %v1270, %v1270
    %v1335 = vpack.c.b16 %v1271, %v1271
    %v1336 = vpack.c.b16 %v1272, %v1272
    %vm1401 = vcmask 257024
    %1402 = vst.msk [vmem:[%s2] sm:$0xf] %vm1401, %v1273
    %1403 = vst.msk [vmem:[%s2 + $0x4] sm:$0xf] %vm1401, %v1274
    %1404 = vst.msk [vmem:[%s2 + $0x8] sm:$0xf] %vm1401, %v1275
    %1405 = vst.msk [vmem:[%s2 + $0xc] sm:$0xf] %vm1401, %v1276
    %1406 = vst.msk [vmem:[%s2 + $0x10] sm:$0xf] %vm1401, %v1277
    %1407 = vst.msk [vmem:[%s2 + $0x14] sm:$0xf] %vm1401, %v1278
    %1408 = vst.msk [vmem:[%s2 + $0x18] sm:$0xf] %vm1401, %v1279
    %1409 = vst.msk [vmem:[%s2 + $0x1c] sm:$0xf] %vm1401, %v1280
    %1410 = vst.msk [vmem:[%s2 + $0x20] sm:$0xf] %vm1401, %v1281
    %1411 = vst.msk [vmem:[%s2 + $0x24] sm:$0xf] %vm1401, %v1282
    %1412 = vst.msk [vmem:[%s2 + $0x28] sm:$0xf] %vm1401, %v1283
    %1413 = vst.msk [vmem:[%s2 + $0x2c] sm:$0xf] %vm1401, %v1284
    %1414 = vst.msk [vmem:[%s2 + $0x30] sm:$0xf] %vm1401, %v1285
    %1415 = vst.msk [vmem:[%s2 + $0x34] sm:$0xf] %vm1401, %v1286
    %1416 = vst.msk [vmem:[%s2 + $0x38] sm:$0xf] %vm1401, %v1287
    %1417 = vst.msk [vmem:[%s2 + $0x3c] sm:$0xf] %vm1401, %v1288
    %1418 = vst.msk [vmem:[%s2 + $0x40] sm:$0xf] %vm1401, %v1289
    %1419 = vst.msk [vmem:[%s2 + $0x44] sm:$0xf] %vm1401, %v1290
    %1420 = vst.msk [vmem:[%s2 + $0x48] sm:$0xf] %vm1401, %v1291
    %1421 = vst.msk [vmem:[%s2 + $0x4c] sm:$0xf] %vm1401, %v1292
    %1422 = vst.msk [vmem:[%s2 + $0x50] sm:$0xf] %vm1401, %v1293
    %1423 = vst.msk [vmem:[%s2 + $0x54] sm:$0xf] %vm1401, %v1294
    %1424 = vst.msk [vmem:[%s2 + $0x58] sm:$0xf] %vm1401, %v1295
    %1425 = vst.msk [vmem:[%s2 + $0x5c] sm:$0xf] %vm1401, %v1296
    %1426 = vst.msk [vmem:[%s2 + $0x60] sm:$0xf] %vm1401, %v1297
    %1427 = vst.msk [vmem:[%s2 + $0x64] sm:$0xf] %vm1401, %v1298
    %1428 = vst.msk [vmem:[%s2 + $0x68] sm:$0xf] %vm1401, %v1299
    %1429 = vst.msk [vmem:[%s2 + $0x6c] sm:$0xf] %vm1401, %v1300
    %1430 = vst.msk [vmem:[%s2 + $0x70] sm:$0xf] %vm1401, %v1301
    %1431 = vst.msk [vmem:[%s2 + $0x74] sm:$0xf] %vm1401, %v1302
    %1432 = vst.msk [vmem:[%s2 + $0x78] sm:$0xf] %vm1401, %v1303
    %1433 = vst.msk [vmem:[%s2 + $0x7c] sm:$0xf] %vm1401, %v1304
    %1434 = vst.msk [vmem:[%s2 + $0x80] sm:$0xf] %vm1401, %v1305
    %1435 = vst.msk [vmem:[%s2 + $0x84] sm:$0xf] %vm1401, %v1306
    %1436 = vst.msk [vmem:[%s2 + $0x88] sm:$0xf] %vm1401, %v1307
    %1437 = vst.msk [vmem:[%s2 + $0x8c] sm:$0xf] %vm1401, %v1308
    %1438 = vst.msk [vmem:[%s2 + $0x90] sm:$0xf] %vm1401, %v1309
    %1439 = vst.msk [vmem:[%s2 + $0x94] sm:$0xf] %vm1401, %v1310
    %1440 = vst.msk [vmem:[%s2 + $0x98] sm:$0xf] %vm1401, %v1311
    %1441 = vst.msk [vmem:[%s2 + $0x9c] sm:$0xf] %vm1401, %v1312
    %1442 = vst.msk [vmem:[%s2 + $0xa0] sm:$0xf] %vm1401, %v1313
    %1443 = vst.msk [vmem:[%s2 + $0xa4] sm:$0xf] %vm1401, %v1314
    %1444 = vst.msk [vmem:[%s2 + $0xa8] sm:$0xf] %vm1401, %v1315
    %1445 = vst.msk [vmem:[%s2 + $0xac] sm:$0xf] %vm1401, %v1316
    %1446 = vst.msk [vmem:[%s2 + $0xb0] sm:$0xf] %vm1401, %v1317
    %1447 = vst.msk [vmem:[%s2 + $0xb4] sm:$0xf] %vm1401, %v1318
    %1448 = vst.msk [vmem:[%s2 + $0xb8] sm:$0xf] %vm1401, %v1319
    %1449 = vst.msk [vmem:[%s2 + $0xbc] sm:$0xf] %vm1401, %v1320
    %1450 = vst.msk [vmem:[%s2 + $0xc0] sm:$0xf] %vm1401, %v1321
    %1451 = vst.msk [vmem:[%s2 + $0xc4] sm:$0xf] %vm1401, %v1322
    %1452 = vst.msk [vmem:[%s2 + $0xc8] sm:$0xf] %vm1401, %v1323
    %1453 = vst.msk [vmem:[%s2 + $0xcc] sm:$0xf] %vm1401, %v1324
    %1454 = vst.msk [vmem:[%s2 + $0xd0] sm:$0xf] %vm1401, %v1325
    %1455 = vst.msk [vmem:[%s2 + $0xd4] sm:$0xf] %vm1401, %v1326
    %1456 = vst.msk [vmem:[%s2 + $0xd8] sm:$0xf] %vm1401, %v1327
    %1457 = vst.msk [vmem:[%s2 + $0xdc] sm:$0xf] %vm1401, %v1328
    %1458 = vst.msk [vmem:[%s2 + $0xe0] sm:$0xf] %vm1401, %v1329
    %1459 = vst.msk [vmem:[%s2 + $0xe4] sm:$0xf] %vm1401, %v1330
    %1460 = vst.msk [vmem:[%s2 + $0xe8] sm:$0xf] %vm1401, %v1331
    %1461 = vst.msk [vmem:[%s2 + $0xec] sm:$0xf] %vm1401, %v1332
    %1462 = vst.msk [vmem:[%s2 + $0xf0] sm:$0xf] %vm1401, %v1333
    %1463 = vst.msk [vmem:[%s2 + $0xf4] sm:$0xf] %vm1401, %v1334
    %1464 = vst.msk [vmem:[%s2 + $0xf8] sm:$0xf] %vm1401, %v1335
    %1465 = vst.msk [vmem:[%s2 + $0xfc] sm:$0xf] %vm1401, %v1336
    %v1466 = vsel %vm1013, %v1081, 0.0
    %v1467 = vsel %vm1013, %v1082, 0.0
    %v1468 = vadd.f32 %v1466, %v1467
    %v1469 = vsel %vm1013, %v1083, 0.0
    %v1470 = vadd.f32 %v1468, %v1469
    %v1471 = vsel %vm1013, %v1084, 0.0
    %v1472 = vadd.f32 %v1470, %v1471
    %v1473 = vsel %vm1013, %v1085, 0.0
    %v1474 = vadd.f32 %v1472, %v1473
    %v1475 = vsel %vm1013, %v1086, 0.0
    %v1476 = vadd.f32 %v1474, %v1475
    %v1477 = vsel %vm1013, %v1087, 0.0
    %v1478 = vadd.f32 %v1476, %v1477
    %v1479 = vsel %vm1013, %v1088, 0.0
    %v1480 = vadd.f32 %v1478, %v1479
    %v1481 = vsel %vm1013, %v1089, 0.0
    %v1482 = vadd.f32 %v1480, %v1481
    %v1483 = vsel %vm1013, %v1090, 0.0
    %v1484 = vadd.f32 %v1482, %v1483
    %v1485 = vsel %vm1013, %v1091, 0.0
    %v1486 = vadd.f32 %v1484, %v1485
    %v1487 = vsel %vm1013, %v1092, 0.0
    %v1488 = vadd.f32 %v1486, %v1487
    %v1489 = vsel %vm1013, %v1093, 0.0
    %v1490 = vadd.f32 %v1488, %v1489
    %v1491 = vsel %vm1013, %v1094, 0.0
    %v1492 = vadd.f32 %v1490, %v1491
    %v1493 = vsel %vm1013, %v1095, 0.0
    %v1494 = vadd.f32 %v1492, %v1493
    %v1495 = vsel %vm1013, %v1096, 0.0
    %v1496 = vadd.f32 %v1494, %v1495
    %v1497 = vsel %vm1013, %v1097, 0.0
    %v1498 = vadd.f32 %v1496, %v1497
    %v1499 = vsel %vm1013, %v1098, 0.0
    %v1500 = vadd.f32 %v1498, %v1499
    %v1501 = vsel %vm1013, %v1099, 0.0
    %v1502 = vadd.f32 %v1500, %v1501
    %v1503 = vsel %vm1013, %v1100, 0.0
    %v1504 = vadd.f32 %v1502, %v1503
    %v1505 = vsel %vm1013, %v1101, 0.0
    %v1506 = vadd.f32 %v1504, %v1505
    %v1507 = vsel %vm1013, %v1102, 0.0
    %v1508 = vadd.f32 %v1506, %v1507
    %v1509 = vsel %vm1013, %v1103, 0.0
    %v1510 = vadd.f32 %v1508, %v1509
    %v1511 = vsel %vm1013, %v1104, 0.0
    %v1512 = vadd.f32 %v1510, %v1511
    %v1513 = vsel %vm1013, %v1105, 0.0
    %v1514 = vadd.f32 %v1512, %v1513
    %v1515 = vsel %vm1013, %v1106, 0.0
    %v1516 = vadd.f32 %v1514, %v1515
    %v1517 = vsel %vm1013, %v1107, 0.0
    %v1518 = vadd.f32 %v1516, %v1517
    %v1519 = vsel %vm1013, %v1108, 0.0
    %v1520 = vadd.f32 %v1518, %v1519
    %v1521 = vsel %vm1013, %v1109, 0.0
    %v1522 = vadd.f32 %v1520, %v1521
    %v1523 = vsel %vm1013, %v1110, 0.0
    %v1524 = vadd.f32 %v1522, %v1523
    %v1525 = vsel %vm1013, %v1111, 0.0
    %v1526 = vadd.f32 %v1524, %v1525
    %v1527 = vsel %vm1013, %v1112, 0.0
    %v1528 = vadd.f32 %v1526, %v1527
    %v1529 = vsel %vm1013, %v1113, 0.0
    %v1530 = vadd.f32 %v1528, %v1529
    %v1531 = vsel %vm1013, %v1114, 0.0
    %v1532 = vadd.f32 %v1530, %v1531
    %v1533 = vsel %vm1013, %v1115, 0.0
    %v1534 = vadd.f32 %v1532, %v1533
    %v1535 = vsel %vm1013, %v1116, 0.0
    %v1536 = vadd.f32 %v1534, %v1535
    %v1537 = vsel %vm1013, %v1117, 0.0
    %v1538 = vadd.f32 %v1536, %v1537
    %v1539 = vsel %vm1013, %v1118, 0.0
    %v1540 = vadd.f32 %v1538, %v1539
    %v1541 = vsel %vm1013, %v1119, 0.0
    %v1542 = vadd.f32 %v1540, %v1541
    %v1543 = vsel %vm1013, %v1120, 0.0
    %v1544 = vadd.f32 %v1542, %v1543
    %v1545 = vsel %vm1013, %v1121, 0.0
    %v1546 = vadd.f32 %v1544, %v1545
    %v1547 = vsel %vm1013, %v1122, 0.0
    %v1548 = vadd.f32 %v1546, %v1547
    %v1549 = vsel %vm1013, %v1123, 0.0
    %v1550 = vadd.f32 %v1548, %v1549
    %v1551 = vsel %vm1013, %v1124, 0.0
    %v1552 = vadd.f32 %v1550, %v1551
    %v1553 = vsel %vm1013, %v1125, 0.0
    %v1554 = vadd.f32 %v1552, %v1553
    %v1555 = vsel %vm1013, %v1126, 0.0
    %v1556 = vadd.f32 %v1554, %v1555
    %v1557 = vsel %vm1013, %v1127, 0.0
    %v1558 = vadd.f32 %v1556, %v1557
    %v1559 = vsel %vm1013, %v1128, 0.0
    %v1560 = vadd.f32 %v1558, %v1559
    %v1561 = vsel %vm1013, %v1129, 0.0
    %v1562 = vadd.f32 %v1560, %v1561
    %v1563 = vsel %vm1013, %v1130, 0.0
    %v1564 = vadd.f32 %v1562, %v1563
    %v1565 = vsel %vm1013, %v1131, 0.0
    %v1566 = vadd.f32 %v1564, %v1565
    %v1567 = vsel %vm1013, %v1132, 0.0
    %v1568 = vadd.f32 %v1566, %v1567
    %v1569 = vsel %vm1013, %v1133, 0.0
    %v1570 = vadd.f32 %v1568, %v1569
    %v1571 = vsel %vm1013, %v1134, 0.0
    %v1572 = vadd.f32 %v1570, %v1571
    %v1573 = vsel %vm1013, %v1135, 0.0
    %v1574 = vadd.f32 %v1572, %v1573
    %v1575 = vsel %vm1013, %v1136, 0.0
    %v1576 = vadd.f32 %v1574, %v1575
    %v1577 = vsel %vm1013, %v1137, 0.0
    %v1578 = vadd.f32 %v1576, %v1577
    %v1579 = vsel %vm1013, %v1138, 0.0
    %v1580 = vadd.f32 %v1578, %v1579
    %v1581 = vsel %vm1013, %v1139, 0.0
    %v1582 = vadd.f32 %v1580, %v1581
    %v1583 = vsel %vm1013, %v1140, 0.0
    %v1584 = vadd.f32 %v1582, %v1583
    %v1585 = vsel %vm1013, %v1141, 0.0
    %v1586 = vadd.f32 %v1584, %v1585
    %v1587 = vsel %vm1013, %v1142, 0.0
    %v1588 = vadd.f32 %v1586, %v1587
    %v1589 = vsel %vm1013, %v1143, 0.0
    %v1590 = vadd.f32 %v1588, %v1589
    %v1591 = vsel %vm1013, %v1144, 0.0
    %v1592 = vadd.f32 %v1590, %v1591
    %v1593 = vrot.slane %v1592, 4
    %v1594 = vadd.f32 %v1592, %v1593
    %v1595 = vrot.slane %v1594, 2
    %v1596 = vadd.f32 %v1594, %v1595
    %v1597 = vrot.slane %v1596, 1
    %v1598 = vadd.f32 %v1596, %v1597
    %vm1599 = vcmask 253952
    %1600 = vst.msk [vmem:[%s3] sm:$0x1] %vm1599, %v1598
    %v1601 = vmul.f32 %v1081, %v1081
    %v1602 = vmul.f32 %v1082, %v1082
    %v1603 = vmul.f32 %v1083, %v1083
    %v1604 = vmul.f32 %v1084, %v1084
    %v1605 = vmul.f32 %v1085, %v1085
    %v1606 = vmul.f32 %v1086, %v1086
    %v1607 = vmul.f32 %v1087, %v1087
    %v1608 = vmul.f32 %v1088, %v1088
    %v1609 = vmul.f32 %v1089, %v1089
    %v1610 = vmul.f32 %v1090, %v1090
    %v1611 = vmul.f32 %v1091, %v1091
    %v1612 = vmul.f32 %v1092, %v1092
    %v1613 = vmul.f32 %v1093, %v1093
    %v1614 = vmul.f32 %v1094, %v1094
    %v1615 = vmul.f32 %v1095, %v1095
    %v1616 = vmul.f32 %v1096, %v1096
    %v1617 = vmul.f32 %v1097, %v1097
    %v1618 = vmul.f32 %v1098, %v1098
    %v1619 = vmul.f32 %v1099, %v1099
    %v1620 = vmul.f32 %v1100, %v1100
    %v1621 = vmul.f32 %v1101, %v1101
    %v1622 = vmul.f32 %v1102, %v1102
    %v1623 = vmul.f32 %v1103, %v1103
    %v1624 = vmul.f32 %v1104, %v1104
    %v1625 = vmul.f32 %v1105, %v1105
    %v1626 = vmul.f32 %v1106, %v1106
    %v1627 = vmul.f32 %v1107, %v1107
    %v1628 = vmul.f32 %v1108, %v1108
    %v1629 = vmul.f32 %v1109, %v1109
    %v1630 = vmul.f32 %v1110, %v1110
    %v1631 = vmul.f32 %v1111, %v1111
    %v1632 = vmul.f32 %v1112, %v1112
    %v1633 = vmul.f32 %v1113, %v1113
    %v1634 = vmul.f32 %v1114, %v1114
    %v1635 = vmul.f32 %v1115, %v1115
    %v1636 = vmul.f32 %v1116, %v1116
    %v1637 = vmul.f32 %v1117, %v1117
    %v1638 = vmul.f32 %v1118, %v1118
    %v1639 = vmul.f32 %v1119, %v1119
    %v1640 = vmul.f32 %v1120, %v1120
    %v1641 = vmul.f32 %v1121, %v1121
    %v1642 = vmul.f32 %v1122, %v1122
    %v1643 = vmul.f32 %v1123, %v1123
    %v1644 = vmul.f32 %v1124, %v1124
    %v1645 = vmul.f32 %v1125, %v1125
    %v1646 = vmul.f32 %v1126, %v1126
    %v1647 = vmul.f32 %v1127, %v1127
    %v1648 = vmul.f32 %v1128, %v1128
    %v1649 = vmul.f32 %v1129, %v1129
    %v1650 = vmul.f32 %v1130, %v1130
    %v1651 = vmul.f32 %v1131, %v1131
    %v1652 = vmul.f32 %v1132, %v1132
    %v1653 = vmul.f32 %v1133, %v1133
    %v1654 = vmul.f32 %v1134, %v1134
    %v1655 = vmul.f32 %v1135, %v1135
    %v1656 = vmul.f32 %v1136, %v1136
    %v1657 = vmul.f32 %v1137, %v1137
    %v1658 = vmul.f32 %v1138, %v1138
    %v1659 = vmul.f32 %v1139, %v1139
    %v1660 = vmul.f32 %v1140, %v1140
    %v1661 = vmul.f32 %v1141, %v1141
    %v1662 = vmul.f32 %v1142, %v1142
    %v1663 = vmul.f32 %v1143, %v1143
    %v1664 = vmul.f32 %v1144, %v1144
    %v1665 = vsel %vm1013, %v1601, 0.0
    %v1666 = vsel %vm1013, %v1602, 0.0
    %v1667 = vadd.f32 %v1665, %v1666
    %v1668 = vsel %vm1013, %v1603, 0.0
    %v1669 = vadd.f32 %v1667, %v1668
    %v1670 = vsel %vm1013, %v1604, 0.0
    %v1671 = vadd.f32 %v1669, %v1670
    %v1672 = vsel %vm1013, %v1605, 0.0
    %v1673 = vadd.f32 %v1671, %v1672
    %v1674 = vsel %vm1013, %v1606, 0.0
    %v1675 = vadd.f32 %v1673, %v1674
    %v1676 = vsel %vm1013, %v1607, 0.0
    %v1677 = vadd.f32 %v1675, %v1676
    %v1678 = vsel %vm1013, %v1608, 0.0
    %v1679 = vadd.f32 %v1677, %v1678
    %v1680 = vsel %vm1013, %v1609, 0.0
    %v1681 = vadd.f32 %v1679, %v1680
    %v1682 = vsel %vm1013, %v1610, 0.0
    %v1683 = vadd.f32 %v1681, %v1682
    %v1684 = vsel %vm1013, %v1611, 0.0
    %v1685 = vadd.f32 %v1683, %v1684
    %v1686 = vsel %vm1013, %v1612, 0.0
    %v1687 = vadd.f32 %v1685, %v1686
    %v1688 = vsel %vm1013, %v1613, 0.0
    %v1689 = vadd.f32 %v1687, %v1688
    %v1690 = vsel %vm1013, %v1614, 0.0
    %v1691 = vadd.f32 %v1689, %v1690
    %v1692 = vsel %vm1013, %v1615, 0.0
    %v1693 = vadd.f32 %v1691, %v1692
    %v1694 = vsel %vm1013, %v1616, 0.0
    %v1695 = vadd.f32 %v1693, %v1694
    %v1696 = vsel %vm1013, %v1617, 0.0
    %v1697 = vadd.f32 %v1695, %v1696
    %v1698 = vsel %vm1013, %v1618, 0.0
    %v1699 = vadd.f32 %v1697, %v1698
    %v1700 = vsel %vm1013, %v1619, 0.0
    %v1701 = vadd.f32 %v1699, %v1700
    %v1702 = vsel %vm1013, %v1620, 0.0
    %v1703 = vadd.f32 %v1701, %v1702
    %v1704 = vsel %vm1013, %v1621, 0.0
    %v1705 = vadd.f32 %v1703, %v1704
    %v1706 = vsel %vm1013, %v1622, 0.0
    %v1707 = vadd.f32 %v1705, %v1706
    %v1708 = vsel %vm1013, %v1623, 0.0
    %v1709 = vadd.f32 %v1707, %v1708
    %v1710 = vsel %vm1013, %v1624, 0.0
    %v1711 = vadd.f32 %v1709, %v1710
    %v1712 = vsel %vm1013, %v1625, 0.0
    %v1713 = vadd.f32 %v1711, %v1712
    %v1714 = vsel %vm1013, %v1626, 0.0
    %v1715 = vadd.f32 %v1713, %v1714
    %v1716 = vsel %vm1013, %v1627, 0.0
    %v1717 = vadd.f32 %v1715, %v1716
    %v1718 = vsel %vm1013, %v1628, 0.0
    %v1719 = vadd.f32 %v1717, %v1718
    %v1720 = vsel %vm1013, %v1629, 0.0
    %v1721 = vadd.f32 %v1719, %v1720
    %v1722 = vsel %vm1013, %v1630, 0.0
    %v1723 = vadd.f32 %v1721, %v1722
    %v1724 = vsel %vm1013, %v1631, 0.0
    %v1725 = vadd.f32 %v1723, %v1724
    %v1726 = vsel %vm1013, %v1632, 0.0
    %v1727 = vadd.f32 %v1725, %v1726
    %v1728 = vsel %vm1013, %v1633, 0.0
    %v1729 = vadd.f32 %v1727, %v1728
    %v1730 = vsel %vm1013, %v1634, 0.0
    %v1731 = vadd.f32 %v1729, %v1730
    %v1732 = vsel %vm1013, %v1635, 0.0
    %v1733 = vadd.f32 %v1731, %v1732
    %v1734 = vsel %vm1013, %v1636, 0.0
    %v1735 = vadd.f32 %v1733, %v1734
    %v1736 = vsel %vm1013, %v1637, 0.0
    %v1737 = vadd.f32 %v1735, %v1736
    %v1738 = vsel %vm1013, %v1638, 0.0
    %v1739 = vadd.f32 %v1737, %v1738
    %v1740 = vsel %vm1013, %v1639, 0.0
    %v1741 = vadd.f32 %v1739, %v1740
    %v1742 = vsel %vm1013, %v1640, 0.0
    %v1743 = vadd.f32 %v1741, %v1742
    %v1744 = vsel %vm1013, %v1641, 0.0
    %v1745 = vadd.f32 %v1743, %v1744
    %v1746 = vsel %vm1013, %v1642, 0.0
    %v1747 = vadd.f32 %v1745, %v1746
    %v1748 = vsel %vm1013, %v1643, 0.0
    %v1749 = vadd.f32 %v1747, %v1748
    %v1750 = vsel %vm1013, %v1644, 0.0
    %v1751 = vadd.f32 %v1749, %v1750
    %v1752 = vsel %vm1013, %v1645, 0.0
    %v1753 = vadd.f32 %v1751, %v1752
    %v1754 = vsel %vm1013, %v1646, 0.0
    %v1755 = vadd.f32 %v1753, %v1754
    %v1756 = vsel %vm1013, %v1647, 0.0
    %v1757 = vadd.f32 %v1755, %v1756
    %v1758 = vsel %vm1013, %v1648, 0.0
    %v1759 = vadd.f32 %v1757, %v1758
    %v1760 = vsel %vm1013, %v1649, 0.0
    %v1761 = vadd.f32 %v1759, %v1760
    %v1762 = vsel %vm1013, %v1650, 0.0
    %v1763 = vadd.f32 %v1761, %v1762
    %v1764 = vsel %vm1013, %v1651, 0.0
    %v1765 = vadd.f32 %v1763, %v1764
    %v1766 = vsel %vm1013, %v1652, 0.0
    %v1767 = vadd.f32 %v1765, %v1766
    %v1768 = vsel %vm1013, %v1653, 0.0
    %v1769 = vadd.f32 %v1767, %v1768
    %v1770 = vsel %vm1013, %v1654, 0.0
    %v1771 = vadd.f32 %v1769, %v1770
    %v1772 = vsel %vm1013, %v1655, 0.0
    %v1773 = vadd.f32 %v1771, %v1772
    %v1774 = vsel %vm1013, %v1656, 0.0
    %v1775 = vadd.f32 %v1773, %v1774
    %v1776 = vsel %vm1013, %v1657, 0.0
    %v1777 = vadd.f32 %v1775, %v1776
    %v1778 = vsel %vm1013, %v1658, 0.0
    %v1779 = vadd.f32 %v1777, %v1778
    %v1780 = vsel %vm1013, %v1659, 0.0
    %v1781 = vadd.f32 %v1779, %v1780
    %v1782 = vsel %vm1013, %v1660, 0.0
    %v1783 = vadd.f32 %v1781, %v1782
    %v1784 = vsel %vm1013, %v1661, 0.0
    %v1785 = vadd.f32 %v1783, %v1784
    %v1786 = vsel %vm1013, %v1662, 0.0
    %v1787 = vadd.f32 %v1785, %v1786
    %v1788 = vsel %vm1013, %v1663, 0.0
    %v1789 = vadd.f32 %v1787, %v1788
    %v1790 = vsel %vm1013, %v1664, 0.0
    %v1791 = vadd.f32 %v1789, %v1790
    %v1792 = vrot.slane %v1791, 4
    %v1793 = vadd.f32 %v1791, %v1792
    %v1794 = vrot.slane %v1793, 2
    %v1795 = vadd.f32 %v1793, %v1794
    %v1796 = vrot.slane %v1795, 1
    %v1797 = vadd.f32 %v1795, %v1796
    %1798 = vst.msk [vmem:[%s4] sm:$0x1] %vm1599, %v1797
  $region17: #{discriminator_forward.9} parent=0 // pred_fallthru
    _
  // Predicated region
  $region18: #{discriminator_forward.9} parent=0 // pred_check
    _
  $region19: #{discriminator_forward.9} parent=0 // pred_check_branch
    %1800 = sbr.rel (0) target = $region21
  $region20: #{discriminator_forward.9} parent=0 // pred_region
    _
  $region21: #{discriminator_forward.9} parent=0 // pred_fallthru
    _
  // Predicated region
  $region22: #{discriminator_forward.9} parent=0 // pred_check
    _
  $region23: #{discriminator_forward.9} parent=0 // pred_check_branch
    %1802 = sbr.rel (0) target = $region25
  $region24: #{discriminator_forward.9} parent=0 // pred_region
    _
  $region25: #{discriminator_forward.9} parent=0 // pred_fallthru
    _
  // Predicated region
  $region26: #{discriminator_forward.9} parent=0 // pred_check
    _
  $region27: #{discriminator_forward.9} parent=0 // pred_check_branch
    %1804 = sbr.rel (0) target = $region29
  $region28: #{discriminator_forward.9} parent=0 // pred_region
    _
  $region29: #{discriminator_forward.9} parent=0 // pred_fallthru
    _
  // Predicated region
  $region30: #{discriminator_forward.9} parent=0 // pred_check
    _
  $region31: #{discriminator_forward.9} parent=0 // pred_check_branch
    %1806 = sbr.rel (0) target = $region33
  $region32: #{discriminator_forward.9} parent=0 // pred_region
    _
  $region33: #{discriminator_forward.9} parent=0 // pred_fallthru
    _
  // Predicated region
  $region34: #{discriminator_forward.9} parent=0 // pred_check
    _
  $region35: #{discriminator_forward.9} parent=0 // pred_check_branch
    %1808 = sbr.rel (0) target = $region37
  $region36: #{discriminator_forward.9} parent=0 // pred_region
    _
  $region37: #{discriminator_forward.9} parent=0 // pred_fallthru
    _
  // Predicated region
  $region38: #{discriminator_forward.9} parent=0 // pred_check
    _
  $region39: #{discriminator_forward.9} parent=0 // pred_check_branch
    %1810 = sbr.rel (0) target = $region41
  $region40: #{discriminator_forward.9} parent=0 // pred_region
    _
  $region41: #{discriminator_forward.9} parent=0 // pred_fallthru
    _

// kernel: discriminator_forward.10
$region0: #{discriminator_forward.10}
  #allocation0 [shape = 'u32[]', space=smem, size = 0x4, offset = 0x4, fixed_abs, tag = 'smem constant byte address 0x4 - core index']
  #allocation1 [shape = 'u32[144,128]{1,0:T(1,128)}', space=vmem, size = 0x12000, scoped, tag = 'internal scratch']
  %s0 = inlined_call_operand.vmem [shape: bf16[512,32], index: 0, kind: input, shape index: {}]
  %s1 = inlined_call_operand.vmem [shape: f32[1,32], index: 1, kind: input, shape index: {}]
  %s2 = inlined_call_operand.vmem [shape: f32[1,32], index: 2, kind: input, shape index: {}]
  %s3 = inlined_call_operand.vmem [shape: bf16[512,32], index: 3, kind: output, shape index: {}]
  %s4 = sld [smem:[#allocation0]]
  $region22: #{discriminator_forward.10} parent=0
    _
  %s6 = ssub.s32 1, %s4
  %s7 = scalar_select 0, %s6, %s4
  // Predicated region
  $region2: #{discriminator_forward.10} parent=0 // pred_check
    _
  $region3: #{discriminator_forward.10} parent=0 // pred_check_branch
    %9 = sbr.rel (0) target = $region5
  $region4: #{discriminator_forward.10} parent=0 // pred_region
    _
  $region5: #{discriminator_forward.10} parent=0 // pred_fallthru
    _
  // Predicated region
  $region6: #{discriminator_forward.10} parent=0 // pred_check
    _
  $region7: #{discriminator_forward.10} parent=0 // pred_check_branch
    %11 = sbr.rel (0) target = $region9
  $region8: #{discriminator_forward.10} parent=0 // pred_region
    _
  $region9: #{discriminator_forward.10} parent=0 // pred_fallthru
    _
  // Predicated region
  $region10: #{discriminator_forward.10} parent=0 // pred_check
    _
  $region11: #{discriminator_forward.10} parent=0 // pred_check_branch
    %13 = sbr.rel (0) target = $region13
  $region12: #{discriminator_forward.10} parent=0 // pred_region
    _
  $region13: #{discriminator_forward.10} parent=0 // pred_fallthru
    _
  %v14 = vld [vmem:[%s0] sm:$0xf]
  %v15 = vld [vmem:[%s0 + $0x4] sm:$0xf]
  %v16 = vld [vmem:[%s0 + $0x8] sm:$0xf]
  %v17 = vld [vmem:[%s0 + $0xc] sm:$0xf]
  %v18 = vld [vmem:[%s0 + $0x10] sm:$0xf]
  %v19 = vld [vmem:[%s0 + $0x14] sm:$0xf]
  %v20 = vld [vmem:[%s0 + $0x18] sm:$0xf]
  %v21 = vld [vmem:[%s0 + $0x1c] sm:$0xf]
  %v22 = vld [vmem:[%s0 + $0x20] sm:$0xf]
  %v23 = vld [vmem:[%s0 + $0x24] sm:$0xf]
  %v24 = vld [vmem:[%s0 + $0x28] sm:$0xf]
  %v25 = vld [vmem:[%s0 + $0x2c] sm:$0xf]
  %v26 = vld [vmem:[%s0 + $0x30] sm:$0xf]
  %v27 = vld [vmem:[%s0 + $0x34] sm:$0xf]
  %v28 = vld [vmem:[%s0 + $0x38] sm:$0xf]
  %v29 = vld [vmem:[%s0 + $0x3c] sm:$0xf]
  %v30 = vld [vmem:[%s0 + $0x40] sm:$0xf]
  %v31 = vld [vmem:[%s0 + $0x44] sm:$0xf]
  %v32 = vld [vmem:[%s0 + $0x48] sm:$0xf]
  %v33 = vld [vmem:[%s0 + $0x4c] sm:$0xf]
  %v34 = vld [vmem:[%s0 + $0x50] sm:$0xf]
  %v35 = vld [vmem:[%s0 + $0x54] sm:$0xf]
  %v36 = vld [vmem:[%s0 + $0x58] sm:$0xf]
  %v37 = vld [vmem:[%s0 + $0x5c] sm:$0xf]
  %v38 = vld [vmem:[%s0 + $0x60] sm:$0xf]
  %v39 = vld [vmem:[%s0 + $0x64] sm:$0xf]
  %v40 = vld [vmem:[%s0 + $0x68] sm:$0xf]
  %v41 = vld [vmem:[%s0 + $0x6c] sm:$0xf]
  %v42 = vld [vmem:[%s0 + $0x70] sm:$0xf]
  %v43 = vld [vmem:[%s0 + $0x74] sm:$0xf]
  %v44 = vld [vmem:[%s0 + $0x78] sm:$0xf]
  %v45 = vld [vmem:[%s0 + $0x7c] sm:$0xf]
  %v46 = vld [vmem:[%s0 + $0x80] sm:$0xf]
  %v47 = vld [vmem:[%s0 + $0x84] sm:$0xf]
  %v48 = vld [vmem:[%s0 + $0x88] sm:$0xf]
  %v49 = vld [vmem:[%s0 + $0x8c] sm:$0xf]
  %v50 = vld [vmem:[%s0 + $0x90] sm:$0xf]
  %v51 = vld [vmem:[%s0 + $0x94] sm:$0xf]
  %v52 = vld [vmem:[%s0 + $0x98] sm:$0xf]
  %v53 = vld [vmem:[%s0 + $0x9c] sm:$0xf]
  %v54 = vld [vmem:[%s0 + $0xa0] sm:$0xf]
  %v55 = vld [vmem:[%s0 + $0xa4] sm:$0xf]
  %v56 = vld [vmem:[%s0 + $0xa8] sm:$0xf]
  %v57 = vld [vmem:[%s0 + $0xac] sm:$0xf]
  %v58 = vld [vmem:[%s0 + $0xb0] sm:$0xf]
  %v59 = vld [vmem:[%s0 + $0xb4] sm:$0xf]
  %v60 = vld [vmem:[%s0 + $0xb8] sm:$0xf]
  %v61 = vld [vmem:[%s0 + $0xbc] sm:$0xf]
  %v62 = vld [vmem:[%s0 + $0xc0] sm:$0xf]
  %v63 = vld [vmem:[%s0 + $0xc4] sm:$0xf]
  %v64 = vld [vmem:[%s0 + $0xc8] sm:$0xf]
  %v65 = vld [vmem:[%s0 + $0xcc] sm:$0xf]
  %v66 = vld [vmem:[%s0 + $0xd0] sm:$0xf]
  %v67 = vld [vmem:[%s0 + $0xd4] sm:$0xf]
  %v68 = vld [vmem:[%s0 + $0xd8] sm:$0xf]
  %v69 = vld [vmem:[%s0 + $0xdc] sm:$0xf]
  %v70 = vld [vmem:[%s0 + $0xe0] sm:$0xf]
  %v71 = vld [vmem:[%s0 + $0xe4] sm:$0xf]
  %v72 = vld [vmem:[%s0 + $0xe8] sm:$0xf]
  %v73 = vld [vmem:[%s0 + $0xec] sm:$0xf]
  %v74 = vld [vmem:[%s0 + $0xf0] sm:$0xf]
  %v75 = vld [vmem:[%s0 + $0xf4] sm:$0xf]
  %v76 = vld [vmem:[%s0 + $0xf8] sm:$0xf]
  %v77 = vld [vmem:[%s0 + $0xfc] sm:$0xf]
  %v78 = vunpack.c.l.bf16 %v14
  %v79 = vunpack.c.l.bf16 %v15
  %v80 = vunpack.c.l.bf16 %v16
  %v81 = vunpack.c.l.bf16 %v17
  %v82 = vunpack.c.l.bf16 %v18
  %v83 = vunpack.c.l.bf16 %v19
  %v84 = vunpack.c.l.bf16 %v20
  %v85 = vunpack.c.l.bf16 %v21
  %v86 = vunpack.c.l.bf16 %v22
  %v87 = vunpack.c.l.bf16 %v23
  %v88 = vunpack.c.l.bf16 %v24
  %v89 = vunpack.c.l.bf16 %v25
  %v90 = vunpack.c.l.bf16 %v26
  %v91 = vunpack.c.l.bf16 %v27
  %v92 = vunpack.c.l.bf16 %v28
  %v93 = vunpack.c.l.bf16 %v29
  %v94 = vunpack.c.l.bf16 %v30
  %v95 = vunpack.c.l.bf16 %v31
  %v96 = vunpack.c.l.bf16 %v32
  %v97 = vunpack.c.l.bf16 %v33
  %v98 = vunpack.c.l.bf16 %v34
  %v99 = vunpack.c.l.bf16 %v35
  %v100 = vunpack.c.l.bf16 %v36
  %v101 = vunpack.c.l.bf16 %v37
  %v102 = vunpack.c.l.bf16 %v38
  %v103 = vunpack.c.l.bf16 %v39
  %v104 = vunpack.c.l.bf16 %v40
  %v105 = vunpack.c.l.bf16 %v41
  %v106 = vunpack.c.l.bf16 %v42
  %v107 = vunpack.c.l.bf16 %v43
  %v108 = vunpack.c.l.bf16 %v44
  %v109 = vunpack.c.l.bf16 %v45
  %v110 = vunpack.c.l.bf16 %v46
  %v111 = vunpack.c.l.bf16 %v47
  %v112 = vunpack.c.l.bf16 %v48
  %v113 = vunpack.c.l.bf16 %v49
  %v114 = vunpack.c.l.bf16 %v50
  %v115 = vunpack.c.l.bf16 %v51
  %v116 = vunpack.c.l.bf16 %v52
  %v117 = vunpack.c.l.bf16 %v53
  %v118 = vunpack.c.l.bf16 %v54
  %v119 = vunpack.c.l.bf16 %v55
  %v120 = vunpack.c.l.bf16 %v56
  %v121 = vunpack.c.l.bf16 %v57
  %v122 = vunpack.c.l.bf16 %v58
  %v123 = vunpack.c.l.bf16 %v59
  %v124 = vunpack.c.l.bf16 %v60
  %v125 = vunpack.c.l.bf16 %v61
  %v126 = vunpack.c.l.bf16 %v62
  %v127 = vunpack.c.l.bf16 %v63
  %v128 = vunpack.c.l.bf16 %v64
  %v129 = vunpack.c.l.bf16 %v65
  %v130 = vunpack.c.l.bf16 %v66
  %v131 = vunpack.c.l.bf16 %v67
  %v132 = vunpack.c.l.bf16 %v68
  %v133 = vunpack.c.l.bf16 %v69
  %v134 = vunpack.c.l.bf16 %v70
  %v135 = vunpack.c.l.bf16 %v71
  %v136 = vunpack.c.l.bf16 %v72
  %v137 = vunpack.c.l.bf16 %v73
  %v138 = vunpack.c.l.bf16 %v74
  %v139 = vunpack.c.l.bf16 %v75
  %v140 = vunpack.c.l.bf16 %v76
  %v141 = vunpack.c.l.bf16 %v77
  %v142 = vld [vmem:[%s1] sm:$0x1]
  %v144 = vlaneseq
  %v145 = vshrl.u32 %v144, 7
  %v146 = vsub.s32 0, %v145
  %v147 = vrot.slane %v142, %v146
  %v149 = vmul.f32 %v78, %v147
  %v150 = vmul.f32 %v79, %v147
  %v151 = vmul.f32 %v80, %v147
  %v152 = vmul.f32 %v81, %v147
  %v153 = vmul.f32 %v82, %v147
  %v154 = vmul.f32 %v83, %v147
  %v155 = vmul.f32 %v84, %v147
  %v156 = vmul.f32 %v85, %v147
  %v157 = vmul.f32 %v86, %v147
  %v158 = vmul.f32 %v87, %v147
  %v159 = vmul.f32 %v88, %v147
  %v160 = vmul.f32 %v89, %v147
  %v161 = vmul.f32 %v90, %v147
  %v162 = vmul.f32 %v91, %v147
  %v163 = vmul.f32 %v92, %v147
  %v164 = vmul.f32 %v93, %v147
  %v165 = vmul.f32 %v94, %v147
  %v166 = vmul.f32 %v95, %v147
  %v167 = vmul.f32 %v96, %v147
  %v168 = vmul.f32 %v97, %v147
  %v169 = vmul.f32 %v98, %v147
  %v170 = vmul.f32 %v99, %v147
  %v171 = vmul.f32 %v100, %v147
  %v172 = vmul.f32 %v101, %v147
  %v173 = vmul.f32 %v102, %v147
  %v174 = vmul.f32 %v103, %v147
  %v175 = vmul.f32 %v104, %v147
  %v176 = vmul.f32 %v105, %v147
  %v177 = vmul.f32 %v106, %v147
  %v178 = vmul.f32 %v107, %v147
  %v179 = vmul.f32 %v108, %v147
  %v180 = vmul.f32 %v109, %v147
  %v181 = vmul.f32 %v110, %v147
  %v182 = vmul.f32 %v111, %v147
  %v183 = vmul.f32 %v112, %v147
  %v184 = vmul.f32 %v113, %v147
  %v185 = vmul.f32 %v114, %v147
  %v186 = vmul.f32 %v115, %v147
  %v187 = vmul.f32 %v116, %v147
  %v188 = vmul.f32 %v117, %v147
  %v189 = vmul.f32 %v118, %v147
  %v190 = vmul.f32 %v119, %v147
  %v191 = vmul.f32 %v120, %v147
  %v192 = vmul.f32 %v121, %v147
  %v193 = vmul.f32 %v122, %v147
  %v194 = vmul.f32 %v123, %v147
  %v195 = vmul.f32 %v124, %v147
  %v196 = vmul.f32 %v125, %v147
  %v197 = vmul.f32 %v126, %v147
  %v198 = vmul.f32 %v127, %v147
  %v199 = vmul.f32 %v128, %v147
  %v200 = vmul.f32 %v129, %v147
  %v201 = vmul.f32 %v130, %v147
  %v202 = vmul.f32 %v131, %v147
  %v203 = vmul.f32 %v132, %v147
  %v204 = vmul.f32 %v133, %v147
  %v205 = vmul.f32 %v134, %v147
  %v206 = vmul.f32 %v135, %v147
  %v207 = vmul.f32 %v136, %v147
  %v208 = vmul.f32 %v137, %v147
  %v209 = vmul.f32 %v138, %v147
  %v210 = vmul.f32 %v139, %v147
  %v211 = vmul.f32 %v140, %v147
  %v212 = vmul.f32 %v141, %v147
  %v213 = vld [vmem:[%s2] sm:$0x1]
  %v215 = vlaneseq
  %v216 = vshrl.u32 %v215, 7
  %v217 = vsub.s32 0, %v216
  %v218 = vrot.slane %v213, %v217
  %v220 = vadd.f32 %v149, %v218
  %v221 = vadd.f32 %v150, %v218
  %v222 = vadd.f32 %v151, %v218
  %v223 = vadd.f32 %v152, %v218
  %v224 = vadd.f32 %v153, %v218
  %v225 = vadd.f32 %v154, %v218
  %v226 = vadd.f32 %v155, %v218
  %v227 = vadd.f32 %v156, %v218
  %v228 = vadd.f32 %v157, %v218
  %v229 = vadd.f32 %v158, %v218
  %v230 = vadd.f32 %v159, %v218
  %v231 = vadd.f32 %v160, %v218
  %v232 = vadd.f32 %v161, %v218
  %v233 = vadd.f32 %v162, %v218
  %v234 = vadd.f32 %v163, %v218
  %v235 = vadd.f32 %v164, %v218
  %v236 = vadd.f32 %v165, %v218
  %v237 = vadd.f32 %v166, %v218
  %v238 = vadd.f32 %v167, %v218
  %v239 = vadd.f32 %v168, %v218
  %v240 = vadd.f32 %v169, %v218
  %v241 = vadd.f32 %v170, %v218
  %v242 = vadd.f32 %v171, %v218
  %v243 = vadd.f32 %v172, %v218
  %v244 = vadd.f32 %v173, %v218
  %v245 = vadd.f32 %v174, %v218
  %v246 = vadd.f32 %v175, %v218
  %v247 = vadd.f32 %v176, %v218
  %v248 = vadd.f32 %v177, %v218
  %v249 = vadd.f32 %v178, %v218
  %v250 = vadd.f32 %v179, %v218
  %v251 = vadd.f32 %v180, %v218
  %v252 = vadd.f32 %v181, %v218
  %v253 = vadd.f32 %v182, %v218
  %v254 = vadd.f32 %v183, %v218
  %v255 = vadd.f32 %v184, %v218
  %v256 = vadd.f32 %v185, %v218
  %v257 = vadd.f32 %v186, %v218
  %v258 = vadd.f32 %v187, %v218
  %v259 = vadd.f32 %v188, %v218
  %v260 = vadd.f32 %v189, %v218
  %v261 = vadd.f32 %v190, %v218
  %v262 = vadd.f32 %v191, %v218
  %v263 = vadd.f32 %v192, %v218
  %v264 = vadd.f32 %v193, %v218
  %v265 = vadd.f32 %v194, %v218
  %v266 = vadd.f32 %v195, %v218
  %v267 = vadd.f32 %v196, %v218
  %v268 = vadd.f32 %v197, %v218
  %v269 = vadd.f32 %v198, %v218
  %v270 = vadd.f32 %v199, %v218
  %v271 = vadd.f32 %v200, %v218
  %v272 = vadd.f32 %v201, %v218
  %v273 = vadd.f32 %v202, %v218
  %v274 = vadd.f32 %v203, %v218
  %v275 = vadd.f32 %v204, %v218
  %v276 = vadd.f32 %v205, %v218
  %v277 = vadd.f32 %v206, %v218
  %v278 = vadd.f32 %v207, %v218
  %v279 = vadd.f32 %v208, %v218
  %v280 = vadd.f32 %v209, %v218
  %v281 = vadd.f32 %v210, %v218
  %v282 = vadd.f32 %v211, %v218
  %v283 = vadd.f32 %v212, %v218
  %vm284 = vcmp.ge.f32.partialorder %v220, 0.0
  %vm285 = vcmp.ge.f32.partialorder %v221, 0.0
  %vm286 = vcmp.ge.f32.partialorder %v222, 0.0
  %vm287 = vcmp.ge.f32.partialorder %v223, 0.0
  %vm288 = vcmp.ge.f32.partialorder %v224, 0.0
  %vm289 = vcmp.ge.f32.partialorder %v225, 0.0
  %vm290 = vcmp.ge.f32.partialorder %v226, 0.0
  %vm291 = vcmp.ge.f32.partialorder %v227, 0.0
  %vm292 = vcmp.ge.f32.partialorder %v228, 0.0
  %vm293 = vcmp.ge.f32.partialorder %v229, 0.0
  %vm294 = vcmp.ge.f32.partialorder %v230, 0.0
  %vm295 = vcmp.ge.f32.partialorder %v231, 0.0
  %vm296 = vcmp.ge.f32.partialorder %v232, 0.0
  %vm297 = vcmp.ge.f32.partialorder %v233, 0.0
  %vm298 = vcmp.ge.f32.partialorder %v234, 0.0
  %vm299 = vcmp.ge.f32.partialorder %v235, 0.0
  %vm300 = vcmp.ge.f32.partialorder %v236, 0.0
  %vm301 = vcmp.ge.f32.partialorder %v237, 0.0
  %vm302 = vcmp.ge.f32.partialorder %v238, 0.0
  %vm303 = vcmp.ge.f32.partialorder %v239, 0.0
  %vm304 = vcmp.ge.f32.partialorder %v240, 0.0
  %vm305 = vcmp.ge.f32.partialorder %v241, 0.0
  %vm306 = vcmp.ge.f32.partialorder %v242, 0.0
  %vm307 = vcmp.ge.f32.partialorder %v243, 0.0
  %vm308 = vcmp.ge.f32.partialorder %v244, 0.0
  %vm309 = vcmp.ge.f32.partialorder %v245, 0.0
  %vm310 = vcmp.ge.f32.partialorder %v246, 0.0
  %vm311 = vcmp.ge.f32.partialorder %v247, 0.0
  %vm312 = vcmp.ge.f32.partialorder %v248, 0.0
  %vm313 = vcmp.ge.f32.partialorder %v249, 0.0
  %vm314 = vcmp.ge.f32.partialorder %v250, 0.0
  %vm315 = vcmp.ge.f32.partialorder %v251, 0.0
  %vm316 = vcmp.ge.f32.partialorder %v252, 0.0
  %vm317 = vcmp.ge.f32.partialorder %v253, 0.0
  %vm318 = vcmp.ge.f32.partialorder %v254, 0.0
  %vm319 = vcmp.ge.f32.partialorder %v255, 0.0
  %vm320 = vcmp.ge.f32.partialorder %v256, 0.0
  %vm321 = vcmp.ge.f32.partialorder %v257, 0.0
  %vm322 = vcmp.ge.f32.partialorder %v258, 0.0
  %vm323 = vcmp.ge.f32.partialorder %v259, 0.0
  %vm324 = vcmp.ge.f32.partialorder %v260, 0.0
  %vm325 = vcmp.ge.f32.partialorder %v261, 0.0
  %vm326 = vcmp.ge.f32.partialorder %v262, 0.0
  %vm327 = vcmp.ge.f32.partialorder %v263, 0.0
  %vm328 = vcmp.ge.f32.partialorder %v264, 0.0
  %vm329 = vcmp.ge.f32.partialorder %v265, 0.0
  %vm330 = vcmp.ge.f32.partialorder %v266, 0.0
  %vm331 = vcmp.ge.f32.partialorder %v267, 0.0
  %vm332 = vcmp.ge.f32.partialorder %v268, 0.0
  %vm333 = vcmp.ge.f32.partialorder %v269, 0.0
  %vm334 = vcmp.ge.f32.partialorder %v270, 0.0
  %vm335 = vcmp.ge.f32.partialorder %v271, 0.0
  %vm336 = vcmp.ge.f32.partialorder %v272, 0.0
  %vm337 = vcmp.ge.f32.partialorder %v273, 0.0
  %vm338 = vcmp.ge.f32.partialorder %v274, 0.0
  %vm339 = vcmp.ge.f32.partialorder %v275, 0.0
  %vm340 = vcmp.ge.f32.partialorder %v276, 0.0
  %vm341 = vcmp.ge.f32.partialorder %v277, 0.0
  %vm342 = vcmp.ge.f32.partialorder %v278, 0.0
  %vm343 = vcmp.ge.f32.partialorder %v279, 0.0
  %vm344 = vcmp.ge.f32.partialorder %v280, 0.0
  %vm345 = vcmp.ge.f32.partialorder %v281, 0.0
  %vm346 = vcmp.ge.f32.partialorder %v282, 0.0
  %vm347 = vcmp.ge.f32.partialorder %v283, 0.0
  %v348 = vmul.f32 %v220, 0.2
  %v349 = vmul.f32 %v221, 0.2
  %v350 = vmul.f32 %v222, 0.2
  %v351 = vmul.f32 %v223, 0.2
  %v352 = vmul.f32 %v224, 0.2
  %v353 = vmul.f32 %v225, 0.2
  %v354 = vmul.f32 %v226, 0.2
  %v355 = vmul.f32 %v227, 0.2
  %v356 = vmul.f32 %v228, 0.2
  %v357 = vmul.f32 %v229, 0.2
  %v358 = vmul.f32 %v230, 0.2
  %v359 = vmul.f32 %v231, 0.2
  %v360 = vmul.f32 %v232, 0.2
  %v361 = vmul.f32 %v233, 0.2
  %v362 = vmul.f32 %v234, 0.2
  %v363 = vmul.f32 %v235, 0.2
  %v364 = vmul.f32 %v236, 0.2
  %v365 = vmul.f32 %v237, 0.2
  %v366 = vmul.f32 %v238, 0.2
  %v367 = vmul.f32 %v239, 0.2
  %v368 = vmul.f32 %v240, 0.2
  %v369 = vmul.f32 %v241, 0.2
  %v370 = vmul.f32 %v242, 0.2
  %v371 = vmul.f32 %v243, 0.2
  %v372 = vmul.f32 %v244, 0.2
  %v373 = vmul.f32 %v245, 0.2
  %v374 = vmul.f32 %v246, 0.2
  %v375 = vmul.f32 %v247, 0.2
  %v376 = vmul.f32 %v248, 0.2
  %v377 = vmul.f32 %v249, 0.2
  %v378 = vmul.f32 %v250, 0.2
  %v379 = vmul.f32 %v251, 0.2
  %v380 = vmul.f32 %v252, 0.2
  %v381 = vmul.f32 %v253, 0.2
  %v382 = vmul.f32 %v254, 0.2
  %v383 = vmul.f32 %v255, 0.2
  %v384 = vmul.f32 %v256, 0.2
  %v385 = vmul.f32 %v257, 0.2
  %v386 = vmul.f32 %v258, 0.2
  %v387 = vmul.f32 %v259, 0.2
  %v388 = vmul.f32 %v260, 0.2
  %v389 = vmul.f32 %v261, 0.2
  %v390 = vmul.f32 %v262, 0.2
  %v391 = vmul.f32 %v263, 0.2
  %v392 = vmul.f32 %v264, 0.2
  %v393 = vmul.f32 %v265, 0.2
  %v394 = vmul.f32 %v266, 0.2
  %v395 = vmul.f32 %v267, 0.2
  %v396 = vmul.f32 %v268, 0.2
  %v397 = vmul.f32 %v269, 0.2
  %v398 = vmul.f32 %v270, 0.2
  %v399 = vmul.f32 %v271, 0.2
  %v400 = vmul.f32 %v272, 0.2
  %v401 = vmul.f32 %v273, 0.2
  %v402 = vmul.f32 %v274, 0.2
  %v403 = vmul.f32 %v275, 0.2
  %v404 = vmul.f32 %v276, 0.2
  %v405 = vmul.f32 %v277, 0.2
  %v406 = vmul.f32 %v278, 0.2
  %v407 = vmul.f32 %v279, 0.2
  %v408 = vmul.f32 %v280, 0.2
  %v409 = vmul.f32 %v281, 0.2
  %v410 = vmul.f32 %v282, 0.2
  %v411 = vmul.f32 %v283, 0.2
  %v412 = vsel %vm284, %v220, %v348
  %v413 = vsel %vm285, %v221, %v349
  %v414 = vsel %vm286, %v222, %v350
  %v415 = vsel %vm287, %v223, %v351
  %v416 = vsel %vm288, %v224, %v352
  %v417 = vsel %vm289, %v225, %v353
  %v418 = vsel %vm290, %v226, %v354
  %v419 = vsel %vm291, %v227, %v355
  %v420 = vsel %vm292, %v228, %v356
  %v421 = vsel %vm293, %v229, %v357
  %v422 = vsel %vm294, %v230, %v358
  %v423 = vsel %vm295, %v231, %v359
  %v424 = vsel %vm296, %v232, %v360
  %v425 = vsel %vm297, %v233, %v361
  %v426 = vsel %vm298, %v234, %v362
  %v427 = vsel %vm299, %v235, %v363
  %v428 = vsel %vm300, %v236, %v364
  %v429 = vsel %vm301, %v237, %v365
  %v430 = vsel %vm302, %v238, %v366
  %v431 = vsel %vm303, %v239, %v367
  %v432 = vsel %vm304, %v240, %v368
  %v433 = vsel %vm305, %v241, %v369
  %v434 = vsel %vm306, %v242, %v370
  %v435 = vsel %vm307, %v243, %v371
  %v436 = vsel %vm308, %v244, %v372
  %v437 = vsel %vm309, %v245, %v373
  %v438 = vsel %vm310, %v246, %v374
  %v439 = vsel %vm311, %v247, %v375
  %v440 = vsel %vm312, %v248, %v376
  %v441 = vsel %vm313, %v249, %v377
  %v442 = vsel %vm314, %v250, %v378
  %v443 = vsel %vm315, %v251, %v379
  %v444 = vsel %vm316, %v252, %v380
  %v445 = vsel %vm317, %v253, %v381
  %v446 = vsel %vm318, %v254, %v382
  %v447 = vsel %vm319, %v255, %v383
  %v448 = vsel %vm320, %v256, %v384
  %v449 = vsel %vm321, %v257, %v385
  %v450 = vsel %vm322, %v258, %v386
  %v451 = vsel %vm323, %v259, %v387
  %v452 = vsel %vm324, %v260, %v388
  %v453 = vsel %vm325, %v261, %v389
  %v454 = vsel %vm326, %v262, %v390
  %v455 = vsel %vm327, %v263, %v391
  %v456 = vsel %vm328, %v264, %v392
  %v457 = vsel %vm329, %v265, %v393
  %v458 = vsel %vm330, %v266, %v394
  %v459 = vsel %vm331, %v267, %v395
  %v460 = vsel %vm332, %v268, %v396
  %v461 = vsel %vm333, %v269, %v397
  %v462 = vsel %vm334, %v270, %v398
  %v463 = vsel %vm335, %v271, %v399
  %v464 = vsel %vm336, %v272, %v400
  %v465 = vsel %vm337, %v273, %v401
  %v466 = vsel %vm338, %v274, %v402
  %v467 = vsel %vm339, %v275, %v403
  %v468 = vsel %vm340, %v276, %v404
  %v469 = vsel %vm341, %v277, %v405
  %v470 = vsel %vm342, %v278, %v406
  %v471 = vsel %vm343, %v279, %v407
  %v472 = vsel %vm344, %v280, %v408
  %v473 = vsel %vm345, %v281, %v409
  %v474 = vsel %vm346, %v282, %v410
  %v475 = vsel %vm347, %v283, %v411
  %v476 = vpack.c.bf16 %v413, %v412
  %v477 = vpack.c.bf16 %v415, %v414
  %v478 = vpack.c.bf16 %v417, %v416
  %v479 = vpack.c.bf16 %v419, %v418
  %v480 = vpack.c.bf16 %v421, %v420
  %v481 = vpack.c.bf16 %v423, %v422
  %v482 = vpack.c.bf16 %v425, %v424
  %v483 = vpack.c.bf16 %v427, %v426
  %v484 = vpack.c.bf16 %v429, %v428
  %v485 = vpack.c.bf16 %v431, %v430
  %v486 = vpack.c.bf16 %v433, %v432
  %v487 = vpack.c.bf16 %v435, %v434
  %v488 = vpack.c.bf16 %v437, %v436
  %v489 = vpack.c.bf16 %v439, %v438
  %v490 = vpack.c.bf16 %v441, %v440
  %v491 = vpack.c.bf16 %v443, %v442
  %v492 = vpack.c.bf16 %v445, %v444
  %v493 = vpack.c.bf16 %v447, %v446
  %v494 = vpack.c.bf16 %v449, %v448
  %v495 = vpack.c.bf16 %v451, %v450
  %v496 = vpack.c.bf16 %v453, %v452
  %v497 = vpack.c.bf16 %v455, %v454
  %v498 = vpack.c.bf16 %v457, %v456
  %v499 = vpack.c.bf16 %v459, %v458
  %v500 = vpack.c.bf16 %v461, %v460
  %v501 = vpack.c.bf16 %v463, %v462
  %v502 = vpack.c.bf16 %v465, %v464
  %v503 = vpack.c.bf16 %v467, %v466
  %v504 = vpack.c.bf16 %v469, %v468
  %v505 = vpack.c.bf16 %v471, %v470
  %v506 = vpack.c.bf16 %v473, %v472
  %v507 = vpack.c.bf16 %v475, %v474
  %v540 = vunpack.c.l.b16 %v476
  %v541 = vunpack.c.h.b16 %v476
  %v542 = vunpack.c.l.b16 %v477
  %v543 = vunpack.c.h.b16 %v477
  %v544 = vunpack.c.l.b16 %v478
  %v545 = vunpack.c.h.b16 %v478
  %v546 = vunpack.c.l.b16 %v479
  %v547 = vunpack.c.h.b16 %v479
  %v548 = vunpack.c.l.b16 %v480
  %v549 = vunpack.c.h.b16 %v480
  %v550 = vunpack.c.l.b16 %v481
  %v551 = vunpack.c.h.b16 %v481
  %v552 = vunpack.c.l.b16 %v482
  %v553 = vunpack.c.h.b16 %v482
  %v554 = vunpack.c.l.b16 %v483
  %v555 = vunpack.c.h.b16 %v483
  %v556 = vunpack.c.l.b16 %v484
  %v557 = vunpack.c.h.b16 %v484
  %v558 = vunpack.c.l.b16 %v485
  %v559 = vunpack.c.h.b16 %v485
  %v560 = vunpack.c.l.b16 %v486
  %v561 = vunpack.c.h.b16 %v486
  %v562 = vunpack.c.l.b16 %v487
  %v563 = vunpack.c.h.b16 %v487
  %v564 = vunpack.c.l.b16 %v488
  %v565 = vunpack.c.h.b16 %v488
  %v566 = vunpack.c.l.b16 %v489
  %v567 = vunpack.c.h.b16 %v489
  %v568 = vunpack.c.l.b16 %v490
  %v569 = vunpack.c.h.b16 %v490
  %v570 = vunpack.c.l.b16 %v491
  %v571 = vunpack.c.h.b16 %v491
  %v572 = vunpack.c.l.b16 %v492
  %v573 = vunpack.c.h.b16 %v492
  %v574 = vunpack.c.l.b16 %v493
  %v575 = vunpack.c.h.b16 %v493
  %v576 = vunpack.c.l.b16 %v494
  %v577 = vunpack.c.h.b16 %v494
  %v578 = vunpack.c.l.b16 %v495
  %v579 = vunpack.c.h.b16 %v495
  %v580 = vunpack.c.l.b16 %v496
  %v581 = vunpack.c.h.b16 %v496
  %v582 = vunpack.c.l.b16 %v497
  %v583 = vunpack.c.h.b16 %v497
  %v584 = vunpack.c.l.b16 %v498
  %v585 = vunpack.c.h.b16 %v498
  %v586 = vunpack.c.l.b16 %v499
  %v587 = vunpack.c.h.b16 %v499
  %v588 = vunpack.c.l.b16 %v500
  %v589 = vunpack.c.h.b16 %v500
  %v590 = vunpack.c.l.b16 %v501
  %v591 = vunpack.c.h.b16 %v501
  %v592 = vunpack.c.l.b16 %v502
  %v593 = vunpack.c.h.b16 %v502
  %v594 = vunpack.c.l.b16 %v503
  %v595 = vunpack.c.h.b16 %v503
  %v596 = vunpack.c.l.b16 %v504
  %v597 = vunpack.c.h.b16 %v504
  %v598 = vunpack.c.l.b16 %v505
  %v599 = vunpack.c.h.b16 %v505
  %v600 = vunpack.c.l.b16 %v506
  %v601 = vunpack.c.h.b16 %v506
  %v602 = vunpack.c.l.b16 %v507
  %v603 = vunpack.c.h.b16 %v507
  %v604 = vpack.c.b16 %v540, %v540
  %v605 = vpack.c.b16 %v541, %v541
  %v606 = vpack.c.b16 %v542, %v542
  %v607 = vpack.c.b16 %v543, %v543
  %v608 = vpack.c.b16 %v544, %v544
  %v609 = vpack.c.b16 %v545, %v545
  %v610 = vpack.c.b16 %v546, %v546
  %v611 = vpack.c.b16 %v547, %v547
  %v612 = vpack.c.b16 %v548, %v548
  %v613 = vpack.c.b16 %v549, %v549
  %v614 = vpack.c.b16 %v550, %v550
  %v615 = vpack.c.b16 %v551, %v551
  %v616 = vpack.c.b16 %v552, %v552
  %v617 = vpack.c.b16 %v553, %v553
  %v618 = vpack.c.b16 %v554, %v554
  %v619 = vpack.c.b16 %v555, %v555
  %v620 = vpack.c.b16 %v556, %v556
  %v621 = vpack.c.b16 %v557, %v557
  %v622 = vpack.c.b16 %v558, %v558
  %v623 = vpack.c.b16 %v559, %v559
  %v624 = vpack.c.b16 %v560, %v560
  %v625 = vpack.c.b16 %v561, %v561
  %v626 = vpack.c.b16 %v562, %v562
  %v627 = vpack.c.b16 %v563, %v563
  %v628 = vpack.c.b16 %v564, %v564
  %v629 = vpack.c.b16 %v565, %v565
  %v630 = vpack.c.b16 %v566, %v566
  %v631 = vpack.c.b16 %v567, %v567
  %v632 = vpack.c.b16 %v568, %v568
  %v633 = vpack.c.b16 %v569, %v569
  %v634 = vpack.c.b16 %v570, %v570
  %v635 = vpack.c.b16 %v571, %v571
  %v636 = vpack.c.b16 %v572, %v572
  %v637 = vpack.c.b16 %v573, %v573
  %v638 = vpack.c.b16 %v574, %v574
  %v639 = vpack.c.b16 %v575, %v575
  %v640 = vpack.c.b16 %v576, %v576
  %v641 = vpack.c.b16 %v577, %v577
  %v642 = vpack.c.b16 %v578, %v578
  %v643 = vpack.c.b16 %v579, %v579
  %v644 = vpack.c.b16 %v580, %v580
  %v645 = vpack.c.b16 %v581, %v581
  %v646 = vpack.c.b16 %v582, %v582
  %v647 = vpack.c.b16 %v583, %v583
  %v648 = vpack.c.b16 %v584, %v584
  %v649 = vpack.c.b16 %v585, %v585
  %v650 = vpack.c.b16 %v586, %v586
  %v651 = vpack.c.b16 %v587, %v587
  %v652 = vpack.c.b16 %v588, %v588
  %v653 = vpack.c.b16 %v589, %v589
  %v654 = vpack.c.b16 %v590, %v590
  %v655 = vpack.c.b16 %v591, %v591
  %v656 = vpack.c.b16 %v592, %v592
  %v657 = vpack.c.b16 %v593, %v593
  %v658 = vpack.c.b16 %v594, %v594
  %v659 = vpack.c.b16 %v595, %v595
  %v660 = vpack.c.b16 %v596, %v596
  %v661 = vpack.c.b16 %v597, %v597
  %v662 = vpack.c.b16 %v598, %v598
  %v663 = vpack.c.b16 %v599, %v599
  %v664 = vpack.c.b16 %v600, %v600
  %v665 = vpack.c.b16 %v601, %v601
  %v666 = vpack.c.b16 %v602, %v602
  %v667 = vpack.c.b16 %v603, %v603
  %vm732 = vcmask 257024
  %733 = vst.msk [vmem:[%s3] sm:$0xf] %vm732, %v604
  %734 = vst.msk [vmem:[%s3 + $0x4] sm:$0xf] %vm732, %v605
  %735 = vst.msk [vmem:[%s3 + $0x8] sm:$0xf] %vm732, %v606
  %736 = vst.msk [vmem:[%s3 + $0xc] sm:$0xf] %vm732, %v607
  %737 = vst.msk [vmem:[%s3 + $0x10] sm:$0xf] %vm732, %v608
  %738 = vst.msk [vmem:[%s3 + $0x14] sm:$0xf] %vm732, %v609
  %739 = vst.msk [vmem:[%s3 + $0x18] sm:$0xf] %vm732, %v610
  %740 = vst.msk [vmem:[%s3 + $0x1c] sm:$0xf] %vm732, %v611
  %741 = vst.msk [vmem:[%s3 + $0x20] sm:$0xf] %vm732, %v612
  %742 = vst.msk [vmem:[%s3 + $0x24] sm:$0xf] %vm732, %v613
  %743 = vst.msk [vmem:[%s3 + $0x28] sm:$0xf] %vm732, %v614
  %744 = vst.msk [vmem:[%s3 + $0x2c] sm:$0xf] %vm732, %v615
  %745 = vst.msk [vmem:[%s3 + $0x30] sm:$0xf] %vm732, %v616
  %746 = vst.msk [vmem:[%s3 + $0x34] sm:$0xf] %vm732, %v617
  %747 = vst.msk [vmem:[%s3 + $0x38] sm:$0xf] %vm732, %v618
  %748 = vst.msk [vmem:[%s3 + $0x3c] sm:$0xf] %vm732, %v619
  %749 = vst.msk [vmem:[%s3 + $0x40] sm:$0xf] %vm732, %v620
  %750 = vst.msk [vmem:[%s3 + $0x44] sm:$0xf] %vm732, %v621
  %751 = vst.msk [vmem:[%s3 + $0x48] sm:$0xf] %vm732, %v622
  %752 = vst.msk [vmem:[%s3 + $0x4c] sm:$0xf] %vm732, %v623
  %753 = vst.msk [vmem:[%s3 + $0x50] sm:$0xf] %vm732, %v624
  %754 = vst.msk [vmem:[%s3 + $0x54] sm:$0xf] %vm732, %v625
  %755 = vst.msk [vmem:[%s3 + $0x58] sm:$0xf] %vm732, %v626
  %756 = vst.msk [vmem:[%s3 + $0x5c] sm:$0xf] %vm732, %v627
  %757 = vst.msk [vmem:[%s3 + $0x60] sm:$0xf] %vm732, %v628
  %758 = vst.msk [vmem:[%s3 + $0x64] sm:$0xf] %vm732, %v629
  %759 = vst.msk [vmem:[%s3 + $0x68] sm:$0xf] %vm732, %v630
  %760 = vst.msk [vmem:[%s3 + $0x6c] sm:$0xf] %vm732, %v631
  %761 = vst.msk [vmem:[%s3 + $0x70] sm:$0xf] %vm732, %v632
  %762 = vst.msk [vmem:[%s3 + $0x74] sm:$0xf] %vm732, %v633
  %763 = vst.msk [vmem:[%s3 + $0x78] sm:$0xf] %vm732, %v634
  %764 = vst.msk [vmem:[%s3 + $0x7c] sm:$0xf] %vm732, %v635
  %765 = vst.msk [vmem:[%s3 + $0x80] sm:$0xf] %vm732, %v636
  %766 = vst.msk [vmem:[%s3 + $0x84] sm:$0xf] %vm732, %v637
  %767 = vst.msk [vmem:[%s3 + $0x88] sm:$0xf] %vm732, %v638
  %768 = vst.msk [vmem:[%s3 + $0x8c] sm:$0xf] %vm732, %v639
  %769 = vst.msk [vmem:[%s3 + $0x90] sm:$0xf] %vm732, %v640
  %770 = vst.msk [vmem:[%s3 + $0x94] sm:$0xf] %vm732, %v641
  %771 = vst.msk [vmem:[%s3 + $0x98] sm:$0xf] %vm732, %v642
  %772 = vst.msk [vmem:[%s3 + $0x9c] sm:$0xf] %vm732, %v643
  %773 = vst.msk [vmem:[%s3 + $0xa0] sm:$0xf] %vm732, %v644
  %774 = vst.msk [vmem:[%s3 + $0xa4] sm:$0xf] %vm732, %v645
  %775 = vst.msk [vmem:[%s3 + $0xa8] sm:$0xf] %vm732, %v646
  %776 = vst.msk [vmem:[%s3 + $0xac] sm:$0xf] %vm732, %v647
  %777 = vst.msk [vmem:[%s3 + $0xb0] sm:$0xf] %vm732, %v648
  %778 = vst.msk [vmem:[%s3 + $0xb4] sm:$0xf] %vm732, %v649
  %779 = vst.msk [vmem:[%s3 + $0xb8] sm:$0xf] %vm732, %v650
  %780 = vst.msk [vmem:[%s3 + $0xbc] sm:$0xf] %vm732, %v651
  %781 = vst.msk [vmem:[%s3 + $0xc0] sm:$0xf] %vm732, %v652
  %782 = vst.msk [vmem:[%s3 + $0xc4] sm:$0xf] %vm732, %v653
  %783 = vst.msk [vmem:[%s3 + $0xc8] sm:$0xf] %vm732, %v654
  %784 = vst.msk [vmem:[%s3 + $0xcc] sm:$0xf] %vm732, %v655
  %785 = vst.msk [vmem:[%s3 + $0xd0] sm:$0xf] %vm732, %v656
  %786 = vst.msk [vmem:[%s3 + $0xd4] sm:$0xf] %vm732, %v657
  %787 = vst.msk [vmem:[%s3 + $0xd8] sm:$0xf] %vm732, %v658
  %788 = vst.msk [vmem:[%s3 + $0xdc] sm:$0xf] %vm732, %v659
  %789 = vst.msk [vmem:[%s3 + $0xe0] sm:$0xf] %vm732, %v660
  %790 = vst.msk [vmem:[%s3 + $0xe4] sm:$0xf] %vm732, %v661
  %791 = vst.msk [vmem:[%s3 + $0xe8] sm:$0xf] %vm732, %v662
  %792 = vst.msk [vmem:[%s3 + $0xec] sm:$0xf] %vm732, %v663
  %793 = vst.msk [vmem:[%s3 + $0xf0] sm:$0xf] %vm732, %v664
  %794 = vst.msk [vmem:[%s3 + $0xf4] sm:$0xf] %vm732, %v665
  %795 = vst.msk [vmem:[%s3 + $0xf8] sm:$0xf] %vm732, %v666
  %796 = vst.msk [vmem:[%s3 + $0xfc] sm:$0xf] %vm732, %v667
  // Predicated region
  $region14: #{discriminator_forward.10} parent=0 // pred_check
    _
  $region15: #{discriminator_forward.10} parent=0 // pred_check_branch
    %798 = sbr.rel (0) target = $region17
  $region16: #{discriminator_forward.10} parent=0 // pred_region
    _
  $region17: #{discriminator_forward.10} parent=0 // pred_fallthru
    _
  // Predicated region
  $region18: #{discriminator_forward.10} parent=0 // pred_check
    _
  $region19: #{discriminator_forward.10} parent=0 // pred_check_branch
    %800 = sbr.rel (0) target = $region21
  $region20: #{discriminator_forward.10} parent=0 // pred_region
    _
  $region21: #{discriminator_forward.10} parent=0 // pred_fallthru
    _

// kernel: discriminator_forward.11
$region0: #{discriminator_forward.11}
  #allocation0 [shape = 'u32[]', space=smem, size = 0x4, offset = 0x4, fixed_abs, tag = 'smem constant byte address 0x4 - core index']
  #allocation1 [shape = 'u32[144,128]{1,0:T(1,128)}', space=vmem, size = 0x12000, scoped, tag = 'internal scratch']
  #allocation2 [shape = 'f32[128,64]{1,0:T(8,128)}', space=vmem, size = 0x10000, scoped, tag = 'scratch operand']
  %s0 = inlined_call_operand.vmem [shape: bf16[128,512], index: 0, kind: input, shape index: {}]
  %s1 = inlined_call_operand.vmem [shape: bf16[512,64], index: 1, kind: input, shape index: {}]
  %s2 = inlined_call_operand.vmem [shape: bf16[128,64], index: 2, kind: output, shape index: {0}]
  %s3 = inlined_call_operand.vmem [shape: f32[1,1,64], index: 3, kind: output, shape index: {1}]
  %s4 = inlined_call_operand.vmem [shape: f32[1,1,64], index: 4, kind: output, shape index: {2}]
  %5 = xla_tuple %s2, %s3, %s4
  %s6 = sld [smem:[#allocation0]]
  $region42: #{discriminator_forward.11} parent=0
    _
  %s8 = ssub.s32 1, %s6
  %s9 = scalar_select 0, %s8, %s6
  // Predicated region
  $region2: #{discriminator_forward.11} parent=0 // pred_check
    _
  $region3: #{discriminator_forward.11} parent=0 // pred_check_branch
    %11 = sbr.rel (0) target = $region5
  $region4: #{discriminator_forward.11} parent=0 // pred_region
    _
  $region5: #{discriminator_forward.11} parent=0 // pred_fallthru
    _
  // Predicated region
  $region6: #{discriminator_forward.11} parent=0 // pred_check
    _
  $region7: #{discriminator_forward.11} parent=0 // pred_check_branch
    %13 = sbr.rel (0) target = $region9
  $region8: #{discriminator_forward.11} parent=0 // pred_region
    _
  $region9: #{discriminator_forward.11} parent=0 // pred_fallthru
    _
  %p15 = scmp.eq.s32.totalorder 0, 0
  // Predicated region
  $region10: #{discriminator_forward.11} parent=0 // pred_check
    %p16 = pneg %p15
  $region11: #{discriminator_forward.11} parent=0 // pred_check_branch
    %18 = sbr.rel (%p16) target = $region13
  $region12: #{discriminator_forward.11} parent=0 // pred_region
    %vm19 = vcmask 523264
    %20 = vst.msk [vmem:[#allocation2] sm:$0xff] %vm19, 0.0
    %21 = vst.msk [vmem:[#allocation2 + $0x8] sm:$0xff] %vm19, 0.0
    %22 = vst.msk [vmem:[#allocation2 + $0x10] sm:$0xff] %vm19, 0.0
    %23 = vst.msk [vmem:[#allocation2 + $0x18] sm:$0xff] %vm19, 0.0
    %24 = vst.msk [vmem:[#allocation2 + $0x20] sm:$0xff] %vm19, 0.0
    %25 = vst.msk [vmem:[#allocation2 + $0x28] sm:$0xff] %vm19, 0.0
    %26 = vst.msk [vmem:[#allocation2 + $0x30] sm:$0xff] %vm19, 0.0
    %27 = vst.msk [vmem:[#allocation2 + $0x38] sm:$0xff] %vm19, 0.0
    %28 = vst.msk [vmem:[#allocation2 + $0x40] sm:$0xff] %vm19, 0.0
    %29 = vst.msk [vmem:[#allocation2 + $0x48] sm:$0xff] %vm19, 0.0
    %30 = vst.msk [vmem:[#allocation2 + $0x50] sm:$0xff] %vm19, 0.0
    %31 = vst.msk [vmem:[#allocation2 + $0x58] sm:$0xff] %vm19, 0.0
    %32 = vst.msk [vmem:[#allocation2 + $0x60] sm:$0xff] %vm19, 0.0
    %33 = vst.msk [vmem:[#allocation2 + $0x68] sm:$0xff] %vm19, 0.0
    %34 = vst.msk [vmem:[#allocation2 + $0x70] sm:$0xff] %vm19, 0.0
    %35 = vst.msk [vmem:[#allocation2 + $0x78] sm:$0xff] %vm19, 0.0
  $region13: #{discriminator_forward.11} parent=0 // pred_fallthru
    _
  %v36 = vld [vmem:[#allocation2] sm:$0xff]
  %v37 = vld [vmem:[#allocation2 + $0x8] sm:$0xff]
  %v38 = vld [vmem:[#allocation2 + $0x10] sm:$0xff]
  %v39 = vld [vmem:[#allocation2 + $0x18] sm:$0xff]
  %v40 = vld [vmem:[#allocation2 + $0x20] sm:$0xff]
  %v41 = vld [vmem:[#allocation2 + $0x28] sm:$0xff]
  %v42 = vld [vmem:[#allocation2 + $0x30] sm:$0xff]
  %v43 = vld [vmem:[#allocation2 + $0x38] sm:$0xff]
  %v44 = vld [vmem:[#allocation2 + $0x40] sm:$0xff]
  %v45 = vld [vmem:[#allocation2 + $0x48] sm:$0xff]
  %v46 = vld [vmem:[#allocation2 + $0x50] sm:$0xff]
  %v47 = vld [vmem:[#allocation2 + $0x58] sm:$0xff]
  %v48 = vld [vmem:[#allocation2 + $0x60] sm:$0xff]
  %v49 = vld [vmem:[#allocation2 + $0x68] sm:$0xff]
  %v50 = vld [vmem:[#allocation2 + $0x70] sm:$0xff]
  %v51 = vld [vmem:[#allocation2 + $0x78] sm:$0xff]
  %v52 = vld [vmem:[%s0] sm:$0xff]
  %v53 = vld [vmem:[%s0 + $0x8] sm:$0xff]
  %v54 = vld [vmem:[%s0 + $0x10] sm:$0xff]
  %v55 = vld [vmem:[%s0 + $0x18] sm:$0xff]
  %v56 = vld [vmem:[%s0 + $0x20] sm:$0xff]
  %v57 = vld [vmem:[%s0 + $0x28] sm:$0xff]
  %v58 = vld [vmem:[%s0 + $0x30] sm:$0xff]
  %v59 = vld [vmem:[%s0 + $0x38] sm:$0xff]
  %v60 = vld [vmem:[%s0 + $0x40] sm:$0xff]
  %v61 = vld [vmem:[%s0 + $0x48] sm:$0xff]
  %v62 = vld [vmem:[%s0 + $0x50] sm:$0xff]
  %v63 = vld [vmem:[%s0 + $0x58] sm:$0xff]
  %v64 = vld [vmem:[%s0 + $0x60] sm:$0xff]
  %v65 = vld [vmem:[%s0 + $0x68] sm:$0xff]
  %v66 = vld [vmem:[%s0 + $0x70] sm:$0xff]
  %v67 = vld [vmem:[%s0 + $0x78] sm:$0xff]
  %v68 = vld [vmem:[%s0 + $0x80] sm:$0xff]
  %v69 = vld [vmem:[%s0 + $0x88] sm:$0xff]
  %v70 = vld [vmem:[%s0 + $0x90] sm:$0xff]
  %v71 = vld [vmem:[%s0 + $0x98] sm:$0xff]
  %v72 = vld [vmem:[%s0 + $0xa0] sm:$0xff]
  %v73 = vld [vmem:[%s0 + $0xa8] sm:$0xff]
  %v74 = vld [vmem:[%s0 + $0xb0] sm:$0xff]
  %v75 = vld [vmem:[%s0 + $0xb8] sm:$0xff]
  %v76 = vld [vmem:[%s0 + $0xc0] sm:$0xff]
  %v77 = vld [vmem:[%s0 + $0xc8] sm:$0xff]
  %v78 = vld [vmem:[%s0 + $0xd0] sm:$0xff]
  %v79 = vld [vmem:[%s0 + $0xd8] sm:$0xff]
  %v80 = vld [vmem:[%s0 + $0xe0] sm:$0xff]
  %v81 = vld [vmem:[%s0 + $0xe8] sm:$0xff]
  %v82 = vld [vmem:[%s0 + $0xf0] sm:$0xff]
  %v83 = vld [vmem:[%s0 + $0xf8] sm:$0xff]
  %v84 = vld [vmem:[%s1] sm:$0xf]
  %v85 = vld [vmem:[%s1 + $0x4] sm:$0xf]
  %v86 = vld [vmem:[%s1 + $0x8] sm:$0xf]
  %v87 = vld [vmem:[%s1 + $0xc] sm:$0xf]
  %v88 = vld [vmem:[%s1 + $0x10] sm:$0xf]
  %v89 = vld [vmem:[%s1 + $0x14] sm:$0xf]
  %v90 = vld [vmem:[%s1 + $0x18] sm:$0xf]
  %v91 = vld [vmem:[%s1 + $0x1c] sm:$0xf]
  %v92 = vld [vmem:[%s1 + $0x20] sm:$0xf]
  %v93 = vld [vmem:[%s1 + $0x24] sm:$0xf]
  %v94 = vld [vmem:[%s1 + $0x28] sm:$0xf]
  %v95 = vld [vmem:[%s1 + $0x2c] sm:$0xf]
  %v96 = vld [vmem:[%s1 + $0x30] sm:$0xf]
  %v97 = vld [vmem:[%s1 + $0x34] sm:$0xf]
  %v98 = vld [vmem:[%s1 + $0x38] sm:$0xf]
  %v99 = vld [vmem:[%s1 + $0x3c] sm:$0xf]
  %v100 = vld [vmem:[%s1 + $0x40] sm:$0xf]
  %v101 = vld [vmem:[%s1 + $0x44] sm:$0xf]
  %v102 = vld [vmem:[%s1 + $0x48] sm:$0xf]
  %v103 = vld [vmem:[%s1 + $0x4c] sm:$0xf]
  %v104 = vld [vmem:[%s1 + $0x50] sm:$0xf]
  %v105 = vld [vmem:[%s1 + $0x54] sm:$0xf]
  %v106 = vld [vmem:[%s1 + $0x58] sm:$0xf]
  %v107 = vld [vmem:[%s1 + $0x5c] sm:$0xf]
  %v108 = vld [vmem:[%s1 + $0x60] sm:$0xf]
  %v109 = vld [vmem:[%s1 + $0x64] sm:$0xf]
  %v110 = vld [vmem:[%s1 + $0x68] sm:$0xf]
  %v111 = vld [vmem:[%s1 + $0x6c] sm:$0xf]
  %v112 = vld [vmem:[%s1 + $0x70] sm:$0xf]
  %v113 = vld [vmem:[%s1 + $0x74] sm:$0xf]
  %v114 = vld [vmem:[%s1 + $0x78] sm:$0xf]
  %v115 = vld [vmem:[%s1 + $0x7c] sm:$0xf]
  %v116 = vld [vmem:[%s1 + $0x80] sm:$0xf]
  %v117 = vld [vmem:[%s1 + $0x84] sm:$0xf]
  %v118 = vld [vmem:[%s1 + $0x88] sm:$0xf]
  %v119 = vld [vmem:[%s1 + $0x8c] sm:$0xf]
  %v120 = vld [vmem:[%s1 + $0x90] sm:$0xf]
  %v121 = vld [vmem:[%s1 + $0x94] sm:$0xf]
  %v122 = vld [vmem:[%s1 + $0x98] sm:$0xf]
  %v123 = vld [vmem:[%s1 + $0x9c] sm:$0xf]
  %v124 = vld [vmem:[%s1 + $0xa0] sm:$0xf]
  %v125 = vld [vmem:[%s1 + $0xa4] sm:$0xf]
  %v126 = vld [vmem:[%s1 + $0xa8] sm:$0xf]
  %v127 = vld [vmem:[%s1 + $0xac] sm:$0xf]
  %v128 = vld [vmem:[%s1 + $0xb0] sm:$0xf]
  %v129 = vld [vmem:[%s1 + $0xb4] sm:$0xf]
  %v130 = vld [vmem:[%s1 + $0xb8] sm:$0xf]
  %v131 = vld [vmem:[%s1 + $0xbc] sm:$0xf]
  %v132 = vld [vmem:[%s1 + $0xc0] sm:$0xf]
  %v133 = vld [vmem:[%s1 + $0xc4] sm:$0xf]
  %v134 = vld [vmem:[%s1 + $0xc8] sm:$0xf]
  %v135 = vld [vmem:[%s1 + $0xcc] sm:$0xf]
  %v136 = vld [vmem:[%s1 + $0xd0] sm:$0xf]
  %v137 = vld [vmem:[%s1 + $0xd4] sm:$0xf]
  %v138 = vld [vmem:[%s1 + $0xd8] sm:$0xf]
  %v139 = vld [vmem:[%s1 + $0xdc] sm:$0xf]
  %v140 = vld [vmem:[%s1 + $0xe0] sm:$0xf]
  %v141 = vld [vmem:[%s1 + $0xe4] sm:$0xf]
  %v142 = vld [vmem:[%s1 + $0xe8] sm:$0xf]
  %v143 = vld [vmem:[%s1 + $0xec] sm:$0xf]
  %v144 = vld [vmem:[%s1 + $0xf0] sm:$0xf]
  %v145 = vld [vmem:[%s1 + $0xf4] sm:$0xf]
  %v146 = vld [vmem:[%s1 + $0xf8] sm:$0xf]
  %v147 = vld [vmem:[%s1 + $0xfc] sm:$0xf]
  %v180 = vunpack.c.l.b16 %v52
  %v181 = vunpack.c.h.b16 %v52
  %v182 = vunpack.c.l.b16 %v53
  %v183 = vunpack.c.h.b16 %v53
  %v184 = vunpack.c.l.b16 %v54
  %v185 = vunpack.c.h.b16 %v54
  %v186 = vunpack.c.l.b16 %v55
  %v187 = vunpack.c.h.b16 %v55
  %v188 = vunpack.c.l.b16 %v56
  %v189 = vunpack.c.h.b16 %v56
  %v190 = vunpack.c.l.b16 %v57
  %v191 = vunpack.c.h.b16 %v57
  %v192 = vunpack.c.l.b16 %v58
  %v193 = vunpack.c.h.b16 %v58
  %v194 = vunpack.c.l.b16 %v59
  %v195 = vunpack.c.h.b16 %v59
  %v196 = vunpack.c.l.b16 %v60
  %v197 = vunpack.c.h.b16 %v60
  %v198 = vunpack.c.l.b16 %v61
  %v199 = vunpack.c.h.b16 %v61
  %v200 = vunpack.c.l.b16 %v62
  %v201 = vunpack.c.h.b16 %v62
  %v202 = vunpack.c.l.b16 %v63
  %v203 = vunpack.c.h.b16 %v63
  %v204 = vunpack.c.l.b16 %v64
  %v205 = vunpack.c.h.b16 %v64
  %v206 = vunpack.c.l.b16 %v65
  %v207 = vunpack.c.h.b16 %v65
  %v208 = vunpack.c.l.b16 %v66
  %v209 = vunpack.c.h.b16 %v66
  %v210 = vunpack.c.l.b16 %v67
  %v211 = vunpack.c.h.b16 %v67
  %v212 = vunpack.c.l.b16 %v68
  %v213 = vunpack.c.h.b16 %v68
  %v214 = vunpack.c.l.b16 %v69
  %v215 = vunpack.c.h.b16 %v69
  %v216 = vunpack.c.l.b16 %v70
  %v217 = vunpack.c.h.b16 %v70
  %v218 = vunpack.c.l.b16 %v71
  %v219 = vunpack.c.h.b16 %v71
  %v220 = vunpack.c.l.b16 %v72
  %v221 = vunpack.c.h.b16 %v72
  %v222 = vunpack.c.l.b16 %v73
  %v223 = vunpack.c.h.b16 %v73
  %v224 = vunpack.c.l.b16 %v74
  %v225 = vunpack.c.h.b16 %v74
  %v226 = vunpack.c.l.b16 %v75
  %v227 = vunpack.c.h.b16 %v75
  %v228 = vunpack.c.l.b16 %v76
  %v229 = vunpack.c.h.b16 %v76
  %v230 = vunpack.c.l.b16 %v77
  %v231 = vunpack.c.h.b16 %v77
  %v232 = vunpack.c.l.b16 %v78
  %v233 = vunpack.c.h.b16 %v78
  %v234 = vunpack.c.l.b16 %v79
  %v235 = vunpack.c.h.b16 %v79
  %v236 = vunpack.c.l.b16 %v80
  %v237 = vunpack.c.h.b16 %v80
  %v238 = vunpack.c.l.b16 %v81
  %v239 = vunpack.c.h.b16 %v81
  %v240 = vunpack.c.l.b16 %v82
  %v241 = vunpack.c.h.b16 %v82
  %v242 = vunpack.c.l.b16 %v83
  %v243 = vunpack.c.h.b16 %v83
  %v244 = vpack.c.b16 %v184, %v180
  %v245 = vpack.c.b16 %v185, %v181
  %v246 = vpack.c.b16 %v186, %v182
  %v247 = vpack.c.b16 %v187, %v183
  %v248 = vpack.c.b16 %v192, %v188
  %v249 = vpack.c.b16 %v193, %v189
  %v250 = vpack.c.b16 %v194, %v190
  %v251 = vpack.c.b16 %v195, %v191
  %v252 = vpack.c.b16 %v200, %v196
  %v253 = vpack.c.b16 %v201, %v197
  %v254 = vpack.c.b16 %v202, %v198
  %v255 = vpack.c.b16 %v203, %v199
  %v256 = vpack.c.b16 %v208, %v204
  %v257 = vpack.c.b16 %v209, %v205
  %v258 = vpack.c.b16 %v210, %v206
  %v259 = vpack.c.b16 %v211, %v207
  %v260 = vpack.c.b16 %v216, %v212
  %v261 = vpack.c.b16 %v217, %v213
  %v262 = vpack.c.b16 %v218, %v214
  %v263 = vpack.c.b16 %v219, %v215
  %v264 = vpack.c.b16 %v224, %v220
  %v265 = vpack.c.b16 %v225, %v221
  %v266 = vpack.c.b16 %v226, %v222
  %v267 = vpack.c.b16 %v227, %v223
  %v268 = vpack.c.b16 %v232, %v228
  %v269 = vpack.c.b16 %v233, %v229
  %v270 = vpack.c.b16 %v234, %v230
  %v271 = vpack.c.b16 %v235, %v231
  %v272 = vpack.c.b16 %v240, %v236
  %v273 = vpack.c.b16 %v241, %v237
  %v274 = vpack.c.b16 %v242, %v238
  %v275 = vpack.c.b16 %v243, %v239
  %v372 = vunpack.c.l.b16 %v84
  %v373 = vunpack.c.l.b16 %v85
  %v374 = vunpack.c.l.b16 %v86
  %v375 = vunpack.c.l.b16 %v87
  %v376 = vunpack.c.l.b16 %v88
  %v377 = vunpack.c.l.b16 %v89
  %v378 = vunpack.c.l.b16 %v90
  %v379 = vunpack.c.l.b16 %v91
  %v380 = vunpack.c.l.b16 %v92
  %v381 = vunpack.c.l.b16 %v93
  %v382 = vunpack.c.l.b16 %v94
  %v383 = vunpack.c.l.b16 %v95
  %v384 = vunpack.c.l.b16 %v96
  %v385 = vunpack.c.l.b16 %v97
  %v386 = vunpack.c.l.b16 %v98
  %v387 = vunpack.c.l.b16 %v99
  %v388 = vunpack.c.l.b16 %v100
  %v389 = vunpack.c.l.b16 %v101
  %v390 = vunpack.c.l.b16 %v102
  %v391 = vunpack.c.l.b16 %v103
  %v392 = vunpack.c.l.b16 %v104
  %v393 = vunpack.c.l.b16 %v105
  %v394 = vunpack.c.l.b16 %v106
  %v395 = vunpack.c.l.b16 %v107
  %v396 = vunpack.c.l.b16 %v108
  %v397 = vunpack.c.l.b16 %v109
  %v398 = vunpack.c.l.b16 %v110
  %v399 = vunpack.c.l.b16 %v111
  %v400 = vunpack.c.l.b16 %v112
  %v401 = vunpack.c.l.b16 %v113
  %v402 = vunpack.c.l.b16 %v114
  %v403 = vunpack.c.l.b16 %v115
  %v404 = vunpack.c.l.b16 %v116
  %v405 = vunpack.c.l.b16 %v117
  %v406 = vunpack.c.l.b16 %v118
  %v407 = vunpack.c.l.b16 %v119
  %v408 = vunpack.c.l.b16 %v120
  %v409 = vunpack.c.l.b16 %v121
  %v410 = vunpack.c.l.b16 %v122
  %v411 = vunpack.c.l.b16 %v123
  %v412 = vunpack.c.l.b16 %v124
  %v413 = vunpack.c.l.b16 %v125
  %v414 = vunpack.c.l.b16 %v126
  %v415 = vunpack.c.l.b16 %v127
  %v416 = vunpack.c.l.b16 %v128
  %v417 = vunpack.c.l.b16 %v129
  %v418 = vunpack.c.l.b16 %v130
  %v419 = vunpack.c.l.b16 %v131
  %v420 = vunpack.c.l.b16 %v132
  %v421 = vunpack.c.l.b16 %v133
  %v422 = vunpack.c.l.b16 %v134
  %v423 = vunpack.c.l.b16 %v135
  %v424 = vunpack.c.l.b16 %v136
  %v425 = vunpack.c.l.b16 %v137
  %v426 = vunpack.c.l.b16 %v138
  %v427 = vunpack.c.l.b16 %v139
  %v428 = vunpack.c.l.b16 %v140
  %v429 = vunpack.c.l.b16 %v141
  %v430 = vunpack.c.l.b16 %v142
  %v431 = vunpack.c.l.b16 %v143
  %v432 = vunpack.c.l.b16 %v144
  %v433 = vunpack.c.l.b16 %v145
  %v434 = vunpack.c.l.b16 %v146
  %v435 = vunpack.c.l.b16 %v147
  %v436 = vpack.c.b16 %v373, %v372
  %v437 = vpack.c.b16 %v375, %v374
  %v438 = vpack.c.b16 %v377, %v376
  %v439 = vpack.c.b16 %v379, %v378
  %v440 = vpack.c.b16 %v381, %v380
  %v441 = vpack.c.b16 %v383, %v382
  %v442 = vpack.c.b16 %v385, %v384
  %v443 = vpack.c.b16 %v387, %v386
  %v444 = vpack.c.b16 %v389, %v388
  %v445 = vpack.c.b16 %v391, %v390
  %v446 = vpack.c.b16 %v393, %v392
  %v447 = vpack.c.b16 %v395, %v394
  %v448 = vpack.c.b16 %v397, %v396
  %v449 = vpack.c.b16 %v399, %v398
  %v450 = vpack.c.b16 %v401, %v400
  %v451 = vpack.c.b16 %v403, %v402
  %v452 = vpack.c.b16 %v405, %v404
  %v453 = vpack.c.b16 %v407, %v406
  %v454 = vpack.c.b16 %v409, %v408
  %v455 = vpack.c.b16 %v411, %v410
  %v456 = vpack.c.b16 %v413, %v412
  %v457 = vpack.c.b16 %v415, %v414
  %v458 = vpack.c.b16 %v417, %v416
  %v459 = vpack.c.b16 %v419, %v418
  %v460 = vpack.c.b16 %v421, %v420
  %v461 = vpack.c.b16 %v423, %v422
  %v462 = vpack.c.b16 %v425, %v424
  %v463 = vpack.c.b16 %v427, %v426
  %v464 = vpack.c.b16 %v429, %v428
  %v465 = vpack.c.b16 %v431, %v430
  %v466 = vpack.c.b16 %v433, %v432
  %v467 = vpack.c.b16 %v435, %v434
  %500 = vmatprep.subr.bf16.mxu0 0
  %501 = vmatpush1.bf16.msra.mxu0 %v436
  %502 = vmatprep.subr.bf16.mxu0 0
  %503 = vmatpush1.bf16.msra.mxu0 %v437
  %504 = vmatprep.subr.bf16.mxu0 0
  %505 = vmatpush1.bf16.msra.mxu0 %v438
  %506 = vmatprep.subr.bf16.mxu0 0
  %507 = vmatpush1.bf16.msra.mxu0 %v439
  %508 = vmatprep.subr.bf16.mxu0 0
  %509 = vmatpush1.bf16.msra.mxu0 %v440
  %510 = vmatprep.subr.bf16.mxu0 0
  %511 = vmatpush1.bf16.msra.mxu0 %v441
  %512 = vmatprep.subr.bf16.mxu0 0
  %513 = vmatpush1.bf16.msra.mxu0 %v442
  %514 = vmatprep.subr.bf16.mxu0 0
  %515 = vmatpush1.bf16.msra.mxu0 %v443
  %516 = vmatprep.subr.bf16.mxu0 0
  %517 = vmatpush1.bf16.msra.mxu0 %v444
  %518 = vmatprep.subr.bf16.mxu0 0
  %519 = vmatpush1.bf16.msra.mxu0 %v445
  %520 = vmatprep.subr.bf16.mxu0 0
  %521 = vmatpush1.bf16.msra.mxu0 %v446
  %522 = vmatprep.subr.bf16.mxu0 0
  %523 = vmatpush1.bf16.msra.mxu0 %v447
  %524 = vmatprep.subr.bf16.mxu0 0
  %525 = vmatpush1.bf16.msra.mxu0 %v448
  %526 = vmatprep.subr.bf16.mxu0 0
  %527 = vmatpush1.bf16.msra.mxu0 %v449
  %528 = vmatprep.subr.bf16.mxu0 0
  %529 = vmatpush1.bf16.msra.mxu0 %v450
  %530 = vmatprep.subr.bf16.mxu0 0
  %531 = vmatpush1.bf16.msra.mxu0 %v451
  %532 = vmatprep.mubr.bf16.mxu0 %v245
  %533 = vmatmul.mubr.bf16.gmra.mrb[0].mxu0 %v244
  %v534 = vpop.f32.mrb[0].mxu0
  %v535 = vadd.f32 0.0, %v534
  %v536 = vpop.f32.mrb[0].mxu0
  %v537 = vpop.f32.mrb[0].mxu0
  %v538 = vadd.f32 0.0, %v537
  %v539 = vpop.f32.mrb[0].mxu0
  %540 = vmatprep.mubr.bf16.mxu0 %v249
  %541 = vmatmul.mubr.bf16.gmra.mrb[0].mxu0 %v248
  %v542 = vpop.f32.mrb[0].mxu0
  %v543 = vadd.f32 0.0, %v542
  %v544 = vpop.f32.mrb[0].mxu0
  %v545 = vpop.f32.mrb[0].mxu0
  %v546 = vadd.f32 0.0, %v545
  %v547 = vpop.f32.mrb[0].mxu0
  %548 = vmatprep.mubr.bf16.mxu0 %v253
  %549 = vmatmul.mubr.bf16.gmra.mrb[0].mxu0 %v252
  %v550 = vpop.f32.mrb[0].mxu0
  %v551 = vadd.f32 0.0, %v550
  %v552 = vpop.f32.mrb[0].mxu0
  %v553 = vpop.f32.mrb[0].mxu0
  %v554 = vadd.f32 0.0, %v553
  %v555 = vpop.f32.mrb[0].mxu0
  %556 = vmatprep.mubr.bf16.mxu0 %v257
  %557 = vmatmul.mubr.bf16.gmra.mrb[0].mxu0 %v256
  %v558 = vpop.f32.mrb[0].mxu0
  %v559 = vadd.f32 0.0, %v558
  %v560 = vpop.f32.mrb[0].mxu0
  %v561 = vpop.f32.mrb[0].mxu0
  %v562 = vadd.f32 0.0, %v561
  %v563 = vpop.f32.mrb[0].mxu0
  %564 = vmatprep.mubr.bf16.mxu0 %v261
  %565 = vmatmul.mubr.bf16.gmra.mrb[0].mxu0 %v260
  %v566 = vpop.f32.mrb[0].mxu0
  %v567 = vadd.f32 0.0, %v566
  %v568 = vpop.f32.mrb[0].mxu0
  %v569 = vpop.f32.mrb[0].mxu0
  %v570 = vadd.f32 0.0, %v569
  %v571 = vpop.f32.mrb[0].mxu0
  %572 = vmatprep.mubr.bf16.mxu0 %v265
  %573 = vmatmul.mubr.bf16.gmra.mrb[0].mxu0 %v264
  %v574 = vpop.f32.mrb[0].mxu0
  %v575 = vadd.f32 0.0, %v574
  %v576 = vpop.f32.mrb[0].mxu0
  %v577 = vpop.f32.mrb[0].mxu0
  %v578 = vadd.f32 0.0, %v577
  %v579 = vpop.f32.mrb[0].mxu0
  %580 = vmatprep.mubr.bf16.mxu0 %v269
  %581 = vmatmul.mubr.bf16.gmra.mrb[0].mxu0 %v268
  %v582 = vpop.f32.mrb[0].mxu0
  %v583 = vadd.f32 0.0, %v582
  %v584 = vpop.f32.mrb[0].mxu0
  %v585 = vpop.f32.mrb[0].mxu0
  %v586 = vadd.f32 0.0, %v585
  %v587 = vpop.f32.mrb[0].mxu0
  %588 = vmatprep.mubr.bf16.mxu0 %v273
  %589 = vmatmul.mubr.bf16.gmra.mrb[0].mxu0 %v272
  %v590 = vpop.f32.mrb[0].mxu0
  %v591 = vadd.f32 0.0, %v590
  %v592 = vpop.f32.mrb[0].mxu0
  %v593 = vpop.f32.mrb[0].mxu0
  %v594 = vadd.f32 0.0, %v593
  %v595 = vpop.f32.mrb[0].mxu0
  %596 = vdwg.mxu0
  %597 = vmatprep.subr.bf16.mxu0 0
  %598 = vmatpush1.bf16.msra.mxu0 %v452
  %599 = vmatprep.subr.bf16.mxu0 0
  %600 = vmatpush1.bf16.msra.mxu0 %v453
  %601 = vmatprep.subr.bf16.mxu0 0
  %602 = vmatpush1.bf16.msra.mxu0 %v454
  %603 = vmatprep.subr.bf16.mxu0 0
  %604 = vmatpush1.bf16.msra.mxu0 %v455
  %605 = vmatprep.subr.bf16.mxu0 0
  %606 = vmatpush1.bf16.msra.mxu0 %v456
  %607 = vmatprep.subr.bf16.mxu0 0
  %608 = vmatpush1.bf16.msra.mxu0 %v457
  %609 = vmatprep.subr.bf16.mxu0 0
  %610 = vmatpush1.bf16.msra.mxu0 %v458
  %611 = vmatprep.subr.bf16.mxu0 0
  %612 = vmatpush1.bf16.msra.mxu0 %v459
  %613 = vmatprep.subr.bf16.mxu0 0
  %614 = vmatpush1.bf16.msra.mxu0 %v460
  %615 = vmatprep.subr.bf16.mxu0 0
  %616 = vmatpush1.bf16.msra.mxu0 %v461
  %617 = vmatprep.subr.bf16.mxu0 0
  %618 = vmatpush1.bf16.msra.mxu0 %v462
  %619 = vmatprep.subr.bf16.mxu0 0
  %620 = vmatpush1.bf16.msra.mxu0 %v463
  %621 = vmatprep.subr.bf16.mxu0 0
  %622 = vmatpush1.bf16.msra.mxu0 %v464
  %623 = vmatprep.subr.bf16.mxu0 0
  %624 = vmatpush1.bf16.msra.mxu0 %v465
  %625 = vmatprep.subr.bf16.mxu0 0
  %626 = vmatpush1.bf16.msra.mxu0 %v466
  %627 = vmatprep.subr.bf16.mxu0 0
  %628 = vmatpush1.bf16.msra.mxu0 %v467
  %629 = vmatprep.mubr.bf16.mxu0 %v247
  %630 = vmatmul.mubr.bf16.gmra.mrb[0].mxu0 %v246
  %v631 = vpop.f32.mrb[0].mxu0
  %v632 = vadd.f32 %v535, %v631
  %v633 = vpop.f32.mrb[0].mxu0
  %v634 = vpop.f32.mrb[0].mxu0
  %v635 = vadd.f32 %v538, %v634
  %v636 = vpop.f32.mrb[0].mxu0
  %637 = vmatprep.mubr.bf16.mxu0 %v251
  %638 = vmatmul.mubr.bf16.gmra.mrb[0].mxu0 %v250
  %v639 = vpop.f32.mrb[0].mxu0
  %v640 = vadd.f32 %v543, %v639
  %v641 = vpop.f32.mrb[0].mxu0
  %v642 = vpop.f32.mrb[0].mxu0
  %v643 = vadd.f32 %v546, %v642
  %v644 = vpop.f32.mrb[0].mxu0
  %645 = vmatprep.mubr.bf16.mxu0 %v255
  %646 = vmatmul.mubr.bf16.gmra.mrb[0].mxu0 %v254
  %v647 = vpop.f32.mrb[0].mxu0
  %v648 = vadd.f32 %v551, %v647
  %v649 = vpop.f32.mrb[0].mxu0
  %v650 = vpop.f32.mrb[0].mxu0
  %v651 = vadd.f32 %v554, %v650
  %v652 = vpop.f32.mrb[0].mxu0
  %653 = vmatprep.mubr.bf16.mxu0 %v259
  %654 = vmatmul.mubr.bf16.gmra.mrb[0].mxu0 %v258
  %v655 = vpop.f32.mrb[0].mxu0
  %v656 = vadd.f32 %v559, %v655
  %v657 = vpop.f32.mrb[0].mxu0
  %v658 = vpop.f32.mrb[0].mxu0
  %v659 = vadd.f32 %v562, %v658
  %v660 = vpop.f32.mrb[0].mxu0
  %661 = vmatprep.mubr.bf16.mxu0 %v263
  %662 = vmatmul.mubr.bf16.gmra.mrb[0].mxu0 %v262
  %v663 = vpop.f32.mrb[0].mxu0
  %v664 = vadd.f32 %v567, %v663
  %v665 = vpop.f32.mrb[0].mxu0
  %v666 = vpop.f32.mrb[0].mxu0
  %v667 = vadd.f32 %v570, %v666
  %v668 = vpop.f32.mrb[0].mxu0
  %669 = vmatprep.mubr.bf16.mxu0 %v267
  %670 = vmatmul.mubr.bf16.gmra.mrb[0].mxu0 %v266
  %v671 = vpop.f32.mrb[0].mxu0
  %v672 = vadd.f32 %v575, %v671
  %v673 = vpop.f32.mrb[0].mxu0
  %v674 = vpop.f32.mrb[0].mxu0
  %v675 = vadd.f32 %v578, %v674
  %v676 = vpop.f32.mrb[0].mxu0
  %677 = vmatprep.mubr.bf16.mxu0 %v271
  %678 = vmatmul.mubr.bf16.gmra.mrb[0].mxu0 %v270
  %v679 = vpop.f32.mrb[0].mxu0
  %v680 = vadd.f32 %v583, %v679
  %v681 = vpop.f32.mrb[0].mxu0
  %v682 = vpop.f32.mrb[0].mxu0
  %v683 = vadd.f32 %v586, %v682
  %v684 = vpop.f32.mrb[0].mxu0
  %685 = vmatprep.mubr.bf16.mxu0 %v275
  %686 = vmatmul.mubr.bf16.gmra.mrb[0].mxu0 %v274
  %v687 = vpop.f32.mrb[0].mxu0
  %v688 = vadd.f32 %v591, %v687
  %v689 = vpop.f32.mrb[0].mxu0
  %v690 = vpop.f32.mrb[0].mxu0
  %v691 = vadd.f32 %v594, %v690
  %v692 = vpop.f32.mrb[0].mxu0
  %693 = vdwg.mxu0
  %v694 = vadd.f32 %v36, %v632
  %v695 = vadd.f32 %v37, %v635
  %v696 = vadd.f32 %v38, %v640
  %v697 = vadd.f32 %v39, %v643
  %v698 = vadd.f32 %v40, %v648
  %v699 = vadd.f32 %v41, %v651
  %v700 = vadd.f32 %v42, %v656
  %v701 = vadd.f32 %v43, %v659
  %v702 = vadd.f32 %v44, %v664
  %v703 = vadd.f32 %v45, %v667
  %v704 = vadd.f32 %v46, %v672
  %v705 = vadd.f32 %v47, %v675
  %v706 = vadd.f32 %v48, %v680
  %v707 = vadd.f32 %v49, %v683
  %v708 = vadd.f32 %v50, %v688
  %v709 = vadd.f32 %v51, %v691
  %vm710 = vcmask 523264
  %711 = vst.msk [vmem:[#allocation2] sm:$0xff] %vm710, %v694
  %712 = vst.msk [vmem:[#allocation2 + $0x8] sm:$0xff] %vm710, %v695
  %713 = vst.msk [vmem:[#allocation2 + $0x10] sm:$0xff] %vm710, %v696
  %714 = vst.msk [vmem:[#allocation2 + $0x18] sm:$0xff] %vm710, %v697
  %715 = vst.msk [vmem:[#allocation2 + $0x20] sm:$0xff] %vm710, %v698
  %716 = vst.msk [vmem:[#allocation2 + $0x28] sm:$0xff] %vm710, %v699
  %717 = vst.msk [vmem:[#allocation2 + $0x30] sm:$0xff] %vm710, %v700
  %718 = vst.msk [vmem:[#allocation2 + $0x38] sm:$0xff] %vm710, %v701
  %719 = vst.msk [vmem:[#allocation2 + $0x40] sm:$0xff] %vm710, %v702
  %720 = vst.msk [vmem:[#allocation2 + $0x48] sm:$0xff] %vm710, %v703
  %721 = vst.msk [vmem:[#allocation2 + $0x50] sm:$0xff] %vm710, %v704
  %722 = vst.msk [vmem:[#allocation2 + $0x58] sm:$0xff] %vm710, %v705
  %723 = vst.msk [vmem:[#allocation2 + $0x60] sm:$0xff] %vm710, %v706
  %724 = vst.msk [vmem:[#allocation2 + $0x68] sm:$0xff] %vm710, %v707
  %725 = vst.msk [vmem:[#allocation2 + $0x70] sm:$0xff] %vm710, %v708
  %726 = vst.msk [vmem:[#allocation2 + $0x78] sm:$0xff] %vm710, %v709
  // Predicated region
  $region14: #{discriminator_forward.11} parent=0 // pred_check
    %p727 = pneg %p15
  $region15: #{discriminator_forward.11} parent=0 // pred_check_branch
    %729 = sbr.rel (%p727) target = $region17
  $region16: #{discriminator_forward.11} parent=0 // pred_region
    %v730 = vld [vmem:[#allocation2] sm:$0xff]
    %v731 = vld [vmem:[#allocation2 + $0x8] sm:$0xff]
    %v732 = vld [vmem:[#allocation2 + $0x10] sm:$0xff]
    %v733 = vld [vmem:[#allocation2 + $0x18] sm:$0xff]
    %v734 = vld [vmem:[#allocation2 + $0x20] sm:$0xff]
    %v735 = vld [vmem:[#allocation2 + $0x28] sm:$0xff]
    %v736 = vld [vmem:[#allocation2 + $0x30] sm:$0xff]
    %v737 = vld [vmem:[#allocation2 + $0x38] sm:$0xff]
    %v738 = vld [vmem:[#allocation2 + $0x40] sm:$0xff]
    %v739 = vld [vmem:[#allocation2 + $0x48] sm:$0xff]
    %v740 = vld [vmem:[#allocation2 + $0x50] sm:$0xff]
    %v741 = vld [vmem:[#allocation2 + $0x58] sm:$0xff]
    %v742 = vld [vmem:[#allocation2 + $0x60] sm:$0xff]
    %v743 = vld [vmem:[#allocation2 + $0x68] sm:$0xff]
    %v744 = vld [vmem:[#allocation2 + $0x70] sm:$0xff]
    %v745 = vld [vmem:[#allocation2 + $0x78] sm:$0xff]
    %v746 = vpack.c.bf16 %v731, %v730
    %v747 = vpack.c.bf16 %v733, %v732
    %v748 = vpack.c.bf16 %v735, %v734
    %v749 = vpack.c.bf16 %v737, %v736
    %v750 = vpack.c.bf16 %v739, %v738
    %v751 = vpack.c.bf16 %v741, %v740
    %v752 = vpack.c.bf16 %v743, %v742
    %v753 = vpack.c.bf16 %v745, %v744
    %v762 = vunpack.c.l.b16 %v746
    %v763 = vunpack.c.h.b16 %v746
    %v764 = vunpack.c.l.b16 %v747
    %v765 = vunpack.c.h.b16 %v747
    %v766 = vunpack.c.l.b16 %v748
    %v767 = vunpack.c.h.b16 %v748
    %v768 = vunpack.c.l.b16 %v749
    %v769 = vunpack.c.h.b16 %v749
    %v770 = vunpack.c.l.b16 %v750
    %v771 = vunpack.c.h.b16 %v750
    %v772 = vunpack.c.l.b16 %v751
    %v773 = vunpack.c.h.b16 %v751
    %v774 = vunpack.c.l.b16 %v752
    %v775 = vunpack.c.h.b16 %v752
    %v776 = vunpack.c.l.b16 %v753
    %v777 = vunpack.c.h.b16 %v753
    %v778 = vpack.c.b16 %v762, %v762
    %v779 = vpack.c.b16 %v763, %v763
    %v780 = vpack.c.b16 %v764, %v764
    %v781 = vpack.c.b16 %v765, %v765
    %v782 = vpack.c.b16 %v766, %v766
    %v783 = vpack.c.b16 %v767, %v767
    %v784 = vpack.c.b16 %v768, %v768
    %v785 = vpack.c.b16 %v769, %v769
    %v786 = vpack.c.b16 %v770, %v770
    %v787 = vpack.c.b16 %v771, %v771
    %v788 = vpack.c.b16 %v772, %v772
    %v789 = vpack.c.b16 %v773, %v773
    %v790 = vpack.c.b16 %v774, %v774
    %v791 = vpack.c.b16 %v775, %v775
    %v792 = vpack.c.b16 %v776, %v776
    %v793 = vpack.c.b16 %v777, %v777
    %vm810 = vcmask 519168
    %811 = vst.msk [vmem:[%s2] sm:$0xf] %vm810, %v778
    %812 = vst.msk [vmem:[%s2 + $0x4] sm:$0xf] %vm810, %v779
    %813 = vst.msk [vmem:[%s2 + $0x8] sm:$0xf] %vm810, %v780
    %814 = vst.msk [vmem:[%s2 + $0xc] sm:$0xf] %vm810, %v781
    %815 = vst.msk [vmem:[%s2 + $0x10] sm:$0xf] %vm810, %v782
    %816 = vst.msk [vmem:[%s2 + $0x14] sm:$0xf] %vm810, %v783
    %817 = vst.msk [vmem:[%s2 + $0x18] sm:$0xf] %vm810, %v784
    %818 = vst.msk [vmem:[%s2 + $0x1c] sm:$0xf] %vm810, %v785
    %819 = vst.msk [vmem:[%s2 + $0x20] sm:$0xf] %vm810, %v786
    %820 = vst.msk [vmem:[%s2 + $0x24] sm:$0xf] %vm810, %v787
    %821 = vst.msk [vmem:[%s2 + $0x28] sm:$0xf] %vm810, %v788
    %822 = vst.msk [vmem:[%s2 + $0x2c] sm:$0xf] %vm810, %v789
    %823 = vst.msk [vmem:[%s2 + $0x30] sm:$0xf] %vm810, %v790
    %824 = vst.msk [vmem:[%s2 + $0x34] sm:$0xf] %vm810, %v791
    %825 = vst.msk [vmem:[%s2 + $0x38] sm:$0xf] %vm810, %v792
    %826 = vst.msk [vmem:[%s2 + $0x3c] sm:$0xf] %vm810, %v793
    %v827 = vsel %vm710, %v730, 0.0
    %v828 = vsel %vm710, %v731, 0.0
    %v829 = vadd.f32 %v827, %v828
    %v830 = vsel %vm710, %v732, 0.0
    %v831 = vadd.f32 %v829, %v830
    %v832 = vsel %vm710, %v733, 0.0
    %v833 = vadd.f32 %v831, %v832
    %v834 = vsel %vm710, %v734, 0.0
    %v835 = vadd.f32 %v833, %v834
    %v836 = vsel %vm710, %v735, 0.0
    %v837 = vadd.f32 %v835, %v836
    %v838 = vsel %vm710, %v736, 0.0
    %v839 = vadd.f32 %v837, %v838
    %v840 = vsel %vm710, %v737, 0.0
    %v841 = vadd.f32 %v839, %v840
    %v842 = vsel %vm710, %v738, 0.0
    %v843 = vadd.f32 %v841, %v842
    %v844 = vsel %vm710, %v739, 0.0
    %v845 = vadd.f32 %v843, %v844
    %v846 = vsel %vm710, %v740, 0.0
    %v847 = vadd.f32 %v845, %v846
    %v848 = vsel %vm710, %v741, 0.0
    %v849 = vadd.f32 %v847, %v848
    %v850 = vsel %vm710, %v742, 0.0
    %v851 = vadd.f32 %v849, %v850
    %v852 = vsel %vm710, %v743, 0.0
    %v853 = vadd.f32 %v851, %v852
    %v854 = vsel %vm710, %v744, 0.0
    %v855 = vadd.f32 %v853, %v854
    %v856 = vsel %vm710, %v745, 0.0
    %v857 = vadd.f32 %v855, %v856
    %v858 = vrot.slane %v857, 4
    %v859 = vadd.f32 %v857, %v858
    %v860 = vrot.slane %v859, 2
    %v861 = vadd.f32 %v859, %v860
    %v862 = vrot.slane %v861, 1
    %v863 = vadd.f32 %v861, %v862
    %vm864 = vcmask 516096
    %865 = vst.msk [vmem:[%s3] sm:$0x1] %vm864, %v863
    %v866 = vmul.f32 %v730, %v730
    %v867 = vmul.f32 %v731, %v731
    %v868 = vmul.f32 %v732, %v732
    %v869 = vmul.f32 %v733, %v733
    %v870 = vmul.f32 %v734, %v734
    %v871 = vmul.f32 %v735, %v735
    %v872 = vmul.f32 %v736, %v736
    %v873 = vmul.f32 %v737, %v737
    %v874 = vmul.f32 %v738, %v738
    %v875 = vmul.f32 %v739, %v739
    %v876 = vmul.f32 %v740, %v740
    %v877 = vmul.f32 %v741, %v741
    %v878 = vmul.f32 %v742, %v742
    %v879 = vmul.f32 %v743, %v743
    %v880 = vmul.f32 %v744, %v744
    %v881 = vmul.f32 %v745, %v745
    %v882 = vsel %vm710, %v866, 0.0
    %v883 = vsel %vm710, %v867, 0.0
    %v884 = vadd.f32 %v882, %v883
    %v885 = vsel %vm710, %v868, 0.0
    %v886 = vadd.f32 %v884, %v885
    %v887 = vsel %vm710, %v869, 0.0
    %v888 = vadd.f32 %v886, %v887
    %v889 = vsel %vm710, %v870, 0.0
    %v890 = vadd.f32 %v888, %v889
    %v891 = vsel %vm710, %v871, 0.0
    %v892 = vadd.f32 %v890, %v891
    %v893 = vsel %vm710, %v872, 0.0
    %v894 = vadd.f32 %v892, %v893
    %v895 = vsel %vm710, %v873, 0.0
    %v896 = vadd.f32 %v894, %v895
    %v897 = vsel %vm710, %v874, 0.0
    %v898 = vadd.f32 %v896, %v897
    %v899 = vsel %vm710, %v875, 0.0
    %v900 = vadd.f32 %v898, %v899
    %v901 = vsel %vm710, %v876, 0.0
    %v902 = vadd.f32 %v900, %v901
    %v903 = vsel %vm710, %v877, 0.0
    %v904 = vadd.f32 %v902, %v903
    %v905 = vsel %vm710, %v878, 0.0
    %v906 = vadd.f32 %v904, %v905
    %v907 = vsel %vm710, %v879, 0.0
    %v908 = vadd.f32 %v906, %v907
    %v909 = vsel %vm710, %v880, 0.0
    %v910 = vadd.f32 %v908, %v909
    %v911 = vsel %vm710, %v881, 0.0
    %v912 = vadd.f32 %v910, %v911
    %v913 = vrot.slane %v912, 4
    %v914 = vadd.f32 %v912, %v913
    %v915 = vrot.slane %v914, 2
    %v916 = vadd.f32 %v914, %v915
    %v917 = vrot.slane %v916, 1
    %v918 = vadd.f32 %v916, %v917
    %919 = vst.msk [vmem:[%s4] sm:$0x1] %vm864, %v918
  $region17: #{discriminator_forward.11} parent=0 // pred_fallthru
    _
  // Predicated region
  $region18: #{discriminator_forward.11} parent=0 // pred_check
    _
  $region19: #{discriminator_forward.11} parent=0 // pred_check_branch
    %921 = sbr.rel (0) target = $region21
  $region20: #{discriminator_forward.11} parent=0 // pred_region
    _
  $region21: #{discriminator_forward.11} parent=0 // pred_fallthru
    _
  // Predicated region
  $region22: #{discriminator_forward.11} parent=0 // pred_check
    _
  $region23: #{discriminator_forward.11} parent=0 // pred_check_branch
    %923 = sbr.rel (0) target = $region25
  $region24: #{discriminator_forward.11} parent=0 // pred_region
    _
  $region25: #{discriminator_forward.11} parent=0 // pred_fallthru
    _
  // Predicated region
  $region26: #{discriminator_forward.11} parent=0 // pred_check
    _
  $region27: #{discriminator_forward.11} parent=0 // pred_check_branch
    %925 = sbr.rel (0) target = $region29
  $region28: #{discriminator_forward.11} parent=0 // pred_region
    _
  $region29: #{discriminator_forward.11} parent=0 // pred_fallthru
    _
  // Predicated region
  $region30: #{discriminator_forward.11} parent=0 // pred_check
    _
  $region31: #{discriminator_forward.11} parent=0 // pred_check_branch
    %927 = sbr.rel (0) target = $region33
  $region32: #{discriminator_forward.11} parent=0 // pred_region
    _
  $region33: #{discriminator_forward.11} parent=0 // pred_fallthru
    _
  // Predicated region
  $region34: #{discriminator_forward.11} parent=0 // pred_check
    _
  $region35: #{discriminator_forward.11} parent=0 // pred_check_branch
    %929 = sbr.rel (0) target = $region37
  $region36: #{discriminator_forward.11} parent=0 // pred_region
    _
  $region37: #{discriminator_forward.11} parent=0 // pred_fallthru
    _
  // Predicated region
  $region38: #{discriminator_forward.11} parent=0 // pred_check
    _
  $region39: #{discriminator_forward.11} parent=0 // pred_check_branch
    %931 = sbr.rel (0) target = $region41
  $region40: #{discriminator_forward.11} parent=0 // pred_region
    _
  $region41: #{discriminator_forward.11} parent=0 // pred_fallthru
    _

// kernel: discriminator_forward.12
$region0: #{discriminator_forward.12}
  #allocation0 [shape = 'u32[]', space=smem, size = 0x4, offset = 0x4, fixed_abs, tag = 'smem constant byte address 0x4 - core index']
  #allocation1 [shape = 'u32[144,128]{1,0:T(1,128)}', space=vmem, size = 0x12000, scoped, tag = 'internal scratch']
  %s0 = inlined_call_operand.vmem [shape: bf16[128,64], index: 0, kind: input, shape index: {}]
  %s1 = inlined_call_operand.vmem [shape: f32[1,64], index: 1, kind: input, shape index: {}]
  %s2 = inlined_call_operand.vmem [shape: f32[1,64], index: 2, kind: input, shape index: {}]
  %s3 = inlined_call_operand.vmem [shape: bf16[128,64], index: 3, kind: output, shape index: {}]
  %s4 = sld [smem:[#allocation0]]
  $region22: #{discriminator_forward.12} parent=0
    _
  %s6 = ssub.s32 1, %s4
  %s7 = scalar_select 0, %s6, %s4
  // Predicated region
  $region2: #{discriminator_forward.12} parent=0 // pred_check
    _
  $region3: #{discriminator_forward.12} parent=0 // pred_check_branch
    %9 = sbr.rel (0) target = $region5
  $region4: #{discriminator_forward.12} parent=0 // pred_region
    _
  $region5: #{discriminator_forward.12} parent=0 // pred_fallthru
    _
  // Predicated region
  $region6: #{discriminator_forward.12} parent=0 // pred_check
    _
  $region7: #{discriminator_forward.12} parent=0 // pred_check_branch
    %11 = sbr.rel (0) target = $region9
  $region8: #{discriminator_forward.12} parent=0 // pred_region
    _
  $region9: #{discriminator_forward.12} parent=0 // pred_fallthru
    _
  // Predicated region
  $region10: #{discriminator_forward.12} parent=0 // pred_check
    _
  $region11: #{discriminator_forward.12} parent=0 // pred_check_branch
    %13 = sbr.rel (0) target = $region13
  $region12: #{discriminator_forward.12} parent=0 // pred_region
    _
  $region13: #{discriminator_forward.12} parent=0 // pred_fallthru
    _
  %v14 = vld [vmem:[%s0] sm:$0xf]
  %v15 = vld [vmem:[%s0 + $0x4] sm:$0xf]
  %v16 = vld [vmem:[%s0 + $0x8] sm:$0xf]
  %v17 = vld [vmem:[%s0 + $0xc] sm:$0xf]
  %v18 = vld [vmem:[%s0 + $0x10] sm:$0xf]
  %v19 = vld [vmem:[%s0 + $0x14] sm:$0xf]
  %v20 = vld [vmem:[%s0 + $0x18] sm:$0xf]
  %v21 = vld [vmem:[%s0 + $0x1c] sm:$0xf]
  %v22 = vld [vmem:[%s0 + $0x20] sm:$0xf]
  %v23 = vld [vmem:[%s0 + $0x24] sm:$0xf]
  %v24 = vld [vmem:[%s0 + $0x28] sm:$0xf]
  %v25 = vld [vmem:[%s0 + $0x2c] sm:$0xf]
  %v26 = vld [vmem:[%s0 + $0x30] sm:$0xf]
  %v27 = vld [vmem:[%s0 + $0x34] sm:$0xf]
  %v28 = vld [vmem:[%s0 + $0x38] sm:$0xf]
  %v29 = vld [vmem:[%s0 + $0x3c] sm:$0xf]
  %v30 = vunpack.c.l.bf16 %v14
  %v31 = vunpack.c.l.bf16 %v15
  %v32 = vunpack.c.l.bf16 %v16
  %v33 = vunpack.c.l.bf16 %v17
  %v34 = vunpack.c.l.bf16 %v18
  %v35 = vunpack.c.l.bf16 %v19
  %v36 = vunpack.c.l.bf16 %v20
  %v37 = vunpack.c.l.bf16 %v21
  %v38 = vunpack.c.l.bf16 %v22
  %v39 = vunpack.c.l.bf16 %v23
  %v40 = vunpack.c.l.bf16 %v24
  %v41 = vunpack.c.l.bf16 %v25
  %v42 = vunpack.c.l.bf16 %v26
  %v43 = vunpack.c.l.bf16 %v27
  %v44 = vunpack.c.l.bf16 %v28
  %v45 = vunpack.c.l.bf16 %v29
  %v46 = vld [vmem:[%s1] sm:$0x1]
  %v48 = vlaneseq
  %v49 = vshrl.u32 %v48, 7
  %v50 = vsub.s32 0, %v49
  %v51 = vrot.slane %v46, %v50
  %v53 = vmul.f32 %v30, %v51
  %v54 = vmul.f32 %v31, %v51
  %v55 = vmul.f32 %v32, %v51
  %v56 = vmul.f32 %v33, %v51
  %v57 = vmul.f32 %v34, %v51
  %v58 = vmul.f32 %v35, %v51
  %v59 = vmul.f32 %v36, %v51
  %v60 = vmul.f32 %v37, %v51
  %v61 = vmul.f32 %v38, %v51
  %v62 = vmul.f32 %v39, %v51
  %v63 = vmul.f32 %v40, %v51
  %v64 = vmul.f32 %v41, %v51
  %v65 = vmul.f32 %v42, %v51
  %v66 = vmul.f32 %v43, %v51
  %v67 = vmul.f32 %v44, %v51
  %v68 = vmul.f32 %v45, %v51
  %v69 = vld [vmem:[%s2] sm:$0x1]
  %v71 = vlaneseq
  %v72 = vshrl.u32 %v71, 7
  %v73 = vsub.s32 0, %v72
  %v74 = vrot.slane %v69, %v73
  %v76 = vadd.f32 %v53, %v74
  %v77 = vadd.f32 %v54, %v74
  %v78 = vadd.f32 %v55, %v74
  %v79 = vadd.f32 %v56, %v74
  %v80 = vadd.f32 %v57, %v74
  %v81 = vadd.f32 %v58, %v74
  %v82 = vadd.f32 %v59, %v74
  %v83 = vadd.f32 %v60, %v74
  %v84 = vadd.f32 %v61, %v74
  %v85 = vadd.f32 %v62, %v74
  %v86 = vadd.f32 %v63, %v74
  %v87 = vadd.f32 %v64, %v74
  %v88 = vadd.f32 %v65, %v74
  %v89 = vadd.f32 %v66, %v74
  %v90 = vadd.f32 %v67, %v74
  %v91 = vadd.f32 %v68, %v74
  %vm92 = vcmp.ge.f32.partialorder %v76, 0.0
  %vm93 = vcmp.ge.f32.partialorder %v77, 0.0
  %vm94 = vcmp.ge.f32.partialorder %v78, 0.0
  %vm95 = vcmp.ge.f32.partialorder %v79, 0.0
  %vm96 = vcmp.ge.f32.partialorder %v80, 0.0
  %vm97 = vcmp.ge.f32.partialorder %v81, 0.0
  %vm98 = vcmp.ge.f32.partialorder %v82, 0.0
  %vm99 = vcmp.ge.f32.partialorder %v83, 0.0
  %vm100 = vcmp.ge.f32.partialorder %v84, 0.0
  %vm101 = vcmp.ge.f32.partialorder %v85, 0.0
  %vm102 = vcmp.ge.f32.partialorder %v86, 0.0
  %vm103 = vcmp.ge.f32.partialorder %v87, 0.0
  %vm104 = vcmp.ge.f32.partialorder %v88, 0.0
  %vm105 = vcmp.ge.f32.partialorder %v89, 0.0
  %vm106 = vcmp.ge.f32.partialorder %v90, 0.0
  %vm107 = vcmp.ge.f32.partialorder %v91, 0.0
  %v108 = vmul.f32 %v76, 0.2
  %v109 = vmul.f32 %v77, 0.2
  %v110 = vmul.f32 %v78, 0.2
  %v111 = vmul.f32 %v79, 0.2
  %v112 = vmul.f32 %v80, 0.2
  %v113 = vmul.f32 %v81, 0.2
  %v114 = vmul.f32 %v82, 0.2
  %v115 = vmul.f32 %v83, 0.2
  %v116 = vmul.f32 %v84, 0.2
  %v117 = vmul.f32 %v85, 0.2
  %v118 = vmul.f32 %v86, 0.2
  %v119 = vmul.f32 %v87, 0.2
  %v120 = vmul.f32 %v88, 0.2
  %v121 = vmul.f32 %v89, 0.2
  %v122 = vmul.f32 %v90, 0.2
  %v123 = vmul.f32 %v91, 0.2
  %v124 = vsel %vm92, %v76, %v108
  %v125 = vsel %vm93, %v77, %v109
  %v126 = vsel %vm94, %v78, %v110
  %v127 = vsel %vm95, %v79, %v111
  %v128 = vsel %vm96, %v80, %v112
  %v129 = vsel %vm97, %v81, %v113
  %v130 = vsel %vm98, %v82, %v114
  %v131 = vsel %vm99, %v83, %v115
  %v132 = vsel %vm100, %v84, %v116
  %v133 = vsel %vm101, %v85, %v117
  %v134 = vsel %vm102, %v86, %v118
  %v135 = vsel %vm103, %v87, %v119
  %v136 = vsel %vm104, %v88, %v120
  %v137 = vsel %vm105, %v89, %v121
  %v138 = vsel %vm106, %v90, %v122
  %v139 = vsel %vm107, %v91, %v123
  %v140 = vpack.c.bf16 %v125, %v124
  %v141 = vpack.c.bf16 %v127, %v126
  %v142 = vpack.c.bf16 %v129, %v128
  %v143 = vpack.c.bf16 %v131, %v130
  %v144 = vpack.c.bf16 %v133, %v132
  %v145 = vpack.c.bf16 %v135, %v134
  %v146 = vpack.c.bf16 %v137, %v136
  %v147 = vpack.c.bf16 %v139, %v138
  %v156 = vunpack.c.l.b16 %v140
  %v157 = vunpack.c.h.b16 %v140
  %v158 = vunpack.c.l.b16 %v141
  %v159 = vunpack.c.h.b16 %v141
  %v160 = vunpack.c.l.b16 %v142
  %v161 = vunpack.c.h.b16 %v142
  %v162 = vunpack.c.l.b16 %v143
  %v163 = vunpack.c.h.b16 %v143
  %v164 = vunpack.c.l.b16 %v144
  %v165 = vunpack.c.h.b16 %v144
  %v166 = vunpack.c.l.b16 %v145
  %v167 = vunpack.c.h.b16 %v145
  %v168 = vunpack.c.l.b16 %v146
  %v169 = vunpack.c.h.b16 %v146
  %v170 = vunpack.c.l.b16 %v147
  %v171 = vunpack.c.h.b16 %v147
  %v172 = vpack.c.b16 %v156, %v156
  %v173 = vpack.c.b16 %v157, %v157
  %v174 = vpack.c.b16 %v158, %v158
  %v175 = vpack.c.b16 %v159, %v159
  %v176 = vpack.c.b16 %v160, %v160
  %v177 = vpack.c.b16 %v161, %v161
  %v178 = vpack.c.b16 %v162, %v162
  %v179 = vpack.c.b16 %v163, %v163
  %v180 = vpack.c.b16 %v164, %v164
  %v181 = vpack.c.b16 %v165, %v165
  %v182 = vpack.c.b16 %v166, %v166
  %v183 = vpack.c.b16 %v167, %v167
  %v184 = vpack.c.b16 %v168, %v168
  %v185 = vpack.c.b16 %v169, %v169
  %v186 = vpack.c.b16 %v170, %v170
  %v187 = vpack.c.b16 %v171, %v171
  %vm204 = vcmask 519168
  %205 = vst.msk [vmem:[%s3] sm:$0xf] %vm204, %v172
  %206 = vst.msk [vmem:[%s3 + $0x4] sm:$0xf] %vm204, %v173
  %207 = vst.msk [vmem:[%s3 + $0x8] sm:$0xf] %vm204, %v174
  %208 = vst.msk [vmem:[%s3 + $0xc] sm:$0xf] %vm204, %v175
  %209 = vst.msk [vmem:[%s3 + $0x10] sm:$0xf] %vm204, %v176
  %210 = vst.msk [vmem:[%s3 + $0x14] sm:$0xf] %vm204, %v177
  %211 = vst.msk [vmem:[%s3 + $0x18] sm:$0xf] %vm204, %v178
  %212 = vst.msk [vmem:[%s3 + $0x1c] sm:$0xf] %vm204, %v179
  %213 = vst.msk [vmem:[%s3 + $0x20] sm:$0xf] %vm204, %v180
  %214 = vst.msk [vmem:[%s3 + $0x24] sm:$0xf] %vm204, %v181
  %215 = vst.msk [vmem:[%s3 + $0x28] sm:$0xf] %vm204, %v182
  %216 = vst.msk [vmem:[%s3 + $0x2c] sm:$0xf] %vm204, %v183
  %217 = vst.msk [vmem:[%s3 + $0x30] sm:$0xf] %vm204, %v184
  %218 = vst.msk [vmem:[%s3 + $0x34] sm:$0xf] %vm204, %v185
  %219 = vst.msk [vmem:[%s3 + $0x38] sm:$0xf] %vm204, %v186
  %220 = vst.msk [vmem:[%s3 + $0x3c] sm:$0xf] %vm204, %v187
  // Predicated region
  $region14: #{discriminator_forward.12} parent=0 // pred_check
    _
  $region15: #{discriminator_forward.12} parent=0 // pred_check_branch
    %222 = sbr.rel (0) target = $region17
  $region16: #{discriminator_forward.12} parent=0 // pred_region
    _
  $region17: #{discriminator_forward.12} parent=0 // pred_fallthru
    _
  // Predicated region
  $region18: #{discriminator_forward.12} parent=0 // pred_check
    _
  $region19: #{discriminator_forward.12} parent=0 // pred_check_branch
    %224 = sbr.rel (0) target = $region21
  $region20: #{discriminator_forward.12} parent=0 // pred_region
    _
  $region21: #{discriminator_forward.12} parent=0 // pred_fallthru
    _

// kernel: discriminator_forward.13
$region0: #{discriminator_forward.13}
  #allocation0 [shape = 'u32[]', space=smem, size = 0x4, offset = 0x4, fixed_abs, tag = 'smem constant byte address 0x4 - core index']
  #allocation1 [shape = 'u32[144,128]{1,0:T(1,128)}', space=vmem, size = 0x12000, scoped, tag = 'internal scratch']
  #allocation2 [shape = 'f32[32,128]{1,0:T(8,128)}', space=vmem, size = 0x4000, scoped, tag = 'scratch operand']
  %s0 = inlined_call_operand.vmem [shape: bf16[32,1024], index: 0, kind: input, shape index: {}]
  %s1 = inlined_call_operand.vmem [shape: bf16[1024,128], index: 1, kind: input, shape index: {}]
  %s2 = inlined_call_operand.vmem [shape: bf16[32,128], index: 2, kind: output, shape index: {0}]
  %s3 = inlined_call_operand.vmem [shape: f32[1,1,128], index: 3, kind: output, shape index: {1}]
  %s4 = inlined_call_operand.vmem [shape: f32[1,1,128], index: 4, kind: output, shape index: {2}]
  %5 = xla_tuple %s2, %s3, %s4
  %s6 = sld [smem:[#allocation0]]
  $region42: #{discriminator_forward.13} parent=0
    _
  %s8 = ssub.s32 1, %s6
  %s9 = scalar_select 0, %s8, %s6
  // Predicated region
  $region2: #{discriminator_forward.13} parent=0 // pred_check
    _
  $region3: #{discriminator_forward.13} parent=0 // pred_check_branch
    %11 = sbr.rel (0) target = $region5
  $region4: #{discriminator_forward.13} parent=0 // pred_region
    _
  $region5: #{discriminator_forward.13} parent=0 // pred_fallthru
    _
  // Predicated region
  $region6: #{discriminator_forward.13} parent=0 // pred_check
    _
  $region7: #{discriminator_forward.13} parent=0 // pred_check_branch
    %13 = sbr.rel (0) target = $region9
  $region8: #{discriminator_forward.13} parent=0 // pred_region
    _
  $region9: #{discriminator_forward.13} parent=0 // pred_fallthru
    _
  %p15 = scmp.eq.s32.totalorder 0, 0
  // Predicated region
  $region10: #{discriminator_forward.13} parent=0 // pred_check
    %p16 = pneg %p15
  $region11: #{discriminator_forward.13} parent=0 // pred_check_branch
    %18 = sbr.rel (%p16) target = $region13
  $region12: #{discriminator_forward.13} parent=0 // pred_region
    %19 = vst [vmem:[#allocation2] sm:$0xff] 0.0
    %20 = vst [vmem:[#allocation2 + $0x8] sm:$0xff] 0.0
    %21 = vst [vmem:[#allocation2 + $0x10] sm:$0xff] 0.0
    %22 = vst [vmem:[#allocation2 + $0x18] sm:$0xff] 0.0
  $region13: #{discriminator_forward.13} parent=0 // pred_fallthru
    _
  %v23 = vld [vmem:[#allocation2] sm:$0xff]
  %v24 = vld [vmem:[#allocation2 + $0x8] sm:$0xff]
  %v25 = vld [vmem:[#allocation2 + $0x10] sm:$0xff]
  %v26 = vld [vmem:[#allocation2 + $0x18] sm:$0xff]
  %v27 = vld [vmem:[%s0] sm:$0xff]
  %v28 = vld [vmem:[%s0 + $0x8] sm:$0xff]
  %v29 = vld [vmem:[%s0 + $0x10] sm:$0xff]
  %v30 = vld [vmem:[%s0 + $0x18] sm:$0xff]
  %v31 = vld [vmem:[%s0 + $0x20] sm:$0xff]
  %v32 = vld [vmem:[%s0 + $0x28] sm:$0xff]
  %v33 = vld [vmem:[%s0 + $0x30] sm:$0xff]
  %v34 = vld [vmem:[%s0 + $0x38] sm:$0xff]
  %v35 = vld [vmem:[%s0 + $0x40] sm:$0xff]
  %v36 = vld [vmem:[%s0 + $0x48] sm:$0xff]
  %v37 = vld [vmem:[%s0 + $0x50] sm:$0xff]
  %v38 = vld [vmem:[%s0 + $0x58] sm:$0xff]
  %v39 = vld [vmem:[%s0 + $0x60] sm:$0xff]
  %v40 = vld [vmem:[%s0 + $0x68] sm:$0xff]
  %v41 = vld [vmem:[%s0 + $0x70] sm:$0xff]
  %v42 = vld [vmem:[%s0 + $0x78] sm:$0xff]
  %v43 = vld [vmem:[%s1] sm:$0xf]
  %v44 = vld [vmem:[%s1 + $0x4] sm:$0xf]
  %v45 = vld [vmem:[%s1 + $0x8] sm:$0xf]
  %v46 = vld [vmem:[%s1 + $0xc] sm:$0xf]
  %v47 = vld [vmem:[%s1 + $0x10] sm:$0xf]
  %v48 = vld [vmem:[%s1 + $0x14] sm:$0xf]
  %v49 = vld [vmem:[%s1 + $0x18] sm:$0xf]
  %v50 = vld [vmem:[%s1 + $0x1c] sm:$0xf]
  %v51 = vld [vmem:[%s1 + $0x20] sm:$0xf]
  %v52 = vld [vmem:[%s1 + $0x24] sm:$0xf]
  %v53 = vld [vmem:[%s1 + $0x28] sm:$0xf]
  %v54 = vld [vmem:[%s1 + $0x2c] sm:$0xf]
  %v55 = vld [vmem:[%s1 + $0x30] sm:$0xf]
  %v56 = vld [vmem:[%s1 + $0x34] sm:$0xf]
  %v57 = vld [vmem:[%s1 + $0x38] sm:$0xf]
  %v58 = vld [vmem:[%s1 + $0x3c] sm:$0xf]
  %v59 = vld [vmem:[%s1 + $0x40] sm:$0xf]
  %v60 = vld [vmem:[%s1 + $0x44] sm:$0xf]
  %v61 = vld [vmem:[%s1 + $0x48] sm:$0xf]
  %v62 = vld [vmem:[%s1 + $0x4c] sm:$0xf]
  %v63 = vld [vmem:[%s1 + $0x50] sm:$0xf]
  %v64 = vld [vmem:[%s1 + $0x54] sm:$0xf]
  %v65 = vld [vmem:[%s1 + $0x58] sm:$0xf]
  %v66 = vld [vmem:[%s1 + $0x5c] sm:$0xf]
  %v67 = vld [vmem:[%s1 + $0x60] sm:$0xf]
  %v68 = vld [vmem:[%s1 + $0x64] sm:$0xf]
  %v69 = vld [vmem:[%s1 + $0x68] sm:$0xf]
  %v70 = vld [vmem:[%s1 + $0x6c] sm:$0xf]
  %v71 = vld [vmem:[%s1 + $0x70] sm:$0xf]
  %v72 = vld [vmem:[%s1 + $0x74] sm:$0xf]
  %v73 = vld [vmem:[%s1 + $0x78] sm:$0xf]
  %v74 = vld [vmem:[%s1 + $0x7c] sm:$0xf]
  %v75 = vld [vmem:[%s1 + $0x80] sm:$0xf]
  %v76 = vld [vmem:[%s1 + $0x84] sm:$0xf]
  %v77 = vld [vmem:[%s1 + $0x88] sm:$0xf]
  %v78 = vld [vmem:[%s1 + $0x8c] sm:$0xf]
  %v79 = vld [vmem:[%s1 + $0x90] sm:$0xf]
  %v80 = vld [vmem:[%s1 + $0x94] sm:$0xf]
  %v81 = vld [vmem:[%s1 + $0x98] sm:$0xf]
  %v82 = vld [vmem:[%s1 + $0x9c] sm:$0xf]
  %v83 = vld [vmem:[%s1 + $0xa0] sm:$0xf]
  %v84 = vld [vmem:[%s1 + $0xa4] sm:$0xf]
  %v85 = vld [vmem:[%s1 + $0xa8] sm:$0xf]
  %v86 = vld [vmem:[%s1 + $0xac] sm:$0xf]
  %v87 = vld [vmem:[%s1 + $0xb0] sm:$0xf]
  %v88 = vld [vmem:[%s1 + $0xb4] sm:$0xf]
  %v89 = vld [vmem:[%s1 + $0xb8] sm:$0xf]
  %v90 = vld [vmem:[%s1 + $0xbc] sm:$0xf]
  %v91 = vld [vmem:[%s1 + $0xc0] sm:$0xf]
  %v92 = vld [vmem:[%s1 + $0xc4] sm:$0xf]
  %v93 = vld [vmem:[%s1 + $0xc8] sm:$0xf]
  %v94 = vld [vmem:[%s1 + $0xcc] sm:$0xf]
  %v95 = vld [vmem:[%s1 + $0xd0] sm:$0xf]
  %v96 = vld [vmem:[%s1 + $0xd4] sm:$0xf]
  %v97 = vld [vmem:[%s1 + $0xd8] sm:$0xf]
  %v98 = vld [vmem:[%s1 + $0xdc] sm:$0xf]
  %v99 = vld [vmem:[%s1 + $0xe0] sm:$0xf]
  %v100 = vld [vmem:[%s1 + $0xe4] sm:$0xf]
  %v101 = vld [vmem:[%s1 + $0xe8] sm:$0xf]
  %v102 = vld [vmem:[%s1 + $0xec] sm:$0xf]
  %v103 = vld [vmem:[%s1 + $0xf0] sm:$0xf]
  %v104 = vld [vmem:[%s1 + $0xf4] sm:$0xf]
  %v105 = vld [vmem:[%s1 + $0xf8] sm:$0xf]
  %v106 = vld [vmem:[%s1 + $0xfc] sm:$0xf]
  %v107 = vld [vmem:[%s1 + $0x100] sm:$0xf]
  %v108 = vld [vmem:[%s1 + $0x104] sm:$0xf]
  %v109 = vld [vmem:[%s1 + $0x108] sm:$0xf]
  %v110 = vld [vmem:[%s1 + $0x10c] sm:$0xf]
  %v111 = vld [vmem:[%s1 + $0x110] sm:$0xf]
  %v112 = vld [vmem:[%s1 + $0x114] sm:$0xf]
  %v113 = vld [vmem:[%s1 + $0x118] sm:$0xf]
  %v114 = vld [vmem:[%s1 + $0x11c] sm:$0xf]
  %v115 = vld [vmem:[%s1 + $0x120] sm:$0xf]
  %v116 = vld [vmem:[%s1 + $0x124] sm:$0xf]
  %v117 = vld [vmem:[%s1 + $0x128] sm:$0xf]
  %v118 = vld [vmem:[%s1 + $0x12c] sm:$0xf]
  %v119 = vld [vmem:[%s1 + $0x130] sm:$0xf]
  %v120 = vld [vmem:[%s1 + $0x134] sm:$0xf]
  %v121 = vld [vmem:[%s1 + $0x138] sm:$0xf]
  %v122 = vld [vmem:[%s1 + $0x13c] sm:$0xf]
  %v123 = vld [vmem:[%s1 + $0x140] sm:$0xf]
  %v124 = vld [vmem:[%s1 + $0x144] sm:$0xf]
  %v125 = vld [vmem:[%s1 + $0x148] sm:$0xf]
  %v126 = vld [vmem:[%s1 + $0x14c] sm:$0xf]
  %v127 = vld [vmem:[%s1 + $0x150] sm:$0xf]
  %v128 = vld [vmem:[%s1 + $0x154] sm:$0xf]
  %v129 = vld [vmem:[%s1 + $0x158] sm:$0xf]
  %v130 = vld [vmem:[%s1 + $0x15c] sm:$0xf]
  %v131 = vld [vmem:[%s1 + $0x160] sm:$0xf]
  %v132 = vld [vmem:[%s1 + $0x164] sm:$0xf]
  %v133 = vld [vmem:[%s1 + $0x168] sm:$0xf]
  %v134 = vld [vmem:[%s1 + $0x16c] sm:$0xf]
  %v135 = vld [vmem:[%s1 + $0x170] sm:$0xf]
  %v136 = vld [vmem:[%s1 + $0x174] sm:$0xf]
  %v137 = vld [vmem:[%s1 + $0x178] sm:$0xf]
  %v138 = vld [vmem:[%s1 + $0x17c] sm:$0xf]
  %v139 = vld [vmem:[%s1 + $0x180] sm:$0xf]
  %v140 = vld [vmem:[%s1 + $0x184] sm:$0xf]
  %v141 = vld [vmem:[%s1 + $0x188] sm:$0xf]
  %v142 = vld [vmem:[%s1 + $0x18c] sm:$0xf]
  %v143 = vld [vmem:[%s1 + $0x190] sm:$0xf]
  %v144 = vld [vmem:[%s1 + $0x194] sm:$0xf]
  %v145 = vld [vmem:[%s1 + $0x198] sm:$0xf]
  %v146 = vld [vmem:[%s1 + $0x19c] sm:$0xf]
  %v147 = vld [vmem:[%s1 + $0x1a0] sm:$0xf]
  %v148 = vld [vmem:[%s1 + $0x1a4] sm:$0xf]
  %v149 = vld [vmem:[%s1 + $0x1a8] sm:$0xf]
  %v150 = vld [vmem:[%s1 + $0x1ac] sm:$0xf]
  %v151 = vld [vmem:[%s1 + $0x1b0] sm:$0xf]
  %v152 = vld [vmem:[%s1 + $0x1b4] sm:$0xf]
  %v153 = vld [vmem:[%s1 + $0x1b8] sm:$0xf]
  %v154 = vld [vmem:[%s1 + $0x1bc] sm:$0xf]
  %v155 = vld [vmem:[%s1 + $0x1c0] sm:$0xf]
  %v156 = vld [vmem:[%s1 + $0x1c4] sm:$0xf]
  %v157 = vld [vmem:[%s1 + $0x1c8] sm:$0xf]
  %v158 = vld [vmem:[%s1 + $0x1cc] sm:$0xf]
  %v159 = vld [vmem:[%s1 + $0x1d0] sm:$0xf]
  %v160 = vld [vmem:[%s1 + $0x1d4] sm:$0xf]
  %v161 = vld [vmem:[%s1 + $0x1d8] sm:$0xf]
  %v162 = vld [vmem:[%s1 + $0x1dc] sm:$0xf]
  %v163 = vld [vmem:[%s1 + $0x1e0] sm:$0xf]
  %v164 = vld [vmem:[%s1 + $0x1e4] sm:$0xf]
  %v165 = vld [vmem:[%s1 + $0x1e8] sm:$0xf]
  %v166 = vld [vmem:[%s1 + $0x1ec] sm:$0xf]
  %v167 = vld [vmem:[%s1 + $0x1f0] sm:$0xf]
  %v168 = vld [vmem:[%s1 + $0x1f4] sm:$0xf]
  %v169 = vld [vmem:[%s1 + $0x1f8] sm:$0xf]
  %v170 = vld [vmem:[%s1 + $0x1fc] sm:$0xf]
  %v187 = vunpack.c.l.b16 %v27
  %v188 = vunpack.c.h.b16 %v27
  %v189 = vunpack.c.l.b16 %v28
  %v190 = vunpack.c.h.b16 %v28
  %v191 = vunpack.c.l.b16 %v29
  %v192 = vunpack.c.h.b16 %v29
  %v193 = vunpack.c.l.b16 %v30
  %v194 = vunpack.c.h.b16 %v30
  %v195 = vunpack.c.l.b16 %v31
  %v196 = vunpack.c.h.b16 %v31
  %v197 = vunpack.c.l.b16 %v32
  %v198 = vunpack.c.h.b16 %v32
  %v199 = vunpack.c.l.b16 %v33
  %v200 = vunpack.c.h.b16 %v33
  %v201 = vunpack.c.l.b16 %v34
  %v202 = vunpack.c.h.b16 %v34
  %v203 = vunpack.c.l.b16 %v35
  %v204 = vunpack.c.h.b16 %v35
  %v205 = vunpack.c.l.b16 %v36
  %v206 = vunpack.c.h.b16 %v36
  %v207 = vunpack.c.l.b16 %v37
  %v208 = vunpack.c.h.b16 %v37
  %v209 = vunpack.c.l.b16 %v38
  %v210 = vunpack.c.h.b16 %v38
  %v211 = vunpack.c.l.b16 %v39
  %v212 = vunpack.c.h.b16 %v39
  %v213 = vunpack.c.l.b16 %v40
  %v214 = vunpack.c.h.b16 %v40
  %v215 = vunpack.c.l.b16 %v41
  %v216 = vunpack.c.h.b16 %v41
  %v217 = vunpack.c.l.b16 %v42
  %v218 = vunpack.c.h.b16 %v42
  %v219 = vpack.c.b16 %v195, %v187
  %v220 = vpack.c.b16 %v196, %v188
  %v221 = vpack.c.b16 %v197, %v189
  %v222 = vpack.c.b16 %v198, %v190
  %v223 = vpack.c.b16 %v199, %v191
  %v224 = vpack.c.b16 %v200, %v192
  %v225 = vpack.c.b16 %v201, %v193
  %v226 = vpack.c.b16 %v202, %v194
  %v227 = vpack.c.b16 %v211, %v203
  %v228 = vpack.c.b16 %v212, %v204
  %v229 = vpack.c.b16 %v213, %v205
  %v230 = vpack.c.b16 %v214, %v206
  %v231 = vpack.c.b16 %v215, %v207
  %v232 = vpack.c.b16 %v216, %v208
  %v233 = vpack.c.b16 %v217, %v209
  %v234 = vpack.c.b16 %v218, %v210
  %v379 = vunpack.c.l.b16 %v43
  %v380 = vunpack.c.l.b16 %v44
  %v381 = vunpack.c.l.b16 %v45
  %v382 = vunpack.c.l.b16 %v46
  %v383 = vunpack.c.l.b16 %v47
  %v384 = vunpack.c.l.b16 %v48
  %v385 = vunpack.c.l.b16 %v49
  %v386 = vunpack.c.l.b16 %v50
  %v387 = vunpack.c.l.b16 %v51
  %v388 = vunpack.c.l.b16 %v52
  %v389 = vunpack.c.l.b16 %v53
  %v390 = vunpack.c.l.b16 %v54
  %v391 = vunpack.c.l.b16 %v55
  %v392 = vunpack.c.l.b16 %v56
  %v393 = vunpack.c.l.b16 %v57
  %v394 = vunpack.c.l.b16 %v58
  %v395 = vunpack.c.l.b16 %v59
  %v396 = vunpack.c.l.b16 %v60
  %v397 = vunpack.c.l.b16 %v61
  %v398 = vunpack.c.l.b16 %v62
  %v399 = vunpack.c.l.b16 %v63
  %v400 = vunpack.c.l.b16 %v64
  %v401 = vunpack.c.l.b16 %v65
  %v402 = vunpack.c.l.b16 %v66
  %v403 = vunpack.c.l.b16 %v67
  %v404 = vunpack.c.l.b16 %v68
  %v405 = vunpack.c.l.b16 %v69
  %v406 = vunpack.c.l.b16 %v70
  %v407 = vunpack.c.l.b16 %v71
  %v408 = vunpack.c.l.b16 %v72
  %v409 = vunpack.c.l.b16 %v73
  %v410 = vunpack.c.l.b16 %v74
  %v411 = vunpack.c.l.b16 %v75
  %v412 = vunpack.c.l.b16 %v76
  %v413 = vunpack.c.l.b16 %v77
  %v414 = vunpack.c.l.b16 %v78
  %v415 = vunpack.c.l.b16 %v79
  %v416 = vunpack.c.l.b16 %v80
  %v417 = vunpack.c.l.b16 %v81
  %v418 = vunpack.c.l.b16 %v82
  %v419 = vunpack.c.l.b16 %v83
  %v420 = vunpack.c.l.b16 %v84
  %v421 = vunpack.c.l.b16 %v85
  %v422 = vunpack.c.l.b16 %v86
  %v423 = vunpack.c.l.b16 %v87
  %v424 = vunpack.c.l.b16 %v88
  %v425 = vunpack.c.l.b16 %v89
  %v426 = vunpack.c.l.b16 %v90
  %v427 = vunpack.c.l.b16 %v91
  %v428 = vunpack.c.l.b16 %v92
  %v429 = vunpack.c.l.b16 %v93
  %v430 = vunpack.c.l.b16 %v94
  %v431 = vunpack.c.l.b16 %v95
  %v432 = vunpack.c.l.b16 %v96
  %v433 = vunpack.c.l.b16 %v97
  %v434 = vunpack.c.l.b16 %v98
  %v435 = vunpack.c.l.b16 %v99
  %v436 = vunpack.c.l.b16 %v100
  %v437 = vunpack.c.l.b16 %v101
  %v438 = vunpack.c.l.b16 %v102
  %v439 = vunpack.c.l.b16 %v103
  %v440 = vunpack.c.l.b16 %v104
  %v441 = vunpack.c.l.b16 %v105
  %v442 = vunpack.c.l.b16 %v106
  %v443 = vunpack.c.l.b16 %v107
  %v444 = vunpack.c.l.b16 %v108
  %v445 = vunpack.c.l.b16 %v109
  %v446 = vunpack.c.l.b16 %v110
  %v447 = vunpack.c.l.b16 %v111
  %v448 = vunpack.c.l.b16 %v112
  %v449 = vunpack.c.l.b16 %v113
  %v450 = vunpack.c.l.b16 %v114
  %v451 = vunpack.c.l.b16 %v115
  %v452 = vunpack.c.l.b16 %v116
  %v453 = vunpack.c.l.b16 %v117
  %v454 = vunpack.c.l.b16 %v118
  %v455 = vunpack.c.l.b16 %v119
  %v456 = vunpack.c.l.b16 %v120
  %v457 = vunpack.c.l.b16 %v121
  %v458 = vunpack.c.l.b16 %v122
  %v459 = vunpack.c.l.b16 %v123
  %v460 = vunpack.c.l.b16 %v124
  %v461 = vunpack.c.l.b16 %v125
  %v462 = vunpack.c.l.b16 %v126
  %v463 = vunpack.c.l.b16 %v127
  %v464 = vunpack.c.l.b16 %v128
  %v465 = vunpack.c.l.b16 %v129
  %v466 = vunpack.c.l.b16 %v130
  %v467 = vunpack.c.l.b16 %v131
  %v468 = vunpack.c.l.b16 %v132
  %v469 = vunpack.c.l.b16 %v133
  %v470 = vunpack.c.l.b16 %v134
  %v471 = vunpack.c.l.b16 %v135
  %v472 = vunpack.c.l.b16 %v136
  %v473 = vunpack.c.l.b16 %v137
  %v474 = vunpack.c.l.b16 %v138
  %v475 = vunpack.c.l.b16 %v139
  %v476 = vunpack.c.l.b16 %v140
  %v477 = vunpack.c.l.b16 %v141
  %v478 = vunpack.c.l.b16 %v142
  %v479 = vunpack.c.l.b16 %v143
  %v480 = vunpack.c.l.b16 %v144
  %v481 = vunpack.c.l.b16 %v145
  %v482 = vunpack.c.l.b16 %v146
  %v483 = vunpack.c.l.b16 %v147
  %v484 = vunpack.c.l.b16 %v148
  %v485 = vunpack.c.l.b16 %v149
  %v486 = vunpack.c.l.b16 %v150
  %v487 = vunpack.c.l.b16 %v151
  %v488 = vunpack.c.l.b16 %v152
  %v489 = vunpack.c.l.b16 %v153
  %v490 = vunpack.c.l.b16 %v154
  %v491 = vunpack.c.l.b16 %v155
  %v492 = vunpack.c.l.b16 %v156
  %v493 = vunpack.c.l.b16 %v157
  %v494 = vunpack.c.l.b16 %v158
  %v495 = vunpack.c.l.b16 %v159
  %v496 = vunpack.c.l.b16 %v160
  %v497 = vunpack.c.l.b16 %v161
  %v498 = vunpack.c.l.b16 %v162
  %v499 = vunpack.c.l.b16 %v163
  %v500 = vunpack.c.l.b16 %v164
  %v501 = vunpack.c.l.b16 %v165
  %v502 = vunpack.c.l.b16 %v166
  %v503 = vunpack.c.l.b16 %v167
  %v504 = vunpack.c.l.b16 %v168
  %v505 = vunpack.c.l.b16 %v169
  %v506 = vunpack.c.l.b16 %v170
  %v507 = vpack.c.b16 %v380, %v379
  %v508 = vpack.c.b16 %v382, %v381
  %v509 = vpack.c.b16 %v384, %v383
  %v510 = vpack.c.b16 %v386, %v385
  %v511 = vpack.c.b16 %v388, %v387
  %v512 = vpack.c.b16 %v390, %v389
  %v513 = vpack.c.b16 %v392, %v391
  %v514 = vpack.c.b16 %v394, %v393
  %v515 = vpack.c.b16 %v396, %v395
  %v516 = vpack.c.b16 %v398, %v397
  %v517 = vpack.c.b16 %v400, %v399
  %v518 = vpack.c.b16 %v402, %v401
  %v519 = vpack.c.b16 %v404, %v403
  %v520 = vpack.c.b16 %v406, %v405
  %v521 = vpack.c.b16 %v408, %v407
  %v522 = vpack.c.b16 %v410, %v409
  %v523 = vpack.c.b16 %v412, %v411
  %v524 = vpack.c.b16 %v414, %v413
  %v525 = vpack.c.b16 %v416, %v415
  %v526 = vpack.c.b16 %v418, %v417
  %v527 = vpack.c.b16 %v420, %v419
  %v528 = vpack.c.b16 %v422, %v421
  %v529 = vpack.c.b16 %v424, %v423
  %v530 = vpack.c.b16 %v426, %v425
  %v531 = vpack.c.b16 %v428, %v427
  %v532 = vpack.c.b16 %v430, %v429
  %v533 = vpack.c.b16 %v432, %v431
  %v534 = vpack.c.b16 %v434, %v433
  %v535 = vpack.c.b16 %v436, %v435
  %v536 = vpack.c.b16 %v438, %v437
  %v537 = vpack.c.b16 %v440, %v439
  %v538 = vpack.c.b16 %v442, %v441
  %v539 = vpack.c.b16 %v444, %v443
  %v540 = vpack.c.b16 %v446, %v445
  %v541 = vpack.c.b16 %v448, %v447
  %v542 = vpack.c.b16 %v450, %v449
  %v543 = vpack.c.b16 %v452, %v451
  %v544 = vpack.c.b16 %v454, %v453
  %v545 = vpack.c.b16 %v456, %v455
  %v546 = vpack.c.b16 %v458, %v457
  %v547 = vpack.c.b16 %v460, %v459
  %v548 = vpack.c.b16 %v462, %v461
  %v549 = vpack.c.b16 %v464, %v463
  %v550 = vpack.c.b16 %v466, %v465
  %v551 = vpack.c.b16 %v468, %v467
  %v552 = vpack.c.b16 %v470, %v469
  %v553 = vpack.c.b16 %v472, %v471
  %v554 = vpack.c.b16 %v474, %v473
  %v555 = vpack.c.b16 %v476, %v475
  %v556 = vpack.c.b16 %v478, %v477
  %v557 = vpack.c.b16 %v480, %v479
  %v558 = vpack.c.b16 %v482, %v481
  %v559 = vpack.c.b16 %v484, %v483
  %v560 = vpack.c.b16 %v486, %v485
  %v561 = vpack.c.b16 %v488, %v487
  %v562 = vpack.c.b16 %v490, %v489
  %v563 = vpack.c.b16 %v492, %v491
  %v564 = vpack.c.b16 %v494, %v493
  %v565 = vpack.c.b16 %v496, %v495
  %v566 = vpack.c.b16 %v498, %v497
  %v567 = vpack.c.b16 %v500, %v499
  %v568 = vpack.c.b16 %v502, %v501
  %v569 = vpack.c.b16 %v504, %v503
  %v570 = vpack.c.b16 %v506, %v505
  %635 = vmatprep.subr.bf16.mxu0 0
  %636 = vmatpush1.bf16.msra.mxu0 %v507
  %637 = vmatprep.subr.bf16.mxu0 0
  %638 = vmatpush1.bf16.msra.mxu0 %v508
  %639 = vmatprep.subr.bf16.mxu0 0
  %640 = vmatpush1.bf16.msra.mxu0 %v509
  %641 = vmatprep.subr.bf16.mxu0 0
  %642 = vmatpush1.bf16.msra.mxu0 %v510
  %643 = vmatprep.subr.bf16.mxu0 0
  %644 = vmatpush1.bf16.msra.mxu0 %v511
  %645 = vmatprep.subr.bf16.mxu0 0
  %646 = vmatpush1.bf16.msra.mxu0 %v512
  %647 = vmatprep.subr.bf16.mxu0 0
  %648 = vmatpush1.bf16.msra.mxu0 %v513
  %649 = vmatprep.subr.bf16.mxu0 0
  %650 = vmatpush1.bf16.msra.mxu0 %v514
  %651 = vmatprep.subr.bf16.mxu0 0
  %652 = vmatpush1.bf16.msra.mxu0 %v515
  %653 = vmatprep.subr.bf16.mxu0 0
  %654 = vmatpush1.bf16.msra.mxu0 %v516
  %655 = vmatprep.subr.bf16.mxu0 0
  %656 = vmatpush1.bf16.msra.mxu0 %v517
  %657 = vmatprep.subr.bf16.mxu0 0
  %658 = vmatpush1.bf16.msra.mxu0 %v518
  %659 = vmatprep.subr.bf16.mxu0 0
  %660 = vmatpush1.bf16.msra.mxu0 %v519
  %661 = vmatprep.subr.bf16.mxu0 0
  %662 = vmatpush1.bf16.msra.mxu0 %v520
  %663 = vmatprep.subr.bf16.mxu0 0
  %664 = vmatpush1.bf16.msra.mxu0 %v521
  %665 = vmatprep.subr.bf16.mxu0 0
  %666 = vmatpush1.bf16.msra.mxu0 %v522
  %667 = vmatprep.mubr.bf16.mxu0 %v220
  %668 = vmatmul.mubr.bf16.gmra.mrb[0].mxu0 %v219
  %v669 = vpop.f32.mrb[0].mxu0
  %v670 = vadd.f32 0.0, %v669
  %v671 = vpop.f32.mrb[0].mxu0
  %v672 = vpop.f32.mrb[0].mxu0
  %v673 = vadd.f32 0.0, %v672
  %v674 = vpop.f32.mrb[0].mxu0
  %675 = vmatprep.mubr.bf16.mxu0 %v228
  %676 = vmatmul.mubr.bf16.gmra.mrb[0].mxu0 %v227
  %v677 = vpop.f32.mrb[0].mxu0
  %v678 = vadd.f32 0.0, %v677
  %v679 = vpop.f32.mrb[0].mxu0
  %v680 = vpop.f32.mrb[0].mxu0
  %v681 = vadd.f32 0.0, %v680
  %v682 = vpop.f32.mrb[0].mxu0
  %683 = vdwg.mxu0
  %684 = vmatprep.subr.bf16.mxu0 0
  %685 = vmatpush1.bf16.msra.mxu0 %v523
  %686 = vmatprep.subr.bf16.mxu0 0
  %687 = vmatpush1.bf16.msra.mxu0 %v524
  %688 = vmatprep.subr.bf16.mxu0 0
  %689 = vmatpush1.bf16.msra.mxu0 %v525
  %690 = vmatprep.subr.bf16.mxu0 0
  %691 = vmatpush1.bf16.msra.mxu0 %v526
  %692 = vmatprep.subr.bf16.mxu0 0
  %693 = vmatpush1.bf16.msra.mxu0 %v527
  %694 = vmatprep.subr.bf16.mxu0 0
  %695 = vmatpush1.bf16.msra.mxu0 %v528
  %696 = vmatprep.subr.bf16.mxu0 0
  %697 = vmatpush1.bf16.msra.mxu0 %v529
  %698 = vmatprep.subr.bf16.mxu0 0
  %699 = vmatpush1.bf16.msra.mxu0 %v530
  %700 = vmatprep.subr.bf16.mxu0 0
  %701 = vmatpush1.bf16.msra.mxu0 %v531
  %702 = vmatprep.subr.bf16.mxu0 0
  %703 = vmatpush1.bf16.msra.mxu0 %v532
  %704 = vmatprep.subr.bf16.mxu0 0
  %705 = vmatpush1.bf16.msra.mxu0 %v533
  %706 = vmatprep.subr.bf16.mxu0 0
  %707 = vmatpush1.bf16.msra.mxu0 %v534
  %708 = vmatprep.subr.bf16.mxu0 0
  %709 = vmatpush1.bf16.msra.mxu0 %v535
  %710 = vmatprep.subr.bf16.mxu0 0
  %711 = vmatpush1.bf16.msra.mxu0 %v536
  %712 = vmatprep.subr.bf16.mxu0 0
  %713 = vmatpush1.bf16.msra.mxu0 %v537
  %714 = vmatprep.subr.bf16.mxu0 0
  %715 = vmatpush1.bf16.msra.mxu0 %v538
  %716 = vmatprep.mubr.bf16.mxu0 %v222
  %717 = vmatmul.mubr.bf16.gmra.mrb[0].mxu0 %v221
  %v718 = vpop.f32.mrb[0].mxu0
  %v719 = vadd.f32 %v670, %v718
  %v720 = vpop.f32.mrb[0].mxu0
  %v721 = vpop.f32.mrb[0].mxu0
  %v722 = vadd.f32 %v673, %v721
  %v723 = vpop.f32.mrb[0].mxu0
  %724 = vmatprep.mubr.bf16.mxu0 %v230
  %725 = vmatmul.mubr.bf16.gmra.mrb[0].mxu0 %v229
  %v726 = vpop.f32.mrb[0].mxu0
  %v727 = vadd.f32 %v678, %v726
  %v728 = vpop.f32.mrb[0].mxu0
  %v729 = vpop.f32.mrb[0].mxu0
  %v730 = vadd.f32 %v681, %v729
  %v731 = vpop.f32.mrb[0].mxu0
  %732 = vdwg.mxu0
  %733 = vmatprep.subr.bf16.mxu0 0
  %734 = vmatpush1.bf16.msra.mxu0 %v539
  %735 = vmatprep.subr.bf16.mxu0 0
  %736 = vmatpush1.bf16.msra.mxu0 %v540
  %737 = vmatprep.subr.bf16.mxu0 0
  %738 = vmatpush1.bf16.msra.mxu0 %v541
  %739 = vmatprep.subr.bf16.mxu0 0
  %740 = vmatpush1.bf16.msra.mxu0 %v542
  %741 = vmatprep.subr.bf16.mxu0 0
  %742 = vmatpush1.bf16.msra.mxu0 %v543
  %743 = vmatprep.subr.bf16.mxu0 0
  %744 = vmatpush1.bf16.msra.mxu0 %v544
  %745 = vmatprep.subr.bf16.mxu0 0
  %746 = vmatpush1.bf16.msra.mxu0 %v545
  %747 = vmatprep.subr.bf16.mxu0 0
  %748 = vmatpush1.bf16.msra.mxu0 %v546
  %749 = vmatprep.subr.bf16.mxu0 0
  %750 = vmatpush1.bf16.msra.mxu0 %v547
  %751 = vmatprep.subr.bf16.mxu0 0
  %752 = vmatpush1.bf16.msra.mxu0 %v548
  %753 = vmatprep.subr.bf16.mxu0 0
  %754 = vmatpush1.bf16.msra.mxu0 %v549
  %755 = vmatprep.subr.bf16.mxu0 0
  %756 = vmatpush1.bf16.msra.mxu0 %v550
  %757 = vmatprep.subr.bf16.mxu0 0
  %758 = vmatpush1.bf16.msra.mxu0 %v551
  %759 = vmatprep.subr.bf16.mxu0 0
  %760 = vmatpush1.bf16.msra.mxu0 %v552
  %761 = vmatprep.subr.bf16.mxu0 0
  %762 = vmatpush1.bf16.msra.mxu0 %v553
  %763 = vmatprep.subr.bf16.mxu0 0
  %764 = vmatpush1.bf16.msra.mxu0 %v554
  %765 = vmatprep.mubr.bf16.mxu0 %v224
  %766 = vmatmul.mubr.bf16.gmra.mrb[0].mxu0 %v223
  %v767 = vpop.f32.mrb[0].mxu0
  %v768 = vadd.f32 %v719, %v767
  %v769 = vpop.f32.mrb[0].mxu0
  %v770 = vpop.f32.mrb[0].mxu0
  %v771 = vadd.f32 %v722, %v770
  %v772 = vpop.f32.mrb[0].mxu0
  %773 = vmatprep.mubr.bf16.mxu0 %v232
  %774 = vmatmul.mubr.bf16.gmra.mrb[0].mxu0 %v231
  %v775 = vpop.f32.mrb[0].mxu0
  %v776 = vadd.f32 %v727, %v775
  %v777 = vpop.f32.mrb[0].mxu0
  %v778 = vpop.f32.mrb[0].mxu0
  %v779 = vadd.f32 %v730, %v778
  %v780 = vpop.f32.mrb[0].mxu0
  %781 = vdwg.mxu0
  %782 = vmatprep.subr.bf16.mxu0 0
  %783 = vmatpush1.bf16.msra.mxu0 %v555
  %784 = vmatprep.subr.bf16.mxu0 0
  %785 = vmatpush1.bf16.msra.mxu0 %v556
  %786 = vmatprep.subr.bf16.mxu0 0
  %787 = vmatpush1.bf16.msra.mxu0 %v557
  %788 = vmatprep.subr.bf16.mxu0 0
  %789 = vmatpush1.bf16.msra.mxu0 %v558
  %790 = vmatprep.subr.bf16.mxu0 0
  %791 = vmatpush1.bf16.msra.mxu0 %v559
  %792 = vmatprep.subr.bf16.mxu0 0
  %793 = vmatpush1.bf16.msra.mxu0 %v560
  %794 = vmatprep.subr.bf16.mxu0 0
  %795 = vmatpush1.bf16.msra.mxu0 %v561
  %796 = vmatprep.subr.bf16.mxu0 0
  %797 = vmatpush1.bf16.msra.mxu0 %v562
  %798 = vmatprep.subr.bf16.mxu0 0
  %799 = vmatpush1.bf16.msra.mxu0 %v563
  %800 = vmatprep.subr.bf16.mxu0 0
  %801 = vmatpush1.bf16.msra.mxu0 %v564
  %802 = vmatprep.subr.bf16.mxu0 0
  %803 = vmatpush1.bf16.msra.mxu0 %v565
  %804 = vmatprep.subr.bf16.mxu0 0
  %805 = vmatpush1.bf16.msra.mxu0 %v566
  %806 = vmatprep.subr.bf16.mxu0 0
  %807 = vmatpush1.bf16.msra.mxu0 %v567
  %808 = vmatprep.subr.bf16.mxu0 0
  %809 = vmatpush1.bf16.msra.mxu0 %v568
  %810 = vmatprep.subr.bf16.mxu0 0
  %811 = vmatpush1.bf16.msra.mxu0 %v569
  %812 = vmatprep.subr.bf16.mxu0 0
  %813 = vmatpush1.bf16.msra.mxu0 %v570
  %814 = vmatprep.mubr.bf16.mxu0 %v226
  %815 = vmatmul.mubr.bf16.gmra.mrb[0].mxu0 %v225
  %v816 = vpop.f32.mrb[0].mxu0
  %v817 = vadd.f32 %v768, %v816
  %v818 = vpop.f32.mrb[0].mxu0
  %v819 = vpop.f32.mrb[0].mxu0
  %v820 = vadd.f32 %v771, %v819
  %v821 = vpop.f32.mrb[0].mxu0
  %822 = vmatprep.mubr.bf16.mxu0 %v234
  %823 = vmatmul.mubr.bf16.gmra.mrb[0].mxu0 %v233
  %v824 = vpop.f32.mrb[0].mxu0
  %v825 = vadd.f32 %v776, %v824
  %v826 = vpop.f32.mrb[0].mxu0
  %v827 = vpop.f32.mrb[0].mxu0
  %v828 = vadd.f32 %v779, %v827
  %v829 = vpop.f32.mrb[0].mxu0
  %830 = vdwg.mxu0
  %v831 = vadd.f32 %v23, %v817
  %v832 = vadd.f32 %v24, %v820
  %v833 = vadd.f32 %v25, %v825
  %v834 = vadd.f32 %v26, %v828
  %835 = vst [vmem:[#allocation2] sm:$0xff] %v831
  %836 = vst [vmem:[#allocation2 + $0x8] sm:$0xff] %v832
  %837 = vst [vmem:[#allocation2 + $0x10] sm:$0xff] %v833
  %838 = vst [vmem:[#allocation2 + $0x18] sm:$0xff] %v834
  // Predicated region
  $region14: #{discriminator_forward.13} parent=0 // pred_check
    %p839 = pneg %p15
  $region15: #{discriminator_forward.13} parent=0 // pred_check_branch
    %841 = sbr.rel (%p839) target = $region17
  $region16: #{discriminator_forward.13} parent=0 // pred_region
    %v842 = vld [vmem:[#allocation2] sm:$0xff]
    %v843 = vld [vmem:[#allocation2 + $0x8] sm:$0xff]
    %v844 = vld [vmem:[#allocation2 + $0x10] sm:$0xff]
    %v845 = vld [vmem:[#allocation2 + $0x18] sm:$0xff]
    %v846 = vpack.c.bf16 %v843, %v842
    %v847 = vpack.c.bf16 %v845, %v844
    %v850 = vunpack.c.l.b16 %v846
    %v851 = vunpack.c.h.b16 %v846
    %v852 = vunpack.c.l.b16 %v847
    %v853 = vunpack.c.h.b16 %v847
    %v854 = vpack.c.b16 %v850, %v850
    %v855 = vpack.c.b16 %v851, %v851
    %v856 = vpack.c.b16 %v852, %v852
    %v857 = vpack.c.b16 %v853, %v853
    %862 = vst [vmem:[%s2] sm:$0xf] %v854
    %863 = vst [vmem:[%s2 + $0x4] sm:$0xf] %v855
    %864 = vst [vmem:[%s2 + $0x8] sm:$0xf] %v856
    %865 = vst [vmem:[%s2 + $0xc] sm:$0xf] %v857
    %v866 = vadd.f32 %v842, %v843
    %v867 = vadd.f32 %v866, %v844
    %v868 = vadd.f32 %v867, %v845
    %v869 = vrot.slane %v868, 4
    %v870 = vadd.f32 %v868, %v869
    %v871 = vrot.slane %v870, 2
    %v872 = vadd.f32 %v870, %v871
    %v873 = vrot.slane %v872, 1
    %v874 = vadd.f32 %v872, %v873
    %875 = vst [vmem:[%s3] sm:$0x1] %v874
    %v876 = vmul.f32 %v842, %v842
    %v877 = vmul.f32 %v843, %v843
    %v878 = vmul.f32 %v844, %v844
    %v879 = vmul.f32 %v845, %v845
    %v880 = vadd.f32 %v876, %v877
    %v881 = vadd.f32 %v880, %v878
    %v882 = vadd.f32 %v881, %v879
    %v883 = vrot.slane %v882, 4
    %v884 = vadd.f32 %v882, %v883
    %v885 = vrot.slane %v884, 2
    %v886 = vadd.f32 %v884, %v885
    %v887 = vrot.slane %v886, 1
    %v888 = vadd.f32 %v886, %v887
    %889 = vst [vmem:[%s4] sm:$0x1] %v888
  $region17: #{discriminator_forward.13} parent=0 // pred_fallthru
    _
  // Predicated region
  $region18: #{discriminator_forward.13} parent=0 // pred_check
    _
  $region19: #{discriminator_forward.13} parent=0 // pred_check_branch
    %891 = sbr.rel (0) target = $region21
  $region20: #{discriminator_forward.13} parent=0 // pred_region
    _
  $region21: #{discriminator_forward.13} parent=0 // pred_fallthru
    _
  // Predicated region
  $region22: #{discriminator_forward.13} parent=0 // pred_check
    _
  $region23: #{discriminator_forward.13} parent=0 // pred_check_branch
    %893 = sbr.rel (0) target = $region25
  $region24: #{discriminator_forward.13} parent=0 // pred_region
    _
  $region25: #{discriminator_forward.13} parent=0 // pred_fallthru
    _
  // Predicated region
  $region26: #{discriminator_forward.13} parent=0 // pred_check
    _
  $region27: #{discriminator_forward.13} parent=0 // pred_check_branch
    %895 = sbr.rel (0) target = $region29
  $region28: #{discriminator_forward.13} parent=0 // pred_region
    _
  $region29: #{discriminator_forward.13} parent=0 // pred_fallthru
    _
  // Predicated region
  $region30: #{discriminator_forward.13} parent=0 // pred_check
    _
  $region31: #{discriminator_forward.13} parent=0 // pred_check_branch
    %897 = sbr.rel (0) target = $region33
  $region32: #{discriminator_forward.13} parent=0 // pred_region
    _
  $region33: #{discriminator_forward.13} parent=0 // pred_fallthru
    _
  // Predicated region
  $region34: #{discriminator_forward.13} parent=0 // pred_check
    _
  $region35: #{discriminator_forward.13} parent=0 // pred_check_branch
    %899 = sbr.rel (0) target = $region37
  $region36: #{discriminator_forward.13} parent=0 // pred_region
    _
  $region37: #{discriminator_forward.13} parent=0 // pred_fallthru
    _
  // Predicated region
  $region38: #{discriminator_forward.13} parent=0 // pred_check
    _
  $region39: #{discriminator_forward.13} parent=0 // pred_check_branch
    %901 = sbr.rel (0) target = $region41
  $region40: #{discriminator_forward.13} parent=0 // pred_region
    _
  $region41: #{discriminator_forward.13} parent=0 // pred_fallthru
    _

// kernel: discriminator_forward.14
$region0: #{discriminator_forward.14}
  #allocation0 [shape = 'u32[]', space=smem, size = 0x4, offset = 0x4, fixed_abs, tag = 'smem constant byte address 0x4 - core index']
  #allocation1 [shape = 'u32[144,128]{1,0:T(1,128)}', space=vmem, size = 0x12000, scoped, tag = 'internal scratch']
  %s0 = inlined_call_operand.vmem [shape: bf16[32,128], index: 0, kind: input, shape index: {}]
  %s1 = inlined_call_operand.vmem [shape: f32[1,128], index: 1, kind: input, shape index: {}]
  %s2 = inlined_call_operand.vmem [shape: f32[1,128], index: 2, kind: input, shape index: {}]
  %s3 = inlined_call_operand.vmem [shape: bf16[32,128], index: 3, kind: output, shape index: {}]
  %s4 = sld [smem:[#allocation0]]
  $region22: #{discriminator_forward.14} parent=0
    _
  %s6 = ssub.s32 1, %s4
  %s7 = scalar_select 0, %s6, %s4
  // Predicated region
  $region2: #{discriminator_forward.14} parent=0 // pred_check
    _
  $region3: #{discriminator_forward.14} parent=0 // pred_check_branch
    %9 = sbr.rel (0) target = $region5
  $region4: #{discriminator_forward.14} parent=0 // pred_region
    _
  $region5: #{discriminator_forward.14} parent=0 // pred_fallthru
    _
  // Predicated region
  $region6: #{discriminator_forward.14} parent=0 // pred_check
    _
  $region7: #{discriminator_forward.14} parent=0 // pred_check_branch
    %11 = sbr.rel (0) target = $region9
  $region8: #{discriminator_forward.14} parent=0 // pred_region
    _
  $region9: #{discriminator_forward.14} parent=0 // pred_fallthru
    _
  // Predicated region
  $region10: #{discriminator_forward.14} parent=0 // pred_check
    _
  $region11: #{discriminator_forward.14} parent=0 // pred_check_branch
    %13 = sbr.rel (0) target = $region13
  $region12: #{discriminator_forward.14} parent=0 // pred_region
    _
  $region13: #{discriminator_forward.14} parent=0 // pred_fallthru
    _
  %v14 = vld [vmem:[%s0] sm:$0xf]
  %v15 = vld [vmem:[%s0 + $0x4] sm:$0xf]
  %v16 = vld [vmem:[%s0 + $0x8] sm:$0xf]
  %v17 = vld [vmem:[%s0 + $0xc] sm:$0xf]
  %v18 = vunpack.c.l.bf16 %v14
  %v19 = vunpack.c.l.bf16 %v15
  %v20 = vunpack.c.l.bf16 %v16
  %v21 = vunpack.c.l.bf16 %v17
  %v22 = vld [vmem:[%s1] sm:$0x1]
  %v24 = vlaneseq
  %v25 = vshrl.u32 %v24, 7
  %v26 = vsub.s32 0, %v25
  %v27 = vrot.slane %v22, %v26
  %v29 = vmul.f32 %v18, %v27
  %v30 = vmul.f32 %v19, %v27
  %v31 = vmul.f32 %v20, %v27
  %v32 = vmul.f32 %v21, %v27
  %v33 = vld [vmem:[%s2] sm:$0x1]
  %v35 = vlaneseq
  %v36 = vshrl.u32 %v35, 7
  %v37 = vsub.s32 0, %v36
  %v38 = vrot.slane %v33, %v37
  %v40 = vadd.f32 %v29, %v38
  %v41 = vadd.f32 %v30, %v38
  %v42 = vadd.f32 %v31, %v38
  %v43 = vadd.f32 %v32, %v38
  %vm44 = vcmp.ge.f32.partialorder %v40, 0.0
  %vm45 = vcmp.ge.f32.partialorder %v41, 0.0
  %vm46 = vcmp.ge.f32.partialorder %v42, 0.0
  %vm47 = vcmp.ge.f32.partialorder %v43, 0.0
  %v48 = vmul.f32 %v40, 0.2
  %v49 = vmul.f32 %v41, 0.2
  %v50 = vmul.f32 %v42, 0.2
  %v51 = vmul.f32 %v43, 0.2
  %v52 = vsel %vm44, %v40, %v48
  %v53 = vsel %vm45, %v41, %v49
  %v54 = vsel %vm46, %v42, %v50
  %v55 = vsel %vm47, %v43, %v51
  %v56 = vpack.c.bf16 %v53, %v52
  %v57 = vpack.c.bf16 %v55, %v54
  %v60 = vunpack.c.l.b16 %v56
  %v61 = vunpack.c.h.b16 %v56
  %v62 = vunpack.c.l.b16 %v57
  %v63 = vunpack.c.h.b16 %v57
  %v64 = vpack.c.b16 %v60, %v60
  %v65 = vpack.c.b16 %v61, %v61
  %v66 = vpack.c.b16 %v62, %v62
  %v67 = vpack.c.b16 %v63, %v63
  %72 = vst [vmem:[%s3] sm:$0xf] %v64
  %73 = vst [vmem:[%s3 + $0x4] sm:$0xf] %v65
  %74 = vst [vmem:[%s3 + $0x8] sm:$0xf] %v66
  %75 = vst [vmem:[%s3 + $0xc] sm:$0xf] %v67
  // Predicated region
  $region14: #{discriminator_forward.14} parent=0 // pred_check
    _
  $region15: #{discriminator_forward.14} parent=0 // pred_check_branch
    %77 = sbr.rel (0) target = $region17
  $region16: #{discriminator_forward.14} parent=0 // pred_region
    _
  $region17: #{discriminator_forward.14} parent=0 // pred_fallthru
    _
  // Predicated region
  $region18: #{discriminator_forward.14} parent=0 // pred_check
    _
  $region19: #{discriminator_forward.14} parent=0 // pred_check_branch
    %79 = sbr.rel (0) target = $region21
  $region20: #{discriminator_forward.14} parent=0 // pred_region
    _
  $region21: #{discriminator_forward.14} parent=0 // pred_fallthru
    _

// kernel: discriminator_forward.15
$region0: #{discriminator_forward.15}
  #allocation0 [shape = 'u32[]', space=smem, size = 0x4, offset = 0x4, fixed_abs, tag = 'smem constant byte address 0x4 - core index']
  #allocation1 [shape = 'u32[144,128]{1,0:T(1,128)}', space=vmem, size = 0x12000, scoped, tag = 'internal scratch']
  %s0 = inlined_call_operand.vmem [shape: bf16[8,2048], index: 0, kind: input, shape index: {}]
  %s1 = inlined_call_operand.vmem [shape: f32[1,2048], index: 1, kind: input, shape index: {}]
  %s2 = inlined_call_operand.vmem [shape: f32[8,1], index: 2, kind: output, shape index: {}]
  %s3 = sld [smem:[#allocation0]]
  $region18: #{discriminator_forward.15} parent=0
    _
  %s5 = ssub.s32 1, %s3
  %s6 = scalar_select 0, %s5, %s3
  // Predicated region
  $region2: #{discriminator_forward.15} parent=0 // pred_check
    _
  $region3: #{discriminator_forward.15} parent=0 // pred_check_branch
    %8 = sbr.rel (0) target = $region5
  $region4: #{discriminator_forward.15} parent=0 // pred_region
    _
  $region5: #{discriminator_forward.15} parent=0 // pred_fallthru
    _
  // Predicated region
  $region6: #{discriminator_forward.15} parent=0 // pred_check
    _
  $region7: #{discriminator_forward.15} parent=0 // pred_check_branch
    %10 = sbr.rel (0) target = $region9
  $region8: #{discriminator_forward.15} parent=0 // pred_region
    _
  $region9: #{discriminator_forward.15} parent=0 // pred_fallthru
    _
  %v11 = vld [vmem:[%s0] sm:$0xff]
  %v12 = vld [vmem:[%s0 + $0x8] sm:$0xff]
  %v13 = vld [vmem:[%s0 + $0x10] sm:$0xff]
  %v14 = vld [vmem:[%s0 + $0x18] sm:$0xff]
  %v15 = vld [vmem:[%s0 + $0x20] sm:$0xff]
  %v16 = vld [vmem:[%s0 + $0x28] sm:$0xff]
  %v17 = vld [vmem:[%s0 + $0x30] sm:$0xff]
  %v18 = vld [vmem:[%s0 + $0x38] sm:$0xff]
  %v19 = vunpack.c.l.bf16 %v11
  %v20 = vunpack.c.h.bf16 %v11
  %v21 = vunpack.c.l.bf16 %v12
  %v22 = vunpack.c.h.bf16 %v12
  %v23 = vunpack.c.l.bf16 %v13
  %v24 = vunpack.c.h.bf16 %v13
  %v25 = vunpack.c.l.bf16 %v14
  %v26 = vunpack.c.h.bf16 %v14
  %v27 = vunpack.c.l.bf16 %v15
  %v28 = vunpack.c.h.bf16 %v15
  %v29 = vunpack.c.l.bf16 %v16
  %v30 = vunpack.c.h.bf16 %v16
  %v31 = vunpack.c.l.bf16 %v17
  %v32 = vunpack.c.h.bf16 %v17
  %v33 = vunpack.c.l.bf16 %v18
  %v34 = vunpack.c.h.bf16 %v18
  %v35 = vld [vmem:[%s1] sm:$0xff]
  %v36 = vld [vmem:[%s1 + $0x8] sm:$0xff]
  %v39 = vlaneseq
  %v40 = vshrl.u32 %v39, 7
  %v41 = vsub.s32 0, %v40
  %v42 = vrot.slane %v35, %v41
  %v43 = vlaneseq
  %v44 = vshrl.u32 %v43, 7
  %v45 = vsub.s32 1, %v44
  %v46 = vrot.slane %v35, %v45
  %v47 = vlaneseq
  %v48 = vshrl.u32 %v47, 7
  %v49 = vsub.s32 2, %v48
  %v50 = vrot.slane %v35, %v49
  %v51 = vlaneseq
  %v52 = vshrl.u32 %v51, 7
  %v53 = vsub.s32 3, %v52
  %v54 = vrot.slane %v35, %v53
  %v55 = vlaneseq
  %v56 = vshrl.u32 %v55, 7
  %v57 = vsub.s32 4, %v56
  %v58 = vrot.slane %v35, %v57
  %v59 = vlaneseq
  %v60 = vshrl.u32 %v59, 7
  %v61 = vsub.s32 5, %v60
  %v62 = vrot.slane %v35, %v61
  %v63 = vlaneseq
  %v64 = vshrl.u32 %v63, 7
  %v65 = vsub.s32 6, %v64
  %v66 = vrot.slane %v35, %v65
  %v67 = vlaneseq
  %v68 = vshrl.u32 %v67, 7
  %v69 = vsub.s32 7, %v68
  %v70 = vrot.slane %v35, %v69
  %v71 = vlaneseq
  %v72 = vshrl.u32 %v71, 7
  %v73 = vsub.s32 0, %v72
  %v74 = vrot.slane %v36, %v73
  %v75 = vlaneseq
  %v76 = vshrl.u32 %v75, 7
  %v77 = vsub.s32 1, %v76
  %v78 = vrot.slane %v36, %v77
  %v79 = vlaneseq
  %v80 = vshrl.u32 %v79, 7
  %v81 = vsub.s32 2, %v80
  %v82 = vrot.slane %v36, %v81
  %v83 = vlaneseq
  %v84 = vshrl.u32 %v83, 7
  %v85 = vsub.s32 3, %v84
  %v86 = vrot.slane %v36, %v85
  %v87 = vlaneseq
  %v88 = vshrl.u32 %v87, 7
  %v89 = vsub.s32 4, %v88
  %v90 = vrot.slane %v36, %v89
  %v91 = vlaneseq
  %v92 = vshrl.u32 %v91, 7
  %v93 = vsub.s32 5, %v92
  %v94 = vrot.slane %v36, %v93
  %v95 = vlaneseq
  %v96 = vshrl.u32 %v95, 7
  %v97 = vsub.s32 6, %v96
  %v98 = vrot.slane %v36, %v97
  %v99 = vlaneseq
  %v100 = vshrl.u32 %v99, 7
  %v101 = vsub.s32 7, %v100
  %v102 = vrot.slane %v36, %v101
  %v119 = vmul.f32 %v19, %v42
  %v120 = vmul.f32 %v20, %v46
  %v121 = vmul.f32 %v21, %v50
  %v122 = vmul.f32 %v22, %v54
  %v123 = vmul.f32 %v23, %v58
  %v124 = vmul.f32 %v24, %v62
  %v125 = vmul.f32 %v25, %v66
  %v126 = vmul.f32 %v26, %v70
  %v127 = vmul.f32 %v27, %v74
  %v128 = vmul.f32 %v28, %v78
  %v129 = vmul.f32 %v29, %v82
  %v130 = vmul.f32 %v30, %v86
  %v131 = vmul.f32 %v31, %v90
  %v132 = vmul.f32 %v32, %v94
  %v133 = vmul.f32 %v33, %v98
  %v134 = vmul.f32 %v34, %v102
  %v135 = vadd.f32 %v119, %v120
  %v136 = vadd.f32 %v135, %v121
  %v137 = vadd.f32 %v136, %v122
  %v138 = vadd.f32 %v137, %v123
  %v139 = vadd.f32 %v138, %v124
  %v140 = vadd.f32 %v139, %v125
  %v141 = vadd.f32 %v140, %v126
  %v142 = vadd.f32 %v141, %v127
  %v143 = vadd.f32 %v142, %v128
  %v144 = vadd.f32 %v143, %v129
  %v145 = vadd.f32 %v144, %v130
  %v146 = vadd.f32 %v145, %v131
  %v147 = vadd.f32 %v146, %v132
  %v148 = vadd.f32 %v147, %v133
  %v149 = vadd.f32 %v148, %v134
  %150 = vadd.xlane.f32.xlu0 %v149
  %v151 = vpop.xlane.xlu0 %150
  %v152 = vxor.u32 %v151, 2147483648
  %v153 = vmul.f32 %v152, 1.442695
  %v154 = vpow.pop %v153
  %v155 = vadd.f32 %v154, 1.0
  %v156 = vrcp.pop %v155
  %v157 = vmul.f32 1.0, %v156
  %vm158 = vcmask 7168
  %159 = vst.msk [vmem:[%s2] sm:$0xff] %vm158, %v157
  // Predicated region
  $region10: #{discriminator_forward.15} parent=0 // pred_check
    _
  $region11: #{discriminator_forward.15} parent=0 // pred_check_branch
    %161 = sbr.rel (0) target = $region13
  $region12: #{discriminator_forward.15} parent=0 // pred_region
    _
  $region13: #{discriminator_forward.15} parent=0 // pred_fallthru
    _
  // Predicated region
  $region14: #{discriminator_forward.15} parent=0 // pred_check
    _
  $region15: #{discriminator_forward.15} parent=0 // pred_check_branch
    %163 = sbr.rel (0) target = $region17
  $region16: #{discriminator_forward.15} parent=0 // pred_region
    _
  $region17: #{discriminator_forward.15} parent=0 // pred_fallthru
    _

</llo_original>
